<compile_context>
chip_gen: v7x
topology: tpu7x:2x2x1
jax: 0.10.0
libtpu: 0.0.40
codegen_flags: <defaults>
</compile_context>

<pallas_src>
import functools

import jax
import jax.numpy as jnp
from jax.experimental import pallas as pl
from jax.experimental.pallas import tpu as pltpu


def _round_up(x, m):
    return (x + m - 1) // m * m


# tap t = kh*2 + kw  <->  spatial row shift kh*8 + kw (rows r = h*8 + w)
_TAP_SHIFTS = (0, 1, 8, 9)


# ----------------------------------------------------------------------------
# Fused kernel: conv1 -> ReLU -> conv2 -> ReLU -> fc1 -> ReLU -> fc2
# for one batch block of B images.  Activation layout: (channels, spatial*B).
# ----------------------------------------------------------------------------
def _fused_qnet_kernel(x_ref, w1_ref, w2_ref, wf1_ref, wf2_ref,
                       b1_ref, b2_ref, bf1_ref, bf2_ref,
                       out_ref, y1_ref, y2_ref):
    B = out_ref.shape[1]
    f32 = jnp.float32

    # ---- conv1 + ReLU: 4 accumulating MXU dots (K = Cin, unpadded). ----
    # Spatial rows with h == 7 or w == 7 hold junk that is never consumed.
    acc = jnp.dot(w1_ref[0], x_ref[:, pl.ds(0, 64 * B)],
                  preferred_element_type=f32)
    for t in (1, 2, 3):
        sh = _TAP_SHIFTS[t]
        acc = acc + jnp.dot(w1_ref[t], x_ref[:, pl.ds(sh * B, 64 * B)],
                            preferred_element_type=f32)
    y1_ref[...] = jnp.maximum(acc + b1_ref[...], 0.0)          # (kp, 64*B)

    # ---- conv2 + ReLU: single im2col matmul, taps stacked on sublanes. ----
    p2 = jnp.concatenate(
        [y1_ref[:, pl.ds(sh * B, 48 * B)] for sh in _TAP_SHIFTS], axis=0)
    y2 = jnp.dot(w2_ref[...], p2, preferred_element_type=f32)  # (kp, 48*B)
    y2_ref[...] = jnp.maximum(y2 + b2_ref[...], 0.0)

    # ---- fc1 + ReLU: gather the 36 valid positions onto sublanes and do one
    #      (hp, 36*kp) @ (36*kp, B) matmul (junk positions never read). ----
    rhs = jnp.concatenate(
        [y2_ref[:, pl.ds((h * 8 + w) * B, B)]
         for h in range(6) for w in range(6)], axis=0)          # (36*kp, B)
    h1 = jnp.dot(wf1_ref[...], rhs, preferred_element_type=f32)
    h1 = jnp.maximum(h1 + bf1_ref[...], 0.0)                    # (hp, B)

    # ---- fc2 ----
    out_ref[...] = (jnp.dot(wf2_ref[...], h1, preferred_element_type=f32)
                    + bf2_ref[...])                             # (orows, B)


# ----------------------------------------------------------------------------
# Trace-time weight repacking (one-off, tiny XLA ops).
# ----------------------------------------------------------------------------
def _pack_params(params, input_dim, kernels):
    w1, b1, w2, b2, wf1, bf1, wf2, bf2 = params
    hidden = wf1.shape[1]
    out_dim = wf2.shape[1]

    kp = _round_up(kernels, 8)
    hp = _round_up(hidden, 8)
    orows = _round_up(out_dim, 8)

    # conv1: (tap, cout, cin), tap = kh*2 + kw.
    w1p = jnp.zeros((4, kp, input_dim), jnp.float32)
    w1p = w1p.at[:, :kernels, :].set(
        jnp.transpose(w1, (2, 3, 0, 1)).reshape(4, kernels, input_dim))

    # conv2: (cout, 4*kp); column block t*kp..(t+1)*kp holds tap t.
    w2p = jnp.zeros((kp, 4, kp), jnp.float32)
    w2p = w2p.at[:kernels, :, :kernels].set(
        jnp.transpose(w2, (0, 2, 3, 1)).reshape(kernels, 4, kernels))
    w2p = w2p.reshape(kp, 4 * kp)

    # fc1: (hp, 36*kp); column (h*6+w)*kp + c  <-  wf1[c*36 + h*6 + w, :]
    # (PyTorch NCHW flatten folded into the pack).
    wf1t = jnp.transpose(wf1.reshape(kernels, 6, 6, hidden), (3, 1, 2, 0))
    wf1p = jnp.zeros((hp, 6, 6, kp), jnp.float32)
    wf1p = wf1p.at[:hidden, :, :, :kernels].set(wf1t)
    wf1p = wf1p.reshape(hp, 36 * kp)

    # fc2: (orows, hp)
    wf2p = jnp.zeros((orows, hp), jnp.float32)
    wf2p = wf2p.at[:out_dim, :hidden].set(wf2.T)

    # Biases as column vectors (broadcast along the lane/batch axis in-kernel).
    b1p = jnp.zeros((kp, 1), jnp.float32).at[:kernels, 0].set(b1)
    b2p = jnp.zeros((kp, 1), jnp.float32).at[:kernels, 0].set(b2)
    bf1p = jnp.zeros((hp, 1), jnp.float32).at[:hidden, 0].set(bf1)
    bf2p = jnp.zeros((orows, 1), jnp.float32).at[:out_dim, 0].set(bf2)

    return (w1p, w2p, wf1p, wf2p, b1p, b2p, bf1p, bf2p,
            (kp, hp, orows, out_dim))


# ----------------------------------------------------------------------------
# Conv_QNet forward
# ----------------------------------------------------------------------------
def conv_qnet_forward(x, params, *, input_dim, kernels):
    """x: any shape reshapeable to (-1, input_dim, 8, 8), float32."""
    (w1p, w2p, wf1p, wf2p, b1p, b2p, bf1p, bf2p,
     (kp, hp, orows, out_dim)) = _pack_params(params, input_dim, kernels)

    x = x.reshape(-1, input_dim, 8, 8).astype(jnp.float32)
    n = x.shape[0]

    # Batch block: a multiple of 128 so every in-kernel lane slice (multiples
    # of B) is 128-aligned; 256 keeps per-step VMEM ~5 MB (fits v7x defaults)
    # while amortizing grid-step overhead.
    B = 128 if n <= 128 else 256
    n_pad = _round_up(n, B)
    nblk = n_pad // B

    # Spatial-major, batch-on-lanes layout: xw[blk, c, r*B + b], r = h*8 + w.
    # Spatial rows 64..79 are zero padding so all tap shifts (<= 9) stay
    # in bounds.  Channel dim is left unpadded (review item 5).
    xw = x.reshape(n, input_dim, 64)
    xw = jnp.pad(xw, ((0, n_pad - n), (0, 0), (0, 16)))
    xw = xw.reshape(nblk, B, input_dim, 80)
    xw = jnp.transpose(xw, (0, 2, 3, 1)).reshape(nblk, input_dim, 80 * B)

    out = pl.pallas_call(
        _fused_qnet_kernel,
        out_shape=jax.ShapeDtypeStruct((nblk, orows, B), jnp.float32),
        grid=(nblk,),
        in_specs=[
            pl.BlockSpec((None, input_dim, 80 * B), lambda i: (i, 0, 0)),
            pl.BlockSpec((4, kp, input_dim), lambda i: (0, 0, 0)),
            pl.BlockSpec((kp, 4 * kp), lambda i: (0, 0)),
            pl.BlockSpec((hp, 36 * kp), lambda i: (0, 0)),
            pl.BlockSpec((orows, hp), lambda i: (0, 0)),
            pl.BlockSpec((kp, 1), lambda i: (0, 0)),
            pl.BlockSpec((kp, 1), lambda i: (0, 0)),
            pl.BlockSpec((hp, 1), lambda i: (0, 0)),
            pl.BlockSpec((orows, 1), lambda i: (0, 0)),
        ],
        out_specs=pl.BlockSpec((None, orows, B), lambda i: (i, 0, 0)),
        scratch_shapes=[
            pltpu.VMEM((kp, 64 * B), jnp.float32),   # y1 (conv1 output)
            pltpu.VMEM((kp, 48 * B), jnp.float32),   # y2 (conv2 output)
        ],
        compiler_params=pltpu.CompilerParams(
            dimension_semantics=("parallel",)),       # v7x: 2 TCs split blocks
    )(xw, w1p, w2p, wf1p, wf2p, b1p, b2p, bf1p, bf2p)

    out = jnp.transpose(out, (0, 2, 1)).reshape(n_pad, orows)
    return out[:n, :out_dim]


# ----------------------------------------------------------------------------
# Deterministic parameter init (PyTorch-style uniform fan-in bounds)
# ----------------------------------------------------------------------------
def init_params(key, input_dim, kernels, hidden_size, output_size):
    ks = jax.random.split(key, 8)

    def u(k, shape, fan_in):
        bound = 1.0 / jnp.sqrt(fan_in)
        return jax.random.uniform(k, shape, jnp.float32, -bound, bound)

    w1 = u(ks[0], (kernels, input_dim, 2, 2), input_dim * 4)
    b1 = u(ks[1], (kernels,), input_dim * 4)
    w2 = u(ks[2], (kernels, kernels, 2, 2), kernels * 4)
    b2 = u(ks[3], (kernels,), kernels * 4)
    wf1 = u(ks[4], (kernels * 36, hidden_size), kernels * 36)
    bf1 = u(ks[5], (hidden_size,), kernels * 36)
    wf2 = u(ks[6], (hidden_size, output_size), hidden_size)
    bf2 = u(ks[7], (output_size,), hidden_size)
    return (w1, b1, w2, b2, wf1, bf1, wf2, bf2)


# ----------------------------------------------------------------------------
# Pure-JAX reference (for correctness check)
# ----------------------------------------------------------------------------
def reference_forward(x, params, input_dim, kernels):
    w1, b1, w2, b2, wf1, bf1, wf2, bf2 = params
    x = x.reshape(-1, input_dim, 8, 8)
    dn = jax.lax.conv_dimension_numbers(x.shape, w1.shape, ("NCHW", "OIHW", "NCHW"))
    y = jax.lax.conv_general_dilated(x, w1, (1, 1), "VALID", dimension_numbers=dn)
    y = jax.nn.relu(y + b1[None, :, None, None])
    dn2 = jax.lax.conv_dimension_numbers(y.shape, w2.shape, ("NCHW", "OIHW", "NCHW"))
    y = jax.lax.conv_general_dilated(y, w2, (1, 1), "VALID", dimension_numbers=dn2)
    y = jax.nn.relu(y + b2[None, :, None, None])
    y = y.reshape(y.shape[0], kernels * 36)
    y = jax.nn.relu(y @ wf1 + bf1)
    return y @ wf2 + bf2


if __name__ == "__main__":
    input_dim, kernels, hidden_size, output_size = 4, 8, 32, 4

    key = jax.random.PRNGKey(0)
    k_x, k_p, k_x2 = jax.random.split(key, 3)
    params = init_params(k_p, input_dim, kernels, hidden_size, output_size)

    fwd = jax.jit(functools.partial(conv_qnet_forward,
                                    input_dim=input_dim, kernels=kernels))

    # Small batch (module-sized example).
    batch = 2
    x = jax.random.normal(k_x, (batch, input_dim, 8, 8), jnp.float32)
    out = jax.block_until_ready(fwd(x, params))
    ref = reference_forward(x, params, input_dim, kernels)
    assert out.shape == (batch, output_size)
    assert jnp.allclose(out, ref, rtol=1e-3, atol=1e-3)

    # Larger batch: exercises multi-block grid + batch padding.
    batch2 = 300
    x2 = jax.random.normal(k_x2, (batch2, input_dim, 8, 8), jnp.float32)
    out2 = jax.block_until_ready(fwd(x2, params))
    ref2 = reference_forward(x2, params, input_dim, kernels)
    assert out2.shape == (batch2, output_size)
    assert jnp.allclose(out2, ref2, rtol=1e-3, atol=1e-3)

    print("KERNEL_OK")
</pallas_src>

<mosaic_0001>
module attributes {stable_mosaic.version = 11 : i64} {
  func.func @_fused_qnet_kernel(%arg0: i32, %arg1: memref<1x4x10240xf32, #tpu.memory_space<vmem>>, %arg2: memref<4x8x4xf32, #tpu.memory_space<vmem>>, %arg3: memref<8x32xf32, #tpu.memory_space<vmem>>, %arg4: memref<32x288xf32, #tpu.memory_space<vmem>>, %arg5: memref<8x32xf32, #tpu.memory_space<vmem>>, %arg6: memref<8x1xf32, #tpu.memory_space<vmem>>, %arg7: memref<8x1xf32, #tpu.memory_space<vmem>>, %arg8: memref<32x1xf32, #tpu.memory_space<vmem>>, %arg9: memref<8x1xf32, #tpu.memory_space<vmem>>, %arg10: memref<1x8x128xf32, #tpu.memory_space<vmem>>, %arg11: memref<8x8192xf32, #tpu.memory_space<vmem>>, %arg12: memref<8x6144xf32, #tpu.memory_space<vmem>>) attributes {dimension_semantics = [#tpu.dimension_semantics<parallel>], iteration_bounds = array<i64: 1>, scalar_prefetch = 0 : i64, scratch_operands = 2 : i64, tpu.core_type = #tpu.core_type<tc>, window_params = [{transform_indices = @transform_0, window_bounds = array<i64: 1, 4, 10240>}, {pipeline_mode = #tpu.pipeline_mode<synchronous>, transform_indices = @transform_1, window_bounds = array<i64: 4, 8, 4>}, {pipeline_mode = #tpu.pipeline_mode<synchronous>, transform_indices = @transform_2, window_bounds = array<i64: 8, 32>}, {pipeline_mode = #tpu.pipeline_mode<synchronous>, transform_indices = @transform_3, window_bounds = array<i64: 32, 288>}, {pipeline_mode = #tpu.pipeline_mode<synchronous>, transform_indices = @transform_4, window_bounds = array<i64: 8, 32>}, {pipeline_mode = #tpu.pipeline_mode<synchronous>, transform_indices = @transform_5, window_bounds = array<i64: 8, 1>}, {pipeline_mode = #tpu.pipeline_mode<synchronous>, transform_indices = @transform_6, window_bounds = array<i64: 8, 1>}, {pipeline_mode = #tpu.pipeline_mode<synchronous>, transform_indices = @transform_7, window_bounds = array<i64: 32, 1>}, {pipeline_mode = #tpu.pipeline_mode<synchronous>, transform_indices = @transform_8, window_bounds = array<i64: 8, 1>}, {transform_indices = @transform_9, window_bounds = array<i64: 1, 8, 128>}]} {
    %c0 = arith.constant 0 : index
    %c0_0 = arith.constant 0 : index
    %c0_1 = arith.constant 0 : index
    %0 = vector.load %arg2[%c0, %c0_0, %c0_1] : memref<4x8x4xf32, #tpu.memory_space<vmem>>, vector<1x8x4xf32>
    %1 = vector.shape_cast %0 : vector<1x8x4xf32> to vector<8x4xf32>
    %c0_2 = arith.constant 0 : index
    %c0_3 = arith.constant 0 : index
    %c0_4 = arith.constant 0 : index
    %2 = vector.load %arg1[%c0_2, %c0_3, %c0_4] : memref<1x4x10240xf32, #tpu.memory_space<vmem>>, vector<1x4x8192xf32>
    %3 = vector.shape_cast %2 : vector<1x4x8192xf32> to vector<4x8192xf32>
    %cst = arith.constant dense<0.000000e+00> : vector<8x8192xf32>
    %4 = tpu.matmul %1, %3, %cst {dimension_numbers = #tpu.dot_dimension_numbers<[1], [0], [0], [1], [0, 0, 1, 1], [], []>} : vector<8x4xf32>, vector<4x8192xf32>, vector<8x8192xf32> -> vector<8x8192xf32>
    %c1 = arith.constant 1 : index
    %c0_5 = arith.constant 0 : index
    %c0_6 = arith.constant 0 : index
    %5 = vector.load %arg2[%c1, %c0_5, %c0_6] : memref<4x8x4xf32, #tpu.memory_space<vmem>>, vector<1x8x4xf32>
    %6 = vector.shape_cast %5 : vector<1x8x4xf32> to vector<8x4xf32>
    %c0_7 = arith.constant 0 : index
    %c0_8 = arith.constant 0 : index
    %c128 = arith.constant 128 : index
    %7 = vector.load %arg1[%c0_7, %c0_8, %c128] : memref<1x4x10240xf32, #tpu.memory_space<vmem>>, vector<1x4x8192xf32>
    %8 = vector.shape_cast %7 : vector<1x4x8192xf32> to vector<4x8192xf32>
    %cst_9 = arith.constant dense<0.000000e+00> : vector<8x8192xf32>
    %9 = tpu.matmul %6, %8, %cst_9 {dimension_numbers = #tpu.dot_dimension_numbers<[1], [0], [0], [1], [0, 0, 1, 1], [], []>} : vector<8x4xf32>, vector<4x8192xf32>, vector<8x8192xf32> -> vector<8x8192xf32>
    %10 = arith.addf %4, %9 : vector<8x8192xf32>
    %c2 = arith.constant 2 : index
    %c0_10 = arith.constant 0 : index
    %c0_11 = arith.constant 0 : index
    %11 = vector.load %arg2[%c2, %c0_10, %c0_11] : memref<4x8x4xf32, #tpu.memory_space<vmem>>, vector<1x8x4xf32>
    %12 = vector.shape_cast %11 : vector<1x8x4xf32> to vector<8x4xf32>
    %c0_12 = arith.constant 0 : index
    %c0_13 = arith.constant 0 : index
    %c1024 = arith.constant 1024 : index
    %13 = vector.load %arg1[%c0_12, %c0_13, %c1024] : memref<1x4x10240xf32, #tpu.memory_space<vmem>>, vector<1x4x8192xf32>
    %14 = vector.shape_cast %13 : vector<1x4x8192xf32> to vector<4x8192xf32>
    %cst_14 = arith.constant dense<0.000000e+00> : vector<8x8192xf32>
    %15 = tpu.matmul %12, %14, %cst_14 {dimension_numbers = #tpu.dot_dimension_numbers<[1], [0], [0], [1], [0, 0, 1, 1], [], []>} : vector<8x4xf32>, vector<4x8192xf32>, vector<8x8192xf32> -> vector<8x8192xf32>
    %16 = arith.addf %10, %15 : vector<8x8192xf32>
    %c3 = arith.constant 3 : index
    %c0_15 = arith.constant 0 : index
    %c0_16 = arith.constant 0 : index
    %17 = vector.load %arg2[%c3, %c0_15, %c0_16] : memref<4x8x4xf32, #tpu.memory_space<vmem>>, vector<1x8x4xf32>
    %18 = vector.shape_cast %17 : vector<1x8x4xf32> to vector<8x4xf32>
    %c0_17 = arith.constant 0 : index
    %c0_18 = arith.constant 0 : index
    %c1152 = arith.constant 1152 : index
    %19 = vector.load %arg1[%c0_17, %c0_18, %c1152] : memref<1x4x10240xf32, #tpu.memory_space<vmem>>, vector<1x4x8192xf32>
    %20 = vector.shape_cast %19 : vector<1x4x8192xf32> to vector<4x8192xf32>
    %cst_19 = arith.constant dense<0.000000e+00> : vector<8x8192xf32>
    %21 = tpu.matmul %18, %20, %cst_19 {dimension_numbers = #tpu.dot_dimension_numbers<[1], [0], [0], [1], [0, 0, 1, 1], [], []>} : vector<8x4xf32>, vector<4x8192xf32>, vector<8x8192xf32> -> vector<8x8192xf32>
    %22 = arith.addf %16, %21 : vector<8x8192xf32>
    %c0_20 = arith.constant 0 : index
    %c0_21 = arith.constant 0 : index
    %23 = vector.load %arg6[%c0_20, %c0_21] : memref<8x1xf32, #tpu.memory_space<vmem>>, vector<8x1xf32>
    %24 = vector.broadcast %23 : vector<8x1xf32> to vector<8x8192xf32>
    %25 = arith.addf %22, %24 : vector<8x8192xf32>
    %cst_22 = arith.constant 0.000000e+00 : f32
    %26 = vector.broadcast %cst_22 : f32 to vector<8x8192xf32>
    %27 = arith.maximumf %25, %26 : vector<8x8192xf32>
    %c0_23 = arith.constant 0 : index
    %c0_24 = arith.constant 0 : index
    %28 = vector.load %arg11[%c0_23, %c0_24] : memref<8x8192xf32, #tpu.memory_space<vmem>>, vector<8x8192xf32>
    tpu.vector_store %arg11[%c0_23, %c0_24], %27 {strides = array<i32>} : memref<8x8192xf32, #tpu.memory_space<vmem>>, vector<8x8192xf32>,
    %c0_25 = arith.constant 0 : index
    %c0_26 = arith.constant 0 : index
    %29 = vector.load %arg11[%c0_25, %c0_26] : memref<8x8192xf32, #tpu.memory_space<vmem>>, vector<8x6144xf32>
    %c0_27 = arith.constant 0 : index
    %c128_28 = arith.constant 128 : index
    %30 = vector.load %arg11[%c0_27, %c128_28] : memref<8x8192xf32, #tpu.memory_space<vmem>>, vector<8x6144xf32>
    %c0_29 = arith.constant 0 : index
    %c1024_30 = arith.constant 1024 : index
    %31 = vector.load %arg11[%c0_29, %c1024_30] : memref<8x8192xf32, #tpu.memory_space<vmem>>, vector<8x6144xf32>
    %c0_31 = arith.constant 0 : index
    %c1152_32 = arith.constant 1152 : index
    %32 = vector.load %arg11[%c0_31, %c1152_32] : memref<8x8192xf32, #tpu.memory_space<vmem>>, vector<8x6144xf32>
    %33 = tpu.concatenate %29, %30, %31, %32 in 0 : vector<8x6144xf32>, vector<8x6144xf32>, vector<8x6144xf32>, vector<8x6144xf32> -> vector<32x6144xf32>
    %c0_33 = arith.constant 0 : index
    %c0_34 = arith.constant 0 : index
    %34 = vector.load %arg3[%c0_33, %c0_34] : memref<8x32xf32, #tpu.memory_space<vmem>>, vector<8x32xf32>
    %cst_35 = arith.constant dense<0.000000e+00> : vector<8x6144xf32>
    %35 = tpu.matmul %34, %33, %cst_35 {dimension_numbers = #tpu.dot_dimension_numbers<[1], [0], [0], [1], [0, 0, 1, 1], [], []>} : vector<8x32xf32>, vector<32x6144xf32>, vector<8x6144xf32> -> vector<8x6144xf32>
    %c0_36 = arith.constant 0 : index
    %c0_37 = arith.constant 0 : index
    %36 = vector.load %arg7[%c0_36, %c0_37] : memref<8x1xf32, #tpu.memory_space<vmem>>, vector<8x1xf32>
    %37 = vector.broadcast %36 : vector<8x1xf32> to vector<8x6144xf32>
    %38 = arith.addf %35, %37 : vector<8x6144xf32>
    %cst_38 = arith.constant 0.000000e+00 : f32
    %39 = vector.broadcast %cst_38 : f32 to vector<8x6144xf32>
    %40 = arith.maximumf %38, %39 : vector<8x6144xf32>
    %c0_39 = arith.constant 0 : index
    %c0_40 = arith.constant 0 : index
    %41 = vector.load %arg12[%c0_39, %c0_40] : memref<8x6144xf32, #tpu.memory_space<vmem>>, vector<8x6144xf32>
    tpu.vector_store %arg12[%c0_39, %c0_40], %40 {strides = array<i32>} : memref<8x6144xf32, #tpu.memory_space<vmem>>, vector<8x6144xf32>,
    %c0_41 = arith.constant 0 : index
    %c0_42 = arith.constant 0 : index
    %42 = vector.load %arg12[%c0_41, %c0_42] : memref<8x6144xf32, #tpu.memory_space<vmem>>, vector<8x128xf32>
    %c0_43 = arith.constant 0 : index
    %c128_44 = arith.constant 128 : index
    %43 = vector.load %arg12[%c0_43, %c128_44] : memref<8x6144xf32, #tpu.memory_space<vmem>>, vector<8x128xf32>
    %c0_45 = arith.constant 0 : index
    %c256 = arith.constant 256 : index
    %44 = vector.load %arg12[%c0_45, %c256] : memref<8x6144xf32, #tpu.memory_space<vmem>>, vector<8x128xf32>
    %c0_46 = arith.constant 0 : index
    %c384 = arith.constant 384 : index
    %45 = vector.load %arg12[%c0_46, %c384] : memref<8x6144xf32, #tpu.memory_space<vmem>>, vector<8x128xf32>
    %c0_47 = arith.constant 0 : index
    %c512 = arith.constant 512 : index
    %46 = vector.load %arg12[%c0_47, %c512] : memref<8x6144xf32, #tpu.memory_space<vmem>>, vector<8x128xf32>
    %c0_48 = arith.constant 0 : index
    %c640 = arith.constant 640 : index
    %47 = vector.load %arg12[%c0_48, %c640] : memref<8x6144xf32, #tpu.memory_space<vmem>>, vector<8x128xf32>
    %c0_49 = arith.constant 0 : index
    %c1024_50 = arith.constant 1024 : index
    %48 = vector.load %arg12[%c0_49, %c1024_50] : memref<8x6144xf32, #tpu.memory_space<vmem>>, vector<8x128xf32>
    %c0_51 = arith.constant 0 : index
    %c1152_52 = arith.constant 1152 : index
    %49 = vector.load %arg12[%c0_51, %c1152_52] : memref<8x6144xf32, #tpu.memory_space<vmem>>, vector<8x128xf32>
    %c0_53 = arith.constant 0 : index
    %c1280 = arith.constant 1280 : index
    %50 = vector.load %arg12[%c0_53, %c1280] : memref<8x6144xf32, #tpu.memory_space<vmem>>, vector<8x128xf32>
    %c0_54 = arith.constant 0 : index
    %c1408 = arith.constant 1408 : index
    %51 = vector.load %arg12[%c0_54, %c1408] : memref<8x6144xf32, #tpu.memory_space<vmem>>, vector<8x128xf32>
    %c0_55 = arith.constant 0 : index
    %c1536 = arith.constant 1536 : index
    %52 = vector.load %arg12[%c0_55, %c1536] : memref<8x6144xf32, #tpu.memory_space<vmem>>, vector<8x128xf32>
    %c0_56 = arith.constant 0 : index
    %c1664 = arith.constant 1664 : index
    %53 = vector.load %arg12[%c0_56, %c1664] : memref<8x6144xf32, #tpu.memory_space<vmem>>, vector<8x128xf32>
    %c0_57 = arith.constant 0 : index
    %c2048 = arith.constant 2048 : index
    %54 = vector.load %arg12[%c0_57, %c2048] : memref<8x6144xf32, #tpu.memory_space<vmem>>, vector<8x128xf32>
    %c0_58 = arith.constant 0 : index
    %c2176 = arith.constant 2176 : index
    %55 = vector.load %arg12[%c0_58, %c2176] : memref<8x6144xf32, #tpu.memory_space<vmem>>, vector<8x128xf32>
    %c0_59 = arith.constant 0 : index
    %c2304 = arith.constant 2304 : index
    %56 = vector.load %arg12[%c0_59, %c2304] : memref<8x6144xf32, #tpu.memory_space<vmem>>, vector<8x128xf32>
    %c0_60 = arith.constant 0 : index
    %c2432 = arith.constant 2432 : index
    %57 = vector.load %arg12[%c0_60, %c2432] : memref<8x6144xf32, #tpu.memory_space<vmem>>, vector<8x128xf32>
    %c0_61 = arith.constant 0 : index
    %c2560 = arith.constant 2560 : index
    %58 = vector.load %arg12[%c0_61, %c2560] : memref<8x6144xf32, #tpu.memory_space<vmem>>, vector<8x128xf32>
    %c0_62 = arith.constant 0 : index
    %c2688 = arith.constant 2688 : index
    %59 = vector.load %arg12[%c0_62, %c2688] : memref<8x6144xf32, #tpu.memory_space<vmem>>, vector<8x128xf32>
    %c0_63 = arith.constant 0 : index
    %c3072 = arith.constant 3072 : index
    %60 = vector.load %arg12[%c0_63, %c3072] : memref<8x6144xf32, #tpu.memory_space<vmem>>, vector<8x128xf32>
    %c0_64 = arith.constant 0 : index
    %c3200 = arith.constant 3200 : index
    %61 = vector.load %arg12[%c0_64, %c3200] : memref<8x6144xf32, #tpu.memory_space<vmem>>, vector<8x128xf32>
    %c0_65 = arith.constant 0 : index
    %c3328 = arith.constant 3328 : index
    %62 = vector.load %arg12[%c0_65, %c3328] : memref<8x6144xf32, #tpu.memory_space<vmem>>, vector<8x128xf32>
    %c0_66 = arith.constant 0 : index
    %c3456 = arith.constant 3456 : index
    %63 = vector.load %arg12[%c0_66, %c3456] : memref<8x6144xf32, #tpu.memory_space<vmem>>, vector<8x128xf32>
    %c0_67 = arith.constant 0 : index
    %c3584 = arith.constant 3584 : index
    %64 = vector.load %arg12[%c0_67, %c3584] : memref<8x6144xf32, #tpu.memory_space<vmem>>, vector<8x128xf32>
    %c0_68 = arith.constant 0 : index
    %c3712 = arith.constant 3712 : index
    %65 = vector.load %arg12[%c0_68, %c3712] : memref<8x6144xf32, #tpu.memory_space<vmem>>, vector<8x128xf32>
    %c0_69 = arith.constant 0 : index
    %c4096 = arith.constant 4096 : index
    %66 = vector.load %arg12[%c0_69, %c4096] : memref<8x6144xf32, #tpu.memory_space<vmem>>, vector<8x128xf32>
    %c0_70 = arith.constant 0 : index
    %c4224 = arith.constant 4224 : index
    %67 = vector.load %arg12[%c0_70, %c4224] : memref<8x6144xf32, #tpu.memory_space<vmem>>, vector<8x128xf32>
    %c0_71 = arith.constant 0 : index
    %c4352 = arith.constant 4352 : index
    %68 = vector.load %arg12[%c0_71, %c4352] : memref<8x6144xf32, #tpu.memory_space<vmem>>, vector<8x128xf32>
    %c0_72 = arith.constant 0 : index
    %c4480 = arith.constant 4480 : index
    %69 = vector.load %arg12[%c0_72, %c4480] : memref<8x6144xf32, #tpu.memory_space<vmem>>, vector<8x128xf32>
    %c0_73 = arith.constant 0 : index
    %c4608 = arith.constant 4608 : index
    %70 = vector.load %arg12[%c0_73, %c4608] : memref<8x6144xf32, #tpu.memory_space<vmem>>, vector<8x128xf32>
    %c0_74 = arith.constant 0 : index
    %c4736 = arith.constant 4736 : index
    %71 = vector.load %arg12[%c0_74, %c4736] : memref<8x6144xf32, #tpu.memory_space<vmem>>, vector<8x128xf32>
    %c0_75 = arith.constant 0 : index
    %c5120 = arith.constant 5120 : index
    %72 = vector.load %arg12[%c0_75, %c5120] : memref<8x6144xf32, #tpu.memory_space<vmem>>, vector<8x128xf32>
    %c0_76 = arith.constant 0 : index
    %c5248 = arith.constant 5248 : index
    %73 = vector.load %arg12[%c0_76, %c5248] : memref<8x6144xf32, #tpu.memory_space<vmem>>, vector<8x128xf32>
    %c0_77 = arith.constant 0 : index
    %c5376 = arith.constant 5376 : index
    %74 = vector.load %arg12[%c0_77, %c5376] : memref<8x6144xf32, #tpu.memory_space<vmem>>, vector<8x128xf32>
    %c0_78 = arith.constant 0 : index
    %c5504 = arith.constant 5504 : index
    %75 = vector.load %arg12[%c0_78, %c5504] : memref<8x6144xf32, #tpu.memory_space<vmem>>, vector<8x128xf32>
    %c0_79 = arith.constant 0 : index
    %c5632 = arith.constant 5632 : index
    %76 = vector.load %arg12[%c0_79, %c5632] : memref<8x6144xf32, #tpu.memory_space<vmem>>, vector<8x128xf32>
    %c0_80 = arith.constant 0 : index
    %c5760 = arith.constant 5760 : index
    %77 = vector.load %arg12[%c0_80, %c5760] : memref<8x6144xf32, #tpu.memory_space<vmem>>, vector<8x128xf32>
    %78 = tpu.concatenate %42, %43, %44, %45, %46, %47, %48, %49, %50, %51, %52, %53, %54, %55, %56, %57 in 0 : vector<8x128xf32>, vector<8x128xf32>, vector<8x128xf32>, vector<8x128xf32>, vector<8x128xf32>, vector<8x128xf32>, vector<8x128xf32>, vector<8x128xf32>, vector<8x128xf32>, vector<8x128xf32>, vector<8x128xf32>, vector<8x128xf32>, vector<8x128xf32>, vector<8x128xf32>, vector<8x128xf32>, vector<8x128xf32> -> vector<128x128xf32>
    %79 = tpu.concatenate %58, %59, %60, %61, %62, %63, %64, %65, %66, %67, %68, %69, %70, %71, %72, %73 in 0 : vector<8x128xf32>, vector<8x128xf32>, vector<8x128xf32>, vector<8x128xf32>, vector<8x128xf32>, vector<8x128xf32>, vector<8x128xf32>, vector<8x128xf32>, vector<8x128xf32>, vector<8x128xf32>, vector<8x128xf32>, vector<8x128xf32>, vector<8x128xf32>, vector<8x128xf32>, vector<8x128xf32>, vector<8x128xf32> -> vector<128x128xf32>
    %80 = tpu.concatenate %74, %75, %76, %77 in 0 : vector<8x128xf32>, vector<8x128xf32>, vector<8x128xf32>, vector<8x128xf32> -> vector<32x128xf32>
    %81 = tpu.concatenate %78, %79, %80 in 0 : vector<128x128xf32>, vector<128x128xf32>, vector<32x128xf32> -> vector<288x128xf32>
    %c0_81 = arith.constant 0 : index
    %c0_82 = arith.constant 0 : index
    %82 = vector.load %arg4[%c0_81, %c0_82] : memref<32x288xf32, #tpu.memory_space<vmem>>, vector<32x288xf32>
    %cst_83 = arith.constant dense<0.000000e+00> : vector<32x128xf32>
    %83 = tpu.matmul %82, %81, %cst_83 {dimension_numbers = #tpu.dot_dimension_numbers<[1], [0], [0], [1], [0, 0, 1, 1], [], []>} : vector<32x288xf32>, vector<288x128xf32>, vector<32x128xf32> -> vector<32x128xf32>
    %c0_84 = arith.constant 0 : index
    %c0_85 = arith.constant 0 : index
    %84 = vector.load %arg8[%c0_84, %c0_85] : memref<32x1xf32, #tpu.memory_space<vmem>>, vector<32x1xf32>
    %85 = vector.broadcast %84 : vector<32x1xf32> to vector<32x128xf32>
    %86 = arith.addf %83, %85 : vector<32x128xf32>
    %cst_86 = arith.constant 0.000000e+00 : f32
    %87 = vector.broadcast %cst_86 : f32 to vector<32x128xf32>
    %88 = arith.maximumf %86, %87 : vector<32x128xf32>
    %c0_87 = arith.constant 0 : index
    %c0_88 = arith.constant 0 : index
    %89 = vector.load %arg5[%c0_87, %c0_88] : memref<8x32xf32, #tpu.memory_space<vmem>>, vector<8x32xf32>
    %cst_89 = arith.constant dense<0.000000e+00> : vector<8x128xf32>
    %90 = tpu.matmul %89, %88, %cst_89 {dimension_numbers = #tpu.dot_dimension_numbers<[1], [0], [0], [1], [0, 0, 1, 1], [], []>} : vector<8x32xf32>, vector<32x128xf32>, vector<8x128xf32> -> vector<8x128xf32>
    %c0_90 = arith.constant 0 : index
    %c0_91 = arith.constant 0 : index
    %91 = vector.load %arg9[%c0_90, %c0_91] : memref<8x1xf32, #tpu.memory_space<vmem>>, vector<8x1xf32>
    %92 = vector.broadcast %91 : vector<8x1xf32> to vector<8x128xf32>
    %93 = arith.addf %90, %92 : vector<8x128xf32>
    %c0_92 = arith.constant 0 : index
    %c0_93 = arith.constant 0 : index
    %c0_94 = arith.constant 0 : index
    %94 = vector.load %arg10[%c0_92, %c0_93, %c0_94] : memref<1x8x128xf32, #tpu.memory_space<vmem>>, vector<1x8x128xf32>
    %95 = vector.shape_cast %94 : vector<1x8x128xf32> to vector<8x128xf32>
    %96 = vector.shape_cast %93 : vector<8x128xf32> to vector<1x8x128xf32>
    tpu.vector_store %arg10[%c0_92, %c0_93, %c0_94], %96 {strides = array<i32>} : memref<1x8x128xf32, #tpu.memory_space<vmem>>, vector<1x8x128xf32>,
    return
  }
  func.func @transform_0(%arg0: i32) -> (i32, i32, i32) {
    %c0_i32 = arith.constant 0 : i32
    %c0_i32_0 = arith.constant 0 : i32
    %c0_i32_1 = arith.constant 0 : i32
    return %arg0, %c0_i32, %c0_i32_0 : i32, i32, i32
  }
  func.func @transform_1(%arg0: i32) -> (i32, i32, i32) {
    %c0_i32 = arith.constant 0 : i32
    %c0_i32_0 = arith.constant 0 : i32
    %c0_i32_1 = arith.constant 0 : i32
    %c0_i32_2 = arith.constant 0 : i32
    return %c0_i32, %c0_i32_0, %c0_i32_1 : i32, i32, i32
  }
  func.func @transform_2(%arg0: i32) -> (i32, i32) {
    %c0_i32 = arith.constant 0 : i32
    %c0_i32_0 = arith.constant 0 : i32
    %c0_i32_1 = arith.constant 0 : i32
    return %c0_i32, %c0_i32_0 : i32, i32
  }
  func.func @transform_3(%arg0: i32) -> (i32, i32) {
    %c0_i32 = arith.constant 0 : i32
    %c0_i32_0 = arith.constant 0 : i32
    %c0_i32_1 = arith.constant 0 : i32
    return %c0_i32, %c0_i32_0 : i32, i32
  }
  func.func @transform_4(%arg0: i32) -> (i32, i32) {
    %c0_i32 = arith.constant 0 : i32
    %c0_i32_0 = arith.constant 0 : i32
    %c0_i32_1 = arith.constant 0 : i32
    return %c0_i32, %c0_i32_0 : i32, i32
  }
  func.func @transform_5(%arg0: i32) -> (i32, i32) {
    %c0_i32 = arith.constant 0 : i32
    %c0_i32_0 = arith.constant 0 : i32
    %c0_i32_1 = arith.constant 0 : i32
    return %c0_i32, %c0_i32_0 : i32, i32
  }
  func.func @transform_6(%arg0: i32) -> (i32, i32) {
    %c0_i32 = arith.constant 0 : i32
    %c0_i32_0 = arith.constant 0 : i32
    %c0_i32_1 = arith.constant 0 : i32
    return %c0_i32, %c0_i32_0 : i32, i32
  }
  func.func @transform_7(%arg0: i32) -> (i32, i32) {
    %c0_i32 = arith.constant 0 : i32
    %c0_i32_0 = arith.constant 0 : i32
    %c0_i32_1 = arith.constant 0 : i32
    return %c0_i32, %c0_i32_0 : i32, i32
  }
  func.func @transform_8(%arg0: i32) -> (i32, i32) {
    %c0_i32 = arith.constant 0 : i32
    %c0_i32_0 = arith.constant 0 : i32
    %c0_i32_1 = arith.constant 0 : i32
    return %c0_i32, %c0_i32_0 : i32, i32
  }
  func.func @transform_9(%arg0: i32) -> (i32, i32, i32) {
    %c0_i32 = arith.constant 0 : i32
    %c0_i32_0 = arith.constant 0 : i32
    %c0_i32_1 = arith.constant 0 : i32
    return %arg0, %c0_i32, %c0_i32_0 : i32, i32, i32
  }
}

</mosaic_0001>

<llo_original>
// kernel: conv_qnet_forward.1
$region0: #{conv_qnet_forward.1}
  #allocation0 [shape = 'u32[]', space=smem, size = 0x4, offset = 0x4, fixed_abs, tag = 'smem constant byte address 0x4 - core index']
  #allocation1 [shape = 'u32[144,128]{1,0:T(1,128)}', space=vmem, size = 0x12000, scoped, tag = 'internal scratch']
  #allocation2 [shape = 'f32[8,8192]{1,0:T(8,128)}', space=vmem, size = 0x40000, scoped, tag = 'scratch operand']
  #allocation3 [shape = 'f32[8,6144]{1,0:T(8,128)}', space=vmem, size = 0x30000, scoped, tag = 'scratch operand']
  %s0 = inlined_call_operand.vmem [shape: f32[1,4,10240], index: 0, kind: input, shape index: {}]
  %s1 = inlined_call_operand.vmem [shape: f32[4,8,4], index: 1, kind: input, shape index: {}]
  %s2 = inlined_call_operand.vmem [shape: f32[8,32], index: 2, kind: input, shape index: {}]
  %s3 = inlined_call_operand.vmem [shape: f32[32,288], index: 3, kind: input, shape index: {}]
  %s4 = inlined_call_operand.vmem [shape: f32[8,32], index: 4, kind: input, shape index: {}]
  %s5 = inlined_call_operand.vmem [shape: f32[8,1], index: 5, kind: input, shape index: {}]
  %s6 = inlined_call_operand.vmem [shape: f32[8,1], index: 6, kind: input, shape index: {}]
  %s7 = inlined_call_operand.vmem [shape: f32[32,1], index: 7, kind: input, shape index: {}]
  %s8 = inlined_call_operand.vmem [shape: f32[8,1], index: 8, kind: input, shape index: {}]
  %s9 = inlined_call_operand.vmem [shape: f32[1,8,128], index: 9, kind: output, shape index: {}]
  %s10 = sld [smem:[#allocation0]]
  $region46: #{conv_qnet_forward.1} parent=0
    _
  %s12 = ssub.s32 1, %s10
  %s13 = scalar_select 0, %s12, %s10
  // Predicated region
  $region2: #{conv_qnet_forward.1} parent=0 // pred_check
    _
  $region3: #{conv_qnet_forward.1} parent=0 // pred_check_branch
    %15 = sbr.rel (0) target = $region5
  $region4: #{conv_qnet_forward.1} parent=0 // pred_region
    _
  $region5: #{conv_qnet_forward.1} parent=0 // pred_fallthru
    _
  // Predicated region
  $region6: #{conv_qnet_forward.1} parent=0 // pred_check
    _
  $region7: #{conv_qnet_forward.1} parent=0 // pred_check_branch
    %17 = sbr.rel (0) target = $region9
  $region8: #{conv_qnet_forward.1} parent=0 // pred_region
    _
  $region9: #{conv_qnet_forward.1} parent=0 // pred_fallthru
    _
  // Predicated region
  $region10: #{conv_qnet_forward.1} parent=0 // pred_check
    _
  $region11: #{conv_qnet_forward.1} parent=0 // pred_check_branch
    %19 = sbr.rel (0) target = $region13
  $region12: #{conv_qnet_forward.1} parent=0 // pred_region
    _
  $region13: #{conv_qnet_forward.1} parent=0 // pred_fallthru
    _
  // Predicated region
  $region14: #{conv_qnet_forward.1} parent=0 // pred_check
    _
  $region15: #{conv_qnet_forward.1} parent=0 // pred_check_branch
    %21 = sbr.rel (0) target = $region17
  $region16: #{conv_qnet_forward.1} parent=0 // pred_region
    _
  $region17: #{conv_qnet_forward.1} parent=0 // pred_fallthru
    _
  // Predicated region
  $region18: #{conv_qnet_forward.1} parent=0 // pred_check
    _
  $region19: #{conv_qnet_forward.1} parent=0 // pred_check_branch
    %23 = sbr.rel (0) target = $region21
  $region20: #{conv_qnet_forward.1} parent=0 // pred_region
    _
  $region21: #{conv_qnet_forward.1} parent=0 // pred_fallthru
    _
  // Predicated region
  $region22: #{conv_qnet_forward.1} parent=0 // pred_check
    _
  $region23: #{conv_qnet_forward.1} parent=0 // pred_check_branch
    %25 = sbr.rel (0) target = $region25
  $region24: #{conv_qnet_forward.1} parent=0 // pred_region
    _
  $region25: #{conv_qnet_forward.1} parent=0 // pred_fallthru
    _
  // Predicated region
  $region26: #{conv_qnet_forward.1} parent=0 // pred_check
    _
  $region27: #{conv_qnet_forward.1} parent=0 // pred_check_branch
    %27 = sbr.rel (0) target = $region29
  $region28: #{conv_qnet_forward.1} parent=0 // pred_region
    _
  $region29: #{conv_qnet_forward.1} parent=0 // pred_fallthru
    _
  // Predicated region
  $region30: #{conv_qnet_forward.1} parent=0 // pred_check
    _
  $region31: #{conv_qnet_forward.1} parent=0 // pred_check_branch
    %29 = sbr.rel (0) target = $region33
  $region32: #{conv_qnet_forward.1} parent=0 // pred_region
    _
  $region33: #{conv_qnet_forward.1} parent=0 // pred_fallthru
    _
  // Predicated region
  $region34: #{conv_qnet_forward.1} parent=0 // pred_check
    _
  $region35: #{conv_qnet_forward.1} parent=0 // pred_check_branch
    %31 = sbr.rel (0) target = $region37
  $region36: #{conv_qnet_forward.1} parent=0 // pred_region
    _
  $region37: #{conv_qnet_forward.1} parent=0 // pred_fallthru
    _
  %v32 = vld [vmem:[%s1] sm:$0xff]
  %v33 = vld [vmem:[%s0] sm:$0xff]
  %v34 = vld [vmem:[%s0 + $0x8] sm:$0xff]
  %v35 = vld [vmem:[%s0 + $0x10] sm:$0xff]
  %v36 = vld [vmem:[%s0 + $0x18] sm:$0xff]
  %v37 = vld [vmem:[%s0 + $0x20] sm:$0xff]
  %v38 = vld [vmem:[%s0 + $0x28] sm:$0xff]
  %v39 = vld [vmem:[%s0 + $0x30] sm:$0xff]
  %v40 = vld [vmem:[%s0 + $0x38] sm:$0xff]
  %v41 = vld [vmem:[%s0 + $0x40] sm:$0xff]
  %v42 = vld [vmem:[%s0 + $0x48] sm:$0xff]
  %v43 = vld [vmem:[%s0 + $0x50] sm:$0xff]
  %v44 = vld [vmem:[%s0 + $0x58] sm:$0xff]
  %v45 = vld [vmem:[%s0 + $0x60] sm:$0xff]
  %v46 = vld [vmem:[%s0 + $0x68] sm:$0xff]
  %v47 = vld [vmem:[%s0 + $0x70] sm:$0xff]
  %v48 = vld [vmem:[%s0 + $0x78] sm:$0xff]
  %v49 = vld [vmem:[%s0 + $0x80] sm:$0xff]
  %v50 = vld [vmem:[%s0 + $0x88] sm:$0xff]
  %v51 = vld [vmem:[%s0 + $0x90] sm:$0xff]
  %v52 = vld [vmem:[%s0 + $0x98] sm:$0xff]
  %v53 = vld [vmem:[%s0 + $0xa0] sm:$0xff]
  %v54 = vld [vmem:[%s0 + $0xa8] sm:$0xff]
  %v55 = vld [vmem:[%s0 + $0xb0] sm:$0xff]
  %v56 = vld [vmem:[%s0 + $0xb8] sm:$0xff]
  %v57 = vld [vmem:[%s0 + $0xc0] sm:$0xff]
  %v58 = vld [vmem:[%s0 + $0xc8] sm:$0xff]
  %v59 = vld [vmem:[%s0 + $0xd0] sm:$0xff]
  %v60 = vld [vmem:[%s0 + $0xd8] sm:$0xff]
  %v61 = vld [vmem:[%s0 + $0xe0] sm:$0xff]
  %v62 = vld [vmem:[%s0 + $0xe8] sm:$0xff]
  %v63 = vld [vmem:[%s0 + $0xf0] sm:$0xff]
  %v64 = vld [vmem:[%s0 + $0xf8] sm:$0xff]
  %s65 = scalar_lea.vmem %s1, 8
  %v66 = vld [vmem:[%s65] sm:$0xff]
  %v67 = vld [vmem:[%s0 + $0x4] sm:$0xff]
  %v68 = vld [vmem:[%s0 + $0xc] sm:$0xff]
  %v69 = vld [vmem:[%s0 + $0x14] sm:$0xff]
  %v70 = vld [vmem:[%s0 + $0x1c] sm:$0xff]
  %v71 = vld [vmem:[%s0 + $0x24] sm:$0xff]
  %v72 = vld [vmem:[%s0 + $0x2c] sm:$0xff]
  %v73 = vld [vmem:[%s0 + $0x34] sm:$0xff]
  %v74 = vld [vmem:[%s0 + $0x3c] sm:$0xff]
  %v75 = vld [vmem:[%s0 + $0x44] sm:$0xff]
  %v76 = vld [vmem:[%s0 + $0x4c] sm:$0xff]
  %v77 = vld [vmem:[%s0 + $0x54] sm:$0xff]
  %v78 = vld [vmem:[%s0 + $0x5c] sm:$0xff]
  %v79 = vld [vmem:[%s0 + $0x64] sm:$0xff]
  %v80 = vld [vmem:[%s0 + $0x6c] sm:$0xff]
  %v81 = vld [vmem:[%s0 + $0x74] sm:$0xff]
  %v82 = vld [vmem:[%s0 + $0x7c] sm:$0xff]
  %v83 = vld [vmem:[%s0 + $0x84] sm:$0xff]
  %v84 = vld [vmem:[%s0 + $0x8c] sm:$0xff]
  %v85 = vld [vmem:[%s0 + $0x94] sm:$0xff]
  %v86 = vld [vmem:[%s0 + $0x9c] sm:$0xff]
  %v87 = vld [vmem:[%s0 + $0xa4] sm:$0xff]
  %v88 = vld [vmem:[%s0 + $0xac] sm:$0xff]
  %v89 = vld [vmem:[%s0 + $0xb4] sm:$0xff]
  %v90 = vld [vmem:[%s0 + $0xbc] sm:$0xff]
  %v91 = vld [vmem:[%s0 + $0xc4] sm:$0xff]
  %v92 = vld [vmem:[%s0 + $0xcc] sm:$0xff]
  %v93 = vld [vmem:[%s0 + $0xd4] sm:$0xff]
  %v94 = vld [vmem:[%s0 + $0xdc] sm:$0xff]
  %v95 = vld [vmem:[%s0 + $0xe4] sm:$0xff]
  %v96 = vld [vmem:[%s0 + $0xec] sm:$0xff]
  %v97 = vld [vmem:[%s0 + $0xf4] sm:$0xff]
  %v98 = vld [vmem:[%s0 + $0xfc] sm:$0xff]
  %v131 = vcombine.high %v67, %v67
  %v132 = vcombine.high %v68, %v68
  %v133 = vcombine.high %v69, %v69
  %v134 = vcombine.high %v70, %v70
  %v135 = vcombine.high %v71, %v71
  %v136 = vcombine.high %v72, %v72
  %v137 = vcombine.high %v73, %v73
  %v138 = vcombine.high %v74, %v74
  %v139 = vcombine.high %v75, %v75
  %v140 = vcombine.high %v76, %v76
  %v141 = vcombine.high %v77, %v77
  %v142 = vcombine.high %v78, %v78
  %v143 = vcombine.high %v79, %v79
  %v144 = vcombine.high %v80, %v80
  %v145 = vcombine.high %v81, %v81
  %v146 = vcombine.high %v82, %v82
  %v147 = vcombine.high %v83, %v83
  %v148 = vcombine.high %v84, %v84
  %v149 = vcombine.high %v85, %v85
  %v150 = vcombine.high %v86, %v86
  %v151 = vcombine.high %v87, %v87
  %v152 = vcombine.high %v88, %v88
  %v153 = vcombine.high %v89, %v89
  %v154 = vcombine.high %v90, %v90
  %v155 = vcombine.high %v91, %v91
  %v156 = vcombine.high %v92, %v92
  %v157 = vcombine.high %v93, %v93
  %v158 = vcombine.high %v94, %v94
  %v159 = vcombine.high %v95, %v95
  %v160 = vcombine.high %v96, %v96
  %v161 = vcombine.high %v97, %v97
  %v162 = vcombine.high %v98, %v98
  %vm163 = vcmask 31744
  %v165 = vsel %vm163, %v66, 0
  %vm167 = vcmask 1043456
  %v168 = vsel %vm167, %v67, 0
  %v170 = vsel %vm167, %v131, 0
  %v172 = vsel %vm167, %v68, 0
  %v174 = vsel %vm167, %v132, 0
  %v176 = vsel %vm167, %v69, 0
  %v178 = vsel %vm167, %v133, 0
  %v180 = vsel %vm167, %v70, 0
  %v182 = vsel %vm167, %v134, 0
  %v184 = vsel %vm167, %v71, 0
  %v186 = vsel %vm167, %v135, 0
  %v188 = vsel %vm167, %v72, 0
  %v190 = vsel %vm167, %v136, 0
  %v192 = vsel %vm167, %v73, 0
  %v194 = vsel %vm167, %v137, 0
  %v196 = vsel %vm167, %v74, 0
  %v198 = vsel %vm167, %v138, 0
  %v200 = vsel %vm167, %v75, 0
  %v202 = vsel %vm167, %v139, 0
  %v204 = vsel %vm167, %v76, 0
  %v206 = vsel %vm167, %v140, 0
  %v208 = vsel %vm167, %v77, 0
  %v210 = vsel %vm167, %v141, 0
  %v212 = vsel %vm167, %v78, 0
  %v214 = vsel %vm167, %v142, 0
  %v216 = vsel %vm167, %v79, 0
  %v218 = vsel %vm167, %v143, 0
  %v220 = vsel %vm167, %v80, 0
  %v222 = vsel %vm167, %v144, 0
  %v224 = vsel %vm167, %v81, 0
  %v226 = vsel %vm167, %v145, 0
  %v228 = vsel %vm167, %v82, 0
  %v230 = vsel %vm167, %v146, 0
  %v232 = vsel %vm167, %v83, 0
  %v234 = vsel %vm167, %v147, 0
  %v236 = vsel %vm167, %v84, 0
  %v238 = vsel %vm167, %v148, 0
  %v240 = vsel %vm167, %v85, 0
  %v242 = vsel %vm167, %v149, 0
  %v244 = vsel %vm167, %v86, 0
  %v246 = vsel %vm167, %v150, 0
  %v248 = vsel %vm167, %v87, 0
  %v250 = vsel %vm167, %v151, 0
  %v252 = vsel %vm167, %v88, 0
  %v254 = vsel %vm167, %v152, 0
  %v256 = vsel %vm167, %v89, 0
  %v258 = vsel %vm167, %v153, 0
  %v260 = vsel %vm167, %v90, 0
  %v262 = vsel %vm167, %v154, 0
  %v264 = vsel %vm167, %v91, 0
  %v266 = vsel %vm167, %v155, 0
  %v268 = vsel %vm167, %v92, 0
  %v270 = vsel %vm167, %v156, 0
  %v272 = vsel %vm167, %v93, 0
  %v274 = vsel %vm167, %v157, 0
  %v276 = vsel %vm167, %v94, 0
  %v278 = vsel %vm167, %v158, 0
  %v280 = vsel %vm167, %v95, 0
  %v282 = vsel %vm167, %v159, 0
  %v284 = vsel %vm167, %v96, 0
  %v286 = vsel %vm167, %v160, 0
  %v288 = vsel %vm167, %v97, 0
  %v290 = vsel %vm167, %v161, 0
  %v292 = vsel %vm167, %v98, 0
  %v294 = vsel %vm167, %v162, 0
  %296 = vmatprep.subr.mxu0 %v170
  %297 = vmatpush1.msra.mxu0 %v168
  %298 = vmatprep.subr.mxu0 0.0
  %299 = vmatpush1.msra.mxu0 0.0
  %300 = vmatprep.subr.mxu0 0.0
  %301 = vmatpush1.msra.mxu0 0.0
  %302 = vmatprep.subr.mxu0 0.0
  %303 = vmatpush1.msra.mxu0 0.0
  %304 = vmatprep.subr.mxu0 0.0
  %305 = vmatpush1.msra.mxu0 0.0
  %306 = vmatprep.subr.mxu0 0.0
  %307 = vmatpush1.msra.mxu0 0.0
  %308 = vmatprep.subr.mxu0 0.0
  %309 = vmatpush1.msra.mxu0 0.0
  %310 = vmatprep.subr.mxu0 0.0
  %311 = vmatpush1.msra.mxu0 0.0
  %312 = vmatprep.subr.mxu0 0.0
  %313 = vmatpush1.msra.mxu0 0.0
  %314 = vmatprep.subr.mxu0 0.0
  %315 = vmatpush1.msra.mxu0 0.0
  %316 = vmatprep.subr.mxu0 0.0
  %317 = vmatpush1.msra.mxu0 0.0
  %318 = vmatprep.subr.mxu0 0.0
  %319 = vmatpush1.msra.mxu0 0.0
  %320 = vmatprep.subr.mxu0 0.0
  %321 = vmatpush1.msra.mxu0 0.0
  %322 = vmatprep.subr.mxu0 0.0
  %323 = vmatpush1.msra.mxu0 0.0
  %324 = vmatprep.subr.mxu0 0.0
  %325 = vmatpush1.msra.mxu0 0.0
  %326 = vmatprep.subr.mxu0 0.0
  %327 = vmatpush1.msra.mxu0 0.0
  %328 = vmatprep.subr.mxu0 0.0
  %329 = vmatpush1.msra.mxu0 0.0
  %330 = vmatprep.subr.mxu0 0.0
  %331 = vmatpush1.msra.mxu0 0.0
  %332 = vmatprep.subr.mxu0 0.0
  %333 = vmatpush1.msra.mxu0 0.0
  %334 = vmatprep.subr.mxu0 0.0
  %335 = vmatpush1.msra.mxu0 0.0
  %336 = vmatprep.subr.mxu0 0.0
  %337 = vmatpush1.msra.mxu0 0.0
  %338 = vmatprep.subr.mxu0 0.0
  %339 = vmatpush1.msra.mxu0 0.0
  %340 = vmatprep.subr.mxu0 0.0
  %341 = vmatpush1.msra.mxu0 0.0
  %342 = vmatprep.subr.mxu0 0.0
  %343 = vmatpush1.msra.mxu0 0.0
  %344 = vmatprep.subr.mxu0 0.0
  %345 = vmatpush1.msra.mxu0 0.0
  %346 = vmatprep.subr.mxu0 0.0
  %347 = vmatpush1.msra.mxu0 0.0
  %348 = vmatprep.subr.mxu0 0.0
  %349 = vmatpush1.msra.mxu0 0.0
  %350 = vmatprep.subr.mxu0 0.0
  %351 = vmatpush1.msra.mxu0 0.0
  %352 = vmatprep.subr.mxu0 0.0
  %353 = vmatpush1.msra.mxu0 0.0
  %354 = vmatprep.subr.mxu0 0.0
  %355 = vmatpush1.msra.mxu0 0.0
  %356 = vmatprep.subr.mxu0 0.0
  %357 = vmatpush1.msra.mxu0 0.0
  %358 = vmatprep.subr.mxu0 0.0
  %359 = vmatpush1.msra.mxu0 0.0
  %360 = vmatprep.mubr.f32.mxu0 0.0
  %361 = vmatmul.mubr.f32.gmra.mrb[0].mxu0 %v165
  %v362 = vpop.f32.mrb[0].mxu0
  %v363 = vadd.f32 0.0, %v362
  %v364 = vpop.f32.mrb[0].mxu0
  %v365 = vadd.f32 0.0, %v364
  %366 = vdwg.mxu0
  %367 = vmatprep.subr.mxu0 %v174
  %368 = vmatpush1.msra.mxu0 %v172
  %369 = vmatprep.subr.mxu0 0.0
  %370 = vmatpush1.msra.mxu0 0.0
  %371 = vmatprep.subr.mxu0 0.0
  %372 = vmatpush1.msra.mxu0 0.0
  %373 = vmatprep.subr.mxu0 0.0
  %374 = vmatpush1.msra.mxu0 0.0
  %375 = vmatprep.subr.mxu0 0.0
  %376 = vmatpush1.msra.mxu0 0.0
  %377 = vmatprep.subr.mxu0 0.0
  %378 = vmatpush1.msra.mxu0 0.0
  %379 = vmatprep.subr.mxu0 0.0
  %380 = vmatpush1.msra.mxu0 0.0
  %381 = vmatprep.subr.mxu0 0.0
  %382 = vmatpush1.msra.mxu0 0.0
  %383 = vmatprep.subr.mxu0 0.0
  %384 = vmatpush1.msra.mxu0 0.0
  %385 = vmatprep.subr.mxu0 0.0
  %386 = vmatpush1.msra.mxu0 0.0
  %387 = vmatprep.subr.mxu0 0.0
  %388 = vmatpush1.msra.mxu0 0.0
  %389 = vmatprep.subr.mxu0 0.0
  %390 = vmatpush1.msra.mxu0 0.0
  %391 = vmatprep.subr.mxu0 0.0
  %392 = vmatpush1.msra.mxu0 0.0
  %393 = vmatprep.subr.mxu0 0.0
  %394 = vmatpush1.msra.mxu0 0.0
  %395 = vmatprep.subr.mxu0 0.0
  %396 = vmatpush1.msra.mxu0 0.0
  %397 = vmatprep.subr.mxu0 0.0
  %398 = vmatpush1.msra.mxu0 0.0
  %399 = vmatprep.subr.mxu0 0.0
  %400 = vmatpush1.msra.mxu0 0.0
  %401 = vmatprep.subr.mxu0 0.0
  %402 = vmatpush1.msra.mxu0 0.0
  %403 = vmatprep.subr.mxu0 0.0
  %404 = vmatpush1.msra.mxu0 0.0
  %405 = vmatprep.subr.mxu0 0.0
  %406 = vmatpush1.msra.mxu0 0.0
  %407 = vmatprep.subr.mxu0 0.0
  %408 = vmatpush1.msra.mxu0 0.0
  %409 = vmatprep.subr.mxu0 0.0
  %410 = vmatpush1.msra.mxu0 0.0
  %411 = vmatprep.subr.mxu0 0.0
  %412 = vmatpush1.msra.mxu0 0.0
  %413 = vmatprep.subr.mxu0 0.0
  %414 = vmatpush1.msra.mxu0 0.0
  %415 = vmatprep.subr.mxu0 0.0
  %416 = vmatpush1.msra.mxu0 0.0
  %417 = vmatprep.subr.mxu0 0.0
  %418 = vmatpush1.msra.mxu0 0.0
  %419 = vmatprep.subr.mxu0 0.0
  %420 = vmatpush1.msra.mxu0 0.0
  %421 = vmatprep.subr.mxu0 0.0
  %422 = vmatpush1.msra.mxu0 0.0
  %423 = vmatprep.subr.mxu0 0.0
  %424 = vmatpush1.msra.mxu0 0.0
  %425 = vmatprep.subr.mxu0 0.0
  %426 = vmatpush1.msra.mxu0 0.0
  %427 = vmatprep.subr.mxu0 0.0
  %428 = vmatpush1.msra.mxu0 0.0
  %429 = vmatprep.subr.mxu0 0.0
  %430 = vmatpush1.msra.mxu0 0.0
  %431 = vmatprep.mubr.f32.mxu0 0.0
  %432 = vmatmul.mubr.f32.gmra.mrb[0].mxu0 %v165
  %v433 = vpop.f32.mrb[0].mxu0
  %v434 = vadd.f32 0.0, %v433
  %v435 = vpop.f32.mrb[0].mxu0
  %v436 = vadd.f32 0.0, %v435
  %437 = vdwg.mxu0
  %438 = vmatprep.subr.mxu0 %v178
  %439 = vmatpush1.msra.mxu0 %v176
  %440 = vmatprep.subr.mxu0 0.0
  %441 = vmatpush1.msra.mxu0 0.0
  %442 = vmatprep.subr.mxu0 0.0
  %443 = vmatpush1.msra.mxu0 0.0
  %444 = vmatprep.subr.mxu0 0.0
  %445 = vmatpush1.msra.mxu0 0.0
  %446 = vmatprep.subr.mxu0 0.0
  %447 = vmatpush1.msra.mxu0 0.0
  %448 = vmatprep.subr.mxu0 0.0
  %449 = vmatpush1.msra.mxu0 0.0
  %450 = vmatprep.subr.mxu0 0.0
  %451 = vmatpush1.msra.mxu0 0.0
  %452 = vmatprep.subr.mxu0 0.0
  %453 = vmatpush1.msra.mxu0 0.0
  %454 = vmatprep.subr.mxu0 0.0
  %455 = vmatpush1.msra.mxu0 0.0
  %456 = vmatprep.subr.mxu0 0.0
  %457 = vmatpush1.msra.mxu0 0.0
  %458 = vmatprep.subr.mxu0 0.0
  %459 = vmatpush1.msra.mxu0 0.0
  %460 = vmatprep.subr.mxu0 0.0
  %461 = vmatpush1.msra.mxu0 0.0
  %462 = vmatprep.subr.mxu0 0.0
  %463 = vmatpush1.msra.mxu0 0.0
  %464 = vmatprep.subr.mxu0 0.0
  %465 = vmatpush1.msra.mxu0 0.0
  %466 = vmatprep.subr.mxu0 0.0
  %467 = vmatpush1.msra.mxu0 0.0
  %468 = vmatprep.subr.mxu0 0.0
  %469 = vmatpush1.msra.mxu0 0.0
  %470 = vmatprep.subr.mxu0 0.0
  %471 = vmatpush1.msra.mxu0 0.0
  %472 = vmatprep.subr.mxu0 0.0
  %473 = vmatpush1.msra.mxu0 0.0
  %474 = vmatprep.subr.mxu0 0.0
  %475 = vmatpush1.msra.mxu0 0.0
  %476 = vmatprep.subr.mxu0 0.0
  %477 = vmatpush1.msra.mxu0 0.0
  %478 = vmatprep.subr.mxu0 0.0
  %479 = vmatpush1.msra.mxu0 0.0
  %480 = vmatprep.subr.mxu0 0.0
  %481 = vmatpush1.msra.mxu0 0.0
  %482 = vmatprep.subr.mxu0 0.0
  %483 = vmatpush1.msra.mxu0 0.0
  %484 = vmatprep.subr.mxu0 0.0
  %485 = vmatpush1.msra.mxu0 0.0
  %486 = vmatprep.subr.mxu0 0.0
  %487 = vmatpush1.msra.mxu0 0.0
  %488 = vmatprep.subr.mxu0 0.0
  %489 = vmatpush1.msra.mxu0 0.0
  %490 = vmatprep.subr.mxu0 0.0
  %491 = vmatpush1.msra.mxu0 0.0
  %492 = vmatprep.subr.mxu0 0.0
  %493 = vmatpush1.msra.mxu0 0.0
  %494 = vmatprep.subr.mxu0 0.0
  %495 = vmatpush1.msra.mxu0 0.0
  %496 = vmatprep.subr.mxu0 0.0
  %497 = vmatpush1.msra.mxu0 0.0
  %498 = vmatprep.subr.mxu0 0.0
  %499 = vmatpush1.msra.mxu0 0.0
  %500 = vmatprep.subr.mxu0 0.0
  %501 = vmatpush1.msra.mxu0 0.0
  %502 = vmatprep.mubr.f32.mxu0 0.0
  %503 = vmatmul.mubr.f32.gmra.mrb[0].mxu0 %v165
  %v504 = vpop.f32.mrb[0].mxu0
  %v505 = vadd.f32 0.0, %v504
  %v506 = vpop.f32.mrb[0].mxu0
  %v507 = vadd.f32 0.0, %v506
  %508 = vdwg.mxu0
  %509 = vmatprep.subr.mxu0 %v182
  %510 = vmatpush1.msra.mxu0 %v180
  %511 = vmatprep.subr.mxu0 0.0
  %512 = vmatpush1.msra.mxu0 0.0
  %513 = vmatprep.subr.mxu0 0.0
  %514 = vmatpush1.msra.mxu0 0.0
  %515 = vmatprep.subr.mxu0 0.0
  %516 = vmatpush1.msra.mxu0 0.0
  %517 = vmatprep.subr.mxu0 0.0
  %518 = vmatpush1.msra.mxu0 0.0
  %519 = vmatprep.subr.mxu0 0.0
  %520 = vmatpush1.msra.mxu0 0.0
  %521 = vmatprep.subr.mxu0 0.0
  %522 = vmatpush1.msra.mxu0 0.0
  %523 = vmatprep.subr.mxu0 0.0
  %524 = vmatpush1.msra.mxu0 0.0
  %525 = vmatprep.subr.mxu0 0.0
  %526 = vmatpush1.msra.mxu0 0.0
  %527 = vmatprep.subr.mxu0 0.0
  %528 = vmatpush1.msra.mxu0 0.0
  %529 = vmatprep.subr.mxu0 0.0
  %530 = vmatpush1.msra.mxu0 0.0
  %531 = vmatprep.subr.mxu0 0.0
  %532 = vmatpush1.msra.mxu0 0.0
  %533 = vmatprep.subr.mxu0 0.0
  %534 = vmatpush1.msra.mxu0 0.0
  %535 = vmatprep.subr.mxu0 0.0
  %536 = vmatpush1.msra.mxu0 0.0
  %537 = vmatprep.subr.mxu0 0.0
  %538 = vmatpush1.msra.mxu0 0.0
  %539 = vmatprep.subr.mxu0 0.0
  %540 = vmatpush1.msra.mxu0 0.0
  %541 = vmatprep.subr.mxu0 0.0
  %542 = vmatpush1.msra.mxu0 0.0
  %543 = vmatprep.subr.mxu0 0.0
  %544 = vmatpush1.msra.mxu0 0.0
  %545 = vmatprep.subr.mxu0 0.0
  %546 = vmatpush1.msra.mxu0 0.0
  %547 = vmatprep.subr.mxu0 0.0
  %548 = vmatpush1.msra.mxu0 0.0
  %549 = vmatprep.subr.mxu0 0.0
  %550 = vmatpush1.msra.mxu0 0.0
  %551 = vmatprep.subr.mxu0 0.0
  %552 = vmatpush1.msra.mxu0 0.0
  %553 = vmatprep.subr.mxu0 0.0
  %554 = vmatpush1.msra.mxu0 0.0
  %555 = vmatprep.subr.mxu0 0.0
  %556 = vmatpush1.msra.mxu0 0.0
  %557 = vmatprep.subr.mxu0 0.0
  %558 = vmatpush1.msra.mxu0 0.0
  %559 = vmatprep.subr.mxu0 0.0
  %560 = vmatpush1.msra.mxu0 0.0
  %561 = vmatprep.subr.mxu0 0.0
  %562 = vmatpush1.msra.mxu0 0.0
  %563 = vmatprep.subr.mxu0 0.0
  %564 = vmatpush1.msra.mxu0 0.0
  %565 = vmatprep.subr.mxu0 0.0
  %566 = vmatpush1.msra.mxu0 0.0
  %567 = vmatprep.subr.mxu0 0.0
  %568 = vmatpush1.msra.mxu0 0.0
  %569 = vmatprep.subr.mxu0 0.0
  %570 = vmatpush1.msra.mxu0 0.0
  %571 = vmatprep.subr.mxu0 0.0
  %572 = vmatpush1.msra.mxu0 0.0
  %573 = vmatprep.mubr.f32.mxu0 0.0
  %574 = vmatmul.mubr.f32.gmra.mrb[0].mxu0 %v165
  %v575 = vpop.f32.mrb[0].mxu0
  %v576 = vadd.f32 0.0, %v575
  %v577 = vpop.f32.mrb[0].mxu0
  %v578 = vadd.f32 0.0, %v577
  %579 = vdwg.mxu0
  %580 = vmatprep.subr.mxu0 %v186
  %581 = vmatpush1.msra.mxu0 %v184
  %582 = vmatprep.subr.mxu0 0.0
  %583 = vmatpush1.msra.mxu0 0.0
  %584 = vmatprep.subr.mxu0 0.0
  %585 = vmatpush1.msra.mxu0 0.0
  %586 = vmatprep.subr.mxu0 0.0
  %587 = vmatpush1.msra.mxu0 0.0
  %588 = vmatprep.subr.mxu0 0.0
  %589 = vmatpush1.msra.mxu0 0.0
  %590 = vmatprep.subr.mxu0 0.0
  %591 = vmatpush1.msra.mxu0 0.0
  %592 = vmatprep.subr.mxu0 0.0
  %593 = vmatpush1.msra.mxu0 0.0
  %594 = vmatprep.subr.mxu0 0.0
  %595 = vmatpush1.msra.mxu0 0.0
  %596 = vmatprep.subr.mxu0 0.0
  %597 = vmatpush1.msra.mxu0 0.0
  %598 = vmatprep.subr.mxu0 0.0
  %599 = vmatpush1.msra.mxu0 0.0
  %600 = vmatprep.subr.mxu0 0.0
  %601 = vmatpush1.msra.mxu0 0.0
  %602 = vmatprep.subr.mxu0 0.0
  %603 = vmatpush1.msra.mxu0 0.0
  %604 = vmatprep.subr.mxu0 0.0
  %605 = vmatpush1.msra.mxu0 0.0
  %606 = vmatprep.subr.mxu0 0.0
  %607 = vmatpush1.msra.mxu0 0.0
  %608 = vmatprep.subr.mxu0 0.0
  %609 = vmatpush1.msra.mxu0 0.0
  %610 = vmatprep.subr.mxu0 0.0
  %611 = vmatpush1.msra.mxu0 0.0
  %612 = vmatprep.subr.mxu0 0.0
  %613 = vmatpush1.msra.mxu0 0.0
  %614 = vmatprep.subr.mxu0 0.0
  %615 = vmatpush1.msra.mxu0 0.0
  %616 = vmatprep.subr.mxu0 0.0
  %617 = vmatpush1.msra.mxu0 0.0
  %618 = vmatprep.subr.mxu0 0.0
  %619 = vmatpush1.msra.mxu0 0.0
  %620 = vmatprep.subr.mxu0 0.0
  %621 = vmatpush1.msra.mxu0 0.0
  %622 = vmatprep.subr.mxu0 0.0
  %623 = vmatpush1.msra.mxu0 0.0
  %624 = vmatprep.subr.mxu0 0.0
  %625 = vmatpush1.msra.mxu0 0.0
  %626 = vmatprep.subr.mxu0 0.0
  %627 = vmatpush1.msra.mxu0 0.0
  %628 = vmatprep.subr.mxu0 0.0
  %629 = vmatpush1.msra.mxu0 0.0
  %630 = vmatprep.subr.mxu0 0.0
  %631 = vmatpush1.msra.mxu0 0.0
  %632 = vmatprep.subr.mxu0 0.0
  %633 = vmatpush1.msra.mxu0 0.0
  %634 = vmatprep.subr.mxu0 0.0
  %635 = vmatpush1.msra.mxu0 0.0
  %636 = vmatprep.subr.mxu0 0.0
  %637 = vmatpush1.msra.mxu0 0.0
  %638 = vmatprep.subr.mxu0 0.0
  %639 = vmatpush1.msra.mxu0 0.0
  %640 = vmatprep.subr.mxu0 0.0
  %641 = vmatpush1.msra.mxu0 0.0
  %642 = vmatprep.subr.mxu0 0.0
  %643 = vmatpush1.msra.mxu0 0.0
  %644 = vmatprep.mubr.f32.mxu0 0.0
  %645 = vmatmul.mubr.f32.gmra.mrb[0].mxu0 %v165
  %v646 = vpop.f32.mrb[0].mxu0
  %v647 = vadd.f32 0.0, %v646
  %v648 = vpop.f32.mrb[0].mxu0
  %v649 = vadd.f32 0.0, %v648
  %650 = vdwg.mxu0
  %651 = vmatprep.subr.mxu0 %v190
  %652 = vmatpush1.msra.mxu0 %v188
  %653 = vmatprep.subr.mxu0 0.0
  %654 = vmatpush1.msra.mxu0 0.0
  %655 = vmatprep.subr.mxu0 0.0
  %656 = vmatpush1.msra.mxu0 0.0
  %657 = vmatprep.subr.mxu0 0.0
  %658 = vmatpush1.msra.mxu0 0.0
  %659 = vmatprep.subr.mxu0 0.0
  %660 = vmatpush1.msra.mxu0 0.0
  %661 = vmatprep.subr.mxu0 0.0
  %662 = vmatpush1.msra.mxu0 0.0
  %663 = vmatprep.subr.mxu0 0.0
  %664 = vmatpush1.msra.mxu0 0.0
  %665 = vmatprep.subr.mxu0 0.0
  %666 = vmatpush1.msra.mxu0 0.0
  %667 = vmatprep.subr.mxu0 0.0
  %668 = vmatpush1.msra.mxu0 0.0
  %669 = vmatprep.subr.mxu0 0.0
  %670 = vmatpush1.msra.mxu0 0.0
  %671 = vmatprep.subr.mxu0 0.0
  %672 = vmatpush1.msra.mxu0 0.0
  %673 = vmatprep.subr.mxu0 0.0
  %674 = vmatpush1.msra.mxu0 0.0
  %675 = vmatprep.subr.mxu0 0.0
  %676 = vmatpush1.msra.mxu0 0.0
  %677 = vmatprep.subr.mxu0 0.0
  %678 = vmatpush1.msra.mxu0 0.0
  %679 = vmatprep.subr.mxu0 0.0
  %680 = vmatpush1.msra.mxu0 0.0
  %681 = vmatprep.subr.mxu0 0.0
  %682 = vmatpush1.msra.mxu0 0.0
  %683 = vmatprep.subr.mxu0 0.0
  %684 = vmatpush1.msra.mxu0 0.0
  %685 = vmatprep.subr.mxu0 0.0
  %686 = vmatpush1.msra.mxu0 0.0
  %687 = vmatprep.subr.mxu0 0.0
  %688 = vmatpush1.msra.mxu0 0.0
  %689 = vmatprep.subr.mxu0 0.0
  %690 = vmatpush1.msra.mxu0 0.0
  %691 = vmatprep.subr.mxu0 0.0
  %692 = vmatpush1.msra.mxu0 0.0
  %693 = vmatprep.subr.mxu0 0.0
  %694 = vmatpush1.msra.mxu0 0.0
  %695 = vmatprep.subr.mxu0 0.0
  %696 = vmatpush1.msra.mxu0 0.0
  %697 = vmatprep.subr.mxu0 0.0
  %698 = vmatpush1.msra.mxu0 0.0
  %699 = vmatprep.subr.mxu0 0.0
  %700 = vmatpush1.msra.mxu0 0.0
  %701 = vmatprep.subr.mxu0 0.0
  %702 = vmatpush1.msra.mxu0 0.0
  %703 = vmatprep.subr.mxu0 0.0
  %704 = vmatpush1.msra.mxu0 0.0
  %705 = vmatprep.subr.mxu0 0.0
  %706 = vmatpush1.msra.mxu0 0.0
  %707 = vmatprep.subr.mxu0 0.0
  %708 = vmatpush1.msra.mxu0 0.0
  %709 = vmatprep.subr.mxu0 0.0
  %710 = vmatpush1.msra.mxu0 0.0
  %711 = vmatprep.subr.mxu0 0.0
  %712 = vmatpush1.msra.mxu0 0.0
  %713 = vmatprep.subr.mxu0 0.0
  %714 = vmatpush1.msra.mxu0 0.0
  %715 = vmatprep.mubr.f32.mxu0 0.0
  %716 = vmatmul.mubr.f32.gmra.mrb[0].mxu0 %v165
  %v717 = vpop.f32.mrb[0].mxu0
  %v718 = vadd.f32 0.0, %v717
  %v719 = vpop.f32.mrb[0].mxu0
  %v720 = vadd.f32 0.0, %v719
  %721 = vdwg.mxu0
  %722 = vmatprep.subr.mxu0 %v194
  %723 = vmatpush1.msra.mxu0 %v192
  %724 = vmatprep.subr.mxu0 0.0
  %725 = vmatpush1.msra.mxu0 0.0
  %726 = vmatprep.subr.mxu0 0.0
  %727 = vmatpush1.msra.mxu0 0.0
  %728 = vmatprep.subr.mxu0 0.0
  %729 = vmatpush1.msra.mxu0 0.0
  %730 = vmatprep.subr.mxu0 0.0
  %731 = vmatpush1.msra.mxu0 0.0
  %732 = vmatprep.subr.mxu0 0.0
  %733 = vmatpush1.msra.mxu0 0.0
  %734 = vmatprep.subr.mxu0 0.0
  %735 = vmatpush1.msra.mxu0 0.0
  %736 = vmatprep.subr.mxu0 0.0
  %737 = vmatpush1.msra.mxu0 0.0
  %738 = vmatprep.subr.mxu0 0.0
  %739 = vmatpush1.msra.mxu0 0.0
  %740 = vmatprep.subr.mxu0 0.0
  %741 = vmatpush1.msra.mxu0 0.0
  %742 = vmatprep.subr.mxu0 0.0
  %743 = vmatpush1.msra.mxu0 0.0
  %744 = vmatprep.subr.mxu0 0.0
  %745 = vmatpush1.msra.mxu0 0.0
  %746 = vmatprep.subr.mxu0 0.0
  %747 = vmatpush1.msra.mxu0 0.0
  %748 = vmatprep.subr.mxu0 0.0
  %749 = vmatpush1.msra.mxu0 0.0
  %750 = vmatprep.subr.mxu0 0.0
  %751 = vmatpush1.msra.mxu0 0.0
  %752 = vmatprep.subr.mxu0 0.0
  %753 = vmatpush1.msra.mxu0 0.0
  %754 = vmatprep.subr.mxu0 0.0
  %755 = vmatpush1.msra.mxu0 0.0
  %756 = vmatprep.subr.mxu0 0.0
  %757 = vmatpush1.msra.mxu0 0.0
  %758 = vmatprep.subr.mxu0 0.0
  %759 = vmatpush1.msra.mxu0 0.0
  %760 = vmatprep.subr.mxu0 0.0
  %761 = vmatpush1.msra.mxu0 0.0
  %762 = vmatprep.subr.mxu0 0.0
  %763 = vmatpush1.msra.mxu0 0.0
  %764 = vmatprep.subr.mxu0 0.0
  %765 = vmatpush1.msra.mxu0 0.0
  %766 = vmatprep.subr.mxu0 0.0
  %767 = vmatpush1.msra.mxu0 0.0
  %768 = vmatprep.subr.mxu0 0.0
  %769 = vmatpush1.msra.mxu0 0.0
  %770 = vmatprep.subr.mxu0 0.0
  %771 = vmatpush1.msra.mxu0 0.0
  %772 = vmatprep.subr.mxu0 0.0
  %773 = vmatpush1.msra.mxu0 0.0
  %774 = vmatprep.subr.mxu0 0.0
  %775 = vmatpush1.msra.mxu0 0.0
  %776 = vmatprep.subr.mxu0 0.0
  %777 = vmatpush1.msra.mxu0 0.0
  %778 = vmatprep.subr.mxu0 0.0
  %779 = vmatpush1.msra.mxu0 0.0
  %780 = vmatprep.subr.mxu0 0.0
  %781 = vmatpush1.msra.mxu0 0.0
  %782 = vmatprep.subr.mxu0 0.0
  %783 = vmatpush1.msra.mxu0 0.0
  %784 = vmatprep.subr.mxu0 0.0
  %785 = vmatpush1.msra.mxu0 0.0
  %786 = vmatprep.mubr.f32.mxu0 0.0
  %787 = vmatmul.mubr.f32.gmra.mrb[0].mxu0 %v165
  %v788 = vpop.f32.mrb[0].mxu0
  %v789 = vadd.f32 0.0, %v788
  %v790 = vpop.f32.mrb[0].mxu0
  %v791 = vadd.f32 0.0, %v790
  %792 = vdwg.mxu0
  %793 = vmatprep.subr.mxu0 %v198
  %794 = vmatpush1.msra.mxu0 %v196
  %795 = vmatprep.subr.mxu0 0.0
  %796 = vmatpush1.msra.mxu0 0.0
  %797 = vmatprep.subr.mxu0 0.0
  %798 = vmatpush1.msra.mxu0 0.0
  %799 = vmatprep.subr.mxu0 0.0
  %800 = vmatpush1.msra.mxu0 0.0
  %801 = vmatprep.subr.mxu0 0.0
  %802 = vmatpush1.msra.mxu0 0.0
  %803 = vmatprep.subr.mxu0 0.0
  %804 = vmatpush1.msra.mxu0 0.0
  %805 = vmatprep.subr.mxu0 0.0
  %806 = vmatpush1.msra.mxu0 0.0
  %807 = vmatprep.subr.mxu0 0.0
  %808 = vmatpush1.msra.mxu0 0.0
  %809 = vmatprep.subr.mxu0 0.0
  %810 = vmatpush1.msra.mxu0 0.0
  %811 = vmatprep.subr.mxu0 0.0
  %812 = vmatpush1.msra.mxu0 0.0
  %813 = vmatprep.subr.mxu0 0.0
  %814 = vmatpush1.msra.mxu0 0.0
  %815 = vmatprep.subr.mxu0 0.0
  %816 = vmatpush1.msra.mxu0 0.0
  %817 = vmatprep.subr.mxu0 0.0
  %818 = vmatpush1.msra.mxu0 0.0
  %819 = vmatprep.subr.mxu0 0.0
  %820 = vmatpush1.msra.mxu0 0.0
  %821 = vmatprep.subr.mxu0 0.0
  %822 = vmatpush1.msra.mxu0 0.0
  %823 = vmatprep.subr.mxu0 0.0
  %824 = vmatpush1.msra.mxu0 0.0
  %825 = vmatprep.subr.mxu0 0.0
  %826 = vmatpush1.msra.mxu0 0.0
  %827 = vmatprep.subr.mxu0 0.0
  %828 = vmatpush1.msra.mxu0 0.0
  %829 = vmatprep.subr.mxu0 0.0
  %830 = vmatpush1.msra.mxu0 0.0
  %831 = vmatprep.subr.mxu0 0.0
  %832 = vmatpush1.msra.mxu0 0.0
  %833 = vmatprep.subr.mxu0 0.0
  %834 = vmatpush1.msra.mxu0 0.0
  %835 = vmatprep.subr.mxu0 0.0
  %836 = vmatpush1.msra.mxu0 0.0
  %837 = vmatprep.subr.mxu0 0.0
  %838 = vmatpush1.msra.mxu0 0.0
  %839 = vmatprep.subr.mxu0 0.0
  %840 = vmatpush1.msra.mxu0 0.0
  %841 = vmatprep.subr.mxu0 0.0
  %842 = vmatpush1.msra.mxu0 0.0
  %843 = vmatprep.subr.mxu0 0.0
  %844 = vmatpush1.msra.mxu0 0.0
  %845 = vmatprep.subr.mxu0 0.0
  %846 = vmatpush1.msra.mxu0 0.0
  %847 = vmatprep.subr.mxu0 0.0
  %848 = vmatpush1.msra.mxu0 0.0
  %849 = vmatprep.subr.mxu0 0.0
  %850 = vmatpush1.msra.mxu0 0.0
  %851 = vmatprep.subr.mxu0 0.0
  %852 = vmatpush1.msra.mxu0 0.0
  %853 = vmatprep.subr.mxu0 0.0
  %854 = vmatpush1.msra.mxu0 0.0
  %855 = vmatprep.subr.mxu0 0.0
  %856 = vmatpush1.msra.mxu0 0.0
  %857 = vmatprep.mubr.f32.mxu0 0.0
  %858 = vmatmul.mubr.f32.gmra.mrb[0].mxu0 %v165
  %v859 = vpop.f32.mrb[0].mxu0
  %v860 = vadd.f32 0.0, %v859
  %v861 = vpop.f32.mrb[0].mxu0
  %v862 = vadd.f32 0.0, %v861
  %863 = vdwg.mxu0
  %864 = vmatprep.subr.mxu0 %v202
  %865 = vmatpush1.msra.mxu0 %v200
  %866 = vmatprep.subr.mxu0 0.0
  %867 = vmatpush1.msra.mxu0 0.0
  %868 = vmatprep.subr.mxu0 0.0
  %869 = vmatpush1.msra.mxu0 0.0
  %870 = vmatprep.subr.mxu0 0.0
  %871 = vmatpush1.msra.mxu0 0.0
  %872 = vmatprep.subr.mxu0 0.0
  %873 = vmatpush1.msra.mxu0 0.0
  %874 = vmatprep.subr.mxu0 0.0
  %875 = vmatpush1.msra.mxu0 0.0
  %876 = vmatprep.subr.mxu0 0.0
  %877 = vmatpush1.msra.mxu0 0.0
  %878 = vmatprep.subr.mxu0 0.0
  %879 = vmatpush1.msra.mxu0 0.0
  %880 = vmatprep.subr.mxu0 0.0
  %881 = vmatpush1.msra.mxu0 0.0
  %882 = vmatprep.subr.mxu0 0.0
  %883 = vmatpush1.msra.mxu0 0.0
  %884 = vmatprep.subr.mxu0 0.0
  %885 = vmatpush1.msra.mxu0 0.0
  %886 = vmatprep.subr.mxu0 0.0
  %887 = vmatpush1.msra.mxu0 0.0
  %888 = vmatprep.subr.mxu0 0.0
  %889 = vmatpush1.msra.mxu0 0.0
  %890 = vmatprep.subr.mxu0 0.0
  %891 = vmatpush1.msra.mxu0 0.0
  %892 = vmatprep.subr.mxu0 0.0
  %893 = vmatpush1.msra.mxu0 0.0
  %894 = vmatprep.subr.mxu0 0.0
  %895 = vmatpush1.msra.mxu0 0.0
  %896 = vmatprep.subr.mxu0 0.0
  %897 = vmatpush1.msra.mxu0 0.0
  %898 = vmatprep.subr.mxu0 0.0
  %899 = vmatpush1.msra.mxu0 0.0
  %900 = vmatprep.subr.mxu0 0.0
  %901 = vmatpush1.msra.mxu0 0.0
  %902 = vmatprep.subr.mxu0 0.0
  %903 = vmatpush1.msra.mxu0 0.0
  %904 = vmatprep.subr.mxu0 0.0
  %905 = vmatpush1.msra.mxu0 0.0
  %906 = vmatprep.subr.mxu0 0.0
  %907 = vmatpush1.msra.mxu0 0.0
  %908 = vmatprep.subr.mxu0 0.0
  %909 = vmatpush1.msra.mxu0 0.0
  %910 = vmatprep.subr.mxu0 0.0
  %911 = vmatpush1.msra.mxu0 0.0
  %912 = vmatprep.subr.mxu0 0.0
  %913 = vmatpush1.msra.mxu0 0.0
  %914 = vmatprep.subr.mxu0 0.0
  %915 = vmatpush1.msra.mxu0 0.0
  %916 = vmatprep.subr.mxu0 0.0
  %917 = vmatpush1.msra.mxu0 0.0
  %918 = vmatprep.subr.mxu0 0.0
  %919 = vmatpush1.msra.mxu0 0.0
  %920 = vmatprep.subr.mxu0 0.0
  %921 = vmatpush1.msra.mxu0 0.0
  %922 = vmatprep.subr.mxu0 0.0
  %923 = vmatpush1.msra.mxu0 0.0
  %924 = vmatprep.subr.mxu0 0.0
  %925 = vmatpush1.msra.mxu0 0.0
  %926 = vmatprep.subr.mxu0 0.0
  %927 = vmatpush1.msra.mxu0 0.0
  %928 = vmatprep.mubr.f32.mxu0 0.0
  %929 = vmatmul.mubr.f32.gmra.mrb[0].mxu0 %v165
  %v930 = vpop.f32.mrb[0].mxu0
  %v931 = vadd.f32 0.0, %v930
  %v932 = vpop.f32.mrb[0].mxu0
  %v933 = vadd.f32 0.0, %v932
  %934 = vdwg.mxu0
  %935 = vmatprep.subr.mxu0 %v206
  %936 = vmatpush1.msra.mxu0 %v204
  %937 = vmatprep.subr.mxu0 0.0
  %938 = vmatpush1.msra.mxu0 0.0
  %939 = vmatprep.subr.mxu0 0.0
  %940 = vmatpush1.msra.mxu0 0.0
  %941 = vmatprep.subr.mxu0 0.0
  %942 = vmatpush1.msra.mxu0 0.0
  %943 = vmatprep.subr.mxu0 0.0
  %944 = vmatpush1.msra.mxu0 0.0
  %945 = vmatprep.subr.mxu0 0.0
  %946 = vmatpush1.msra.mxu0 0.0
  %947 = vmatprep.subr.mxu0 0.0
  %948 = vmatpush1.msra.mxu0 0.0
  %949 = vmatprep.subr.mxu0 0.0
  %950 = vmatpush1.msra.mxu0 0.0
  %951 = vmatprep.subr.mxu0 0.0
  %952 = vmatpush1.msra.mxu0 0.0
  %953 = vmatprep.subr.mxu0 0.0
  %954 = vmatpush1.msra.mxu0 0.0
  %955 = vmatprep.subr.mxu0 0.0
  %956 = vmatpush1.msra.mxu0 0.0
  %957 = vmatprep.subr.mxu0 0.0
  %958 = vmatpush1.msra.mxu0 0.0
  %959 = vmatprep.subr.mxu0 0.0
  %960 = vmatpush1.msra.mxu0 0.0
  %961 = vmatprep.subr.mxu0 0.0
  %962 = vmatpush1.msra.mxu0 0.0
  %963 = vmatprep.subr.mxu0 0.0
  %964 = vmatpush1.msra.mxu0 0.0
  %965 = vmatprep.subr.mxu0 0.0
  %966 = vmatpush1.msra.mxu0 0.0
  %967 = vmatprep.subr.mxu0 0.0
  %968 = vmatpush1.msra.mxu0 0.0
  %969 = vmatprep.subr.mxu0 0.0
  %970 = vmatpush1.msra.mxu0 0.0
  %971 = vmatprep.subr.mxu0 0.0
  %972 = vmatpush1.msra.mxu0 0.0
  %973 = vmatprep.subr.mxu0 0.0
  %974 = vmatpush1.msra.mxu0 0.0
  %975 = vmatprep.subr.mxu0 0.0
  %976 = vmatpush1.msra.mxu0 0.0
  %977 = vmatprep.subr.mxu0 0.0
  %978 = vmatpush1.msra.mxu0 0.0
  %979 = vmatprep.subr.mxu0 0.0
  %980 = vmatpush1.msra.mxu0 0.0
  %981 = vmatprep.subr.mxu0 0.0
  %982 = vmatpush1.msra.mxu0 0.0
  %983 = vmatprep.subr.mxu0 0.0
  %984 = vmatpush1.msra.mxu0 0.0
  %985 = vmatprep.subr.mxu0 0.0
  %986 = vmatpush1.msra.mxu0 0.0
  %987 = vmatprep.subr.mxu0 0.0
  %988 = vmatpush1.msra.mxu0 0.0
  %989 = vmatprep.subr.mxu0 0.0
  %990 = vmatpush1.msra.mxu0 0.0
  %991 = vmatprep.subr.mxu0 0.0
  %992 = vmatpush1.msra.mxu0 0.0
  %993 = vmatprep.subr.mxu0 0.0
  %994 = vmatpush1.msra.mxu0 0.0
  %995 = vmatprep.subr.mxu0 0.0
  %996 = vmatpush1.msra.mxu0 0.0
  %997 = vmatprep.subr.mxu0 0.0
  %998 = vmatpush1.msra.mxu0 0.0
  %999 = vmatprep.mubr.f32.mxu0 0.0
  %1000 = vmatmul.mubr.f32.gmra.mrb[0].mxu0 %v165
  %v1001 = vpop.f32.mrb[0].mxu0
  %v1002 = vadd.f32 0.0, %v1001
  %v1003 = vpop.f32.mrb[0].mxu0
  %v1004 = vadd.f32 0.0, %v1003
  %1005 = vdwg.mxu0
  %1006 = vmatprep.subr.mxu0 %v210
  %1007 = vmatpush1.msra.mxu0 %v208
  %1008 = vmatprep.subr.mxu0 0.0
  %1009 = vmatpush1.msra.mxu0 0.0
  %1010 = vmatprep.subr.mxu0 0.0
  %1011 = vmatpush1.msra.mxu0 0.0
  %1012 = vmatprep.subr.mxu0 0.0
  %1013 = vmatpush1.msra.mxu0 0.0
  %1014 = vmatprep.subr.mxu0 0.0
  %1015 = vmatpush1.msra.mxu0 0.0
  %1016 = vmatprep.subr.mxu0 0.0
  %1017 = vmatpush1.msra.mxu0 0.0
  %1018 = vmatprep.subr.mxu0 0.0
  %1019 = vmatpush1.msra.mxu0 0.0
  %1020 = vmatprep.subr.mxu0 0.0
  %1021 = vmatpush1.msra.mxu0 0.0
  %1022 = vmatprep.subr.mxu0 0.0
  %1023 = vmatpush1.msra.mxu0 0.0
  %1024 = vmatprep.subr.mxu0 0.0
  %1025 = vmatpush1.msra.mxu0 0.0
  %1026 = vmatprep.subr.mxu0 0.0
  %1027 = vmatpush1.msra.mxu0 0.0
  %1028 = vmatprep.subr.mxu0 0.0
  %1029 = vmatpush1.msra.mxu0 0.0
  %1030 = vmatprep.subr.mxu0 0.0
  %1031 = vmatpush1.msra.mxu0 0.0
  %1032 = vmatprep.subr.mxu0 0.0
  %1033 = vmatpush1.msra.mxu0 0.0
  %1034 = vmatprep.subr.mxu0 0.0
  %1035 = vmatpush1.msra.mxu0 0.0
  %1036 = vmatprep.subr.mxu0 0.0
  %1037 = vmatpush1.msra.mxu0 0.0
  %1038 = vmatprep.subr.mxu0 0.0
  %1039 = vmatpush1.msra.mxu0 0.0
  %1040 = vmatprep.subr.mxu0 0.0
  %1041 = vmatpush1.msra.mxu0 0.0
  %1042 = vmatprep.subr.mxu0 0.0
  %1043 = vmatpush1.msra.mxu0 0.0
  %1044 = vmatprep.subr.mxu0 0.0
  %1045 = vmatpush1.msra.mxu0 0.0
  %1046 = vmatprep.subr.mxu0 0.0
  %1047 = vmatpush1.msra.mxu0 0.0
  %1048 = vmatprep.subr.mxu0 0.0
  %1049 = vmatpush1.msra.mxu0 0.0
  %1050 = vmatprep.subr.mxu0 0.0
  %1051 = vmatpush1.msra.mxu0 0.0
  %1052 = vmatprep.subr.mxu0 0.0
  %1053 = vmatpush1.msra.mxu0 0.0
  %1054 = vmatprep.subr.mxu0 0.0
  %1055 = vmatpush1.msra.mxu0 0.0
  %1056 = vmatprep.subr.mxu0 0.0
  %1057 = vmatpush1.msra.mxu0 0.0
  %1058 = vmatprep.subr.mxu0 0.0
  %1059 = vmatpush1.msra.mxu0 0.0
  %1060 = vmatprep.subr.mxu0 0.0
  %1061 = vmatpush1.msra.mxu0 0.0
  %1062 = vmatprep.subr.mxu0 0.0
  %1063 = vmatpush1.msra.mxu0 0.0
  %1064 = vmatprep.subr.mxu0 0.0
  %1065 = vmatpush1.msra.mxu0 0.0
  %1066 = vmatprep.subr.mxu0 0.0
  %1067 = vmatpush1.msra.mxu0 0.0
  %1068 = vmatprep.subr.mxu0 0.0
  %1069 = vmatpush1.msra.mxu0 0.0
  %1070 = vmatprep.mubr.f32.mxu0 0.0
  %1071 = vmatmul.mubr.f32.gmra.mrb[0].mxu0 %v165
  %v1072 = vpop.f32.mrb[0].mxu0
  %v1073 = vadd.f32 0.0, %v1072
  %v1074 = vpop.f32.mrb[0].mxu0
  %v1075 = vadd.f32 0.0, %v1074
  %1076 = vdwg.mxu0
  %1077 = vmatprep.subr.mxu0 %v214
  %1078 = vmatpush1.msra.mxu0 %v212
  %1079 = vmatprep.subr.mxu0 0.0
  %1080 = vmatpush1.msra.mxu0 0.0
  %1081 = vmatprep.subr.mxu0 0.0
  %1082 = vmatpush1.msra.mxu0 0.0
  %1083 = vmatprep.subr.mxu0 0.0
  %1084 = vmatpush1.msra.mxu0 0.0
  %1085 = vmatprep.subr.mxu0 0.0
  %1086 = vmatpush1.msra.mxu0 0.0
  %1087 = vmatprep.subr.mxu0 0.0
  %1088 = vmatpush1.msra.mxu0 0.0
  %1089 = vmatprep.subr.mxu0 0.0
  %1090 = vmatpush1.msra.mxu0 0.0
  %1091 = vmatprep.subr.mxu0 0.0
  %1092 = vmatpush1.msra.mxu0 0.0
  %1093 = vmatprep.subr.mxu0 0.0
  %1094 = vmatpush1.msra.mxu0 0.0
  %1095 = vmatprep.subr.mxu0 0.0
  %1096 = vmatpush1.msra.mxu0 0.0
  %1097 = vmatprep.subr.mxu0 0.0
  %1098 = vmatpush1.msra.mxu0 0.0
  %1099 = vmatprep.subr.mxu0 0.0
  %1100 = vmatpush1.msra.mxu0 0.0
  %1101 = vmatprep.subr.mxu0 0.0
  %1102 = vmatpush1.msra.mxu0 0.0
  %1103 = vmatprep.subr.mxu0 0.0
  %1104 = vmatpush1.msra.mxu0 0.0
  %1105 = vmatprep.subr.mxu0 0.0
  %1106 = vmatpush1.msra.mxu0 0.0
  %1107 = vmatprep.subr.mxu0 0.0
  %1108 = vmatpush1.msra.mxu0 0.0
  %1109 = vmatprep.subr.mxu0 0.0
  %1110 = vmatpush1.msra.mxu0 0.0
  %1111 = vmatprep.subr.mxu0 0.0
  %1112 = vmatpush1.msra.mxu0 0.0
  %1113 = vmatprep.subr.mxu0 0.0
  %1114 = vmatpush1.msra.mxu0 0.0
  %1115 = vmatprep.subr.mxu0 0.0
  %1116 = vmatpush1.msra.mxu0 0.0
  %1117 = vmatprep.subr.mxu0 0.0
  %1118 = vmatpush1.msra.mxu0 0.0
  %1119 = vmatprep.subr.mxu0 0.0
  %1120 = vmatpush1.msra.mxu0 0.0
  %1121 = vmatprep.subr.mxu0 0.0
  %1122 = vmatpush1.msra.mxu0 0.0
  %1123 = vmatprep.subr.mxu0 0.0
  %1124 = vmatpush1.msra.mxu0 0.0
  %1125 = vmatprep.subr.mxu0 0.0
  %1126 = vmatpush1.msra.mxu0 0.0
  %1127 = vmatprep.subr.mxu0 0.0
  %1128 = vmatpush1.msra.mxu0 0.0
  %1129 = vmatprep.subr.mxu0 0.0
  %1130 = vmatpush1.msra.mxu0 0.0
  %1131 = vmatprep.subr.mxu0 0.0
  %1132 = vmatpush1.msra.mxu0 0.0
  %1133 = vmatprep.subr.mxu0 0.0
  %1134 = vmatpush1.msra.mxu0 0.0
  %1135 = vmatprep.subr.mxu0 0.0
  %1136 = vmatpush1.msra.mxu0 0.0
  %1137 = vmatprep.subr.mxu0 0.0
  %1138 = vmatpush1.msra.mxu0 0.0
  %1139 = vmatprep.subr.mxu0 0.0
  %1140 = vmatpush1.msra.mxu0 0.0
  %1141 = vmatprep.mubr.f32.mxu0 0.0
  %1142 = vmatmul.mubr.f32.gmra.mrb[0].mxu0 %v165
  %v1143 = vpop.f32.mrb[0].mxu0
  %v1144 = vadd.f32 0.0, %v1143
  %v1145 = vpop.f32.mrb[0].mxu0
  %v1146 = vadd.f32 0.0, %v1145
  %1147 = vdwg.mxu0
  %1148 = vmatprep.subr.mxu0 %v218
  %1149 = vmatpush1.msra.mxu0 %v216
  %1150 = vmatprep.subr.mxu0 0.0
  %1151 = vmatpush1.msra.mxu0 0.0
  %1152 = vmatprep.subr.mxu0 0.0
  %1153 = vmatpush1.msra.mxu0 0.0
  %1154 = vmatprep.subr.mxu0 0.0
  %1155 = vmatpush1.msra.mxu0 0.0
  %1156 = vmatprep.subr.mxu0 0.0
  %1157 = vmatpush1.msra.mxu0 0.0
  %1158 = vmatprep.subr.mxu0 0.0
  %1159 = vmatpush1.msra.mxu0 0.0
  %1160 = vmatprep.subr.mxu0 0.0
  %1161 = vmatpush1.msra.mxu0 0.0
  %1162 = vmatprep.subr.mxu0 0.0
  %1163 = vmatpush1.msra.mxu0 0.0
  %1164 = vmatprep.subr.mxu0 0.0
  %1165 = vmatpush1.msra.mxu0 0.0
  %1166 = vmatprep.subr.mxu0 0.0
  %1167 = vmatpush1.msra.mxu0 0.0
  %1168 = vmatprep.subr.mxu0 0.0
  %1169 = vmatpush1.msra.mxu0 0.0
  %1170 = vmatprep.subr.mxu0 0.0
  %1171 = vmatpush1.msra.mxu0 0.0
  %1172 = vmatprep.subr.mxu0 0.0
  %1173 = vmatpush1.msra.mxu0 0.0
  %1174 = vmatprep.subr.mxu0 0.0
  %1175 = vmatpush1.msra.mxu0 0.0
  %1176 = vmatprep.subr.mxu0 0.0
  %1177 = vmatpush1.msra.mxu0 0.0
  %1178 = vmatprep.subr.mxu0 0.0
  %1179 = vmatpush1.msra.mxu0 0.0
  %1180 = vmatprep.subr.mxu0 0.0
  %1181 = vmatpush1.msra.mxu0 0.0
  %1182 = vmatprep.subr.mxu0 0.0
  %1183 = vmatpush1.msra.mxu0 0.0
  %1184 = vmatprep.subr.mxu0 0.0
  %1185 = vmatpush1.msra.mxu0 0.0
  %1186 = vmatprep.subr.mxu0 0.0
  %1187 = vmatpush1.msra.mxu0 0.0
  %1188 = vmatprep.subr.mxu0 0.0
  %1189 = vmatpush1.msra.mxu0 0.0
  %1190 = vmatprep.subr.mxu0 0.0
  %1191 = vmatpush1.msra.mxu0 0.0
  %1192 = vmatprep.subr.mxu0 0.0
  %1193 = vmatpush1.msra.mxu0 0.0
  %1194 = vmatprep.subr.mxu0 0.0
  %1195 = vmatpush1.msra.mxu0 0.0
  %1196 = vmatprep.subr.mxu0 0.0
  %1197 = vmatpush1.msra.mxu0 0.0
  %1198 = vmatprep.subr.mxu0 0.0
  %1199 = vmatpush1.msra.mxu0 0.0
  %1200 = vmatprep.subr.mxu0 0.0
  %1201 = vmatpush1.msra.mxu0 0.0
  %1202 = vmatprep.subr.mxu0 0.0
  %1203 = vmatpush1.msra.mxu0 0.0
  %1204 = vmatprep.subr.mxu0 0.0
  %1205 = vmatpush1.msra.mxu0 0.0
  %1206 = vmatprep.subr.mxu0 0.0
  %1207 = vmatpush1.msra.mxu0 0.0
  %1208 = vmatprep.subr.mxu0 0.0
  %1209 = vmatpush1.msra.mxu0 0.0
  %1210 = vmatprep.subr.mxu0 0.0
  %1211 = vmatpush1.msra.mxu0 0.0
  %1212 = vmatprep.mubr.f32.mxu0 0.0
  %1213 = vmatmul.mubr.f32.gmra.mrb[0].mxu0 %v165
  %v1214 = vpop.f32.mrb[0].mxu0
  %v1215 = vadd.f32 0.0, %v1214
  %v1216 = vpop.f32.mrb[0].mxu0
  %v1217 = vadd.f32 0.0, %v1216
  %1218 = vdwg.mxu0
  %1219 = vmatprep.subr.mxu0 %v222
  %1220 = vmatpush1.msra.mxu0 %v220
  %1221 = vmatprep.subr.mxu0 0.0
  %1222 = vmatpush1.msra.mxu0 0.0
  %1223 = vmatprep.subr.mxu0 0.0
  %1224 = vmatpush1.msra.mxu0 0.0
  %1225 = vmatprep.subr.mxu0 0.0
  %1226 = vmatpush1.msra.mxu0 0.0
  %1227 = vmatprep.subr.mxu0 0.0
  %1228 = vmatpush1.msra.mxu0 0.0
  %1229 = vmatprep.subr.mxu0 0.0
  %1230 = vmatpush1.msra.mxu0 0.0
  %1231 = vmatprep.subr.mxu0 0.0
  %1232 = vmatpush1.msra.mxu0 0.0
  %1233 = vmatprep.subr.mxu0 0.0
  %1234 = vmatpush1.msra.mxu0 0.0
  %1235 = vmatprep.subr.mxu0 0.0
  %1236 = vmatpush1.msra.mxu0 0.0
  %1237 = vmatprep.subr.mxu0 0.0
  %1238 = vmatpush1.msra.mxu0 0.0
  %1239 = vmatprep.subr.mxu0 0.0
  %1240 = vmatpush1.msra.mxu0 0.0
  %1241 = vmatprep.subr.mxu0 0.0
  %1242 = vmatpush1.msra.mxu0 0.0
  %1243 = vmatprep.subr.mxu0 0.0
  %1244 = vmatpush1.msra.mxu0 0.0
  %1245 = vmatprep.subr.mxu0 0.0
  %1246 = vmatpush1.msra.mxu0 0.0
  %1247 = vmatprep.subr.mxu0 0.0
  %1248 = vmatpush1.msra.mxu0 0.0
  %1249 = vmatprep.subr.mxu0 0.0
  %1250 = vmatpush1.msra.mxu0 0.0
  %1251 = vmatprep.subr.mxu0 0.0
  %1252 = vmatpush1.msra.mxu0 0.0
  %1253 = vmatprep.subr.mxu0 0.0
  %1254 = vmatpush1.msra.mxu0 0.0
  %1255 = vmatprep.subr.mxu0 0.0
  %1256 = vmatpush1.msra.mxu0 0.0
  %1257 = vmatprep.subr.mxu0 0.0
  %1258 = vmatpush1.msra.mxu0 0.0
  %1259 = vmatprep.subr.mxu0 0.0
  %1260 = vmatpush1.msra.mxu0 0.0
  %1261 = vmatprep.subr.mxu0 0.0
  %1262 = vmatpush1.msra.mxu0 0.0
  %1263 = vmatprep.subr.mxu0 0.0
  %1264 = vmatpush1.msra.mxu0 0.0
  %1265 = vmatprep.subr.mxu0 0.0
  %1266 = vmatpush1.msra.mxu0 0.0
  %1267 = vmatprep.subr.mxu0 0.0
  %1268 = vmatpush1.msra.mxu0 0.0
  %1269 = vmatprep.subr.mxu0 0.0
  %1270 = vmatpush1.msra.mxu0 0.0
  %1271 = vmatprep.subr.mxu0 0.0
  %1272 = vmatpush1.msra.mxu0 0.0
  %1273 = vmatprep.subr.mxu0 0.0
  %1274 = vmatpush1.msra.mxu0 0.0
  %1275 = vmatprep.subr.mxu0 0.0
  %1276 = vmatpush1.msra.mxu0 0.0
  %1277 = vmatprep.subr.mxu0 0.0
  %1278 = vmatpush1.msra.mxu0 0.0
  %1279 = vmatprep.subr.mxu0 0.0
  %1280 = vmatpush1.msra.mxu0 0.0
  %1281 = vmatprep.subr.mxu0 0.0
  %1282 = vmatpush1.msra.mxu0 0.0
  %1283 = vmatprep.mubr.f32.mxu0 0.0
  %1284 = vmatmul.mubr.f32.gmra.mrb[0].mxu0 %v165
  %v1285 = vpop.f32.mrb[0].mxu0
  %v1286 = vadd.f32 0.0, %v1285
  %v1287 = vpop.f32.mrb[0].mxu0
  %v1288 = vadd.f32 0.0, %v1287
  %1289 = vdwg.mxu0
  %1290 = vmatprep.subr.mxu0 %v226
  %1291 = vmatpush1.msra.mxu0 %v224
  %1292 = vmatprep.subr.mxu0 0.0
  %1293 = vmatpush1.msra.mxu0 0.0
  %1294 = vmatprep.subr.mxu0 0.0
  %1295 = vmatpush1.msra.mxu0 0.0
  %1296 = vmatprep.subr.mxu0 0.0
  %1297 = vmatpush1.msra.mxu0 0.0
  %1298 = vmatprep.subr.mxu0 0.0
  %1299 = vmatpush1.msra.mxu0 0.0
  %1300 = vmatprep.subr.mxu0 0.0
  %1301 = vmatpush1.msra.mxu0 0.0
  %1302 = vmatprep.subr.mxu0 0.0
  %1303 = vmatpush1.msra.mxu0 0.0
  %1304 = vmatprep.subr.mxu0 0.0
  %1305 = vmatpush1.msra.mxu0 0.0
  %1306 = vmatprep.subr.mxu0 0.0
  %1307 = vmatpush1.msra.mxu0 0.0
  %1308 = vmatprep.subr.mxu0 0.0
  %1309 = vmatpush1.msra.mxu0 0.0
  %1310 = vmatprep.subr.mxu0 0.0
  %1311 = vmatpush1.msra.mxu0 0.0
  %1312 = vmatprep.subr.mxu0 0.0
  %1313 = vmatpush1.msra.mxu0 0.0
  %1314 = vmatprep.subr.mxu0 0.0
  %1315 = vmatpush1.msra.mxu0 0.0
  %1316 = vmatprep.subr.mxu0 0.0
  %1317 = vmatpush1.msra.mxu0 0.0
  %1318 = vmatprep.subr.mxu0 0.0
  %1319 = vmatpush1.msra.mxu0 0.0
  %1320 = vmatprep.subr.mxu0 0.0
  %1321 = vmatpush1.msra.mxu0 0.0
  %1322 = vmatprep.subr.mxu0 0.0
  %1323 = vmatpush1.msra.mxu0 0.0
  %1324 = vmatprep.subr.mxu0 0.0
  %1325 = vmatpush1.msra.mxu0 0.0
  %1326 = vmatprep.subr.mxu0 0.0
  %1327 = vmatpush1.msra.mxu0 0.0
  %1328 = vmatprep.subr.mxu0 0.0
  %1329 = vmatpush1.msra.mxu0 0.0
  %1330 = vmatprep.subr.mxu0 0.0
  %1331 = vmatpush1.msra.mxu0 0.0
  %1332 = vmatprep.subr.mxu0 0.0
  %1333 = vmatpush1.msra.mxu0 0.0
  %1334 = vmatprep.subr.mxu0 0.0
  %1335 = vmatpush1.msra.mxu0 0.0
  %1336 = vmatprep.subr.mxu0 0.0
  %1337 = vmatpush1.msra.mxu0 0.0
  %1338 = vmatprep.subr.mxu0 0.0
  %1339 = vmatpush1.msra.mxu0 0.0
  %1340 = vmatprep.subr.mxu0 0.0
  %1341 = vmatpush1.msra.mxu0 0.0
  %1342 = vmatprep.subr.mxu0 0.0
  %1343 = vmatpush1.msra.mxu0 0.0
  %1344 = vmatprep.subr.mxu0 0.0
  %1345 = vmatpush1.msra.mxu0 0.0
  %1346 = vmatprep.subr.mxu0 0.0
  %1347 = vmatpush1.msra.mxu0 0.0
  %1348 = vmatprep.subr.mxu0 0.0
  %1349 = vmatpush1.msra.mxu0 0.0
  %1350 = vmatprep.subr.mxu0 0.0
  %1351 = vmatpush1.msra.mxu0 0.0
  %1352 = vmatprep.subr.mxu0 0.0
  %1353 = vmatpush1.msra.mxu0 0.0
  %1354 = vmatprep.mubr.f32.mxu0 0.0
  %1355 = vmatmul.mubr.f32.gmra.mrb[0].mxu0 %v165
  %v1356 = vpop.f32.mrb[0].mxu0
  %v1357 = vadd.f32 0.0, %v1356
  %v1358 = vpop.f32.mrb[0].mxu0
  %v1359 = vadd.f32 0.0, %v1358
  %1360 = vdwg.mxu0
  %1361 = vmatprep.subr.mxu0 %v230
  %1362 = vmatpush1.msra.mxu0 %v228
  %1363 = vmatprep.subr.mxu0 0.0
  %1364 = vmatpush1.msra.mxu0 0.0
  %1365 = vmatprep.subr.mxu0 0.0
  %1366 = vmatpush1.msra.mxu0 0.0
  %1367 = vmatprep.subr.mxu0 0.0
  %1368 = vmatpush1.msra.mxu0 0.0
  %1369 = vmatprep.subr.mxu0 0.0
  %1370 = vmatpush1.msra.mxu0 0.0
  %1371 = vmatprep.subr.mxu0 0.0
  %1372 = vmatpush1.msra.mxu0 0.0
  %1373 = vmatprep.subr.mxu0 0.0
  %1374 = vmatpush1.msra.mxu0 0.0
  %1375 = vmatprep.subr.mxu0 0.0
  %1376 = vmatpush1.msra.mxu0 0.0
  %1377 = vmatprep.subr.mxu0 0.0
  %1378 = vmatpush1.msra.mxu0 0.0
  %1379 = vmatprep.subr.mxu0 0.0
  %1380 = vmatpush1.msra.mxu0 0.0
  %1381 = vmatprep.subr.mxu0 0.0
  %1382 = vmatpush1.msra.mxu0 0.0
  %1383 = vmatprep.subr.mxu0 0.0
  %1384 = vmatpush1.msra.mxu0 0.0
  %1385 = vmatprep.subr.mxu0 0.0
  %1386 = vmatpush1.msra.mxu0 0.0
  %1387 = vmatprep.subr.mxu0 0.0
  %1388 = vmatpush1.msra.mxu0 0.0
  %1389 = vmatprep.subr.mxu0 0.0
  %1390 = vmatpush1.msra.mxu0 0.0
  %1391 = vmatprep.subr.mxu0 0.0
  %1392 = vmatpush1.msra.mxu0 0.0
  %1393 = vmatprep.subr.mxu0 0.0
  %1394 = vmatpush1.msra.mxu0 0.0
  %1395 = vmatprep.subr.mxu0 0.0
  %1396 = vmatpush1.msra.mxu0 0.0
  %1397 = vmatprep.subr.mxu0 0.0
  %1398 = vmatpush1.msra.mxu0 0.0
  %1399 = vmatprep.subr.mxu0 0.0
  %1400 = vmatpush1.msra.mxu0 0.0
  %1401 = vmatprep.subr.mxu0 0.0
  %1402 = vmatpush1.msra.mxu0 0.0
  %1403 = vmatprep.subr.mxu0 0.0
  %1404 = vmatpush1.msra.mxu0 0.0
  %1405 = vmatprep.subr.mxu0 0.0
  %1406 = vmatpush1.msra.mxu0 0.0
  %1407 = vmatprep.subr.mxu0 0.0
  %1408 = vmatpush1.msra.mxu0 0.0
  %1409 = vmatprep.subr.mxu0 0.0
  %1410 = vmatpush1.msra.mxu0 0.0
  %1411 = vmatprep.subr.mxu0 0.0
  %1412 = vmatpush1.msra.mxu0 0.0
  %1413 = vmatprep.subr.mxu0 0.0
  %1414 = vmatpush1.msra.mxu0 0.0
  %1415 = vmatprep.subr.mxu0 0.0
  %1416 = vmatpush1.msra.mxu0 0.0
  %1417 = vmatprep.subr.mxu0 0.0
  %1418 = vmatpush1.msra.mxu0 0.0
  %1419 = vmatprep.subr.mxu0 0.0
  %1420 = vmatpush1.msra.mxu0 0.0
  %1421 = vmatprep.subr.mxu0 0.0
  %1422 = vmatpush1.msra.mxu0 0.0
  %1423 = vmatprep.subr.mxu0 0.0
  %1424 = vmatpush1.msra.mxu0 0.0
  %1425 = vmatprep.mubr.f32.mxu0 0.0
  %1426 = vmatmul.mubr.f32.gmra.mrb[0].mxu0 %v165
  %v1427 = vpop.f32.mrb[0].mxu0
  %v1428 = vadd.f32 0.0, %v1427
  %v1429 = vpop.f32.mrb[0].mxu0
  %v1430 = vadd.f32 0.0, %v1429
  %1431 = vdwg.mxu0
  %1432 = vmatprep.subr.mxu0 %v234
  %1433 = vmatpush1.msra.mxu0 %v232
  %1434 = vmatprep.subr.mxu0 0.0
  %1435 = vmatpush1.msra.mxu0 0.0
  %1436 = vmatprep.subr.mxu0 0.0
  %1437 = vmatpush1.msra.mxu0 0.0
  %1438 = vmatprep.subr.mxu0 0.0
  %1439 = vmatpush1.msra.mxu0 0.0
  %1440 = vmatprep.subr.mxu0 0.0
  %1441 = vmatpush1.msra.mxu0 0.0
  %1442 = vmatprep.subr.mxu0 0.0
  %1443 = vmatpush1.msra.mxu0 0.0
  %1444 = vmatprep.subr.mxu0 0.0
  %1445 = vmatpush1.msra.mxu0 0.0
  %1446 = vmatprep.subr.mxu0 0.0
  %1447 = vmatpush1.msra.mxu0 0.0
  %1448 = vmatprep.subr.mxu0 0.0
  %1449 = vmatpush1.msra.mxu0 0.0
  %1450 = vmatprep.subr.mxu0 0.0
  %1451 = vmatpush1.msra.mxu0 0.0
  %1452 = vmatprep.subr.mxu0 0.0
  %1453 = vmatpush1.msra.mxu0 0.0
  %1454 = vmatprep.subr.mxu0 0.0
  %1455 = vmatpush1.msra.mxu0 0.0
  %1456 = vmatprep.subr.mxu0 0.0
  %1457 = vmatpush1.msra.mxu0 0.0
  %1458 = vmatprep.subr.mxu0 0.0
  %1459 = vmatpush1.msra.mxu0 0.0
  %1460 = vmatprep.subr.mxu0 0.0
  %1461 = vmatpush1.msra.mxu0 0.0
  %1462 = vmatprep.subr.mxu0 0.0
  %1463 = vmatpush1.msra.mxu0 0.0
  %1464 = vmatprep.subr.mxu0 0.0
  %1465 = vmatpush1.msra.mxu0 0.0
  %1466 = vmatprep.subr.mxu0 0.0
  %1467 = vmatpush1.msra.mxu0 0.0
  %1468 = vmatprep.subr.mxu0 0.0
  %1469 = vmatpush1.msra.mxu0 0.0
  %1470 = vmatprep.subr.mxu0 0.0
  %1471 = vmatpush1.msra.mxu0 0.0
  %1472 = vmatprep.subr.mxu0 0.0
  %1473 = vmatpush1.msra.mxu0 0.0
  %1474 = vmatprep.subr.mxu0 0.0
  %1475 = vmatpush1.msra.mxu0 0.0
  %1476 = vmatprep.subr.mxu0 0.0
  %1477 = vmatpush1.msra.mxu0 0.0
  %1478 = vmatprep.subr.mxu0 0.0
  %1479 = vmatpush1.msra.mxu0 0.0
  %1480 = vmatprep.subr.mxu0 0.0
  %1481 = vmatpush1.msra.mxu0 0.0
  %1482 = vmatprep.subr.mxu0 0.0
  %1483 = vmatpush1.msra.mxu0 0.0
  %1484 = vmatprep.subr.mxu0 0.0
  %1485 = vmatpush1.msra.mxu0 0.0
  %1486 = vmatprep.subr.mxu0 0.0
  %1487 = vmatpush1.msra.mxu0 0.0
  %1488 = vmatprep.subr.mxu0 0.0
  %1489 = vmatpush1.msra.mxu0 0.0
  %1490 = vmatprep.subr.mxu0 0.0
  %1491 = vmatpush1.msra.mxu0 0.0
  %1492 = vmatprep.subr.mxu0 0.0
  %1493 = vmatpush1.msra.mxu0 0.0
  %1494 = vmatprep.subr.mxu0 0.0
  %1495 = vmatpush1.msra.mxu0 0.0
  %1496 = vmatprep.mubr.f32.mxu0 0.0
  %1497 = vmatmul.mubr.f32.gmra.mrb[0].mxu0 %v165
  %v1498 = vpop.f32.mrb[0].mxu0
  %v1499 = vadd.f32 0.0, %v1498
  %v1500 = vpop.f32.mrb[0].mxu0
  %v1501 = vadd.f32 0.0, %v1500
  %1502 = vdwg.mxu0
  %1503 = vmatprep.subr.mxu0 %v238
  %1504 = vmatpush1.msra.mxu0 %v236
  %1505 = vmatprep.subr.mxu0 0.0
  %1506 = vmatpush1.msra.mxu0 0.0
  %1507 = vmatprep.subr.mxu0 0.0
  %1508 = vmatpush1.msra.mxu0 0.0
  %1509 = vmatprep.subr.mxu0 0.0
  %1510 = vmatpush1.msra.mxu0 0.0
  %1511 = vmatprep.subr.mxu0 0.0
  %1512 = vmatpush1.msra.mxu0 0.0
  %1513 = vmatprep.subr.mxu0 0.0
  %1514 = vmatpush1.msra.mxu0 0.0
  %1515 = vmatprep.subr.mxu0 0.0
  %1516 = vmatpush1.msra.mxu0 0.0
  %1517 = vmatprep.subr.mxu0 0.0
  %1518 = vmatpush1.msra.mxu0 0.0
  %1519 = vmatprep.subr.mxu0 0.0
  %1520 = vmatpush1.msra.mxu0 0.0
  %1521 = vmatprep.subr.mxu0 0.0
  %1522 = vmatpush1.msra.mxu0 0.0
  %1523 = vmatprep.subr.mxu0 0.0
  %1524 = vmatpush1.msra.mxu0 0.0
  %1525 = vmatprep.subr.mxu0 0.0
  %1526 = vmatpush1.msra.mxu0 0.0
  %1527 = vmatprep.subr.mxu0 0.0
  %1528 = vmatpush1.msra.mxu0 0.0
  %1529 = vmatprep.subr.mxu0 0.0
  %1530 = vmatpush1.msra.mxu0 0.0
  %1531 = vmatprep.subr.mxu0 0.0
  %1532 = vmatpush1.msra.mxu0 0.0
  %1533 = vmatprep.subr.mxu0 0.0
  %1534 = vmatpush1.msra.mxu0 0.0
  %1535 = vmatprep.subr.mxu0 0.0
  %1536 = vmatpush1.msra.mxu0 0.0
  %1537 = vmatprep.subr.mxu0 0.0
  %1538 = vmatpush1.msra.mxu0 0.0
  %1539 = vmatprep.subr.mxu0 0.0
  %1540 = vmatpush1.msra.mxu0 0.0
  %1541 = vmatprep.subr.mxu0 0.0
  %1542 = vmatpush1.msra.mxu0 0.0
  %1543 = vmatprep.subr.mxu0 0.0
  %1544 = vmatpush1.msra.mxu0 0.0
  %1545 = vmatprep.subr.mxu0 0.0
  %1546 = vmatpush1.msra.mxu0 0.0
  %1547 = vmatprep.subr.mxu0 0.0
  %1548 = vmatpush1.msra.mxu0 0.0
  %1549 = vmatprep.subr.mxu0 0.0
  %1550 = vmatpush1.msra.mxu0 0.0
  %1551 = vmatprep.subr.mxu0 0.0
  %1552 = vmatpush1.msra.mxu0 0.0
  %1553 = vmatprep.subr.mxu0 0.0
  %1554 = vmatpush1.msra.mxu0 0.0
  %1555 = vmatprep.subr.mxu0 0.0
  %1556 = vmatpush1.msra.mxu0 0.0
  %1557 = vmatprep.subr.mxu0 0.0
  %1558 = vmatpush1.msra.mxu0 0.0
  %1559 = vmatprep.subr.mxu0 0.0
  %1560 = vmatpush1.msra.mxu0 0.0
  %1561 = vmatprep.subr.mxu0 0.0
  %1562 = vmatpush1.msra.mxu0 0.0
  %1563 = vmatprep.subr.mxu0 0.0
  %1564 = vmatpush1.msra.mxu0 0.0
  %1565 = vmatprep.subr.mxu0 0.0
  %1566 = vmatpush1.msra.mxu0 0.0
  %1567 = vmatprep.mubr.f32.mxu0 0.0
  %1568 = vmatmul.mubr.f32.gmra.mrb[0].mxu0 %v165
  %v1569 = vpop.f32.mrb[0].mxu0
  %v1570 = vadd.f32 0.0, %v1569
  %v1571 = vpop.f32.mrb[0].mxu0
  %v1572 = vadd.f32 0.0, %v1571
  %1573 = vdwg.mxu0
  %1574 = vmatprep.subr.mxu0 %v242
  %1575 = vmatpush1.msra.mxu0 %v240
  %1576 = vmatprep.subr.mxu0 0.0
  %1577 = vmatpush1.msra.mxu0 0.0
  %1578 = vmatprep.subr.mxu0 0.0
  %1579 = vmatpush1.msra.mxu0 0.0
  %1580 = vmatprep.subr.mxu0 0.0
  %1581 = vmatpush1.msra.mxu0 0.0
  %1582 = vmatprep.subr.mxu0 0.0
  %1583 = vmatpush1.msra.mxu0 0.0
  %1584 = vmatprep.subr.mxu0 0.0
  %1585 = vmatpush1.msra.mxu0 0.0
  %1586 = vmatprep.subr.mxu0 0.0
  %1587 = vmatpush1.msra.mxu0 0.0
  %1588 = vmatprep.subr.mxu0 0.0
  %1589 = vmatpush1.msra.mxu0 0.0
  %1590 = vmatprep.subr.mxu0 0.0
  %1591 = vmatpush1.msra.mxu0 0.0
  %1592 = vmatprep.subr.mxu0 0.0
  %1593 = vmatpush1.msra.mxu0 0.0
  %1594 = vmatprep.subr.mxu0 0.0
  %1595 = vmatpush1.msra.mxu0 0.0
  %1596 = vmatprep.subr.mxu0 0.0
  %1597 = vmatpush1.msra.mxu0 0.0
  %1598 = vmatprep.subr.mxu0 0.0
  %1599 = vmatpush1.msra.mxu0 0.0
  %1600 = vmatprep.subr.mxu0 0.0
  %1601 = vmatpush1.msra.mxu0 0.0
  %1602 = vmatprep.subr.mxu0 0.0
  %1603 = vmatpush1.msra.mxu0 0.0
  %1604 = vmatprep.subr.mxu0 0.0
  %1605 = vmatpush1.msra.mxu0 0.0
  %1606 = vmatprep.subr.mxu0 0.0
  %1607 = vmatpush1.msra.mxu0 0.0
  %1608 = vmatprep.subr.mxu0 0.0
  %1609 = vmatpush1.msra.mxu0 0.0
  %1610 = vmatprep.subr.mxu0 0.0
  %1611 = vmatpush1.msra.mxu0 0.0
  %1612 = vmatprep.subr.mxu0 0.0
  %1613 = vmatpush1.msra.mxu0 0.0
  %1614 = vmatprep.subr.mxu0 0.0
  %1615 = vmatpush1.msra.mxu0 0.0
  %1616 = vmatprep.subr.mxu0 0.0
  %1617 = vmatpush1.msra.mxu0 0.0
  %1618 = vmatprep.subr.mxu0 0.0
  %1619 = vmatpush1.msra.mxu0 0.0
  %1620 = vmatprep.subr.mxu0 0.0
  %1621 = vmatpush1.msra.mxu0 0.0
  %1622 = vmatprep.subr.mxu0 0.0
  %1623 = vmatpush1.msra.mxu0 0.0
  %1624 = vmatprep.subr.mxu0 0.0
  %1625 = vmatpush1.msra.mxu0 0.0
  %1626 = vmatprep.subr.mxu0 0.0
  %1627 = vmatpush1.msra.mxu0 0.0
  %1628 = vmatprep.subr.mxu0 0.0
  %1629 = vmatpush1.msra.mxu0 0.0
  %1630 = vmatprep.subr.mxu0 0.0
  %1631 = vmatpush1.msra.mxu0 0.0
  %1632 = vmatprep.subr.mxu0 0.0
  %1633 = vmatpush1.msra.mxu0 0.0
  %1634 = vmatprep.subr.mxu0 0.0
  %1635 = vmatpush1.msra.mxu0 0.0
  %1636 = vmatprep.subr.mxu0 0.0
  %1637 = vmatpush1.msra.mxu0 0.0
  %1638 = vmatprep.mubr.f32.mxu0 0.0
  %1639 = vmatmul.mubr.f32.gmra.mrb[0].mxu0 %v165
  %v1640 = vpop.f32.mrb[0].mxu0
  %v1641 = vadd.f32 0.0, %v1640
  %v1642 = vpop.f32.mrb[0].mxu0
  %v1643 = vadd.f32 0.0, %v1642
  %1644 = vdwg.mxu0
  %1645 = vmatprep.subr.mxu0 %v246
  %1646 = vmatpush1.msra.mxu0 %v244
  %1647 = vmatprep.subr.mxu0 0.0
  %1648 = vmatpush1.msra.mxu0 0.0
  %1649 = vmatprep.subr.mxu0 0.0
  %1650 = vmatpush1.msra.mxu0 0.0
  %1651 = vmatprep.subr.mxu0 0.0
  %1652 = vmatpush1.msra.mxu0 0.0
  %1653 = vmatprep.subr.mxu0 0.0
  %1654 = vmatpush1.msra.mxu0 0.0
  %1655 = vmatprep.subr.mxu0 0.0
  %1656 = vmatpush1.msra.mxu0 0.0
  %1657 = vmatprep.subr.mxu0 0.0
  %1658 = vmatpush1.msra.mxu0 0.0
  %1659 = vmatprep.subr.mxu0 0.0
  %1660 = vmatpush1.msra.mxu0 0.0
  %1661 = vmatprep.subr.mxu0 0.0
  %1662 = vmatpush1.msra.mxu0 0.0
  %1663 = vmatprep.subr.mxu0 0.0
  %1664 = vmatpush1.msra.mxu0 0.0
  %1665 = vmatprep.subr.mxu0 0.0
  %1666 = vmatpush1.msra.mxu0 0.0
  %1667 = vmatprep.subr.mxu0 0.0
  %1668 = vmatpush1.msra.mxu0 0.0
  %1669 = vmatprep.subr.mxu0 0.0
  %1670 = vmatpush1.msra.mxu0 0.0
  %1671 = vmatprep.subr.mxu0 0.0
  %1672 = vmatpush1.msra.mxu0 0.0
  %1673 = vmatprep.subr.mxu0 0.0
  %1674 = vmatpush1.msra.mxu0 0.0
  %1675 = vmatprep.subr.mxu0 0.0
  %1676 = vmatpush1.msra.mxu0 0.0
  %1677 = vmatprep.subr.mxu0 0.0
  %1678 = vmatpush1.msra.mxu0 0.0
  %1679 = vmatprep.subr.mxu0 0.0
  %1680 = vmatpush1.msra.mxu0 0.0
  %1681 = vmatprep.subr.mxu0 0.0
  %1682 = vmatpush1.msra.mxu0 0.0
  %1683 = vmatprep.subr.mxu0 0.0
  %1684 = vmatpush1.msra.mxu0 0.0
  %1685 = vmatprep.subr.mxu0 0.0
  %1686 = vmatpush1.msra.mxu0 0.0
  %1687 = vmatprep.subr.mxu0 0.0
  %1688 = vmatpush1.msra.mxu0 0.0
  %1689 = vmatprep.subr.mxu0 0.0
  %1690 = vmatpush1.msra.mxu0 0.0
  %1691 = vmatprep.subr.mxu0 0.0
  %1692 = vmatpush1.msra.mxu0 0.0
  %1693 = vmatprep.subr.mxu0 0.0
  %1694 = vmatpush1.msra.mxu0 0.0
  %1695 = vmatprep.subr.mxu0 0.0
  %1696 = vmatpush1.msra.mxu0 0.0
  %1697 = vmatprep.subr.mxu0 0.0
  %1698 = vmatpush1.msra.mxu0 0.0
  %1699 = vmatprep.subr.mxu0 0.0
  %1700 = vmatpush1.msra.mxu0 0.0
  %1701 = vmatprep.subr.mxu0 0.0
  %1702 = vmatpush1.msra.mxu0 0.0
  %1703 = vmatprep.subr.mxu0 0.0
  %1704 = vmatpush1.msra.mxu0 0.0
  %1705 = vmatprep.subr.mxu0 0.0
  %1706 = vmatpush1.msra.mxu0 0.0
  %1707 = vmatprep.subr.mxu0 0.0
  %1708 = vmatpush1.msra.mxu0 0.0
  %1709 = vmatprep.mubr.f32.mxu0 0.0
  %1710 = vmatmul.mubr.f32.gmra.mrb[0].mxu0 %v165
  %v1711 = vpop.f32.mrb[0].mxu0
  %v1712 = vadd.f32 0.0, %v1711
  %v1713 = vpop.f32.mrb[0].mxu0
  %v1714 = vadd.f32 0.0, %v1713
  %1715 = vdwg.mxu0
  %1716 = vmatprep.subr.mxu0 %v250
  %1717 = vmatpush1.msra.mxu0 %v248
  %1718 = vmatprep.subr.mxu0 0.0
  %1719 = vmatpush1.msra.mxu0 0.0
  %1720 = vmatprep.subr.mxu0 0.0
  %1721 = vmatpush1.msra.mxu0 0.0
  %1722 = vmatprep.subr.mxu0 0.0
  %1723 = vmatpush1.msra.mxu0 0.0
  %1724 = vmatprep.subr.mxu0 0.0
  %1725 = vmatpush1.msra.mxu0 0.0
  %1726 = vmatprep.subr.mxu0 0.0
  %1727 = vmatpush1.msra.mxu0 0.0
  %1728 = vmatprep.subr.mxu0 0.0
  %1729 = vmatpush1.msra.mxu0 0.0
  %1730 = vmatprep.subr.mxu0 0.0
  %1731 = vmatpush1.msra.mxu0 0.0
  %1732 = vmatprep.subr.mxu0 0.0
  %1733 = vmatpush1.msra.mxu0 0.0
  %1734 = vmatprep.subr.mxu0 0.0
  %1735 = vmatpush1.msra.mxu0 0.0
  %1736 = vmatprep.subr.mxu0 0.0
  %1737 = vmatpush1.msra.mxu0 0.0
  %1738 = vmatprep.subr.mxu0 0.0
  %1739 = vmatpush1.msra.mxu0 0.0
  %1740 = vmatprep.subr.mxu0 0.0
  %1741 = vmatpush1.msra.mxu0 0.0
  %1742 = vmatprep.subr.mxu0 0.0
  %1743 = vmatpush1.msra.mxu0 0.0
  %1744 = vmatprep.subr.mxu0 0.0
  %1745 = vmatpush1.msra.mxu0 0.0
  %1746 = vmatprep.subr.mxu0 0.0
  %1747 = vmatpush1.msra.mxu0 0.0
  %1748 = vmatprep.subr.mxu0 0.0
  %1749 = vmatpush1.msra.mxu0 0.0
  %1750 = vmatprep.subr.mxu0 0.0
  %1751 = vmatpush1.msra.mxu0 0.0
  %1752 = vmatprep.subr.mxu0 0.0
  %1753 = vmatpush1.msra.mxu0 0.0
  %1754 = vmatprep.subr.mxu0 0.0
  %1755 = vmatpush1.msra.mxu0 0.0
  %1756 = vmatprep.subr.mxu0 0.0
  %1757 = vmatpush1.msra.mxu0 0.0
  %1758 = vmatprep.subr.mxu0 0.0
  %1759 = vmatpush1.msra.mxu0 0.0
  %1760 = vmatprep.subr.mxu0 0.0
  %1761 = vmatpush1.msra.mxu0 0.0
  %1762 = vmatprep.subr.mxu0 0.0
  %1763 = vmatpush1.msra.mxu0 0.0
  %1764 = vmatprep.subr.mxu0 0.0
  %1765 = vmatpush1.msra.mxu0 0.0
  %1766 = vmatprep.subr.mxu0 0.0
  %1767 = vmatpush1.msra.mxu0 0.0
  %1768 = vmatprep.subr.mxu0 0.0
  %1769 = vmatpush1.msra.mxu0 0.0
  %1770 = vmatprep.subr.mxu0 0.0
  %1771 = vmatpush1.msra.mxu0 0.0
  %1772 = vmatprep.subr.mxu0 0.0
  %1773 = vmatpush1.msra.mxu0 0.0
  %1774 = vmatprep.subr.mxu0 0.0
  %1775 = vmatpush1.msra.mxu0 0.0
  %1776 = vmatprep.subr.mxu0 0.0
  %1777 = vmatpush1.msra.mxu0 0.0
  %1778 = vmatprep.subr.mxu0 0.0
  %1779 = vmatpush1.msra.mxu0 0.0
  %1780 = vmatprep.mubr.f32.mxu0 0.0
  %1781 = vmatmul.mubr.f32.gmra.mrb[0].mxu0 %v165
  %v1782 = vpop.f32.mrb[0].mxu0
  %v1783 = vadd.f32 0.0, %v1782
  %v1784 = vpop.f32.mrb[0].mxu0
  %v1785 = vadd.f32 0.0, %v1784
  %1786 = vdwg.mxu0
  %1787 = vmatprep.subr.mxu0 %v254
  %1788 = vmatpush1.msra.mxu0 %v252
  %1789 = vmatprep.subr.mxu0 0.0
  %1790 = vmatpush1.msra.mxu0 0.0
  %1791 = vmatprep.subr.mxu0 0.0
  %1792 = vmatpush1.msra.mxu0 0.0
  %1793 = vmatprep.subr.mxu0 0.0
  %1794 = vmatpush1.msra.mxu0 0.0
  %1795 = vmatprep.subr.mxu0 0.0
  %1796 = vmatpush1.msra.mxu0 0.0
  %1797 = vmatprep.subr.mxu0 0.0
  %1798 = vmatpush1.msra.mxu0 0.0
  %1799 = vmatprep.subr.mxu0 0.0
  %1800 = vmatpush1.msra.mxu0 0.0
  %1801 = vmatprep.subr.mxu0 0.0
  %1802 = vmatpush1.msra.mxu0 0.0
  %1803 = vmatprep.subr.mxu0 0.0
  %1804 = vmatpush1.msra.mxu0 0.0
  %1805 = vmatprep.subr.mxu0 0.0
  %1806 = vmatpush1.msra.mxu0 0.0
  %1807 = vmatprep.subr.mxu0 0.0
  %1808 = vmatpush1.msra.mxu0 0.0
  %1809 = vmatprep.subr.mxu0 0.0
  %1810 = vmatpush1.msra.mxu0 0.0
  %1811 = vmatprep.subr.mxu0 0.0
  %1812 = vmatpush1.msra.mxu0 0.0
  %1813 = vmatprep.subr.mxu0 0.0
  %1814 = vmatpush1.msra.mxu0 0.0
  %1815 = vmatprep.subr.mxu0 0.0
  %1816 = vmatpush1.msra.mxu0 0.0
  %1817 = vmatprep.subr.mxu0 0.0
  %1818 = vmatpush1.msra.mxu0 0.0
  %1819 = vmatprep.subr.mxu0 0.0
  %1820 = vmatpush1.msra.mxu0 0.0
  %1821 = vmatprep.subr.mxu0 0.0
  %1822 = vmatpush1.msra.mxu0 0.0
  %1823 = vmatprep.subr.mxu0 0.0
  %1824 = vmatpush1.msra.mxu0 0.0
  %1825 = vmatprep.subr.mxu0 0.0
  %1826 = vmatpush1.msra.mxu0 0.0
  %1827 = vmatprep.subr.mxu0 0.0
  %1828 = vmatpush1.msra.mxu0 0.0
  %1829 = vmatprep.subr.mxu0 0.0
  %1830 = vmatpush1.msra.mxu0 0.0
  %1831 = vmatprep.subr.mxu0 0.0
  %1832 = vmatpush1.msra.mxu0 0.0
  %1833 = vmatprep.subr.mxu0 0.0
  %1834 = vmatpush1.msra.mxu0 0.0
  %1835 = vmatprep.subr.mxu0 0.0
  %1836 = vmatpush1.msra.mxu0 0.0
  %1837 = vmatprep.subr.mxu0 0.0
  %1838 = vmatpush1.msra.mxu0 0.0
  %1839 = vmatprep.subr.mxu0 0.0
  %1840 = vmatpush1.msra.mxu0 0.0
  %1841 = vmatprep.subr.mxu0 0.0
  %1842 = vmatpush1.msra.mxu0 0.0
  %1843 = vmatprep.subr.mxu0 0.0
  %1844 = vmatpush1.msra.mxu0 0.0
  %1845 = vmatprep.subr.mxu0 0.0
  %1846 = vmatpush1.msra.mxu0 0.0
  %1847 = vmatprep.subr.mxu0 0.0
  %1848 = vmatpush1.msra.mxu0 0.0
  %1849 = vmatprep.subr.mxu0 0.0
  %1850 = vmatpush1.msra.mxu0 0.0
  %1851 = vmatprep.mubr.f32.mxu0 0.0
  %1852 = vmatmul.mubr.f32.gmra.mrb[0].mxu0 %v165
  %v1853 = vpop.f32.mrb[0].mxu0
  %v1854 = vadd.f32 0.0, %v1853
  %v1855 = vpop.f32.mrb[0].mxu0
  %v1856 = vadd.f32 0.0, %v1855
  %1857 = vdwg.mxu0
  %1858 = vmatprep.subr.mxu0 %v258
  %1859 = vmatpush1.msra.mxu0 %v256
  %1860 = vmatprep.subr.mxu0 0.0
  %1861 = vmatpush1.msra.mxu0 0.0
  %1862 = vmatprep.subr.mxu0 0.0
  %1863 = vmatpush1.msra.mxu0 0.0
  %1864 = vmatprep.subr.mxu0 0.0
  %1865 = vmatpush1.msra.mxu0 0.0
  %1866 = vmatprep.subr.mxu0 0.0
  %1867 = vmatpush1.msra.mxu0 0.0
  %1868 = vmatprep.subr.mxu0 0.0
  %1869 = vmatpush1.msra.mxu0 0.0
  %1870 = vmatprep.subr.mxu0 0.0
  %1871 = vmatpush1.msra.mxu0 0.0
  %1872 = vmatprep.subr.mxu0 0.0
  %1873 = vmatpush1.msra.mxu0 0.0
  %1874 = vmatprep.subr.mxu0 0.0
  %1875 = vmatpush1.msra.mxu0 0.0
  %1876 = vmatprep.subr.mxu0 0.0
  %1877 = vmatpush1.msra.mxu0 0.0
  %1878 = vmatprep.subr.mxu0 0.0
  %1879 = vmatpush1.msra.mxu0 0.0
  %1880 = vmatprep.subr.mxu0 0.0
  %1881 = vmatpush1.msra.mxu0 0.0
  %1882 = vmatprep.subr.mxu0 0.0
  %1883 = vmatpush1.msra.mxu0 0.0
  %1884 = vmatprep.subr.mxu0 0.0
  %1885 = vmatpush1.msra.mxu0 0.0
  %1886 = vmatprep.subr.mxu0 0.0
  %1887 = vmatpush1.msra.mxu0 0.0
  %1888 = vmatprep.subr.mxu0 0.0
  %1889 = vmatpush1.msra.mxu0 0.0
  %1890 = vmatprep.subr.mxu0 0.0
  %1891 = vmatpush1.msra.mxu0 0.0
  %1892 = vmatprep.subr.mxu0 0.0
  %1893 = vmatpush1.msra.mxu0 0.0
  %1894 = vmatprep.subr.mxu0 0.0
  %1895 = vmatpush1.msra.mxu0 0.0
  %1896 = vmatprep.subr.mxu0 0.0
  %1897 = vmatpush1.msra.mxu0 0.0
  %1898 = vmatprep.subr.mxu0 0.0
  %1899 = vmatpush1.msra.mxu0 0.0
  %1900 = vmatprep.subr.mxu0 0.0
  %1901 = vmatpush1.msra.mxu0 0.0
  %1902 = vmatprep.subr.mxu0 0.0
  %1903 = vmatpush1.msra.mxu0 0.0
  %1904 = vmatprep.subr.mxu0 0.0
  %1905 = vmatpush1.msra.mxu0 0.0
  %1906 = vmatprep.subr.mxu0 0.0
  %1907 = vmatpush1.msra.mxu0 0.0
  %1908 = vmatprep.subr.mxu0 0.0
  %1909 = vmatpush1.msra.mxu0 0.0
  %1910 = vmatprep.subr.mxu0 0.0
  %1911 = vmatpush1.msra.mxu0 0.0
  %1912 = vmatprep.subr.mxu0 0.0
  %1913 = vmatpush1.msra.mxu0 0.0
  %1914 = vmatprep.subr.mxu0 0.0
  %1915 = vmatpush1.msra.mxu0 0.0
  %1916 = vmatprep.subr.mxu0 0.0
  %1917 = vmatpush1.msra.mxu0 0.0
  %1918 = vmatprep.subr.mxu0 0.0
  %1919 = vmatpush1.msra.mxu0 0.0
  %1920 = vmatprep.subr.mxu0 0.0
  %1921 = vmatpush1.msra.mxu0 0.0
  %1922 = vmatprep.mubr.f32.mxu0 0.0
  %1923 = vmatmul.mubr.f32.gmra.mrb[0].mxu0 %v165
  %v1924 = vpop.f32.mrb[0].mxu0
  %v1925 = vadd.f32 0.0, %v1924
  %v1926 = vpop.f32.mrb[0].mxu0
  %v1927 = vadd.f32 0.0, %v1926
  %1928 = vdwg.mxu0
  %1929 = vmatprep.subr.mxu0 %v262
  %1930 = vmatpush1.msra.mxu0 %v260
  %1931 = vmatprep.subr.mxu0 0.0
  %1932 = vmatpush1.msra.mxu0 0.0
  %1933 = vmatprep.subr.mxu0 0.0
  %1934 = vmatpush1.msra.mxu0 0.0
  %1935 = vmatprep.subr.mxu0 0.0
  %1936 = vmatpush1.msra.mxu0 0.0
  %1937 = vmatprep.subr.mxu0 0.0
  %1938 = vmatpush1.msra.mxu0 0.0
  %1939 = vmatprep.subr.mxu0 0.0
  %1940 = vmatpush1.msra.mxu0 0.0
  %1941 = vmatprep.subr.mxu0 0.0
  %1942 = vmatpush1.msra.mxu0 0.0
  %1943 = vmatprep.subr.mxu0 0.0
  %1944 = vmatpush1.msra.mxu0 0.0
  %1945 = vmatprep.subr.mxu0 0.0
  %1946 = vmatpush1.msra.mxu0 0.0
  %1947 = vmatprep.subr.mxu0 0.0
  %1948 = vmatpush1.msra.mxu0 0.0
  %1949 = vmatprep.subr.mxu0 0.0
  %1950 = vmatpush1.msra.mxu0 0.0
  %1951 = vmatprep.subr.mxu0 0.0
  %1952 = vmatpush1.msra.mxu0 0.0
  %1953 = vmatprep.subr.mxu0 0.0
  %1954 = vmatpush1.msra.mxu0 0.0
  %1955 = vmatprep.subr.mxu0 0.0
  %1956 = vmatpush1.msra.mxu0 0.0
  %1957 = vmatprep.subr.mxu0 0.0
  %1958 = vmatpush1.msra.mxu0 0.0
  %1959 = vmatprep.subr.mxu0 0.0
  %1960 = vmatpush1.msra.mxu0 0.0
  %1961 = vmatprep.subr.mxu0 0.0
  %1962 = vmatpush1.msra.mxu0 0.0
  %1963 = vmatprep.subr.mxu0 0.0
  %1964 = vmatpush1.msra.mxu0 0.0
  %1965 = vmatprep.subr.mxu0 0.0
  %1966 = vmatpush1.msra.mxu0 0.0
  %1967 = vmatprep.subr.mxu0 0.0
  %1968 = vmatpush1.msra.mxu0 0.0
  %1969 = vmatprep.subr.mxu0 0.0
  %1970 = vmatpush1.msra.mxu0 0.0
  %1971 = vmatprep.subr.mxu0 0.0
  %1972 = vmatpush1.msra.mxu0 0.0
  %1973 = vmatprep.subr.mxu0 0.0
  %1974 = vmatpush1.msra.mxu0 0.0
  %1975 = vmatprep.subr.mxu0 0.0
  %1976 = vmatpush1.msra.mxu0 0.0
  %1977 = vmatprep.subr.mxu0 0.0
  %1978 = vmatpush1.msra.mxu0 0.0
  %1979 = vmatprep.subr.mxu0 0.0
  %1980 = vmatpush1.msra.mxu0 0.0
  %1981 = vmatprep.subr.mxu0 0.0
  %1982 = vmatpush1.msra.mxu0 0.0
  %1983 = vmatprep.subr.mxu0 0.0
  %1984 = vmatpush1.msra.mxu0 0.0
  %1985 = vmatprep.subr.mxu0 0.0
  %1986 = vmatpush1.msra.mxu0 0.0
  %1987 = vmatprep.subr.mxu0 0.0
  %1988 = vmatpush1.msra.mxu0 0.0
  %1989 = vmatprep.subr.mxu0 0.0
  %1990 = vmatpush1.msra.mxu0 0.0
  %1991 = vmatprep.subr.mxu0 0.0
  %1992 = vmatpush1.msra.mxu0 0.0
  %1993 = vmatprep.mubr.f32.mxu0 0.0
  %1994 = vmatmul.mubr.f32.gmra.mrb[0].mxu0 %v165
  %v1995 = vpop.f32.mrb[0].mxu0
  %v1996 = vadd.f32 0.0, %v1995
  %v1997 = vpop.f32.mrb[0].mxu0
  %v1998 = vadd.f32 0.0, %v1997
  %1999 = vdwg.mxu0
  %2000 = vmatprep.subr.mxu0 %v266
  %2001 = vmatpush1.msra.mxu0 %v264
  %2002 = vmatprep.subr.mxu0 0.0
  %2003 = vmatpush1.msra.mxu0 0.0
  %2004 = vmatprep.subr.mxu0 0.0
  %2005 = vmatpush1.msra.mxu0 0.0
  %2006 = vmatprep.subr.mxu0 0.0
  %2007 = vmatpush1.msra.mxu0 0.0
  %2008 = vmatprep.subr.mxu0 0.0
  %2009 = vmatpush1.msra.mxu0 0.0
  %2010 = vmatprep.subr.mxu0 0.0
  %2011 = vmatpush1.msra.mxu0 0.0
  %2012 = vmatprep.subr.mxu0 0.0
  %2013 = vmatpush1.msra.mxu0 0.0
  %2014 = vmatprep.subr.mxu0 0.0
  %2015 = vmatpush1.msra.mxu0 0.0
  %2016 = vmatprep.subr.mxu0 0.0
  %2017 = vmatpush1.msra.mxu0 0.0
  %2018 = vmatprep.subr.mxu0 0.0
  %2019 = vmatpush1.msra.mxu0 0.0
  %2020 = vmatprep.subr.mxu0 0.0
  %2021 = vmatpush1.msra.mxu0 0.0
  %2022 = vmatprep.subr.mxu0 0.0
  %2023 = vmatpush1.msra.mxu0 0.0
  %2024 = vmatprep.subr.mxu0 0.0
  %2025 = vmatpush1.msra.mxu0 0.0
  %2026 = vmatprep.subr.mxu0 0.0
  %2027 = vmatpush1.msra.mxu0 0.0
  %2028 = vmatprep.subr.mxu0 0.0
  %2029 = vmatpush1.msra.mxu0 0.0
  %2030 = vmatprep.subr.mxu0 0.0
  %2031 = vmatpush1.msra.mxu0 0.0
  %2032 = vmatprep.subr.mxu0 0.0
  %2033 = vmatpush1.msra.mxu0 0.0
  %2034 = vmatprep.subr.mxu0 0.0
  %2035 = vmatpush1.msra.mxu0 0.0
  %2036 = vmatprep.subr.mxu0 0.0
  %2037 = vmatpush1.msra.mxu0 0.0
  %2038 = vmatprep.subr.mxu0 0.0
  %2039 = vmatpush1.msra.mxu0 0.0
  %2040 = vmatprep.subr.mxu0 0.0
  %2041 = vmatpush1.msra.mxu0 0.0
  %2042 = vmatprep.subr.mxu0 0.0
  %2043 = vmatpush1.msra.mxu0 0.0
  %2044 = vmatprep.subr.mxu0 0.0
  %2045 = vmatpush1.msra.mxu0 0.0
  %2046 = vmatprep.subr.mxu0 0.0
  %2047 = vmatpush1.msra.mxu0 0.0
  %2048 = vmatprep.subr.mxu0 0.0
  %2049 = vmatpush1.msra.mxu0 0.0
  %2050 = vmatprep.subr.mxu0 0.0
  %2051 = vmatpush1.msra.mxu0 0.0
  %2052 = vmatprep.subr.mxu0 0.0
  %2053 = vmatpush1.msra.mxu0 0.0
  %2054 = vmatprep.subr.mxu0 0.0
  %2055 = vmatpush1.msra.mxu0 0.0
  %2056 = vmatprep.subr.mxu0 0.0
  %2057 = vmatpush1.msra.mxu0 0.0
  %2058 = vmatprep.subr.mxu0 0.0
  %2059 = vmatpush1.msra.mxu0 0.0
  %2060 = vmatprep.subr.mxu0 0.0
  %2061 = vmatpush1.msra.mxu0 0.0
  %2062 = vmatprep.subr.mxu0 0.0
  %2063 = vmatpush1.msra.mxu0 0.0
  %2064 = vmatprep.mubr.f32.mxu0 0.0
  %2065 = vmatmul.mubr.f32.gmra.mrb[0].mxu0 %v165
  %v2066 = vpop.f32.mrb[0].mxu0
  %v2067 = vadd.f32 0.0, %v2066
  %v2068 = vpop.f32.mrb[0].mxu0
  %v2069 = vadd.f32 0.0, %v2068
  %2070 = vdwg.mxu0
  %2071 = vmatprep.subr.mxu0 %v270
  %2072 = vmatpush1.msra.mxu0 %v268
  %2073 = vmatprep.subr.mxu0 0.0
  %2074 = vmatpush1.msra.mxu0 0.0
  %2075 = vmatprep.subr.mxu0 0.0
  %2076 = vmatpush1.msra.mxu0 0.0
  %2077 = vmatprep.subr.mxu0 0.0
  %2078 = vmatpush1.msra.mxu0 0.0
  %2079 = vmatprep.subr.mxu0 0.0
  %2080 = vmatpush1.msra.mxu0 0.0
  %2081 = vmatprep.subr.mxu0 0.0
  %2082 = vmatpush1.msra.mxu0 0.0
  %2083 = vmatprep.subr.mxu0 0.0
  %2084 = vmatpush1.msra.mxu0 0.0
  %2085 = vmatprep.subr.mxu0 0.0
  %2086 = vmatpush1.msra.mxu0 0.0
  %2087 = vmatprep.subr.mxu0 0.0
  %2088 = vmatpush1.msra.mxu0 0.0
  %2089 = vmatprep.subr.mxu0 0.0
  %2090 = vmatpush1.msra.mxu0 0.0
  %2091 = vmatprep.subr.mxu0 0.0
  %2092 = vmatpush1.msra.mxu0 0.0
  %2093 = vmatprep.subr.mxu0 0.0
  %2094 = vmatpush1.msra.mxu0 0.0
  %2095 = vmatprep.subr.mxu0 0.0
  %2096 = vmatpush1.msra.mxu0 0.0
  %2097 = vmatprep.subr.mxu0 0.0
  %2098 = vmatpush1.msra.mxu0 0.0
  %2099 = vmatprep.subr.mxu0 0.0
  %2100 = vmatpush1.msra.mxu0 0.0
  %2101 = vmatprep.subr.mxu0 0.0
  %2102 = vmatpush1.msra.mxu0 0.0
  %2103 = vmatprep.subr.mxu0 0.0
  %2104 = vmatpush1.msra.mxu0 0.0
  %2105 = vmatprep.subr.mxu0 0.0
  %2106 = vmatpush1.msra.mxu0 0.0
  %2107 = vmatprep.subr.mxu0 0.0
  %2108 = vmatpush1.msra.mxu0 0.0
  %2109 = vmatprep.subr.mxu0 0.0
  %2110 = vmatpush1.msra.mxu0 0.0
  %2111 = vmatprep.subr.mxu0 0.0
  %2112 = vmatpush1.msra.mxu0 0.0
  %2113 = vmatprep.subr.mxu0 0.0
  %2114 = vmatpush1.msra.mxu0 0.0
  %2115 = vmatprep.subr.mxu0 0.0
  %2116 = vmatpush1.msra.mxu0 0.0
  %2117 = vmatprep.subr.mxu0 0.0
  %2118 = vmatpush1.msra.mxu0 0.0
  %2119 = vmatprep.subr.mxu0 0.0
  %2120 = vmatpush1.msra.mxu0 0.0
  %2121 = vmatprep.subr.mxu0 0.0
  %2122 = vmatpush1.msra.mxu0 0.0
  %2123 = vmatprep.subr.mxu0 0.0
  %2124 = vmatpush1.msra.mxu0 0.0
  %2125 = vmatprep.subr.mxu0 0.0
  %2126 = vmatpush1.msra.mxu0 0.0
  %2127 = vmatprep.subr.mxu0 0.0
  %2128 = vmatpush1.msra.mxu0 0.0
  %2129 = vmatprep.subr.mxu0 0.0
  %2130 = vmatpush1.msra.mxu0 0.0
  %2131 = vmatprep.subr.mxu0 0.0
  %2132 = vmatpush1.msra.mxu0 0.0
  %2133 = vmatprep.subr.mxu0 0.0
  %2134 = vmatpush1.msra.mxu0 0.0
  %2135 = vmatprep.mubr.f32.mxu0 0.0
  %2136 = vmatmul.mubr.f32.gmra.mrb[0].mxu0 %v165
  %v2137 = vpop.f32.mrb[0].mxu0
  %v2138 = vadd.f32 0.0, %v2137
  %v2139 = vpop.f32.mrb[0].mxu0
  %v2140 = vadd.f32 0.0, %v2139
  %2141 = vdwg.mxu0
  %2142 = vmatprep.subr.mxu0 %v274
  %2143 = vmatpush1.msra.mxu0 %v272
  %2144 = vmatprep.subr.mxu0 0.0
  %2145 = vmatpush1.msra.mxu0 0.0
  %2146 = vmatprep.subr.mxu0 0.0
  %2147 = vmatpush1.msra.mxu0 0.0
  %2148 = vmatprep.subr.mxu0 0.0
  %2149 = vmatpush1.msra.mxu0 0.0
  %2150 = vmatprep.subr.mxu0 0.0
  %2151 = vmatpush1.msra.mxu0 0.0
  %2152 = vmatprep.subr.mxu0 0.0
  %2153 = vmatpush1.msra.mxu0 0.0
  %2154 = vmatprep.subr.mxu0 0.0
  %2155 = vmatpush1.msra.mxu0 0.0
  %2156 = vmatprep.subr.mxu0 0.0
  %2157 = vmatpush1.msra.mxu0 0.0
  %2158 = vmatprep.subr.mxu0 0.0
  %2159 = vmatpush1.msra.mxu0 0.0
  %2160 = vmatprep.subr.mxu0 0.0
  %2161 = vmatpush1.msra.mxu0 0.0
  %2162 = vmatprep.subr.mxu0 0.0
  %2163 = vmatpush1.msra.mxu0 0.0
  %2164 = vmatprep.subr.mxu0 0.0
  %2165 = vmatpush1.msra.mxu0 0.0
  %2166 = vmatprep.subr.mxu0 0.0
  %2167 = vmatpush1.msra.mxu0 0.0
  %2168 = vmatprep.subr.mxu0 0.0
  %2169 = vmatpush1.msra.mxu0 0.0
  %2170 = vmatprep.subr.mxu0 0.0
  %2171 = vmatpush1.msra.mxu0 0.0
  %2172 = vmatprep.subr.mxu0 0.0
  %2173 = vmatpush1.msra.mxu0 0.0
  %2174 = vmatprep.subr.mxu0 0.0
  %2175 = vmatpush1.msra.mxu0 0.0
  %2176 = vmatprep.subr.mxu0 0.0
  %2177 = vmatpush1.msra.mxu0 0.0
  %2178 = vmatprep.subr.mxu0 0.0
  %2179 = vmatpush1.msra.mxu0 0.0
  %2180 = vmatprep.subr.mxu0 0.0
  %2181 = vmatpush1.msra.mxu0 0.0
  %2182 = vmatprep.subr.mxu0 0.0
  %2183 = vmatpush1.msra.mxu0 0.0
  %2184 = vmatprep.subr.mxu0 0.0
  %2185 = vmatpush1.msra.mxu0 0.0
  %2186 = vmatprep.subr.mxu0 0.0
  %2187 = vmatpush1.msra.mxu0 0.0
  %2188 = vmatprep.subr.mxu0 0.0
  %2189 = vmatpush1.msra.mxu0 0.0
  %2190 = vmatprep.subr.mxu0 0.0
  %2191 = vmatpush1.msra.mxu0 0.0
  %2192 = vmatprep.subr.mxu0 0.0
  %2193 = vmatpush1.msra.mxu0 0.0
  %2194 = vmatprep.subr.mxu0 0.0
  %2195 = vmatpush1.msra.mxu0 0.0
  %2196 = vmatprep.subr.mxu0 0.0
  %2197 = vmatpush1.msra.mxu0 0.0
  %2198 = vmatprep.subr.mxu0 0.0
  %2199 = vmatpush1.msra.mxu0 0.0
  %2200 = vmatprep.subr.mxu0 0.0
  %2201 = vmatpush1.msra.mxu0 0.0
  %2202 = vmatprep.subr.mxu0 0.0
  %2203 = vmatpush1.msra.mxu0 0.0
  %2204 = vmatprep.subr.mxu0 0.0
  %2205 = vmatpush1.msra.mxu0 0.0
  %2206 = vmatprep.mubr.f32.mxu0 0.0
  %2207 = vmatmul.mubr.f32.gmra.mrb[0].mxu0 %v165
  %v2208 = vpop.f32.mrb[0].mxu0
  %v2209 = vadd.f32 0.0, %v2208
  %v2210 = vpop.f32.mrb[0].mxu0
  %v2211 = vadd.f32 0.0, %v2210
  %2212 = vdwg.mxu0
  %2213 = vmatprep.subr.mxu0 %v278
  %2214 = vmatpush1.msra.mxu0 %v276
  %2215 = vmatprep.subr.mxu0 0.0
  %2216 = vmatpush1.msra.mxu0 0.0
  %2217 = vmatprep.subr.mxu0 0.0
  %2218 = vmatpush1.msra.mxu0 0.0
  %2219 = vmatprep.subr.mxu0 0.0
  %2220 = vmatpush1.msra.mxu0 0.0
  %2221 = vmatprep.subr.mxu0 0.0
  %2222 = vmatpush1.msra.mxu0 0.0
  %2223 = vmatprep.subr.mxu0 0.0
  %2224 = vmatpush1.msra.mxu0 0.0
  %2225 = vmatprep.subr.mxu0 0.0
  %2226 = vmatpush1.msra.mxu0 0.0
  %2227 = vmatprep.subr.mxu0 0.0
  %2228 = vmatpush1.msra.mxu0 0.0
  %2229 = vmatprep.subr.mxu0 0.0
  %2230 = vmatpush1.msra.mxu0 0.0
  %2231 = vmatprep.subr.mxu0 0.0
  %2232 = vmatpush1.msra.mxu0 0.0
  %2233 = vmatprep.subr.mxu0 0.0
  %2234 = vmatpush1.msra.mxu0 0.0
  %2235 = vmatprep.subr.mxu0 0.0
  %2236 = vmatpush1.msra.mxu0 0.0
  %2237 = vmatprep.subr.mxu0 0.0
  %2238 = vmatpush1.msra.mxu0 0.0
  %2239 = vmatprep.subr.mxu0 0.0
  %2240 = vmatpush1.msra.mxu0 0.0
  %2241 = vmatprep.subr.mxu0 0.0
  %2242 = vmatpush1.msra.mxu0 0.0
  %2243 = vmatprep.subr.mxu0 0.0
  %2244 = vmatpush1.msra.mxu0 0.0
  %2245 = vmatprep.subr.mxu0 0.0
  %2246 = vmatpush1.msra.mxu0 0.0
  %2247 = vmatprep.subr.mxu0 0.0
  %2248 = vmatpush1.msra.mxu0 0.0
  %2249 = vmatprep.subr.mxu0 0.0
  %2250 = vmatpush1.msra.mxu0 0.0
  %2251 = vmatprep.subr.mxu0 0.0
  %2252 = vmatpush1.msra.mxu0 0.0
  %2253 = vmatprep.subr.mxu0 0.0
  %2254 = vmatpush1.msra.mxu0 0.0
  %2255 = vmatprep.subr.mxu0 0.0
  %2256 = vmatpush1.msra.mxu0 0.0
  %2257 = vmatprep.subr.mxu0 0.0
  %2258 = vmatpush1.msra.mxu0 0.0
  %2259 = vmatprep.subr.mxu0 0.0
  %2260 = vmatpush1.msra.mxu0 0.0
  %2261 = vmatprep.subr.mxu0 0.0
  %2262 = vmatpush1.msra.mxu0 0.0
  %2263 = vmatprep.subr.mxu0 0.0
  %2264 = vmatpush1.msra.mxu0 0.0
  %2265 = vmatprep.subr.mxu0 0.0
  %2266 = vmatpush1.msra.mxu0 0.0
  %2267 = vmatprep.subr.mxu0 0.0
  %2268 = vmatpush1.msra.mxu0 0.0
  %2269 = vmatprep.subr.mxu0 0.0
  %2270 = vmatpush1.msra.mxu0 0.0
  %2271 = vmatprep.subr.mxu0 0.0
  %2272 = vmatpush1.msra.mxu0 0.0
  %2273 = vmatprep.subr.mxu0 0.0
  %2274 = vmatpush1.msra.mxu0 0.0
  %2275 = vmatprep.subr.mxu0 0.0
  %2276 = vmatpush1.msra.mxu0 0.0
  %2277 = vmatprep.mubr.f32.mxu0 0.0
  %2278 = vmatmul.mubr.f32.gmra.mrb[0].mxu0 %v165
  %v2279 = vpop.f32.mrb[0].mxu0
  %v2280 = vadd.f32 0.0, %v2279
  %v2281 = vpop.f32.mrb[0].mxu0
  %v2282 = vadd.f32 0.0, %v2281
  %2283 = vdwg.mxu0
  %2284 = vmatprep.subr.mxu0 %v282
  %2285 = vmatpush1.msra.mxu0 %v280
  %2286 = vmatprep.subr.mxu0 0.0
  %2287 = vmatpush1.msra.mxu0 0.0
  %2288 = vmatprep.subr.mxu0 0.0
  %2289 = vmatpush1.msra.mxu0 0.0
  %2290 = vmatprep.subr.mxu0 0.0
  %2291 = vmatpush1.msra.mxu0 0.0
  %2292 = vmatprep.subr.mxu0 0.0
  %2293 = vmatpush1.msra.mxu0 0.0
  %2294 = vmatprep.subr.mxu0 0.0
  %2295 = vmatpush1.msra.mxu0 0.0
  %2296 = vmatprep.subr.mxu0 0.0
  %2297 = vmatpush1.msra.mxu0 0.0
  %2298 = vmatprep.subr.mxu0 0.0
  %2299 = vmatpush1.msra.mxu0 0.0
  %2300 = vmatprep.subr.mxu0 0.0
  %2301 = vmatpush1.msra.mxu0 0.0
  %2302 = vmatprep.subr.mxu0 0.0
  %2303 = vmatpush1.msra.mxu0 0.0
  %2304 = vmatprep.subr.mxu0 0.0
  %2305 = vmatpush1.msra.mxu0 0.0
  %2306 = vmatprep.subr.mxu0 0.0
  %2307 = vmatpush1.msra.mxu0 0.0
  %2308 = vmatprep.subr.mxu0 0.0
  %2309 = vmatpush1.msra.mxu0 0.0
  %2310 = vmatprep.subr.mxu0 0.0
  %2311 = vmatpush1.msra.mxu0 0.0
  %2312 = vmatprep.subr.mxu0 0.0
  %2313 = vmatpush1.msra.mxu0 0.0
  %2314 = vmatprep.subr.mxu0 0.0
  %2315 = vmatpush1.msra.mxu0 0.0
  %2316 = vmatprep.subr.mxu0 0.0
  %2317 = vmatpush1.msra.mxu0 0.0
  %2318 = vmatprep.subr.mxu0 0.0
  %2319 = vmatpush1.msra.mxu0 0.0
  %2320 = vmatprep.subr.mxu0 0.0
  %2321 = vmatpush1.msra.mxu0 0.0
  %2322 = vmatprep.subr.mxu0 0.0
  %2323 = vmatpush1.msra.mxu0 0.0
  %2324 = vmatprep.subr.mxu0 0.0
  %2325 = vmatpush1.msra.mxu0 0.0
  %2326 = vmatprep.subr.mxu0 0.0
  %2327 = vmatpush1.msra.mxu0 0.0
  %2328 = vmatprep.subr.mxu0 0.0
  %2329 = vmatpush1.msra.mxu0 0.0
  %2330 = vmatprep.subr.mxu0 0.0
  %2331 = vmatpush1.msra.mxu0 0.0
  %2332 = vmatprep.subr.mxu0 0.0
  %2333 = vmatpush1.msra.mxu0 0.0
  %2334 = vmatprep.subr.mxu0 0.0
  %2335 = vmatpush1.msra.mxu0 0.0
  %2336 = vmatprep.subr.mxu0 0.0
  %2337 = vmatpush1.msra.mxu0 0.0
  %2338 = vmatprep.subr.mxu0 0.0
  %2339 = vmatpush1.msra.mxu0 0.0
  %2340 = vmatprep.subr.mxu0 0.0
  %2341 = vmatpush1.msra.mxu0 0.0
  %2342 = vmatprep.subr.mxu0 0.0
  %2343 = vmatpush1.msra.mxu0 0.0
  %2344 = vmatprep.subr.mxu0 0.0
  %2345 = vmatpush1.msra.mxu0 0.0
  %2346 = vmatprep.subr.mxu0 0.0
  %2347 = vmatpush1.msra.mxu0 0.0
  %2348 = vmatprep.mubr.f32.mxu0 0.0
  %2349 = vmatmul.mubr.f32.gmra.mrb[0].mxu0 %v165
  %v2350 = vpop.f32.mrb[0].mxu0
  %v2351 = vadd.f32 0.0, %v2350
  %v2352 = vpop.f32.mrb[0].mxu0
  %v2353 = vadd.f32 0.0, %v2352
  %2354 = vdwg.mxu0
  %2355 = vmatprep.subr.mxu0 %v286
  %2356 = vmatpush1.msra.mxu0 %v284
  %2357 = vmatprep.subr.mxu0 0.0
  %2358 = vmatpush1.msra.mxu0 0.0
  %2359 = vmatprep.subr.mxu0 0.0
  %2360 = vmatpush1.msra.mxu0 0.0
  %2361 = vmatprep.subr.mxu0 0.0
  %2362 = vmatpush1.msra.mxu0 0.0
  %2363 = vmatprep.subr.mxu0 0.0
  %2364 = vmatpush1.msra.mxu0 0.0
  %2365 = vmatprep.subr.mxu0 0.0
  %2366 = vmatpush1.msra.mxu0 0.0
  %2367 = vmatprep.subr.mxu0 0.0
  %2368 = vmatpush1.msra.mxu0 0.0
  %2369 = vmatprep.subr.mxu0 0.0
  %2370 = vmatpush1.msra.mxu0 0.0
  %2371 = vmatprep.subr.mxu0 0.0
  %2372 = vmatpush1.msra.mxu0 0.0
  %2373 = vmatprep.subr.mxu0 0.0
  %2374 = vmatpush1.msra.mxu0 0.0
  %2375 = vmatprep.subr.mxu0 0.0
  %2376 = vmatpush1.msra.mxu0 0.0
  %2377 = vmatprep.subr.mxu0 0.0
  %2378 = vmatpush1.msra.mxu0 0.0
  %2379 = vmatprep.subr.mxu0 0.0
  %2380 = vmatpush1.msra.mxu0 0.0
  %2381 = vmatprep.subr.mxu0 0.0
  %2382 = vmatpush1.msra.mxu0 0.0
  %2383 = vmatprep.subr.mxu0 0.0
  %2384 = vmatpush1.msra.mxu0 0.0
  %2385 = vmatprep.subr.mxu0 0.0
  %2386 = vmatpush1.msra.mxu0 0.0
  %2387 = vmatprep.subr.mxu0 0.0
  %2388 = vmatpush1.msra.mxu0 0.0
  %2389 = vmatprep.subr.mxu0 0.0
  %2390 = vmatpush1.msra.mxu0 0.0
  %2391 = vmatprep.subr.mxu0 0.0
  %2392 = vmatpush1.msra.mxu0 0.0
  %2393 = vmatprep.subr.mxu0 0.0
  %2394 = vmatpush1.msra.mxu0 0.0
  %2395 = vmatprep.subr.mxu0 0.0
  %2396 = vmatpush1.msra.mxu0 0.0
  %2397 = vmatprep.subr.mxu0 0.0
  %2398 = vmatpush1.msra.mxu0 0.0
  %2399 = vmatprep.subr.mxu0 0.0
  %2400 = vmatpush1.msra.mxu0 0.0
  %2401 = vmatprep.subr.mxu0 0.0
  %2402 = vmatpush1.msra.mxu0 0.0
  %2403 = vmatprep.subr.mxu0 0.0
  %2404 = vmatpush1.msra.mxu0 0.0
  %2405 = vmatprep.subr.mxu0 0.0
  %2406 = vmatpush1.msra.mxu0 0.0
  %2407 = vmatprep.subr.mxu0 0.0
  %2408 = vmatpush1.msra.mxu0 0.0
  %2409 = vmatprep.subr.mxu0 0.0
  %2410 = vmatpush1.msra.mxu0 0.0
  %2411 = vmatprep.subr.mxu0 0.0
  %2412 = vmatpush1.msra.mxu0 0.0
  %2413 = vmatprep.subr.mxu0 0.0
  %2414 = vmatpush1.msra.mxu0 0.0
  %2415 = vmatprep.subr.mxu0 0.0
  %2416 = vmatpush1.msra.mxu0 0.0
  %2417 = vmatprep.subr.mxu0 0.0
  %2418 = vmatpush1.msra.mxu0 0.0
  %2419 = vmatprep.mubr.f32.mxu0 0.0
  %2420 = vmatmul.mubr.f32.gmra.mrb[0].mxu0 %v165
  %v2421 = vpop.f32.mrb[0].mxu0
  %v2422 = vadd.f32 0.0, %v2421
  %v2423 = vpop.f32.mrb[0].mxu0
  %v2424 = vadd.f32 0.0, %v2423
  %2425 = vdwg.mxu0
  %2426 = vmatprep.subr.mxu0 %v290
  %2427 = vmatpush1.msra.mxu0 %v288
  %2428 = vmatprep.subr.mxu0 0.0
  %2429 = vmatpush1.msra.mxu0 0.0
  %2430 = vmatprep.subr.mxu0 0.0
  %2431 = vmatpush1.msra.mxu0 0.0
  %2432 = vmatprep.subr.mxu0 0.0
  %2433 = vmatpush1.msra.mxu0 0.0
  %2434 = vmatprep.subr.mxu0 0.0
  %2435 = vmatpush1.msra.mxu0 0.0
  %2436 = vmatprep.subr.mxu0 0.0
  %2437 = vmatpush1.msra.mxu0 0.0
  %2438 = vmatprep.subr.mxu0 0.0
  %2439 = vmatpush1.msra.mxu0 0.0
  %2440 = vmatprep.subr.mxu0 0.0
  %2441 = vmatpush1.msra.mxu0 0.0
  %2442 = vmatprep.subr.mxu0 0.0
  %2443 = vmatpush1.msra.mxu0 0.0
  %2444 = vmatprep.subr.mxu0 0.0
  %2445 = vmatpush1.msra.mxu0 0.0
  %2446 = vmatprep.subr.mxu0 0.0
  %2447 = vmatpush1.msra.mxu0 0.0
  %2448 = vmatprep.subr.mxu0 0.0
  %2449 = vmatpush1.msra.mxu0 0.0
  %2450 = vmatprep.subr.mxu0 0.0
  %2451 = vmatpush1.msra.mxu0 0.0
  %2452 = vmatprep.subr.mxu0 0.0
  %2453 = vmatpush1.msra.mxu0 0.0
  %2454 = vmatprep.subr.mxu0 0.0
  %2455 = vmatpush1.msra.mxu0 0.0
  %2456 = vmatprep.subr.mxu0 0.0
  %2457 = vmatpush1.msra.mxu0 0.0
  %2458 = vmatprep.subr.mxu0 0.0
  %2459 = vmatpush1.msra.mxu0 0.0
  %2460 = vmatprep.subr.mxu0 0.0
  %2461 = vmatpush1.msra.mxu0 0.0
  %2462 = vmatprep.subr.mxu0 0.0
  %2463 = vmatpush1.msra.mxu0 0.0
  %2464 = vmatprep.subr.mxu0 0.0
  %2465 = vmatpush1.msra.mxu0 0.0
  %2466 = vmatprep.subr.mxu0 0.0
  %2467 = vmatpush1.msra.mxu0 0.0
  %2468 = vmatprep.subr.mxu0 0.0
  %2469 = vmatpush1.msra.mxu0 0.0
  %2470 = vmatprep.subr.mxu0 0.0
  %2471 = vmatpush1.msra.mxu0 0.0
  %2472 = vmatprep.subr.mxu0 0.0
  %2473 = vmatpush1.msra.mxu0 0.0
  %2474 = vmatprep.subr.mxu0 0.0
  %2475 = vmatpush1.msra.mxu0 0.0
  %2476 = vmatprep.subr.mxu0 0.0
  %2477 = vmatpush1.msra.mxu0 0.0
  %2478 = vmatprep.subr.mxu0 0.0
  %2479 = vmatpush1.msra.mxu0 0.0
  %2480 = vmatprep.subr.mxu0 0.0
  %2481 = vmatpush1.msra.mxu0 0.0
  %2482 = vmatprep.subr.mxu0 0.0
  %2483 = vmatpush1.msra.mxu0 0.0
  %2484 = vmatprep.subr.mxu0 0.0
  %2485 = vmatpush1.msra.mxu0 0.0
  %2486 = vmatprep.subr.mxu0 0.0
  %2487 = vmatpush1.msra.mxu0 0.0
  %2488 = vmatprep.subr.mxu0 0.0
  %2489 = vmatpush1.msra.mxu0 0.0
  %2490 = vmatprep.mubr.f32.mxu0 0.0
  %2491 = vmatmul.mubr.f32.gmra.mrb[0].mxu0 %v165
  %v2492 = vpop.f32.mrb[0].mxu0
  %v2493 = vadd.f32 0.0, %v2492
  %v2494 = vpop.f32.mrb[0].mxu0
  %v2495 = vadd.f32 0.0, %v2494
  %2496 = vdwg.mxu0
  %2497 = vmatprep.subr.mxu0 %v294
  %2498 = vmatpush1.msra.mxu0 %v292
  %2499 = vmatprep.subr.mxu0 0.0
  %2500 = vmatpush1.msra.mxu0 0.0
  %2501 = vmatprep.subr.mxu0 0.0
  %2502 = vmatpush1.msra.mxu0 0.0
  %2503 = vmatprep.subr.mxu0 0.0
  %2504 = vmatpush1.msra.mxu0 0.0
  %2505 = vmatprep.subr.mxu0 0.0
  %2506 = vmatpush1.msra.mxu0 0.0
  %2507 = vmatprep.subr.mxu0 0.0
  %2508 = vmatpush1.msra.mxu0 0.0
  %2509 = vmatprep.subr.mxu0 0.0
  %2510 = vmatpush1.msra.mxu0 0.0
  %2511 = vmatprep.subr.mxu0 0.0
  %2512 = vmatpush1.msra.mxu0 0.0
  %2513 = vmatprep.subr.mxu0 0.0
  %2514 = vmatpush1.msra.mxu0 0.0
  %2515 = vmatprep.subr.mxu0 0.0
  %2516 = vmatpush1.msra.mxu0 0.0
  %2517 = vmatprep.subr.mxu0 0.0
  %2518 = vmatpush1.msra.mxu0 0.0
  %2519 = vmatprep.subr.mxu0 0.0
  %2520 = vmatpush1.msra.mxu0 0.0
  %2521 = vmatprep.subr.mxu0 0.0
  %2522 = vmatpush1.msra.mxu0 0.0
  %2523 = vmatprep.subr.mxu0 0.0
  %2524 = vmatpush1.msra.mxu0 0.0
  %2525 = vmatprep.subr.mxu0 0.0
  %2526 = vmatpush1.msra.mxu0 0.0
  %2527 = vmatprep.subr.mxu0 0.0
  %2528 = vmatpush1.msra.mxu0 0.0
  %2529 = vmatprep.subr.mxu0 0.0
  %2530 = vmatpush1.msra.mxu0 0.0
  %2531 = vmatprep.subr.mxu0 0.0
  %2532 = vmatpush1.msra.mxu0 0.0
  %2533 = vmatprep.subr.mxu0 0.0
  %2534 = vmatpush1.msra.mxu0 0.0
  %2535 = vmatprep.subr.mxu0 0.0
  %2536 = vmatpush1.msra.mxu0 0.0
  %2537 = vmatprep.subr.mxu0 0.0
  %2538 = vmatpush1.msra.mxu0 0.0
  %2539 = vmatprep.subr.mxu0 0.0
  %2540 = vmatpush1.msra.mxu0 0.0
  %2541 = vmatprep.subr.mxu0 0.0
  %2542 = vmatpush1.msra.mxu0 0.0
  %2543 = vmatprep.subr.mxu0 0.0
  %2544 = vmatpush1.msra.mxu0 0.0
  %2545 = vmatprep.subr.mxu0 0.0
  %2546 = vmatpush1.msra.mxu0 0.0
  %2547 = vmatprep.subr.mxu0 0.0
  %2548 = vmatpush1.msra.mxu0 0.0
  %2549 = vmatprep.subr.mxu0 0.0
  %2550 = vmatpush1.msra.mxu0 0.0
  %2551 = vmatprep.subr.mxu0 0.0
  %2552 = vmatpush1.msra.mxu0 0.0
  %2553 = vmatprep.subr.mxu0 0.0
  %2554 = vmatpush1.msra.mxu0 0.0
  %2555 = vmatprep.subr.mxu0 0.0
  %2556 = vmatpush1.msra.mxu0 0.0
  %2557 = vmatprep.subr.mxu0 0.0
  %2558 = vmatpush1.msra.mxu0 0.0
  %2559 = vmatprep.subr.mxu0 0.0
  %2560 = vmatpush1.msra.mxu0 0.0
  %2561 = vmatprep.mubr.f32.mxu0 0.0
  %2562 = vmatmul.mubr.f32.gmra.mrb[0].mxu0 %v165
  %v2563 = vpop.f32.mrb[0].mxu0
  %v2564 = vadd.f32 0.0, %v2563
  %v2565 = vpop.f32.mrb[0].mxu0
  %v2566 = vadd.f32 0.0, %v2565
  %2567 = vdwg.mxu0
  %v2600 = vcombine.high %v33, %v33
  %v2601 = vcombine.high %v34, %v34
  %v2602 = vcombine.high %v35, %v35
  %v2603 = vcombine.high %v36, %v36
  %v2604 = vcombine.high %v37, %v37
  %v2605 = vcombine.high %v38, %v38
  %v2606 = vcombine.high %v39, %v39
  %v2607 = vcombine.high %v40, %v40
  %v2608 = vcombine.high %v41, %v41
  %v2609 = vcombine.high %v42, %v42
  %v2610 = vcombine.high %v43, %v43
  %v2611 = vcombine.high %v44, %v44
  %v2612 = vcombine.high %v45, %v45
  %v2613 = vcombine.high %v46, %v46
  %v2614 = vcombine.high %v47, %v47
  %v2615 = vcombine.high %v48, %v48
  %v2616 = vcombine.high %v49, %v49
  %v2617 = vcombine.high %v50, %v50
  %v2618 = vcombine.high %v51, %v51
  %v2619 = vcombine.high %v52, %v52
  %v2620 = vcombine.high %v53, %v53
  %v2621 = vcombine.high %v54, %v54
  %v2622 = vcombine.high %v55, %v55
  %v2623 = vcombine.high %v56, %v56
  %v2624 = vcombine.high %v57, %v57
  %v2625 = vcombine.high %v58, %v58
  %v2626 = vcombine.high %v59, %v59
  %v2627 = vcombine.high %v60, %v60
  %v2628 = vcombine.high %v61, %v61
  %v2629 = vcombine.high %v62, %v62
  %v2630 = vcombine.high %v63, %v63
  %v2631 = vcombine.high %v64, %v64
  %v2633 = vsel %vm163, %v32, 0
  %v2635 = vsel %vm167, %v33, 0
  %v2637 = vsel %vm167, %v2600, 0
  %v2639 = vsel %vm167, %v34, 0
  %v2641 = vsel %vm167, %v2601, 0
  %v2643 = vsel %vm167, %v35, 0
  %v2645 = vsel %vm167, %v2602, 0
  %v2647 = vsel %vm167, %v36, 0
  %v2649 = vsel %vm167, %v2603, 0
  %v2651 = vsel %vm167, %v37, 0
  %v2653 = vsel %vm167, %v2604, 0
  %v2655 = vsel %vm167, %v38, 0
  %v2657 = vsel %vm167, %v2605, 0
  %v2659 = vsel %vm167, %v39, 0
  %v2661 = vsel %vm167, %v2606, 0
  %v2663 = vsel %vm167, %v40, 0
  %v2665 = vsel %vm167, %v2607, 0
  %v2667 = vsel %vm167, %v41, 0
  %v2669 = vsel %vm167, %v2608, 0
  %v2671 = vsel %vm167, %v42, 0
  %v2673 = vsel %vm167, %v2609, 0
  %v2675 = vsel %vm167, %v43, 0
  %v2677 = vsel %vm167, %v2610, 0
  %v2679 = vsel %vm167, %v44, 0
  %v2681 = vsel %vm167, %v2611, 0
  %v2683 = vsel %vm167, %v45, 0
  %v2685 = vsel %vm167, %v2612, 0
  %v2687 = vsel %vm167, %v46, 0
  %v2689 = vsel %vm167, %v2613, 0
  %v2691 = vsel %vm167, %v47, 0
  %v2693 = vsel %vm167, %v2614, 0
  %v2695 = vsel %vm167, %v48, 0
  %v2697 = vsel %vm167, %v2615, 0
  %v2699 = vsel %vm167, %v49, 0
  %v2701 = vsel %vm167, %v2616, 0
  %v2703 = vsel %vm167, %v50, 0
  %v2705 = vsel %vm167, %v2617, 0
  %v2707 = vsel %vm167, %v51, 0
  %v2709 = vsel %vm167, %v2618, 0
  %v2711 = vsel %vm167, %v52, 0
  %v2713 = vsel %vm167, %v2619, 0
  %v2715 = vsel %vm167, %v53, 0
  %v2717 = vsel %vm167, %v2620, 0
  %v2719 = vsel %vm167, %v54, 0
  %v2721 = vsel %vm167, %v2621, 0
  %v2723 = vsel %vm167, %v55, 0
  %v2725 = vsel %vm167, %v2622, 0
  %v2727 = vsel %vm167, %v56, 0
  %v2729 = vsel %vm167, %v2623, 0
  %v2731 = vsel %vm167, %v57, 0
  %v2733 = vsel %vm167, %v2624, 0
  %v2735 = vsel %vm167, %v58, 0
  %v2737 = vsel %vm167, %v2625, 0
  %v2739 = vsel %vm167, %v59, 0
  %v2741 = vsel %vm167, %v2626, 0
  %v2743 = vsel %vm167, %v60, 0
  %v2745 = vsel %vm167, %v2627, 0
  %v2747 = vsel %vm167, %v61, 0
  %v2749 = vsel %vm167, %v2628, 0
  %v2751 = vsel %vm167, %v62, 0
  %v2753 = vsel %vm167, %v2629, 0
  %v2755 = vsel %vm167, %v63, 0
  %v2757 = vsel %vm167, %v2630, 0
  %v2759 = vsel %vm167, %v64, 0
  %v2761 = vsel %vm167, %v2631, 0
  %2763 = vmatprep.subr.mxu0 %v2637
  %2764 = vmatpush1.msra.mxu0 %v2635
  %2765 = vmatprep.subr.mxu0 0.0
  %2766 = vmatpush1.msra.mxu0 0.0
  %2767 = vmatprep.subr.mxu0 0.0
  %2768 = vmatpush1.msra.mxu0 0.0
  %2769 = vmatprep.subr.mxu0 0.0
  %2770 = vmatpush1.msra.mxu0 0.0
  %2771 = vmatprep.subr.mxu0 0.0
  %2772 = vmatpush1.msra.mxu0 0.0
  %2773 = vmatprep.subr.mxu0 0.0
  %2774 = vmatpush1.msra.mxu0 0.0
  %2775 = vmatprep.subr.mxu0 0.0
  %2776 = vmatpush1.msra.mxu0 0.0
  %2777 = vmatprep.subr.mxu0 0.0
  %2778 = vmatpush1.msra.mxu0 0.0
  %2779 = vmatprep.subr.mxu0 0.0
  %2780 = vmatpush1.msra.mxu0 0.0
  %2781 = vmatprep.subr.mxu0 0.0
  %2782 = vmatpush1.msra.mxu0 0.0
  %2783 = vmatprep.subr.mxu0 0.0
  %2784 = vmatpush1.msra.mxu0 0.0
  %2785 = vmatprep.subr.mxu0 0.0
  %2786 = vmatpush1.msra.mxu0 0.0
  %2787 = vmatprep.subr.mxu0 0.0
  %2788 = vmatpush1.msra.mxu0 0.0
  %2789 = vmatprep.subr.mxu0 0.0
  %2790 = vmatpush1.msra.mxu0 0.0
  %2791 = vmatprep.subr.mxu0 0.0
  %2792 = vmatpush1.msra.mxu0 0.0
  %2793 = vmatprep.subr.mxu0 0.0
  %2794 = vmatpush1.msra.mxu0 0.0
  %2795 = vmatprep.subr.mxu0 0.0
  %2796 = vmatpush1.msra.mxu0 0.0
  %2797 = vmatprep.subr.mxu0 0.0
  %2798 = vmatpush1.msra.mxu0 0.0
  %2799 = vmatprep.subr.mxu0 0.0
  %2800 = vmatpush1.msra.mxu0 0.0
  %2801 = vmatprep.subr.mxu0 0.0
  %2802 = vmatpush1.msra.mxu0 0.0
  %2803 = vmatprep.subr.mxu0 0.0
  %2804 = vmatpush1.msra.mxu0 0.0
  %2805 = vmatprep.subr.mxu0 0.0
  %2806 = vmatpush1.msra.mxu0 0.0
  %2807 = vmatprep.subr.mxu0 0.0
  %2808 = vmatpush1.msra.mxu0 0.0
  %2809 = vmatprep.subr.mxu0 0.0
  %2810 = vmatpush1.msra.mxu0 0.0
  %2811 = vmatprep.subr.mxu0 0.0
  %2812 = vmatpush1.msra.mxu0 0.0
  %2813 = vmatprep.subr.mxu0 0.0
  %2814 = vmatpush1.msra.mxu0 0.0
  %2815 = vmatprep.subr.mxu0 0.0
  %2816 = vmatpush1.msra.mxu0 0.0
  %2817 = vmatprep.subr.mxu0 0.0
  %2818 = vmatpush1.msra.mxu0 0.0
  %2819 = vmatprep.subr.mxu0 0.0
  %2820 = vmatpush1.msra.mxu0 0.0
  %2821 = vmatprep.subr.mxu0 0.0
  %2822 = vmatpush1.msra.mxu0 0.0
  %2823 = vmatprep.subr.mxu0 0.0
  %2824 = vmatpush1.msra.mxu0 0.0
  %2825 = vmatprep.subr.mxu0 0.0
  %2826 = vmatpush1.msra.mxu0 0.0
  %2827 = vmatprep.mubr.f32.mxu0 0.0
  %2828 = vmatmul.mubr.f32.gmra.mrb[0].mxu0 %v2633
  %v2829 = vpop.f32.mrb[0].mxu0
  %v2830 = vadd.f32 %v363, %v2829
  %v2831 = vpop.f32.mrb[0].mxu0
  %v2832 = vadd.f32 %v365, %v2831
  %2833 = vdwg.mxu0
  %2834 = vmatprep.subr.mxu0 %v2641
  %2835 = vmatpush1.msra.mxu0 %v2639
  %2836 = vmatprep.subr.mxu0 0.0
  %2837 = vmatpush1.msra.mxu0 0.0
  %2838 = vmatprep.subr.mxu0 0.0
  %2839 = vmatpush1.msra.mxu0 0.0
  %2840 = vmatprep.subr.mxu0 0.0
  %2841 = vmatpush1.msra.mxu0 0.0
  %2842 = vmatprep.subr.mxu0 0.0
  %2843 = vmatpush1.msra.mxu0 0.0
  %2844 = vmatprep.subr.mxu0 0.0
  %2845 = vmatpush1.msra.mxu0 0.0
  %2846 = vmatprep.subr.mxu0 0.0
  %2847 = vmatpush1.msra.mxu0 0.0
  %2848 = vmatprep.subr.mxu0 0.0
  %2849 = vmatpush1.msra.mxu0 0.0
  %2850 = vmatprep.subr.mxu0 0.0
  %2851 = vmatpush1.msra.mxu0 0.0
  %2852 = vmatprep.subr.mxu0 0.0
  %2853 = vmatpush1.msra.mxu0 0.0
  %2854 = vmatprep.subr.mxu0 0.0
  %2855 = vmatpush1.msra.mxu0 0.0
  %2856 = vmatprep.subr.mxu0 0.0
  %2857 = vmatpush1.msra.mxu0 0.0
  %2858 = vmatprep.subr.mxu0 0.0
  %2859 = vmatpush1.msra.mxu0 0.0
  %2860 = vmatprep.subr.mxu0 0.0
  %2861 = vmatpush1.msra.mxu0 0.0
  %2862 = vmatprep.subr.mxu0 0.0
  %2863 = vmatpush1.msra.mxu0 0.0
  %2864 = vmatprep.subr.mxu0 0.0
  %2865 = vmatpush1.msra.mxu0 0.0
  %2866 = vmatprep.subr.mxu0 0.0
  %2867 = vmatpush1.msra.mxu0 0.0
  %2868 = vmatprep.subr.mxu0 0.0
  %2869 = vmatpush1.msra.mxu0 0.0
  %2870 = vmatprep.subr.mxu0 0.0
  %2871 = vmatpush1.msra.mxu0 0.0
  %2872 = vmatprep.subr.mxu0 0.0
  %2873 = vmatpush1.msra.mxu0 0.0
  %2874 = vmatprep.subr.mxu0 0.0
  %2875 = vmatpush1.msra.mxu0 0.0
  %2876 = vmatprep.subr.mxu0 0.0
  %2877 = vmatpush1.msra.mxu0 0.0
  %2878 = vmatprep.subr.mxu0 0.0
  %2879 = vmatpush1.msra.mxu0 0.0
  %2880 = vmatprep.subr.mxu0 0.0
  %2881 = vmatpush1.msra.mxu0 0.0
  %2882 = vmatprep.subr.mxu0 0.0
  %2883 = vmatpush1.msra.mxu0 0.0
  %2884 = vmatprep.subr.mxu0 0.0
  %2885 = vmatpush1.msra.mxu0 0.0
  %2886 = vmatprep.subr.mxu0 0.0
  %2887 = vmatpush1.msra.mxu0 0.0
  %2888 = vmatprep.subr.mxu0 0.0
  %2889 = vmatpush1.msra.mxu0 0.0
  %2890 = vmatprep.subr.mxu0 0.0
  %2891 = vmatpush1.msra.mxu0 0.0
  %2892 = vmatprep.subr.mxu0 0.0
  %2893 = vmatpush1.msra.mxu0 0.0
  %2894 = vmatprep.subr.mxu0 0.0
  %2895 = vmatpush1.msra.mxu0 0.0
  %2896 = vmatprep.subr.mxu0 0.0
  %2897 = vmatpush1.msra.mxu0 0.0
  %2898 = vmatprep.mubr.f32.mxu0 0.0
  %2899 = vmatmul.mubr.f32.gmra.mrb[0].mxu0 %v2633
  %v2900 = vpop.f32.mrb[0].mxu0
  %v2901 = vadd.f32 %v434, %v2900
  %v2902 = vpop.f32.mrb[0].mxu0
  %v2903 = vadd.f32 %v436, %v2902
  %2904 = vdwg.mxu0
  %2905 = vmatprep.subr.mxu0 %v2645
  %2906 = vmatpush1.msra.mxu0 %v2643
  %2907 = vmatprep.subr.mxu0 0.0
  %2908 = vmatpush1.msra.mxu0 0.0
  %2909 = vmatprep.subr.mxu0 0.0
  %2910 = vmatpush1.msra.mxu0 0.0
  %2911 = vmatprep.subr.mxu0 0.0
  %2912 = vmatpush1.msra.mxu0 0.0
  %2913 = vmatprep.subr.mxu0 0.0
  %2914 = vmatpush1.msra.mxu0 0.0
  %2915 = vmatprep.subr.mxu0 0.0
  %2916 = vmatpush1.msra.mxu0 0.0
  %2917 = vmatprep.subr.mxu0 0.0
  %2918 = vmatpush1.msra.mxu0 0.0
  %2919 = vmatprep.subr.mxu0 0.0
  %2920 = vmatpush1.msra.mxu0 0.0
  %2921 = vmatprep.subr.mxu0 0.0
  %2922 = vmatpush1.msra.mxu0 0.0
  %2923 = vmatprep.subr.mxu0 0.0
  %2924 = vmatpush1.msra.mxu0 0.0
  %2925 = vmatprep.subr.mxu0 0.0
  %2926 = vmatpush1.msra.mxu0 0.0
  %2927 = vmatprep.subr.mxu0 0.0
  %2928 = vmatpush1.msra.mxu0 0.0
  %2929 = vmatprep.subr.mxu0 0.0
  %2930 = vmatpush1.msra.mxu0 0.0
  %2931 = vmatprep.subr.mxu0 0.0
  %2932 = vmatpush1.msra.mxu0 0.0
  %2933 = vmatprep.subr.mxu0 0.0
  %2934 = vmatpush1.msra.mxu0 0.0
  %2935 = vmatprep.subr.mxu0 0.0
  %2936 = vmatpush1.msra.mxu0 0.0
  %2937 = vmatprep.subr.mxu0 0.0
  %2938 = vmatpush1.msra.mxu0 0.0
  %2939 = vmatprep.subr.mxu0 0.0
  %2940 = vmatpush1.msra.mxu0 0.0
  %2941 = vmatprep.subr.mxu0 0.0
  %2942 = vmatpush1.msra.mxu0 0.0
  %2943 = vmatprep.subr.mxu0 0.0
  %2944 = vmatpush1.msra.mxu0 0.0
  %2945 = vmatprep.subr.mxu0 0.0
  %2946 = vmatpush1.msra.mxu0 0.0
  %2947 = vmatprep.subr.mxu0 0.0
  %2948 = vmatpush1.msra.mxu0 0.0
  %2949 = vmatprep.subr.mxu0 0.0
  %2950 = vmatpush1.msra.mxu0 0.0
  %2951 = vmatprep.subr.mxu0 0.0
  %2952 = vmatpush1.msra.mxu0 0.0
  %2953 = vmatprep.subr.mxu0 0.0
  %2954 = vmatpush1.msra.mxu0 0.0
  %2955 = vmatprep.subr.mxu0 0.0
  %2956 = vmatpush1.msra.mxu0 0.0
  %2957 = vmatprep.subr.mxu0 0.0
  %2958 = vmatpush1.msra.mxu0 0.0
  %2959 = vmatprep.subr.mxu0 0.0
  %2960 = vmatpush1.msra.mxu0 0.0
  %2961 = vmatprep.subr.mxu0 0.0
  %2962 = vmatpush1.msra.mxu0 0.0
  %2963 = vmatprep.subr.mxu0 0.0
  %2964 = vmatpush1.msra.mxu0 0.0
  %2965 = vmatprep.subr.mxu0 0.0
  %2966 = vmatpush1.msra.mxu0 0.0
  %2967 = vmatprep.subr.mxu0 0.0
  %2968 = vmatpush1.msra.mxu0 0.0
  %2969 = vmatprep.mubr.f32.mxu0 0.0
  %2970 = vmatmul.mubr.f32.gmra.mrb[0].mxu0 %v2633
  %v2971 = vpop.f32.mrb[0].mxu0
  %v2972 = vadd.f32 %v505, %v2971
  %v2973 = vpop.f32.mrb[0].mxu0
  %v2974 = vadd.f32 %v507, %v2973
  %2975 = vdwg.mxu0
  %2976 = vmatprep.subr.mxu0 %v2649
  %2977 = vmatpush1.msra.mxu0 %v2647
  %2978 = vmatprep.subr.mxu0 0.0
  %2979 = vmatpush1.msra.mxu0 0.0
  %2980 = vmatprep.subr.mxu0 0.0
  %2981 = vmatpush1.msra.mxu0 0.0
  %2982 = vmatprep.subr.mxu0 0.0
  %2983 = vmatpush1.msra.mxu0 0.0
  %2984 = vmatprep.subr.mxu0 0.0
  %2985 = vmatpush1.msra.mxu0 0.0
  %2986 = vmatprep.subr.mxu0 0.0
  %2987 = vmatpush1.msra.mxu0 0.0
  %2988 = vmatprep.subr.mxu0 0.0
  %2989 = vmatpush1.msra.mxu0 0.0
  %2990 = vmatprep.subr.mxu0 0.0
  %2991 = vmatpush1.msra.mxu0 0.0
  %2992 = vmatprep.subr.mxu0 0.0
  %2993 = vmatpush1.msra.mxu0 0.0
  %2994 = vmatprep.subr.mxu0 0.0
  %2995 = vmatpush1.msra.mxu0 0.0
  %2996 = vmatprep.subr.mxu0 0.0
  %2997 = vmatpush1.msra.mxu0 0.0
  %2998 = vmatprep.subr.mxu0 0.0
  %2999 = vmatpush1.msra.mxu0 0.0
  %3000 = vmatprep.subr.mxu0 0.0
  %3001 = vmatpush1.msra.mxu0 0.0
  %3002 = vmatprep.subr.mxu0 0.0
  %3003 = vmatpush1.msra.mxu0 0.0
  %3004 = vmatprep.subr.mxu0 0.0
  %3005 = vmatpush1.msra.mxu0 0.0
  %3006 = vmatprep.subr.mxu0 0.0
  %3007 = vmatpush1.msra.mxu0 0.0
  %3008 = vmatprep.subr.mxu0 0.0
  %3009 = vmatpush1.msra.mxu0 0.0
  %3010 = vmatprep.subr.mxu0 0.0
  %3011 = vmatpush1.msra.mxu0 0.0
  %3012 = vmatprep.subr.mxu0 0.0
  %3013 = vmatpush1.msra.mxu0 0.0
  %3014 = vmatprep.subr.mxu0 0.0
  %3015 = vmatpush1.msra.mxu0 0.0
  %3016 = vmatprep.subr.mxu0 0.0
  %3017 = vmatpush1.msra.mxu0 0.0
  %3018 = vmatprep.subr.mxu0 0.0
  %3019 = vmatpush1.msra.mxu0 0.0
  %3020 = vmatprep.subr.mxu0 0.0
  %3021 = vmatpush1.msra.mxu0 0.0
  %3022 = vmatprep.subr.mxu0 0.0
  %3023 = vmatpush1.msra.mxu0 0.0
  %3024 = vmatprep.subr.mxu0 0.0
  %3025 = vmatpush1.msra.mxu0 0.0
  %3026 = vmatprep.subr.mxu0 0.0
  %3027 = vmatpush1.msra.mxu0 0.0
  %3028 = vmatprep.subr.mxu0 0.0
  %3029 = vmatpush1.msra.mxu0 0.0
  %3030 = vmatprep.subr.mxu0 0.0
  %3031 = vmatpush1.msra.mxu0 0.0
  %3032 = vmatprep.subr.mxu0 0.0
  %3033 = vmatpush1.msra.mxu0 0.0
  %3034 = vmatprep.subr.mxu0 0.0
  %3035 = vmatpush1.msra.mxu0 0.0
  %3036 = vmatprep.subr.mxu0 0.0
  %3037 = vmatpush1.msra.mxu0 0.0
  %3038 = vmatprep.subr.mxu0 0.0
  %3039 = vmatpush1.msra.mxu0 0.0
  %3040 = vmatprep.mubr.f32.mxu0 0.0
  %3041 = vmatmul.mubr.f32.gmra.mrb[0].mxu0 %v2633
  %v3042 = vpop.f32.mrb[0].mxu0
  %v3043 = vadd.f32 %v576, %v3042
  %v3044 = vpop.f32.mrb[0].mxu0
  %v3045 = vadd.f32 %v578, %v3044
  %3046 = vdwg.mxu0
  %3047 = vmatprep.subr.mxu0 %v2653
  %3048 = vmatpush1.msra.mxu0 %v2651
  %3049 = vmatprep.subr.mxu0 0.0
  %3050 = vmatpush1.msra.mxu0 0.0
  %3051 = vmatprep.subr.mxu0 0.0
  %3052 = vmatpush1.msra.mxu0 0.0
  %3053 = vmatprep.subr.mxu0 0.0
  %3054 = vmatpush1.msra.mxu0 0.0
  %3055 = vmatprep.subr.mxu0 0.0
  %3056 = vmatpush1.msra.mxu0 0.0
  %3057 = vmatprep.subr.mxu0 0.0
  %3058 = vmatpush1.msra.mxu0 0.0
  %3059 = vmatprep.subr.mxu0 0.0
  %3060 = vmatpush1.msra.mxu0 0.0
  %3061 = vmatprep.subr.mxu0 0.0
  %3062 = vmatpush1.msra.mxu0 0.0
  %3063 = vmatprep.subr.mxu0 0.0
  %3064 = vmatpush1.msra.mxu0 0.0
  %3065 = vmatprep.subr.mxu0 0.0
  %3066 = vmatpush1.msra.mxu0 0.0
  %3067 = vmatprep.subr.mxu0 0.0
  %3068 = vmatpush1.msra.mxu0 0.0
  %3069 = vmatprep.subr.mxu0 0.0
  %3070 = vmatpush1.msra.mxu0 0.0
  %3071 = vmatprep.subr.mxu0 0.0
  %3072 = vmatpush1.msra.mxu0 0.0
  %3073 = vmatprep.subr.mxu0 0.0
  %3074 = vmatpush1.msra.mxu0 0.0
  %3075 = vmatprep.subr.mxu0 0.0
  %3076 = vmatpush1.msra.mxu0 0.0
  %3077 = vmatprep.subr.mxu0 0.0
  %3078 = vmatpush1.msra.mxu0 0.0
  %3079 = vmatprep.subr.mxu0 0.0
  %3080 = vmatpush1.msra.mxu0 0.0
  %3081 = vmatprep.subr.mxu0 0.0
  %3082 = vmatpush1.msra.mxu0 0.0
  %3083 = vmatprep.subr.mxu0 0.0
  %3084 = vmatpush1.msra.mxu0 0.0
  %3085 = vmatprep.subr.mxu0 0.0
  %3086 = vmatpush1.msra.mxu0 0.0
  %3087 = vmatprep.subr.mxu0 0.0
  %3088 = vmatpush1.msra.mxu0 0.0
  %3089 = vmatprep.subr.mxu0 0.0
  %3090 = vmatpush1.msra.mxu0 0.0
  %3091 = vmatprep.subr.mxu0 0.0
  %3092 = vmatpush1.msra.mxu0 0.0
  %3093 = vmatprep.subr.mxu0 0.0
  %3094 = vmatpush1.msra.mxu0 0.0
  %3095 = vmatprep.subr.mxu0 0.0
  %3096 = vmatpush1.msra.mxu0 0.0
  %3097 = vmatprep.subr.mxu0 0.0
  %3098 = vmatpush1.msra.mxu0 0.0
  %3099 = vmatprep.subr.mxu0 0.0
  %3100 = vmatpush1.msra.mxu0 0.0
  %3101 = vmatprep.subr.mxu0 0.0
  %3102 = vmatpush1.msra.mxu0 0.0
  %3103 = vmatprep.subr.mxu0 0.0
  %3104 = vmatpush1.msra.mxu0 0.0
  %3105 = vmatprep.subr.mxu0 0.0
  %3106 = vmatpush1.msra.mxu0 0.0
  %3107 = vmatprep.subr.mxu0 0.0
  %3108 = vmatpush1.msra.mxu0 0.0
  %3109 = vmatprep.subr.mxu0 0.0
  %3110 = vmatpush1.msra.mxu0 0.0
  %3111 = vmatprep.mubr.f32.mxu0 0.0
  %3112 = vmatmul.mubr.f32.gmra.mrb[0].mxu0 %v2633
  %v3113 = vpop.f32.mrb[0].mxu0
  %v3114 = vadd.f32 %v647, %v3113
  %v3115 = vpop.f32.mrb[0].mxu0
  %v3116 = vadd.f32 %v649, %v3115
  %3117 = vdwg.mxu0
  %3118 = vmatprep.subr.mxu0 %v2657
  %3119 = vmatpush1.msra.mxu0 %v2655
  %3120 = vmatprep.subr.mxu0 0.0
  %3121 = vmatpush1.msra.mxu0 0.0
  %3122 = vmatprep.subr.mxu0 0.0
  %3123 = vmatpush1.msra.mxu0 0.0
  %3124 = vmatprep.subr.mxu0 0.0
  %3125 = vmatpush1.msra.mxu0 0.0
  %3126 = vmatprep.subr.mxu0 0.0
  %3127 = vmatpush1.msra.mxu0 0.0
  %3128 = vmatprep.subr.mxu0 0.0
  %3129 = vmatpush1.msra.mxu0 0.0
  %3130 = vmatprep.subr.mxu0 0.0
  %3131 = vmatpush1.msra.mxu0 0.0
  %3132 = vmatprep.subr.mxu0 0.0
  %3133 = vmatpush1.msra.mxu0 0.0
  %3134 = vmatprep.subr.mxu0 0.0
  %3135 = vmatpush1.msra.mxu0 0.0
  %3136 = vmatprep.subr.mxu0 0.0
  %3137 = vmatpush1.msra.mxu0 0.0
  %3138 = vmatprep.subr.mxu0 0.0
  %3139 = vmatpush1.msra.mxu0 0.0
  %3140 = vmatprep.subr.mxu0 0.0
  %3141 = vmatpush1.msra.mxu0 0.0
  %3142 = vmatprep.subr.mxu0 0.0
  %3143 = vmatpush1.msra.mxu0 0.0
  %3144 = vmatprep.subr.mxu0 0.0
  %3145 = vmatpush1.msra.mxu0 0.0
  %3146 = vmatprep.subr.mxu0 0.0
  %3147 = vmatpush1.msra.mxu0 0.0
  %3148 = vmatprep.subr.mxu0 0.0
  %3149 = vmatpush1.msra.mxu0 0.0
  %3150 = vmatprep.subr.mxu0 0.0
  %3151 = vmatpush1.msra.mxu0 0.0
  %3152 = vmatprep.subr.mxu0 0.0
  %3153 = vmatpush1.msra.mxu0 0.0
  %3154 = vmatprep.subr.mxu0 0.0
  %3155 = vmatpush1.msra.mxu0 0.0
  %3156 = vmatprep.subr.mxu0 0.0
  %3157 = vmatpush1.msra.mxu0 0.0
  %3158 = vmatprep.subr.mxu0 0.0
  %3159 = vmatpush1.msra.mxu0 0.0
  %3160 = vmatprep.subr.mxu0 0.0
  %3161 = vmatpush1.msra.mxu0 0.0
  %3162 = vmatprep.subr.mxu0 0.0
  %3163 = vmatpush1.msra.mxu0 0.0
  %3164 = vmatprep.subr.mxu0 0.0
  %3165 = vmatpush1.msra.mxu0 0.0
  %3166 = vmatprep.subr.mxu0 0.0
  %3167 = vmatpush1.msra.mxu0 0.0
  %3168 = vmatprep.subr.mxu0 0.0
  %3169 = vmatpush1.msra.mxu0 0.0
  %3170 = vmatprep.subr.mxu0 0.0
  %3171 = vmatpush1.msra.mxu0 0.0
  %3172 = vmatprep.subr.mxu0 0.0
  %3173 = vmatpush1.msra.mxu0 0.0
  %3174 = vmatprep.subr.mxu0 0.0
  %3175 = vmatpush1.msra.mxu0 0.0
  %3176 = vmatprep.subr.mxu0 0.0
  %3177 = vmatpush1.msra.mxu0 0.0
  %3178 = vmatprep.subr.mxu0 0.0
  %3179 = vmatpush1.msra.mxu0 0.0
  %3180 = vmatprep.subr.mxu0 0.0
  %3181 = vmatpush1.msra.mxu0 0.0
  %3182 = vmatprep.mubr.f32.mxu0 0.0
  %3183 = vmatmul.mubr.f32.gmra.mrb[0].mxu0 %v2633
  %v3184 = vpop.f32.mrb[0].mxu0
  %v3185 = vadd.f32 %v718, %v3184
  %v3186 = vpop.f32.mrb[0].mxu0
  %v3187 = vadd.f32 %v720, %v3186
  %3188 = vdwg.mxu0
  %3189 = vmatprep.subr.mxu0 %v2661
  %3190 = vmatpush1.msra.mxu0 %v2659
  %3191 = vmatprep.subr.mxu0 0.0
  %3192 = vmatpush1.msra.mxu0 0.0
  %3193 = vmatprep.subr.mxu0 0.0
  %3194 = vmatpush1.msra.mxu0 0.0
  %3195 = vmatprep.subr.mxu0 0.0
  %3196 = vmatpush1.msra.mxu0 0.0
  %3197 = vmatprep.subr.mxu0 0.0
  %3198 = vmatpush1.msra.mxu0 0.0
  %3199 = vmatprep.subr.mxu0 0.0
  %3200 = vmatpush1.msra.mxu0 0.0
  %3201 = vmatprep.subr.mxu0 0.0
  %3202 = vmatpush1.msra.mxu0 0.0
  %3203 = vmatprep.subr.mxu0 0.0
  %3204 = vmatpush1.msra.mxu0 0.0
  %3205 = vmatprep.subr.mxu0 0.0
  %3206 = vmatpush1.msra.mxu0 0.0
  %3207 = vmatprep.subr.mxu0 0.0
  %3208 = vmatpush1.msra.mxu0 0.0
  %3209 = vmatprep.subr.mxu0 0.0
  %3210 = vmatpush1.msra.mxu0 0.0
  %3211 = vmatprep.subr.mxu0 0.0
  %3212 = vmatpush1.msra.mxu0 0.0
  %3213 = vmatprep.subr.mxu0 0.0
  %3214 = vmatpush1.msra.mxu0 0.0
  %3215 = vmatprep.subr.mxu0 0.0
  %3216 = vmatpush1.msra.mxu0 0.0
  %3217 = vmatprep.subr.mxu0 0.0
  %3218 = vmatpush1.msra.mxu0 0.0
  %3219 = vmatprep.subr.mxu0 0.0
  %3220 = vmatpush1.msra.mxu0 0.0
  %3221 = vmatprep.subr.mxu0 0.0
  %3222 = vmatpush1.msra.mxu0 0.0
  %3223 = vmatprep.subr.mxu0 0.0
  %3224 = vmatpush1.msra.mxu0 0.0
  %3225 = vmatprep.subr.mxu0 0.0
  %3226 = vmatpush1.msra.mxu0 0.0
  %3227 = vmatprep.subr.mxu0 0.0
  %3228 = vmatpush1.msra.mxu0 0.0
  %3229 = vmatprep.subr.mxu0 0.0
  %3230 = vmatpush1.msra.mxu0 0.0
  %3231 = vmatprep.subr.mxu0 0.0
  %3232 = vmatpush1.msra.mxu0 0.0
  %3233 = vmatprep.subr.mxu0 0.0
  %3234 = vmatpush1.msra.mxu0 0.0
  %3235 = vmatprep.subr.mxu0 0.0
  %3236 = vmatpush1.msra.mxu0 0.0
  %3237 = vmatprep.subr.mxu0 0.0
  %3238 = vmatpush1.msra.mxu0 0.0
  %3239 = vmatprep.subr.mxu0 0.0
  %3240 = vmatpush1.msra.mxu0 0.0
  %3241 = vmatprep.subr.mxu0 0.0
  %3242 = vmatpush1.msra.mxu0 0.0
  %3243 = vmatprep.subr.mxu0 0.0
  %3244 = vmatpush1.msra.mxu0 0.0
  %3245 = vmatprep.subr.mxu0 0.0
  %3246 = vmatpush1.msra.mxu0 0.0
  %3247 = vmatprep.subr.mxu0 0.0
  %3248 = vmatpush1.msra.mxu0 0.0
  %3249 = vmatprep.subr.mxu0 0.0
  %3250 = vmatpush1.msra.mxu0 0.0
  %3251 = vmatprep.subr.mxu0 0.0
  %3252 = vmatpush1.msra.mxu0 0.0
  %3253 = vmatprep.mubr.f32.mxu0 0.0
  %3254 = vmatmul.mubr.f32.gmra.mrb[0].mxu0 %v2633
  %v3255 = vpop.f32.mrb[0].mxu0
  %v3256 = vadd.f32 %v789, %v3255
  %v3257 = vpop.f32.mrb[0].mxu0
  %v3258 = vadd.f32 %v791, %v3257
  %3259 = vdwg.mxu0
  %3260 = vmatprep.subr.mxu0 %v2665
  %3261 = vmatpush1.msra.mxu0 %v2663
  %3262 = vmatprep.subr.mxu0 0.0
  %3263 = vmatpush1.msra.mxu0 0.0
  %3264 = vmatprep.subr.mxu0 0.0
  %3265 = vmatpush1.msra.mxu0 0.0
  %3266 = vmatprep.subr.mxu0 0.0
  %3267 = vmatpush1.msra.mxu0 0.0
  %3268 = vmatprep.subr.mxu0 0.0
  %3269 = vmatpush1.msra.mxu0 0.0
  %3270 = vmatprep.subr.mxu0 0.0
  %3271 = vmatpush1.msra.mxu0 0.0
  %3272 = vmatprep.subr.mxu0 0.0
  %3273 = vmatpush1.msra.mxu0 0.0
  %3274 = vmatprep.subr.mxu0 0.0
  %3275 = vmatpush1.msra.mxu0 0.0
  %3276 = vmatprep.subr.mxu0 0.0
  %3277 = vmatpush1.msra.mxu0 0.0
  %3278 = vmatprep.subr.mxu0 0.0
  %3279 = vmatpush1.msra.mxu0 0.0
  %3280 = vmatprep.subr.mxu0 0.0
  %3281 = vmatpush1.msra.mxu0 0.0
  %3282 = vmatprep.subr.mxu0 0.0
  %3283 = vmatpush1.msra.mxu0 0.0
  %3284 = vmatprep.subr.mxu0 0.0
  %3285 = vmatpush1.msra.mxu0 0.0
  %3286 = vmatprep.subr.mxu0 0.0
  %3287 = vmatpush1.msra.mxu0 0.0
  %3288 = vmatprep.subr.mxu0 0.0
  %3289 = vmatpush1.msra.mxu0 0.0
  %3290 = vmatprep.subr.mxu0 0.0
  %3291 = vmatpush1.msra.mxu0 0.0
  %3292 = vmatprep.subr.mxu0 0.0
  %3293 = vmatpush1.msra.mxu0 0.0
  %3294 = vmatprep.subr.mxu0 0.0
  %3295 = vmatpush1.msra.mxu0 0.0
  %3296 = vmatprep.subr.mxu0 0.0
  %3297 = vmatpush1.msra.mxu0 0.0
  %3298 = vmatprep.subr.mxu0 0.0
  %3299 = vmatpush1.msra.mxu0 0.0
  %3300 = vmatprep.subr.mxu0 0.0
  %3301 = vmatpush1.msra.mxu0 0.0
  %3302 = vmatprep.subr.mxu0 0.0
  %3303 = vmatpush1.msra.mxu0 0.0
  %3304 = vmatprep.subr.mxu0 0.0
  %3305 = vmatpush1.msra.mxu0 0.0
  %3306 = vmatprep.subr.mxu0 0.0
  %3307 = vmatpush1.msra.mxu0 0.0
  %3308 = vmatprep.subr.mxu0 0.0
  %3309 = vmatpush1.msra.mxu0 0.0
  %3310 = vmatprep.subr.mxu0 0.0
  %3311 = vmatpush1.msra.mxu0 0.0
  %3312 = vmatprep.subr.mxu0 0.0
  %3313 = vmatpush1.msra.mxu0 0.0
  %3314 = vmatprep.subr.mxu0 0.0
  %3315 = vmatpush1.msra.mxu0 0.0
  %3316 = vmatprep.subr.mxu0 0.0
  %3317 = vmatpush1.msra.mxu0 0.0
  %3318 = vmatprep.subr.mxu0 0.0
  %3319 = vmatpush1.msra.mxu0 0.0
  %3320 = vmatprep.subr.mxu0 0.0
  %3321 = vmatpush1.msra.mxu0 0.0
  %3322 = vmatprep.subr.mxu0 0.0
  %3323 = vmatpush1.msra.mxu0 0.0
  %3324 = vmatprep.mubr.f32.mxu0 0.0
  %3325 = vmatmul.mubr.f32.gmra.mrb[0].mxu0 %v2633
  %v3326 = vpop.f32.mrb[0].mxu0
  %v3327 = vadd.f32 %v860, %v3326
  %v3328 = vpop.f32.mrb[0].mxu0
  %v3329 = vadd.f32 %v862, %v3328
  %3330 = vdwg.mxu0
  %3331 = vmatprep.subr.mxu0 %v2669
  %3332 = vmatpush1.msra.mxu0 %v2667
  %3333 = vmatprep.subr.mxu0 0.0
  %3334 = vmatpush1.msra.mxu0 0.0
  %3335 = vmatprep.subr.mxu0 0.0
  %3336 = vmatpush1.msra.mxu0 0.0
  %3337 = vmatprep.subr.mxu0 0.0
  %3338 = vmatpush1.msra.mxu0 0.0
  %3339 = vmatprep.subr.mxu0 0.0
  %3340 = vmatpush1.msra.mxu0 0.0
  %3341 = vmatprep.subr.mxu0 0.0
  %3342 = vmatpush1.msra.mxu0 0.0
  %3343 = vmatprep.subr.mxu0 0.0
  %3344 = vmatpush1.msra.mxu0 0.0
  %3345 = vmatprep.subr.mxu0 0.0
  %3346 = vmatpush1.msra.mxu0 0.0
  %3347 = vmatprep.subr.mxu0 0.0
  %3348 = vmatpush1.msra.mxu0 0.0
  %3349 = vmatprep.subr.mxu0 0.0
  %3350 = vmatpush1.msra.mxu0 0.0
  %3351 = vmatprep.subr.mxu0 0.0
  %3352 = vmatpush1.msra.mxu0 0.0
  %3353 = vmatprep.subr.mxu0 0.0
  %3354 = vmatpush1.msra.mxu0 0.0
  %3355 = vmatprep.subr.mxu0 0.0
  %3356 = vmatpush1.msra.mxu0 0.0
  %3357 = vmatprep.subr.mxu0 0.0
  %3358 = vmatpush1.msra.mxu0 0.0
  %3359 = vmatprep.subr.mxu0 0.0
  %3360 = vmatpush1.msra.mxu0 0.0
  %3361 = vmatprep.subr.mxu0 0.0
  %3362 = vmatpush1.msra.mxu0 0.0
  %3363 = vmatprep.subr.mxu0 0.0
  %3364 = vmatpush1.msra.mxu0 0.0
  %3365 = vmatprep.subr.mxu0 0.0
  %3366 = vmatpush1.msra.mxu0 0.0
  %3367 = vmatprep.subr.mxu0 0.0
  %3368 = vmatpush1.msra.mxu0 0.0
  %3369 = vmatprep.subr.mxu0 0.0
  %3370 = vmatpush1.msra.mxu0 0.0
  %3371 = vmatprep.subr.mxu0 0.0
  %3372 = vmatpush1.msra.mxu0 0.0
  %3373 = vmatprep.subr.mxu0 0.0
  %3374 = vmatpush1.msra.mxu0 0.0
  %3375 = vmatprep.subr.mxu0 0.0
  %3376 = vmatpush1.msra.mxu0 0.0
  %3377 = vmatprep.subr.mxu0 0.0
  %3378 = vmatpush1.msra.mxu0 0.0
  %3379 = vmatprep.subr.mxu0 0.0
  %3380 = vmatpush1.msra.mxu0 0.0
  %3381 = vmatprep.subr.mxu0 0.0
  %3382 = vmatpush1.msra.mxu0 0.0
  %3383 = vmatprep.subr.mxu0 0.0
  %3384 = vmatpush1.msra.mxu0 0.0
  %3385 = vmatprep.subr.mxu0 0.0
  %3386 = vmatpush1.msra.mxu0 0.0
  %3387 = vmatprep.subr.mxu0 0.0
  %3388 = vmatpush1.msra.mxu0 0.0
  %3389 = vmatprep.subr.mxu0 0.0
  %3390 = vmatpush1.msra.mxu0 0.0
  %3391 = vmatprep.subr.mxu0 0.0
  %3392 = vmatpush1.msra.mxu0 0.0
  %3393 = vmatprep.subr.mxu0 0.0
  %3394 = vmatpush1.msra.mxu0 0.0
  %3395 = vmatprep.mubr.f32.mxu0 0.0
  %3396 = vmatmul.mubr.f32.gmra.mrb[0].mxu0 %v2633
  %v3397 = vpop.f32.mrb[0].mxu0
  %v3398 = vadd.f32 %v931, %v3397
  %v3399 = vpop.f32.mrb[0].mxu0
  %v3400 = vadd.f32 %v933, %v3399
  %3401 = vdwg.mxu0
  %3402 = vmatprep.subr.mxu0 %v2673
  %3403 = vmatpush1.msra.mxu0 %v2671
  %3404 = vmatprep.subr.mxu0 0.0
  %3405 = vmatpush1.msra.mxu0 0.0
  %3406 = vmatprep.subr.mxu0 0.0
  %3407 = vmatpush1.msra.mxu0 0.0
  %3408 = vmatprep.subr.mxu0 0.0
  %3409 = vmatpush1.msra.mxu0 0.0
  %3410 = vmatprep.subr.mxu0 0.0
  %3411 = vmatpush1.msra.mxu0 0.0
  %3412 = vmatprep.subr.mxu0 0.0
  %3413 = vmatpush1.msra.mxu0 0.0
  %3414 = vmatprep.subr.mxu0 0.0
  %3415 = vmatpush1.msra.mxu0 0.0
  %3416 = vmatprep.subr.mxu0 0.0
  %3417 = vmatpush1.msra.mxu0 0.0
  %3418 = vmatprep.subr.mxu0 0.0
  %3419 = vmatpush1.msra.mxu0 0.0
  %3420 = vmatprep.subr.mxu0 0.0
  %3421 = vmatpush1.msra.mxu0 0.0
  %3422 = vmatprep.subr.mxu0 0.0
  %3423 = vmatpush1.msra.mxu0 0.0
  %3424 = vmatprep.subr.mxu0 0.0
  %3425 = vmatpush1.msra.mxu0 0.0
  %3426 = vmatprep.subr.mxu0 0.0
  %3427 = vmatpush1.msra.mxu0 0.0
  %3428 = vmatprep.subr.mxu0 0.0
  %3429 = vmatpush1.msra.mxu0 0.0
  %3430 = vmatprep.subr.mxu0 0.0
  %3431 = vmatpush1.msra.mxu0 0.0
  %3432 = vmatprep.subr.mxu0 0.0
  %3433 = vmatpush1.msra.mxu0 0.0
  %3434 = vmatprep.subr.mxu0 0.0
  %3435 = vmatpush1.msra.mxu0 0.0
  %3436 = vmatprep.subr.mxu0 0.0
  %3437 = vmatpush1.msra.mxu0 0.0
  %3438 = vmatprep.subr.mxu0 0.0
  %3439 = vmatpush1.msra.mxu0 0.0
  %3440 = vmatprep.subr.mxu0 0.0
  %3441 = vmatpush1.msra.mxu0 0.0
  %3442 = vmatprep.subr.mxu0 0.0
  %3443 = vmatpush1.msra.mxu0 0.0
  %3444 = vmatprep.subr.mxu0 0.0
  %3445 = vmatpush1.msra.mxu0 0.0
  %3446 = vmatprep.subr.mxu0 0.0
  %3447 = vmatpush1.msra.mxu0 0.0
  %3448 = vmatprep.subr.mxu0 0.0
  %3449 = vmatpush1.msra.mxu0 0.0
  %3450 = vmatprep.subr.mxu0 0.0
  %3451 = vmatpush1.msra.mxu0 0.0
  %3452 = vmatprep.subr.mxu0 0.0
  %3453 = vmatpush1.msra.mxu0 0.0
  %3454 = vmatprep.subr.mxu0 0.0
  %3455 = vmatpush1.msra.mxu0 0.0
  %3456 = vmatprep.subr.mxu0 0.0
  %3457 = vmatpush1.msra.mxu0 0.0
  %3458 = vmatprep.subr.mxu0 0.0
  %3459 = vmatpush1.msra.mxu0 0.0
  %3460 = vmatprep.subr.mxu0 0.0
  %3461 = vmatpush1.msra.mxu0 0.0
  %3462 = vmatprep.subr.mxu0 0.0
  %3463 = vmatpush1.msra.mxu0 0.0
  %3464 = vmatprep.subr.mxu0 0.0
  %3465 = vmatpush1.msra.mxu0 0.0
  %3466 = vmatprep.mubr.f32.mxu0 0.0
  %3467 = vmatmul.mubr.f32.gmra.mrb[0].mxu0 %v2633
  %v3468 = vpop.f32.mrb[0].mxu0
  %v3469 = vadd.f32 %v1002, %v3468
  %v3470 = vpop.f32.mrb[0].mxu0
  %v3471 = vadd.f32 %v1004, %v3470
  %3472 = vdwg.mxu0
  %3473 = vmatprep.subr.mxu0 %v2677
  %3474 = vmatpush1.msra.mxu0 %v2675
  %3475 = vmatprep.subr.mxu0 0.0
  %3476 = vmatpush1.msra.mxu0 0.0
  %3477 = vmatprep.subr.mxu0 0.0
  %3478 = vmatpush1.msra.mxu0 0.0
  %3479 = vmatprep.subr.mxu0 0.0
  %3480 = vmatpush1.msra.mxu0 0.0
  %3481 = vmatprep.subr.mxu0 0.0
  %3482 = vmatpush1.msra.mxu0 0.0
  %3483 = vmatprep.subr.mxu0 0.0
  %3484 = vmatpush1.msra.mxu0 0.0
  %3485 = vmatprep.subr.mxu0 0.0
  %3486 = vmatpush1.msra.mxu0 0.0
  %3487 = vmatprep.subr.mxu0 0.0
  %3488 = vmatpush1.msra.mxu0 0.0
  %3489 = vmatprep.subr.mxu0 0.0
  %3490 = vmatpush1.msra.mxu0 0.0
  %3491 = vmatprep.subr.mxu0 0.0
  %3492 = vmatpush1.msra.mxu0 0.0
  %3493 = vmatprep.subr.mxu0 0.0
  %3494 = vmatpush1.msra.mxu0 0.0
  %3495 = vmatprep.subr.mxu0 0.0
  %3496 = vmatpush1.msra.mxu0 0.0
  %3497 = vmatprep.subr.mxu0 0.0
  %3498 = vmatpush1.msra.mxu0 0.0
  %3499 = vmatprep.subr.mxu0 0.0
  %3500 = vmatpush1.msra.mxu0 0.0
  %3501 = vmatprep.subr.mxu0 0.0
  %3502 = vmatpush1.msra.mxu0 0.0
  %3503 = vmatprep.subr.mxu0 0.0
  %3504 = vmatpush1.msra.mxu0 0.0
  %3505 = vmatprep.subr.mxu0 0.0
  %3506 = vmatpush1.msra.mxu0 0.0
  %3507 = vmatprep.subr.mxu0 0.0
  %3508 = vmatpush1.msra.mxu0 0.0
  %3509 = vmatprep.subr.mxu0 0.0
  %3510 = vmatpush1.msra.mxu0 0.0
  %3511 = vmatprep.subr.mxu0 0.0
  %3512 = vmatpush1.msra.mxu0 0.0
  %3513 = vmatprep.subr.mxu0 0.0
  %3514 = vmatpush1.msra.mxu0 0.0
  %3515 = vmatprep.subr.mxu0 0.0
  %3516 = vmatpush1.msra.mxu0 0.0
  %3517 = vmatprep.subr.mxu0 0.0
  %3518 = vmatpush1.msra.mxu0 0.0
  %3519 = vmatprep.subr.mxu0 0.0
  %3520 = vmatpush1.msra.mxu0 0.0
  %3521 = vmatprep.subr.mxu0 0.0
  %3522 = vmatpush1.msra.mxu0 0.0
  %3523 = vmatprep.subr.mxu0 0.0
  %3524 = vmatpush1.msra.mxu0 0.0
  %3525 = vmatprep.subr.mxu0 0.0
  %3526 = vmatpush1.msra.mxu0 0.0
  %3527 = vmatprep.subr.mxu0 0.0
  %3528 = vmatpush1.msra.mxu0 0.0
  %3529 = vmatprep.subr.mxu0 0.0
  %3530 = vmatpush1.msra.mxu0 0.0
  %3531 = vmatprep.subr.mxu0 0.0
  %3532 = vmatpush1.msra.mxu0 0.0
  %3533 = vmatprep.subr.mxu0 0.0
  %3534 = vmatpush1.msra.mxu0 0.0
  %3535 = vmatprep.subr.mxu0 0.0
  %3536 = vmatpush1.msra.mxu0 0.0
  %3537 = vmatprep.mubr.f32.mxu0 0.0
  %3538 = vmatmul.mubr.f32.gmra.mrb[0].mxu0 %v2633
  %v3539 = vpop.f32.mrb[0].mxu0
  %v3540 = vadd.f32 %v1073, %v3539
  %v3541 = vpop.f32.mrb[0].mxu0
  %v3542 = vadd.f32 %v1075, %v3541
  %3543 = vdwg.mxu0
  %3544 = vmatprep.subr.mxu0 %v2681
  %3545 = vmatpush1.msra.mxu0 %v2679
  %3546 = vmatprep.subr.mxu0 0.0
  %3547 = vmatpush1.msra.mxu0 0.0
  %3548 = vmatprep.subr.mxu0 0.0
  %3549 = vmatpush1.msra.mxu0 0.0
  %3550 = vmatprep.subr.mxu0 0.0
  %3551 = vmatpush1.msra.mxu0 0.0
  %3552 = vmatprep.subr.mxu0 0.0
  %3553 = vmatpush1.msra.mxu0 0.0
  %3554 = vmatprep.subr.mxu0 0.0
  %3555 = vmatpush1.msra.mxu0 0.0
  %3556 = vmatprep.subr.mxu0 0.0
  %3557 = vmatpush1.msra.mxu0 0.0
  %3558 = vmatprep.subr.mxu0 0.0
  %3559 = vmatpush1.msra.mxu0 0.0
  %3560 = vmatprep.subr.mxu0 0.0
  %3561 = vmatpush1.msra.mxu0 0.0
  %3562 = vmatprep.subr.mxu0 0.0
  %3563 = vmatpush1.msra.mxu0 0.0
  %3564 = vmatprep.subr.mxu0 0.0
  %3565 = vmatpush1.msra.mxu0 0.0
  %3566 = vmatprep.subr.mxu0 0.0
  %3567 = vmatpush1.msra.mxu0 0.0
  %3568 = vmatprep.subr.mxu0 0.0
  %3569 = vmatpush1.msra.mxu0 0.0
  %3570 = vmatprep.subr.mxu0 0.0
  %3571 = vmatpush1.msra.mxu0 0.0
  %3572 = vmatprep.subr.mxu0 0.0
  %3573 = vmatpush1.msra.mxu0 0.0
  %3574 = vmatprep.subr.mxu0 0.0
  %3575 = vmatpush1.msra.mxu0 0.0
  %3576 = vmatprep.subr.mxu0 0.0
  %3577 = vmatpush1.msra.mxu0 0.0
  %3578 = vmatprep.subr.mxu0 0.0
  %3579 = vmatpush1.msra.mxu0 0.0
  %3580 = vmatprep.subr.mxu0 0.0
  %3581 = vmatpush1.msra.mxu0 0.0
  %3582 = vmatprep.subr.mxu0 0.0
  %3583 = vmatpush1.msra.mxu0 0.0
  %3584 = vmatprep.subr.mxu0 0.0
  %3585 = vmatpush1.msra.mxu0 0.0
  %3586 = vmatprep.subr.mxu0 0.0
  %3587 = vmatpush1.msra.mxu0 0.0
  %3588 = vmatprep.subr.mxu0 0.0
  %3589 = vmatpush1.msra.mxu0 0.0
  %3590 = vmatprep.subr.mxu0 0.0
  %3591 = vmatpush1.msra.mxu0 0.0
  %3592 = vmatprep.subr.mxu0 0.0
  %3593 = vmatpush1.msra.mxu0 0.0
  %3594 = vmatprep.subr.mxu0 0.0
  %3595 = vmatpush1.msra.mxu0 0.0
  %3596 = vmatprep.subr.mxu0 0.0
  %3597 = vmatpush1.msra.mxu0 0.0
  %3598 = vmatprep.subr.mxu0 0.0
  %3599 = vmatpush1.msra.mxu0 0.0
  %3600 = vmatprep.subr.mxu0 0.0
  %3601 = vmatpush1.msra.mxu0 0.0
  %3602 = vmatprep.subr.mxu0 0.0
  %3603 = vmatpush1.msra.mxu0 0.0
  %3604 = vmatprep.subr.mxu0 0.0
  %3605 = vmatpush1.msra.mxu0 0.0
  %3606 = vmatprep.subr.mxu0 0.0
  %3607 = vmatpush1.msra.mxu0 0.0
  %3608 = vmatprep.mubr.f32.mxu0 0.0
  %3609 = vmatmul.mubr.f32.gmra.mrb[0].mxu0 %v2633
  %v3610 = vpop.f32.mrb[0].mxu0
  %v3611 = vadd.f32 %v1144, %v3610
  %v3612 = vpop.f32.mrb[0].mxu0
  %v3613 = vadd.f32 %v1146, %v3612
  %3614 = vdwg.mxu0
  %3615 = vmatprep.subr.mxu0 %v2685
  %3616 = vmatpush1.msra.mxu0 %v2683
  %3617 = vmatprep.subr.mxu0 0.0
  %3618 = vmatpush1.msra.mxu0 0.0
  %3619 = vmatprep.subr.mxu0 0.0
  %3620 = vmatpush1.msra.mxu0 0.0
  %3621 = vmatprep.subr.mxu0 0.0
  %3622 = vmatpush1.msra.mxu0 0.0
  %3623 = vmatprep.subr.mxu0 0.0
  %3624 = vmatpush1.msra.mxu0 0.0
  %3625 = vmatprep.subr.mxu0 0.0
  %3626 = vmatpush1.msra.mxu0 0.0
  %3627 = vmatprep.subr.mxu0 0.0
  %3628 = vmatpush1.msra.mxu0 0.0
  %3629 = vmatprep.subr.mxu0 0.0
  %3630 = vmatpush1.msra.mxu0 0.0
  %3631 = vmatprep.subr.mxu0 0.0
  %3632 = vmatpush1.msra.mxu0 0.0
  %3633 = vmatprep.subr.mxu0 0.0
  %3634 = vmatpush1.msra.mxu0 0.0
  %3635 = vmatprep.subr.mxu0 0.0
  %3636 = vmatpush1.msra.mxu0 0.0
  %3637 = vmatprep.subr.mxu0 0.0
  %3638 = vmatpush1.msra.mxu0 0.0
  %3639 = vmatprep.subr.mxu0 0.0
  %3640 = vmatpush1.msra.mxu0 0.0
  %3641 = vmatprep.subr.mxu0 0.0
  %3642 = vmatpush1.msra.mxu0 0.0
  %3643 = vmatprep.subr.mxu0 0.0
  %3644 = vmatpush1.msra.mxu0 0.0
  %3645 = vmatprep.subr.mxu0 0.0
  %3646 = vmatpush1.msra.mxu0 0.0
  %3647 = vmatprep.subr.mxu0 0.0
  %3648 = vmatpush1.msra.mxu0 0.0
  %3649 = vmatprep.subr.mxu0 0.0
  %3650 = vmatpush1.msra.mxu0 0.0
  %3651 = vmatprep.subr.mxu0 0.0
  %3652 = vmatpush1.msra.mxu0 0.0
  %3653 = vmatprep.subr.mxu0 0.0
  %3654 = vmatpush1.msra.mxu0 0.0
  %3655 = vmatprep.subr.mxu0 0.0
  %3656 = vmatpush1.msra.mxu0 0.0
  %3657 = vmatprep.subr.mxu0 0.0
  %3658 = vmatpush1.msra.mxu0 0.0
  %3659 = vmatprep.subr.mxu0 0.0
  %3660 = vmatpush1.msra.mxu0 0.0
  %3661 = vmatprep.subr.mxu0 0.0
  %3662 = vmatpush1.msra.mxu0 0.0
  %3663 = vmatprep.subr.mxu0 0.0
  %3664 = vmatpush1.msra.mxu0 0.0
  %3665 = vmatprep.subr.mxu0 0.0
  %3666 = vmatpush1.msra.mxu0 0.0
  %3667 = vmatprep.subr.mxu0 0.0
  %3668 = vmatpush1.msra.mxu0 0.0
  %3669 = vmatprep.subr.mxu0 0.0
  %3670 = vmatpush1.msra.mxu0 0.0
  %3671 = vmatprep.subr.mxu0 0.0
  %3672 = vmatpush1.msra.mxu0 0.0
  %3673 = vmatprep.subr.mxu0 0.0
  %3674 = vmatpush1.msra.mxu0 0.0
  %3675 = vmatprep.subr.mxu0 0.0
  %3676 = vmatpush1.msra.mxu0 0.0
  %3677 = vmatprep.subr.mxu0 0.0
  %3678 = vmatpush1.msra.mxu0 0.0
  %3679 = vmatprep.mubr.f32.mxu0 0.0
  %3680 = vmatmul.mubr.f32.gmra.mrb[0].mxu0 %v2633
  %v3681 = vpop.f32.mrb[0].mxu0
  %v3682 = vadd.f32 %v1215, %v3681
  %v3683 = vpop.f32.mrb[0].mxu0
  %v3684 = vadd.f32 %v1217, %v3683
  %3685 = vdwg.mxu0
  %3686 = vmatprep.subr.mxu0 %v2689
  %3687 = vmatpush1.msra.mxu0 %v2687
  %3688 = vmatprep.subr.mxu0 0.0
  %3689 = vmatpush1.msra.mxu0 0.0
  %3690 = vmatprep.subr.mxu0 0.0
  %3691 = vmatpush1.msra.mxu0 0.0
  %3692 = vmatprep.subr.mxu0 0.0
  %3693 = vmatpush1.msra.mxu0 0.0
  %3694 = vmatprep.subr.mxu0 0.0
  %3695 = vmatpush1.msra.mxu0 0.0
  %3696 = vmatprep.subr.mxu0 0.0
  %3697 = vmatpush1.msra.mxu0 0.0
  %3698 = vmatprep.subr.mxu0 0.0
  %3699 = vmatpush1.msra.mxu0 0.0
  %3700 = vmatprep.subr.mxu0 0.0
  %3701 = vmatpush1.msra.mxu0 0.0
  %3702 = vmatprep.subr.mxu0 0.0
  %3703 = vmatpush1.msra.mxu0 0.0
  %3704 = vmatprep.subr.mxu0 0.0
  %3705 = vmatpush1.msra.mxu0 0.0
  %3706 = vmatprep.subr.mxu0 0.0
  %3707 = vmatpush1.msra.mxu0 0.0
  %3708 = vmatprep.subr.mxu0 0.0
  %3709 = vmatpush1.msra.mxu0 0.0
  %3710 = vmatprep.subr.mxu0 0.0
  %3711 = vmatpush1.msra.mxu0 0.0
  %3712 = vmatprep.subr.mxu0 0.0
  %3713 = vmatpush1.msra.mxu0 0.0
  %3714 = vmatprep.subr.mxu0 0.0
  %3715 = vmatpush1.msra.mxu0 0.0
  %3716 = vmatprep.subr.mxu0 0.0
  %3717 = vmatpush1.msra.mxu0 0.0
  %3718 = vmatprep.subr.mxu0 0.0
  %3719 = vmatpush1.msra.mxu0 0.0
  %3720 = vmatprep.subr.mxu0 0.0
  %3721 = vmatpush1.msra.mxu0 0.0
  %3722 = vmatprep.subr.mxu0 0.0
  %3723 = vmatpush1.msra.mxu0 0.0
  %3724 = vmatprep.subr.mxu0 0.0
  %3725 = vmatpush1.msra.mxu0 0.0
  %3726 = vmatprep.subr.mxu0 0.0
  %3727 = vmatpush1.msra.mxu0 0.0
  %3728 = vmatprep.subr.mxu0 0.0
  %3729 = vmatpush1.msra.mxu0 0.0
  %3730 = vmatprep.subr.mxu0 0.0
  %3731 = vmatpush1.msra.mxu0 0.0
  %3732 = vmatprep.subr.mxu0 0.0
  %3733 = vmatpush1.msra.mxu0 0.0
  %3734 = vmatprep.subr.mxu0 0.0
  %3735 = vmatpush1.msra.mxu0 0.0
  %3736 = vmatprep.subr.mxu0 0.0
  %3737 = vmatpush1.msra.mxu0 0.0
  %3738 = vmatprep.subr.mxu0 0.0
  %3739 = vmatpush1.msra.mxu0 0.0
  %3740 = vmatprep.subr.mxu0 0.0
  %3741 = vmatpush1.msra.mxu0 0.0
  %3742 = vmatprep.subr.mxu0 0.0
  %3743 = vmatpush1.msra.mxu0 0.0
  %3744 = vmatprep.subr.mxu0 0.0
  %3745 = vmatpush1.msra.mxu0 0.0
  %3746 = vmatprep.subr.mxu0 0.0
  %3747 = vmatpush1.msra.mxu0 0.0
  %3748 = vmatprep.subr.mxu0 0.0
  %3749 = vmatpush1.msra.mxu0 0.0
  %3750 = vmatprep.mubr.f32.mxu0 0.0
  %3751 = vmatmul.mubr.f32.gmra.mrb[0].mxu0 %v2633
  %v3752 = vpop.f32.mrb[0].mxu0
  %v3753 = vadd.f32 %v1286, %v3752
  %v3754 = vpop.f32.mrb[0].mxu0
  %v3755 = vadd.f32 %v1288, %v3754
  %3756 = vdwg.mxu0
  %3757 = vmatprep.subr.mxu0 %v2693
  %3758 = vmatpush1.msra.mxu0 %v2691
  %3759 = vmatprep.subr.mxu0 0.0
  %3760 = vmatpush1.msra.mxu0 0.0
  %3761 = vmatprep.subr.mxu0 0.0
  %3762 = vmatpush1.msra.mxu0 0.0
  %3763 = vmatprep.subr.mxu0 0.0
  %3764 = vmatpush1.msra.mxu0 0.0
  %3765 = vmatprep.subr.mxu0 0.0
  %3766 = vmatpush1.msra.mxu0 0.0
  %3767 = vmatprep.subr.mxu0 0.0
  %3768 = vmatpush1.msra.mxu0 0.0
  %3769 = vmatprep.subr.mxu0 0.0
  %3770 = vmatpush1.msra.mxu0 0.0
  %3771 = vmatprep.subr.mxu0 0.0
  %3772 = vmatpush1.msra.mxu0 0.0
  %3773 = vmatprep.subr.mxu0 0.0
  %3774 = vmatpush1.msra.mxu0 0.0
  %3775 = vmatprep.subr.mxu0 0.0
  %3776 = vmatpush1.msra.mxu0 0.0
  %3777 = vmatprep.subr.mxu0 0.0
  %3778 = vmatpush1.msra.mxu0 0.0
  %3779 = vmatprep.subr.mxu0 0.0
  %3780 = vmatpush1.msra.mxu0 0.0
  %3781 = vmatprep.subr.mxu0 0.0
  %3782 = vmatpush1.msra.mxu0 0.0
  %3783 = vmatprep.subr.mxu0 0.0
  %3784 = vmatpush1.msra.mxu0 0.0
  %3785 = vmatprep.subr.mxu0 0.0
  %3786 = vmatpush1.msra.mxu0 0.0
  %3787 = vmatprep.subr.mxu0 0.0
  %3788 = vmatpush1.msra.mxu0 0.0
  %3789 = vmatprep.subr.mxu0 0.0
  %3790 = vmatpush1.msra.mxu0 0.0
  %3791 = vmatprep.subr.mxu0 0.0
  %3792 = vmatpush1.msra.mxu0 0.0
  %3793 = vmatprep.subr.mxu0 0.0
  %3794 = vmatpush1.msra.mxu0 0.0
  %3795 = vmatprep.subr.mxu0 0.0
  %3796 = vmatpush1.msra.mxu0 0.0
  %3797 = vmatprep.subr.mxu0 0.0
  %3798 = vmatpush1.msra.mxu0 0.0
  %3799 = vmatprep.subr.mxu0 0.0
  %3800 = vmatpush1.msra.mxu0 0.0
  %3801 = vmatprep.subr.mxu0 0.0
  %3802 = vmatpush1.msra.mxu0 0.0
  %3803 = vmatprep.subr.mxu0 0.0
  %3804 = vmatpush1.msra.mxu0 0.0
  %3805 = vmatprep.subr.mxu0 0.0
  %3806 = vmatpush1.msra.mxu0 0.0
  %3807 = vmatprep.subr.mxu0 0.0
  %3808 = vmatpush1.msra.mxu0 0.0
  %3809 = vmatprep.subr.mxu0 0.0
  %3810 = vmatpush1.msra.mxu0 0.0
  %3811 = vmatprep.subr.mxu0 0.0
  %3812 = vmatpush1.msra.mxu0 0.0
  %3813 = vmatprep.subr.mxu0 0.0
  %3814 = vmatpush1.msra.mxu0 0.0
  %3815 = vmatprep.subr.mxu0 0.0
  %3816 = vmatpush1.msra.mxu0 0.0
  %3817 = vmatprep.subr.mxu0 0.0
  %3818 = vmatpush1.msra.mxu0 0.0
  %3819 = vmatprep.subr.mxu0 0.0
  %3820 = vmatpush1.msra.mxu0 0.0
  %3821 = vmatprep.mubr.f32.mxu0 0.0
  %3822 = vmatmul.mubr.f32.gmra.mrb[0].mxu0 %v2633
  %v3823 = vpop.f32.mrb[0].mxu0
  %v3824 = vadd.f32 %v1357, %v3823
  %v3825 = vpop.f32.mrb[0].mxu0
  %v3826 = vadd.f32 %v1359, %v3825
  %3827 = vdwg.mxu0
  %3828 = vmatprep.subr.mxu0 %v2697
  %3829 = vmatpush1.msra.mxu0 %v2695
  %3830 = vmatprep.subr.mxu0 0.0
  %3831 = vmatpush1.msra.mxu0 0.0
  %3832 = vmatprep.subr.mxu0 0.0
  %3833 = vmatpush1.msra.mxu0 0.0
  %3834 = vmatprep.subr.mxu0 0.0
  %3835 = vmatpush1.msra.mxu0 0.0
  %3836 = vmatprep.subr.mxu0 0.0
  %3837 = vmatpush1.msra.mxu0 0.0
  %3838 = vmatprep.subr.mxu0 0.0
  %3839 = vmatpush1.msra.mxu0 0.0
  %3840 = vmatprep.subr.mxu0 0.0
  %3841 = vmatpush1.msra.mxu0 0.0
  %3842 = vmatprep.subr.mxu0 0.0
  %3843 = vmatpush1.msra.mxu0 0.0
  %3844 = vmatprep.subr.mxu0 0.0
  %3845 = vmatpush1.msra.mxu0 0.0
  %3846 = vmatprep.subr.mxu0 0.0
  %3847 = vmatpush1.msra.mxu0 0.0
  %3848 = vmatprep.subr.mxu0 0.0
  %3849 = vmatpush1.msra.mxu0 0.0
  %3850 = vmatprep.subr.mxu0 0.0
  %3851 = vmatpush1.msra.mxu0 0.0
  %3852 = vmatprep.subr.mxu0 0.0
  %3853 = vmatpush1.msra.mxu0 0.0
  %3854 = vmatprep.subr.mxu0 0.0
  %3855 = vmatpush1.msra.mxu0 0.0
  %3856 = vmatprep.subr.mxu0 0.0
  %3857 = vmatpush1.msra.mxu0 0.0
  %3858 = vmatprep.subr.mxu0 0.0
  %3859 = vmatpush1.msra.mxu0 0.0
  %3860 = vmatprep.subr.mxu0 0.0
  %3861 = vmatpush1.msra.mxu0 0.0
  %3862 = vmatprep.subr.mxu0 0.0
  %3863 = vmatpush1.msra.mxu0 0.0
  %3864 = vmatprep.subr.mxu0 0.0
  %3865 = vmatpush1.msra.mxu0 0.0
  %3866 = vmatprep.subr.mxu0 0.0
  %3867 = vmatpush1.msra.mxu0 0.0
  %3868 = vmatprep.subr.mxu0 0.0
  %3869 = vmatpush1.msra.mxu0 0.0
  %3870 = vmatprep.subr.mxu0 0.0
  %3871 = vmatpush1.msra.mxu0 0.0
  %3872 = vmatprep.subr.mxu0 0.0
  %3873 = vmatpush1.msra.mxu0 0.0
  %3874 = vmatprep.subr.mxu0 0.0
  %3875 = vmatpush1.msra.mxu0 0.0
  %3876 = vmatprep.subr.mxu0 0.0
  %3877 = vmatpush1.msra.mxu0 0.0
  %3878 = vmatprep.subr.mxu0 0.0
  %3879 = vmatpush1.msra.mxu0 0.0
  %3880 = vmatprep.subr.mxu0 0.0
  %3881 = vmatpush1.msra.mxu0 0.0
  %3882 = vmatprep.subr.mxu0 0.0
  %3883 = vmatpush1.msra.mxu0 0.0
  %3884 = vmatprep.subr.mxu0 0.0
  %3885 = vmatpush1.msra.mxu0 0.0
  %3886 = vmatprep.subr.mxu0 0.0
  %3887 = vmatpush1.msra.mxu0 0.0
  %3888 = vmatprep.subr.mxu0 0.0
  %3889 = vmatpush1.msra.mxu0 0.0
  %3890 = vmatprep.subr.mxu0 0.0
  %3891 = vmatpush1.msra.mxu0 0.0
  %3892 = vmatprep.mubr.f32.mxu0 0.0
  %3893 = vmatmul.mubr.f32.gmra.mrb[0].mxu0 %v2633
  %v3894 = vpop.f32.mrb[0].mxu0
  %v3895 = vadd.f32 %v1428, %v3894
  %v3896 = vpop.f32.mrb[0].mxu0
  %v3897 = vadd.f32 %v1430, %v3896
  %3898 = vdwg.mxu0
  %3899 = vmatprep.subr.mxu0 %v2701
  %3900 = vmatpush1.msra.mxu0 %v2699
  %3901 = vmatprep.subr.mxu0 0.0
  %3902 = vmatpush1.msra.mxu0 0.0
  %3903 = vmatprep.subr.mxu0 0.0
  %3904 = vmatpush1.msra.mxu0 0.0
  %3905 = vmatprep.subr.mxu0 0.0
  %3906 = vmatpush1.msra.mxu0 0.0
  %3907 = vmatprep.subr.mxu0 0.0
  %3908 = vmatpush1.msra.mxu0 0.0
  %3909 = vmatprep.subr.mxu0 0.0
  %3910 = vmatpush1.msra.mxu0 0.0
  %3911 = vmatprep.subr.mxu0 0.0
  %3912 = vmatpush1.msra.mxu0 0.0
  %3913 = vmatprep.subr.mxu0 0.0
  %3914 = vmatpush1.msra.mxu0 0.0
  %3915 = vmatprep.subr.mxu0 0.0
  %3916 = vmatpush1.msra.mxu0 0.0
  %3917 = vmatprep.subr.mxu0 0.0
  %3918 = vmatpush1.msra.mxu0 0.0
  %3919 = vmatprep.subr.mxu0 0.0
  %3920 = vmatpush1.msra.mxu0 0.0
  %3921 = vmatprep.subr.mxu0 0.0
  %3922 = vmatpush1.msra.mxu0 0.0
  %3923 = vmatprep.subr.mxu0 0.0
  %3924 = vmatpush1.msra.mxu0 0.0
  %3925 = vmatprep.subr.mxu0 0.0
  %3926 = vmatpush1.msra.mxu0 0.0
  %3927 = vmatprep.subr.mxu0 0.0
  %3928 = vmatpush1.msra.mxu0 0.0
  %3929 = vmatprep.subr.mxu0 0.0
  %3930 = vmatpush1.msra.mxu0 0.0
  %3931 = vmatprep.subr.mxu0 0.0
  %3932 = vmatpush1.msra.mxu0 0.0
  %3933 = vmatprep.subr.mxu0 0.0
  %3934 = vmatpush1.msra.mxu0 0.0
  %3935 = vmatprep.subr.mxu0 0.0
  %3936 = vmatpush1.msra.mxu0 0.0
  %3937 = vmatprep.subr.mxu0 0.0
  %3938 = vmatpush1.msra.mxu0 0.0
  %3939 = vmatprep.subr.mxu0 0.0
  %3940 = vmatpush1.msra.mxu0 0.0
  %3941 = vmatprep.subr.mxu0 0.0
  %3942 = vmatpush1.msra.mxu0 0.0
  %3943 = vmatprep.subr.mxu0 0.0
  %3944 = vmatpush1.msra.mxu0 0.0
  %3945 = vmatprep.subr.mxu0 0.0
  %3946 = vmatpush1.msra.mxu0 0.0
  %3947 = vmatprep.subr.mxu0 0.0
  %3948 = vmatpush1.msra.mxu0 0.0
  %3949 = vmatprep.subr.mxu0 0.0
  %3950 = vmatpush1.msra.mxu0 0.0
  %3951 = vmatprep.subr.mxu0 0.0
  %3952 = vmatpush1.msra.mxu0 0.0
  %3953 = vmatprep.subr.mxu0 0.0
  %3954 = vmatpush1.msra.mxu0 0.0
  %3955 = vmatprep.subr.mxu0 0.0
  %3956 = vmatpush1.msra.mxu0 0.0
  %3957 = vmatprep.subr.mxu0 0.0
  %3958 = vmatpush1.msra.mxu0 0.0
  %3959 = vmatprep.subr.mxu0 0.0
  %3960 = vmatpush1.msra.mxu0 0.0
  %3961 = vmatprep.subr.mxu0 0.0
  %3962 = vmatpush1.msra.mxu0 0.0
  %3963 = vmatprep.mubr.f32.mxu0 0.0
  %3964 = vmatmul.mubr.f32.gmra.mrb[0].mxu0 %v2633
  %v3965 = vpop.f32.mrb[0].mxu0
  %v3966 = vadd.f32 %v1499, %v3965
  %v3967 = vpop.f32.mrb[0].mxu0
  %v3968 = vadd.f32 %v1501, %v3967
  %3969 = vdwg.mxu0
  %3970 = vmatprep.subr.mxu0 %v2705
  %3971 = vmatpush1.msra.mxu0 %v2703
  %3972 = vmatprep.subr.mxu0 0.0
  %3973 = vmatpush1.msra.mxu0 0.0
  %3974 = vmatprep.subr.mxu0 0.0
  %3975 = vmatpush1.msra.mxu0 0.0
  %3976 = vmatprep.subr.mxu0 0.0
  %3977 = vmatpush1.msra.mxu0 0.0
  %3978 = vmatprep.subr.mxu0 0.0
  %3979 = vmatpush1.msra.mxu0 0.0
  %3980 = vmatprep.subr.mxu0 0.0
  %3981 = vmatpush1.msra.mxu0 0.0
  %3982 = vmatprep.subr.mxu0 0.0
  %3983 = vmatpush1.msra.mxu0 0.0
  %3984 = vmatprep.subr.mxu0 0.0
  %3985 = vmatpush1.msra.mxu0 0.0
  %3986 = vmatprep.subr.mxu0 0.0
  %3987 = vmatpush1.msra.mxu0 0.0
  %3988 = vmatprep.subr.mxu0 0.0
  %3989 = vmatpush1.msra.mxu0 0.0
  %3990 = vmatprep.subr.mxu0 0.0
  %3991 = vmatpush1.msra.mxu0 0.0
  %3992 = vmatprep.subr.mxu0 0.0
  %3993 = vmatpush1.msra.mxu0 0.0
  %3994 = vmatprep.subr.mxu0 0.0
  %3995 = vmatpush1.msra.mxu0 0.0
  %3996 = vmatprep.subr.mxu0 0.0
  %3997 = vmatpush1.msra.mxu0 0.0
  %3998 = vmatprep.subr.mxu0 0.0
  %3999 = vmatpush1.msra.mxu0 0.0
  %4000 = vmatprep.subr.mxu0 0.0
  %4001 = vmatpush1.msra.mxu0 0.0
  %4002 = vmatprep.subr.mxu0 0.0
  %4003 = vmatpush1.msra.mxu0 0.0
  %4004 = vmatprep.subr.mxu0 0.0
  %4005 = vmatpush1.msra.mxu0 0.0
  %4006 = vmatprep.subr.mxu0 0.0
  %4007 = vmatpush1.msra.mxu0 0.0
  %4008 = vmatprep.subr.mxu0 0.0
  %4009 = vmatpush1.msra.mxu0 0.0
  %4010 = vmatprep.subr.mxu0 0.0
  %4011 = vmatpush1.msra.mxu0 0.0
  %4012 = vmatprep.subr.mxu0 0.0
  %4013 = vmatpush1.msra.mxu0 0.0
  %4014 = vmatprep.subr.mxu0 0.0
  %4015 = vmatpush1.msra.mxu0 0.0
  %4016 = vmatprep.subr.mxu0 0.0
  %4017 = vmatpush1.msra.mxu0 0.0
  %4018 = vmatprep.subr.mxu0 0.0
  %4019 = vmatpush1.msra.mxu0 0.0
  %4020 = vmatprep.subr.mxu0 0.0
  %4021 = vmatpush1.msra.mxu0 0.0
  %4022 = vmatprep.subr.mxu0 0.0
  %4023 = vmatpush1.msra.mxu0 0.0
  %4024 = vmatprep.subr.mxu0 0.0
  %4025 = vmatpush1.msra.mxu0 0.0
  %4026 = vmatprep.subr.mxu0 0.0
  %4027 = vmatpush1.msra.mxu0 0.0
  %4028 = vmatprep.subr.mxu0 0.0
  %4029 = vmatpush1.msra.mxu0 0.0
  %4030 = vmatprep.subr.mxu0 0.0
  %4031 = vmatpush1.msra.mxu0 0.0
  %4032 = vmatprep.subr.mxu0 0.0
  %4033 = vmatpush1.msra.mxu0 0.0
  %4034 = vmatprep.mubr.f32.mxu0 0.0
  %4035 = vmatmul.mubr.f32.gmra.mrb[0].mxu0 %v2633
  %v4036 = vpop.f32.mrb[0].mxu0
  %v4037 = vadd.f32 %v1570, %v4036
  %v4038 = vpop.f32.mrb[0].mxu0
  %v4039 = vadd.f32 %v1572, %v4038
  %4040 = vdwg.mxu0
  %4041 = vmatprep.subr.mxu0 %v2709
  %4042 = vmatpush1.msra.mxu0 %v2707
  %4043 = vmatprep.subr.mxu0 0.0
  %4044 = vmatpush1.msra.mxu0 0.0
  %4045 = vmatprep.subr.mxu0 0.0
  %4046 = vmatpush1.msra.mxu0 0.0
  %4047 = vmatprep.subr.mxu0 0.0
  %4048 = vmatpush1.msra.mxu0 0.0
  %4049 = vmatprep.subr.mxu0 0.0
  %4050 = vmatpush1.msra.mxu0 0.0
  %4051 = vmatprep.subr.mxu0 0.0
  %4052 = vmatpush1.msra.mxu0 0.0
  %4053 = vmatprep.subr.mxu0 0.0
  %4054 = vmatpush1.msra.mxu0 0.0
  %4055 = vmatprep.subr.mxu0 0.0
  %4056 = vmatpush1.msra.mxu0 0.0
  %4057 = vmatprep.subr.mxu0 0.0
  %4058 = vmatpush1.msra.mxu0 0.0
  %4059 = vmatprep.subr.mxu0 0.0
  %4060 = vmatpush1.msra.mxu0 0.0
  %4061 = vmatprep.subr.mxu0 0.0
  %4062 = vmatpush1.msra.mxu0 0.0
  %4063 = vmatprep.subr.mxu0 0.0
  %4064 = vmatpush1.msra.mxu0 0.0
  %4065 = vmatprep.subr.mxu0 0.0
  %4066 = vmatpush1.msra.mxu0 0.0
  %4067 = vmatprep.subr.mxu0 0.0
  %4068 = vmatpush1.msra.mxu0 0.0
  %4069 = vmatprep.subr.mxu0 0.0
  %4070 = vmatpush1.msra.mxu0 0.0
  %4071 = vmatprep.subr.mxu0 0.0
  %4072 = vmatpush1.msra.mxu0 0.0
  %4073 = vmatprep.subr.mxu0 0.0
  %4074 = vmatpush1.msra.mxu0 0.0
  %4075 = vmatprep.subr.mxu0 0.0
  %4076 = vmatpush1.msra.mxu0 0.0
  %4077 = vmatprep.subr.mxu0 0.0
  %4078 = vmatpush1.msra.mxu0 0.0
  %4079 = vmatprep.subr.mxu0 0.0
  %4080 = vmatpush1.msra.mxu0 0.0
  %4081 = vmatprep.subr.mxu0 0.0
  %4082 = vmatpush1.msra.mxu0 0.0
  %4083 = vmatprep.subr.mxu0 0.0
  %4084 = vmatpush1.msra.mxu0 0.0
  %4085 = vmatprep.subr.mxu0 0.0
  %4086 = vmatpush1.msra.mxu0 0.0
  %4087 = vmatprep.subr.mxu0 0.0
  %4088 = vmatpush1.msra.mxu0 0.0
  %4089 = vmatprep.subr.mxu0 0.0
  %4090 = vmatpush1.msra.mxu0 0.0
  %4091 = vmatprep.subr.mxu0 0.0
  %4092 = vmatpush1.msra.mxu0 0.0
  %4093 = vmatprep.subr.mxu0 0.0
  %4094 = vmatpush1.msra.mxu0 0.0
  %4095 = vmatprep.subr.mxu0 0.0
  %4096 = vmatpush1.msra.mxu0 0.0
  %4097 = vmatprep.subr.mxu0 0.0
  %4098 = vmatpush1.msra.mxu0 0.0
  %4099 = vmatprep.subr.mxu0 0.0
  %4100 = vmatpush1.msra.mxu0 0.0
  %4101 = vmatprep.subr.mxu0 0.0
  %4102 = vmatpush1.msra.mxu0 0.0
  %4103 = vmatprep.subr.mxu0 0.0
  %4104 = vmatpush1.msra.mxu0 0.0
  %4105 = vmatprep.mubr.f32.mxu0 0.0
  %4106 = vmatmul.mubr.f32.gmra.mrb[0].mxu0 %v2633
  %v4107 = vpop.f32.mrb[0].mxu0
  %v4108 = vadd.f32 %v1641, %v4107
  %v4109 = vpop.f32.mrb[0].mxu0
  %v4110 = vadd.f32 %v1643, %v4109
  %4111 = vdwg.mxu0
  %4112 = vmatprep.subr.mxu0 %v2713
  %4113 = vmatpush1.msra.mxu0 %v2711
  %4114 = vmatprep.subr.mxu0 0.0
  %4115 = vmatpush1.msra.mxu0 0.0
  %4116 = vmatprep.subr.mxu0 0.0
  %4117 = vmatpush1.msra.mxu0 0.0
  %4118 = vmatprep.subr.mxu0 0.0
  %4119 = vmatpush1.msra.mxu0 0.0
  %4120 = vmatprep.subr.mxu0 0.0
  %4121 = vmatpush1.msra.mxu0 0.0
  %4122 = vmatprep.subr.mxu0 0.0
  %4123 = vmatpush1.msra.mxu0 0.0
  %4124 = vmatprep.subr.mxu0 0.0
  %4125 = vmatpush1.msra.mxu0 0.0
  %4126 = vmatprep.subr.mxu0 0.0
  %4127 = vmatpush1.msra.mxu0 0.0
  %4128 = vmatprep.subr.mxu0 0.0
  %4129 = vmatpush1.msra.mxu0 0.0
  %4130 = vmatprep.subr.mxu0 0.0
  %4131 = vmatpush1.msra.mxu0 0.0
  %4132 = vmatprep.subr.mxu0 0.0
  %4133 = vmatpush1.msra.mxu0 0.0
  %4134 = vmatprep.subr.mxu0 0.0
  %4135 = vmatpush1.msra.mxu0 0.0
  %4136 = vmatprep.subr.mxu0 0.0
  %4137 = vmatpush1.msra.mxu0 0.0
  %4138 = vmatprep.subr.mxu0 0.0
  %4139 = vmatpush1.msra.mxu0 0.0
  %4140 = vmatprep.subr.mxu0 0.0
  %4141 = vmatpush1.msra.mxu0 0.0
  %4142 = vmatprep.subr.mxu0 0.0
  %4143 = vmatpush1.msra.mxu0 0.0
  %4144 = vmatprep.subr.mxu0 0.0
  %4145 = vmatpush1.msra.mxu0 0.0
  %4146 = vmatprep.subr.mxu0 0.0
  %4147 = vmatpush1.msra.mxu0 0.0
  %4148 = vmatprep.subr.mxu0 0.0
  %4149 = vmatpush1.msra.mxu0 0.0
  %4150 = vmatprep.subr.mxu0 0.0
  %4151 = vmatpush1.msra.mxu0 0.0
  %4152 = vmatprep.subr.mxu0 0.0
  %4153 = vmatpush1.msra.mxu0 0.0
  %4154 = vmatprep.subr.mxu0 0.0
  %4155 = vmatpush1.msra.mxu0 0.0
  %4156 = vmatprep.subr.mxu0 0.0
  %4157 = vmatpush1.msra.mxu0 0.0
  %4158 = vmatprep.subr.mxu0 0.0
  %4159 = vmatpush1.msra.mxu0 0.0
  %4160 = vmatprep.subr.mxu0 0.0
  %4161 = vmatpush1.msra.mxu0 0.0
  %4162 = vmatprep.subr.mxu0 0.0
  %4163 = vmatpush1.msra.mxu0 0.0
  %4164 = vmatprep.subr.mxu0 0.0
  %4165 = vmatpush1.msra.mxu0 0.0
  %4166 = vmatprep.subr.mxu0 0.0
  %4167 = vmatpush1.msra.mxu0 0.0
  %4168 = vmatprep.subr.mxu0 0.0
  %4169 = vmatpush1.msra.mxu0 0.0
  %4170 = vmatprep.subr.mxu0 0.0
  %4171 = vmatpush1.msra.mxu0 0.0
  %4172 = vmatprep.subr.mxu0 0.0
  %4173 = vmatpush1.msra.mxu0 0.0
  %4174 = vmatprep.subr.mxu0 0.0
  %4175 = vmatpush1.msra.mxu0 0.0
  %4176 = vmatprep.mubr.f32.mxu0 0.0
  %4177 = vmatmul.mubr.f32.gmra.mrb[0].mxu0 %v2633
  %v4178 = vpop.f32.mrb[0].mxu0
  %v4179 = vadd.f32 %v1712, %v4178
  %v4180 = vpop.f32.mrb[0].mxu0
  %v4181 = vadd.f32 %v1714, %v4180
  %4182 = vdwg.mxu0
  %4183 = vmatprep.subr.mxu0 %v2717
  %4184 = vmatpush1.msra.mxu0 %v2715
  %4185 = vmatprep.subr.mxu0 0.0
  %4186 = vmatpush1.msra.mxu0 0.0
  %4187 = vmatprep.subr.mxu0 0.0
  %4188 = vmatpush1.msra.mxu0 0.0
  %4189 = vmatprep.subr.mxu0 0.0
  %4190 = vmatpush1.msra.mxu0 0.0
  %4191 = vmatprep.subr.mxu0 0.0
  %4192 = vmatpush1.msra.mxu0 0.0
  %4193 = vmatprep.subr.mxu0 0.0
  %4194 = vmatpush1.msra.mxu0 0.0
  %4195 = vmatprep.subr.mxu0 0.0
  %4196 = vmatpush1.msra.mxu0 0.0
  %4197 = vmatprep.subr.mxu0 0.0
  %4198 = vmatpush1.msra.mxu0 0.0
  %4199 = vmatprep.subr.mxu0 0.0
  %4200 = vmatpush1.msra.mxu0 0.0
  %4201 = vmatprep.subr.mxu0 0.0
  %4202 = vmatpush1.msra.mxu0 0.0
  %4203 = vmatprep.subr.mxu0 0.0
  %4204 = vmatpush1.msra.mxu0 0.0
  %4205 = vmatprep.subr.mxu0 0.0
  %4206 = vmatpush1.msra.mxu0 0.0
  %4207 = vmatprep.subr.mxu0 0.0
  %4208 = vmatpush1.msra.mxu0 0.0
  %4209 = vmatprep.subr.mxu0 0.0
  %4210 = vmatpush1.msra.mxu0 0.0
  %4211 = vmatprep.subr.mxu0 0.0
  %4212 = vmatpush1.msra.mxu0 0.0
  %4213 = vmatprep.subr.mxu0 0.0
  %4214 = vmatpush1.msra.mxu0 0.0
  %4215 = vmatprep.subr.mxu0 0.0
  %4216 = vmatpush1.msra.mxu0 0.0
  %4217 = vmatprep.subr.mxu0 0.0
  %4218 = vmatpush1.msra.mxu0 0.0
  %4219 = vmatprep.subr.mxu0 0.0
  %4220 = vmatpush1.msra.mxu0 0.0
  %4221 = vmatprep.subr.mxu0 0.0
  %4222 = vmatpush1.msra.mxu0 0.0
  %4223 = vmatprep.subr.mxu0 0.0
  %4224 = vmatpush1.msra.mxu0 0.0
  %4225 = vmatprep.subr.mxu0 0.0
  %4226 = vmatpush1.msra.mxu0 0.0
  %4227 = vmatprep.subr.mxu0 0.0
  %4228 = vmatpush1.msra.mxu0 0.0
  %4229 = vmatprep.subr.mxu0 0.0
  %4230 = vmatpush1.msra.mxu0 0.0
  %4231 = vmatprep.subr.mxu0 0.0
  %4232 = vmatpush1.msra.mxu0 0.0
  %4233 = vmatprep.subr.mxu0 0.0
  %4234 = vmatpush1.msra.mxu0 0.0
  %4235 = vmatprep.subr.mxu0 0.0
  %4236 = vmatpush1.msra.mxu0 0.0
  %4237 = vmatprep.subr.mxu0 0.0
  %4238 = vmatpush1.msra.mxu0 0.0
  %4239 = vmatprep.subr.mxu0 0.0
  %4240 = vmatpush1.msra.mxu0 0.0
  %4241 = vmatprep.subr.mxu0 0.0
  %4242 = vmatpush1.msra.mxu0 0.0
  %4243 = vmatprep.subr.mxu0 0.0
  %4244 = vmatpush1.msra.mxu0 0.0
  %4245 = vmatprep.subr.mxu0 0.0
  %4246 = vmatpush1.msra.mxu0 0.0
  %4247 = vmatprep.mubr.f32.mxu0 0.0
  %4248 = vmatmul.mubr.f32.gmra.mrb[0].mxu0 %v2633
  %v4249 = vpop.f32.mrb[0].mxu0
  %v4250 = vadd.f32 %v1783, %v4249
  %v4251 = vpop.f32.mrb[0].mxu0
  %v4252 = vadd.f32 %v1785, %v4251
  %4253 = vdwg.mxu0
  %4254 = vmatprep.subr.mxu0 %v2721
  %4255 = vmatpush1.msra.mxu0 %v2719
  %4256 = vmatprep.subr.mxu0 0.0
  %4257 = vmatpush1.msra.mxu0 0.0
  %4258 = vmatprep.subr.mxu0 0.0
  %4259 = vmatpush1.msra.mxu0 0.0
  %4260 = vmatprep.subr.mxu0 0.0
  %4261 = vmatpush1.msra.mxu0 0.0
  %4262 = vmatprep.subr.mxu0 0.0
  %4263 = vmatpush1.msra.mxu0 0.0
  %4264 = vmatprep.subr.mxu0 0.0
  %4265 = vmatpush1.msra.mxu0 0.0
  %4266 = vmatprep.subr.mxu0 0.0
  %4267 = vmatpush1.msra.mxu0 0.0
  %4268 = vmatprep.subr.mxu0 0.0
  %4269 = vmatpush1.msra.mxu0 0.0
  %4270 = vmatprep.subr.mxu0 0.0
  %4271 = vmatpush1.msra.mxu0 0.0
  %4272 = vmatprep.subr.mxu0 0.0
  %4273 = vmatpush1.msra.mxu0 0.0
  %4274 = vmatprep.subr.mxu0 0.0
  %4275 = vmatpush1.msra.mxu0 0.0
  %4276 = vmatprep.subr.mxu0 0.0
  %4277 = vmatpush1.msra.mxu0 0.0
  %4278 = vmatprep.subr.mxu0 0.0
  %4279 = vmatpush1.msra.mxu0 0.0
  %4280 = vmatprep.subr.mxu0 0.0
  %4281 = vmatpush1.msra.mxu0 0.0
  %4282 = vmatprep.subr.mxu0 0.0
  %4283 = vmatpush1.msra.mxu0 0.0
  %4284 = vmatprep.subr.mxu0 0.0
  %4285 = vmatpush1.msra.mxu0 0.0
  %4286 = vmatprep.subr.mxu0 0.0
  %4287 = vmatpush1.msra.mxu0 0.0
  %4288 = vmatprep.subr.mxu0 0.0
  %4289 = vmatpush1.msra.mxu0 0.0
  %4290 = vmatprep.subr.mxu0 0.0
  %4291 = vmatpush1.msra.mxu0 0.0
  %4292 = vmatprep.subr.mxu0 0.0
  %4293 = vmatpush1.msra.mxu0 0.0
  %4294 = vmatprep.subr.mxu0 0.0
  %4295 = vmatpush1.msra.mxu0 0.0
  %4296 = vmatprep.subr.mxu0 0.0
  %4297 = vmatpush1.msra.mxu0 0.0
  %4298 = vmatprep.subr.mxu0 0.0
  %4299 = vmatpush1.msra.mxu0 0.0
  %4300 = vmatprep.subr.mxu0 0.0
  %4301 = vmatpush1.msra.mxu0 0.0
  %4302 = vmatprep.subr.mxu0 0.0
  %4303 = vmatpush1.msra.mxu0 0.0
  %4304 = vmatprep.subr.mxu0 0.0
  %4305 = vmatpush1.msra.mxu0 0.0
  %4306 = vmatprep.subr.mxu0 0.0
  %4307 = vmatpush1.msra.mxu0 0.0
  %4308 = vmatprep.subr.mxu0 0.0
  %4309 = vmatpush1.msra.mxu0 0.0
  %4310 = vmatprep.subr.mxu0 0.0
  %4311 = vmatpush1.msra.mxu0 0.0
  %4312 = vmatprep.subr.mxu0 0.0
  %4313 = vmatpush1.msra.mxu0 0.0
  %4314 = vmatprep.subr.mxu0 0.0
  %4315 = vmatpush1.msra.mxu0 0.0
  %4316 = vmatprep.subr.mxu0 0.0
  %4317 = vmatpush1.msra.mxu0 0.0
  %4318 = vmatprep.mubr.f32.mxu0 0.0
  %4319 = vmatmul.mubr.f32.gmra.mrb[0].mxu0 %v2633
  %v4320 = vpop.f32.mrb[0].mxu0
  %v4321 = vadd.f32 %v1854, %v4320
  %v4322 = vpop.f32.mrb[0].mxu0
  %v4323 = vadd.f32 %v1856, %v4322
  %4324 = vdwg.mxu0
  %4325 = vmatprep.subr.mxu0 %v2725
  %4326 = vmatpush1.msra.mxu0 %v2723
  %4327 = vmatprep.subr.mxu0 0.0
  %4328 = vmatpush1.msra.mxu0 0.0
  %4329 = vmatprep.subr.mxu0 0.0
  %4330 = vmatpush1.msra.mxu0 0.0
  %4331 = vmatprep.subr.mxu0 0.0
  %4332 = vmatpush1.msra.mxu0 0.0
  %4333 = vmatprep.subr.mxu0 0.0
  %4334 = vmatpush1.msra.mxu0 0.0
  %4335 = vmatprep.subr.mxu0 0.0
  %4336 = vmatpush1.msra.mxu0 0.0
  %4337 = vmatprep.subr.mxu0 0.0
  %4338 = vmatpush1.msra.mxu0 0.0
  %4339 = vmatprep.subr.mxu0 0.0
  %4340 = vmatpush1.msra.mxu0 0.0
  %4341 = vmatprep.subr.mxu0 0.0
  %4342 = vmatpush1.msra.mxu0 0.0
  %4343 = vmatprep.subr.mxu0 0.0
  %4344 = vmatpush1.msra.mxu0 0.0
  %4345 = vmatprep.subr.mxu0 0.0
  %4346 = vmatpush1.msra.mxu0 0.0
  %4347 = vmatprep.subr.mxu0 0.0
  %4348 = vmatpush1.msra.mxu0 0.0
  %4349 = vmatprep.subr.mxu0 0.0
  %4350 = vmatpush1.msra.mxu0 0.0
  %4351 = vmatprep.subr.mxu0 0.0
  %4352 = vmatpush1.msra.mxu0 0.0
  %4353 = vmatprep.subr.mxu0 0.0
  %4354 = vmatpush1.msra.mxu0 0.0
  %4355 = vmatprep.subr.mxu0 0.0
  %4356 = vmatpush1.msra.mxu0 0.0
  %4357 = vmatprep.subr.mxu0 0.0
  %4358 = vmatpush1.msra.mxu0 0.0
  %4359 = vmatprep.subr.mxu0 0.0
  %4360 = vmatpush1.msra.mxu0 0.0
  %4361 = vmatprep.subr.mxu0 0.0
  %4362 = vmatpush1.msra.mxu0 0.0
  %4363 = vmatprep.subr.mxu0 0.0
  %4364 = vmatpush1.msra.mxu0 0.0
  %4365 = vmatprep.subr.mxu0 0.0
  %4366 = vmatpush1.msra.mxu0 0.0
  %4367 = vmatprep.subr.mxu0 0.0
  %4368 = vmatpush1.msra.mxu0 0.0
  %4369 = vmatprep.subr.mxu0 0.0
  %4370 = vmatpush1.msra.mxu0 0.0
  %4371 = vmatprep.subr.mxu0 0.0
  %4372 = vmatpush1.msra.mxu0 0.0
  %4373 = vmatprep.subr.mxu0 0.0
  %4374 = vmatpush1.msra.mxu0 0.0
  %4375 = vmatprep.subr.mxu0 0.0
  %4376 = vmatpush1.msra.mxu0 0.0
  %4377 = vmatprep.subr.mxu0 0.0
  %4378 = vmatpush1.msra.mxu0 0.0
  %4379 = vmatprep.subr.mxu0 0.0
  %4380 = vmatpush1.msra.mxu0 0.0
  %4381 = vmatprep.subr.mxu0 0.0
  %4382 = vmatpush1.msra.mxu0 0.0
  %4383 = vmatprep.subr.mxu0 0.0
  %4384 = vmatpush1.msra.mxu0 0.0
  %4385 = vmatprep.subr.mxu0 0.0
  %4386 = vmatpush1.msra.mxu0 0.0
  %4387 = vmatprep.subr.mxu0 0.0
  %4388 = vmatpush1.msra.mxu0 0.0
  %4389 = vmatprep.mubr.f32.mxu0 0.0
  %4390 = vmatmul.mubr.f32.gmra.mrb[0].mxu0 %v2633
  %v4391 = vpop.f32.mrb[0].mxu0
  %v4392 = vadd.f32 %v1925, %v4391
  %v4393 = vpop.f32.mrb[0].mxu0
  %v4394 = vadd.f32 %v1927, %v4393
  %4395 = vdwg.mxu0
  %4396 = vmatprep.subr.mxu0 %v2729
  %4397 = vmatpush1.msra.mxu0 %v2727
  %4398 = vmatprep.subr.mxu0 0.0
  %4399 = vmatpush1.msra.mxu0 0.0
  %4400 = vmatprep.subr.mxu0 0.0
  %4401 = vmatpush1.msra.mxu0 0.0
  %4402 = vmatprep.subr.mxu0 0.0
  %4403 = vmatpush1.msra.mxu0 0.0
  %4404 = vmatprep.subr.mxu0 0.0
  %4405 = vmatpush1.msra.mxu0 0.0
  %4406 = vmatprep.subr.mxu0 0.0
  %4407 = vmatpush1.msra.mxu0 0.0
  %4408 = vmatprep.subr.mxu0 0.0
  %4409 = vmatpush1.msra.mxu0 0.0
  %4410 = vmatprep.subr.mxu0 0.0
  %4411 = vmatpush1.msra.mxu0 0.0
  %4412 = vmatprep.subr.mxu0 0.0
  %4413 = vmatpush1.msra.mxu0 0.0
  %4414 = vmatprep.subr.mxu0 0.0
  %4415 = vmatpush1.msra.mxu0 0.0
  %4416 = vmatprep.subr.mxu0 0.0
  %4417 = vmatpush1.msra.mxu0 0.0
  %4418 = vmatprep.subr.mxu0 0.0
  %4419 = vmatpush1.msra.mxu0 0.0
  %4420 = vmatprep.subr.mxu0 0.0
  %4421 = vmatpush1.msra.mxu0 0.0
  %4422 = vmatprep.subr.mxu0 0.0
  %4423 = vmatpush1.msra.mxu0 0.0
  %4424 = vmatprep.subr.mxu0 0.0
  %4425 = vmatpush1.msra.mxu0 0.0
  %4426 = vmatprep.subr.mxu0 0.0
  %4427 = vmatpush1.msra.mxu0 0.0
  %4428 = vmatprep.subr.mxu0 0.0
  %4429 = vmatpush1.msra.mxu0 0.0
  %4430 = vmatprep.subr.mxu0 0.0
  %4431 = vmatpush1.msra.mxu0 0.0
  %4432 = vmatprep.subr.mxu0 0.0
  %4433 = vmatpush1.msra.mxu0 0.0
  %4434 = vmatprep.subr.mxu0 0.0
  %4435 = vmatpush1.msra.mxu0 0.0
  %4436 = vmatprep.subr.mxu0 0.0
  %4437 = vmatpush1.msra.mxu0 0.0
  %4438 = vmatprep.subr.mxu0 0.0
  %4439 = vmatpush1.msra.mxu0 0.0
  %4440 = vmatprep.subr.mxu0 0.0
  %4441 = vmatpush1.msra.mxu0 0.0
  %4442 = vmatprep.subr.mxu0 0.0
  %4443 = vmatpush1.msra.mxu0 0.0
  %4444 = vmatprep.subr.mxu0 0.0
  %4445 = vmatpush1.msra.mxu0 0.0
  %4446 = vmatprep.subr.mxu0 0.0
  %4447 = vmatpush1.msra.mxu0 0.0
  %4448 = vmatprep.subr.mxu0 0.0
  %4449 = vmatpush1.msra.mxu0 0.0
  %4450 = vmatprep.subr.mxu0 0.0
  %4451 = vmatpush1.msra.mxu0 0.0
  %4452 = vmatprep.subr.mxu0 0.0
  %4453 = vmatpush1.msra.mxu0 0.0
  %4454 = vmatprep.subr.mxu0 0.0
  %4455 = vmatpush1.msra.mxu0 0.0
  %4456 = vmatprep.subr.mxu0 0.0
  %4457 = vmatpush1.msra.mxu0 0.0
  %4458 = vmatprep.subr.mxu0 0.0
  %4459 = vmatpush1.msra.mxu0 0.0
  %4460 = vmatprep.mubr.f32.mxu0 0.0
  %4461 = vmatmul.mubr.f32.gmra.mrb[0].mxu0 %v2633
  %v4462 = vpop.f32.mrb[0].mxu0
  %v4463 = vadd.f32 %v1996, %v4462
  %v4464 = vpop.f32.mrb[0].mxu0
  %v4465 = vadd.f32 %v1998, %v4464
  %4466 = vdwg.mxu0
  %4467 = vmatprep.subr.mxu0 %v2733
  %4468 = vmatpush1.msra.mxu0 %v2731
  %4469 = vmatprep.subr.mxu0 0.0
  %4470 = vmatpush1.msra.mxu0 0.0
  %4471 = vmatprep.subr.mxu0 0.0
  %4472 = vmatpush1.msra.mxu0 0.0
  %4473 = vmatprep.subr.mxu0 0.0
  %4474 = vmatpush1.msra.mxu0 0.0
  %4475 = vmatprep.subr.mxu0 0.0
  %4476 = vmatpush1.msra.mxu0 0.0
  %4477 = vmatprep.subr.mxu0 0.0
  %4478 = vmatpush1.msra.mxu0 0.0
  %4479 = vmatprep.subr.mxu0 0.0
  %4480 = vmatpush1.msra.mxu0 0.0
  %4481 = vmatprep.subr.mxu0 0.0
  %4482 = vmatpush1.msra.mxu0 0.0
  %4483 = vmatprep.subr.mxu0 0.0
  %4484 = vmatpush1.msra.mxu0 0.0
  %4485 = vmatprep.subr.mxu0 0.0
  %4486 = vmatpush1.msra.mxu0 0.0
  %4487 = vmatprep.subr.mxu0 0.0
  %4488 = vmatpush1.msra.mxu0 0.0
  %4489 = vmatprep.subr.mxu0 0.0
  %4490 = vmatpush1.msra.mxu0 0.0
  %4491 = vmatprep.subr.mxu0 0.0
  %4492 = vmatpush1.msra.mxu0 0.0
  %4493 = vmatprep.subr.mxu0 0.0
  %4494 = vmatpush1.msra.mxu0 0.0
  %4495 = vmatprep.subr.mxu0 0.0
  %4496 = vmatpush1.msra.mxu0 0.0
  %4497 = vmatprep.subr.mxu0 0.0
  %4498 = vmatpush1.msra.mxu0 0.0
  %4499 = vmatprep.subr.mxu0 0.0
  %4500 = vmatpush1.msra.mxu0 0.0
  %4501 = vmatprep.subr.mxu0 0.0
  %4502 = vmatpush1.msra.mxu0 0.0
  %4503 = vmatprep.subr.mxu0 0.0
  %4504 = vmatpush1.msra.mxu0 0.0
  %4505 = vmatprep.subr.mxu0 0.0
  %4506 = vmatpush1.msra.mxu0 0.0
  %4507 = vmatprep.subr.mxu0 0.0
  %4508 = vmatpush1.msra.mxu0 0.0
  %4509 = vmatprep.subr.mxu0 0.0
  %4510 = vmatpush1.msra.mxu0 0.0
  %4511 = vmatprep.subr.mxu0 0.0
  %4512 = vmatpush1.msra.mxu0 0.0
  %4513 = vmatprep.subr.mxu0 0.0
  %4514 = vmatpush1.msra.mxu0 0.0
  %4515 = vmatprep.subr.mxu0 0.0
  %4516 = vmatpush1.msra.mxu0 0.0
  %4517 = vmatprep.subr.mxu0 0.0
  %4518 = vmatpush1.msra.mxu0 0.0
  %4519 = vmatprep.subr.mxu0 0.0
  %4520 = vmatpush1.msra.mxu0 0.0
  %4521 = vmatprep.subr.mxu0 0.0
  %4522 = vmatpush1.msra.mxu0 0.0
  %4523 = vmatprep.subr.mxu0 0.0
  %4524 = vmatpush1.msra.mxu0 0.0
  %4525 = vmatprep.subr.mxu0 0.0
  %4526 = vmatpush1.msra.mxu0 0.0
  %4527 = vmatprep.subr.mxu0 0.0
  %4528 = vmatpush1.msra.mxu0 0.0
  %4529 = vmatprep.subr.mxu0 0.0
  %4530 = vmatpush1.msra.mxu0 0.0
  %4531 = vmatprep.mubr.f32.mxu0 0.0
  %4532 = vmatmul.mubr.f32.gmra.mrb[0].mxu0 %v2633
  %v4533 = vpop.f32.mrb[0].mxu0
  %v4534 = vadd.f32 %v2067, %v4533
  %v4535 = vpop.f32.mrb[0].mxu0
  %v4536 = vadd.f32 %v2069, %v4535
  %4537 = vdwg.mxu0
  %4538 = vmatprep.subr.mxu0 %v2737
  %4539 = vmatpush1.msra.mxu0 %v2735
  %4540 = vmatprep.subr.mxu0 0.0
  %4541 = vmatpush1.msra.mxu0 0.0
  %4542 = vmatprep.subr.mxu0 0.0
  %4543 = vmatpush1.msra.mxu0 0.0
  %4544 = vmatprep.subr.mxu0 0.0
  %4545 = vmatpush1.msra.mxu0 0.0
  %4546 = vmatprep.subr.mxu0 0.0
  %4547 = vmatpush1.msra.mxu0 0.0
  %4548 = vmatprep.subr.mxu0 0.0
  %4549 = vmatpush1.msra.mxu0 0.0
  %4550 = vmatprep.subr.mxu0 0.0
  %4551 = vmatpush1.msra.mxu0 0.0
  %4552 = vmatprep.subr.mxu0 0.0
  %4553 = vmatpush1.msra.mxu0 0.0
  %4554 = vmatprep.subr.mxu0 0.0
  %4555 = vmatpush1.msra.mxu0 0.0
  %4556 = vmatprep.subr.mxu0 0.0
  %4557 = vmatpush1.msra.mxu0 0.0
  %4558 = vmatprep.subr.mxu0 0.0
  %4559 = vmatpush1.msra.mxu0 0.0
  %4560 = vmatprep.subr.mxu0 0.0
  %4561 = vmatpush1.msra.mxu0 0.0
  %4562 = vmatprep.subr.mxu0 0.0
  %4563 = vmatpush1.msra.mxu0 0.0
  %4564 = vmatprep.subr.mxu0 0.0
  %4565 = vmatpush1.msra.mxu0 0.0
  %4566 = vmatprep.subr.mxu0 0.0
  %4567 = vmatpush1.msra.mxu0 0.0
  %4568 = vmatprep.subr.mxu0 0.0
  %4569 = vmatpush1.msra.mxu0 0.0
  %4570 = vmatprep.subr.mxu0 0.0
  %4571 = vmatpush1.msra.mxu0 0.0
  %4572 = vmatprep.subr.mxu0 0.0
  %4573 = vmatpush1.msra.mxu0 0.0
  %4574 = vmatprep.subr.mxu0 0.0
  %4575 = vmatpush1.msra.mxu0 0.0
  %4576 = vmatprep.subr.mxu0 0.0
  %4577 = vmatpush1.msra.mxu0 0.0
  %4578 = vmatprep.subr.mxu0 0.0
  %4579 = vmatpush1.msra.mxu0 0.0
  %4580 = vmatprep.subr.mxu0 0.0
  %4581 = vmatpush1.msra.mxu0 0.0
  %4582 = vmatprep.subr.mxu0 0.0
  %4583 = vmatpush1.msra.mxu0 0.0
  %4584 = vmatprep.subr.mxu0 0.0
  %4585 = vmatpush1.msra.mxu0 0.0
  %4586 = vmatprep.subr.mxu0 0.0
  %4587 = vmatpush1.msra.mxu0 0.0
  %4588 = vmatprep.subr.mxu0 0.0
  %4589 = vmatpush1.msra.mxu0 0.0
  %4590 = vmatprep.subr.mxu0 0.0
  %4591 = vmatpush1.msra.mxu0 0.0
  %4592 = vmatprep.subr.mxu0 0.0
  %4593 = vmatpush1.msra.mxu0 0.0
  %4594 = vmatprep.subr.mxu0 0.0
  %4595 = vmatpush1.msra.mxu0 0.0
  %4596 = vmatprep.subr.mxu0 0.0
  %4597 = vmatpush1.msra.mxu0 0.0
  %4598 = vmatprep.subr.mxu0 0.0
  %4599 = vmatpush1.msra.mxu0 0.0
  %4600 = vmatprep.subr.mxu0 0.0
  %4601 = vmatpush1.msra.mxu0 0.0
  %4602 = vmatprep.mubr.f32.mxu0 0.0
  %4603 = vmatmul.mubr.f32.gmra.mrb[0].mxu0 %v2633
  %v4604 = vpop.f32.mrb[0].mxu0
  %v4605 = vadd.f32 %v2138, %v4604
  %v4606 = vpop.f32.mrb[0].mxu0
  %v4607 = vadd.f32 %v2140, %v4606
  %4608 = vdwg.mxu0
  %4609 = vmatprep.subr.mxu0 %v2741
  %4610 = vmatpush1.msra.mxu0 %v2739
  %4611 = vmatprep.subr.mxu0 0.0
  %4612 = vmatpush1.msra.mxu0 0.0
  %4613 = vmatprep.subr.mxu0 0.0
  %4614 = vmatpush1.msra.mxu0 0.0
  %4615 = vmatprep.subr.mxu0 0.0
  %4616 = vmatpush1.msra.mxu0 0.0
  %4617 = vmatprep.subr.mxu0 0.0
  %4618 = vmatpush1.msra.mxu0 0.0
  %4619 = vmatprep.subr.mxu0 0.0
  %4620 = vmatpush1.msra.mxu0 0.0
  %4621 = vmatprep.subr.mxu0 0.0
  %4622 = vmatpush1.msra.mxu0 0.0
  %4623 = vmatprep.subr.mxu0 0.0
  %4624 = vmatpush1.msra.mxu0 0.0
  %4625 = vmatprep.subr.mxu0 0.0
  %4626 = vmatpush1.msra.mxu0 0.0
  %4627 = vmatprep.subr.mxu0 0.0
  %4628 = vmatpush1.msra.mxu0 0.0
  %4629 = vmatprep.subr.mxu0 0.0
  %4630 = vmatpush1.msra.mxu0 0.0
  %4631 = vmatprep.subr.mxu0 0.0
  %4632 = vmatpush1.msra.mxu0 0.0
  %4633 = vmatprep.subr.mxu0 0.0
  %4634 = vmatpush1.msra.mxu0 0.0
  %4635 = vmatprep.subr.mxu0 0.0
  %4636 = vmatpush1.msra.mxu0 0.0
  %4637 = vmatprep.subr.mxu0 0.0
  %4638 = vmatpush1.msra.mxu0 0.0
  %4639 = vmatprep.subr.mxu0 0.0
  %4640 = vmatpush1.msra.mxu0 0.0
  %4641 = vmatprep.subr.mxu0 0.0
  %4642 = vmatpush1.msra.mxu0 0.0
  %4643 = vmatprep.subr.mxu0 0.0
  %4644 = vmatpush1.msra.mxu0 0.0
  %4645 = vmatprep.subr.mxu0 0.0
  %4646 = vmatpush1.msra.mxu0 0.0
  %4647 = vmatprep.subr.mxu0 0.0
  %4648 = vmatpush1.msra.mxu0 0.0
  %4649 = vmatprep.subr.mxu0 0.0
  %4650 = vmatpush1.msra.mxu0 0.0
  %4651 = vmatprep.subr.mxu0 0.0
  %4652 = vmatpush1.msra.mxu0 0.0
  %4653 = vmatprep.subr.mxu0 0.0
  %4654 = vmatpush1.msra.mxu0 0.0
  %4655 = vmatprep.subr.mxu0 0.0
  %4656 = vmatpush1.msra.mxu0 0.0
  %4657 = vmatprep.subr.mxu0 0.0
  %4658 = vmatpush1.msra.mxu0 0.0
  %4659 = vmatprep.subr.mxu0 0.0
  %4660 = vmatpush1.msra.mxu0 0.0
  %4661 = vmatprep.subr.mxu0 0.0
  %4662 = vmatpush1.msra.mxu0 0.0
  %4663 = vmatprep.subr.mxu0 0.0
  %4664 = vmatpush1.msra.mxu0 0.0
  %4665 = vmatprep.subr.mxu0 0.0
  %4666 = vmatpush1.msra.mxu0 0.0
  %4667 = vmatprep.subr.mxu0 0.0
  %4668 = vmatpush1.msra.mxu0 0.0
  %4669 = vmatprep.subr.mxu0 0.0
  %4670 = vmatpush1.msra.mxu0 0.0
  %4671 = vmatprep.subr.mxu0 0.0
  %4672 = vmatpush1.msra.mxu0 0.0
  %4673 = vmatprep.mubr.f32.mxu0 0.0
  %4674 = vmatmul.mubr.f32.gmra.mrb[0].mxu0 %v2633
  %v4675 = vpop.f32.mrb[0].mxu0
  %v4676 = vadd.f32 %v2209, %v4675
  %v4677 = vpop.f32.mrb[0].mxu0
  %v4678 = vadd.f32 %v2211, %v4677
  %4679 = vdwg.mxu0
  %4680 = vmatprep.subr.mxu0 %v2745
  %4681 = vmatpush1.msra.mxu0 %v2743
  %4682 = vmatprep.subr.mxu0 0.0
  %4683 = vmatpush1.msra.mxu0 0.0
  %4684 = vmatprep.subr.mxu0 0.0
  %4685 = vmatpush1.msra.mxu0 0.0
  %4686 = vmatprep.subr.mxu0 0.0
  %4687 = vmatpush1.msra.mxu0 0.0
  %4688 = vmatprep.subr.mxu0 0.0
  %4689 = vmatpush1.msra.mxu0 0.0
  %4690 = vmatprep.subr.mxu0 0.0
  %4691 = vmatpush1.msra.mxu0 0.0
  %4692 = vmatprep.subr.mxu0 0.0
  %4693 = vmatpush1.msra.mxu0 0.0
  %4694 = vmatprep.subr.mxu0 0.0
  %4695 = vmatpush1.msra.mxu0 0.0
  %4696 = vmatprep.subr.mxu0 0.0
  %4697 = vmatpush1.msra.mxu0 0.0
  %4698 = vmatprep.subr.mxu0 0.0
  %4699 = vmatpush1.msra.mxu0 0.0
  %4700 = vmatprep.subr.mxu0 0.0
  %4701 = vmatpush1.msra.mxu0 0.0
  %4702 = vmatprep.subr.mxu0 0.0
  %4703 = vmatpush1.msra.mxu0 0.0
  %4704 = vmatprep.subr.mxu0 0.0
  %4705 = vmatpush1.msra.mxu0 0.0
  %4706 = vmatprep.subr.mxu0 0.0
  %4707 = vmatpush1.msra.mxu0 0.0
  %4708 = vmatprep.subr.mxu0 0.0
  %4709 = vmatpush1.msra.mxu0 0.0
  %4710 = vmatprep.subr.mxu0 0.0
  %4711 = vmatpush1.msra.mxu0 0.0
  %4712 = vmatprep.subr.mxu0 0.0
  %4713 = vmatpush1.msra.mxu0 0.0
  %4714 = vmatprep.subr.mxu0 0.0
  %4715 = vmatpush1.msra.mxu0 0.0
  %4716 = vmatprep.subr.mxu0 0.0
  %4717 = vmatpush1.msra.mxu0 0.0
  %4718 = vmatprep.subr.mxu0 0.0
  %4719 = vmatpush1.msra.mxu0 0.0
  %4720 = vmatprep.subr.mxu0 0.0
  %4721 = vmatpush1.msra.mxu0 0.0
  %4722 = vmatprep.subr.mxu0 0.0
  %4723 = vmatpush1.msra.mxu0 0.0
  %4724 = vmatprep.subr.mxu0 0.0
  %4725 = vmatpush1.msra.mxu0 0.0
  %4726 = vmatprep.subr.mxu0 0.0
  %4727 = vmatpush1.msra.mxu0 0.0
  %4728 = vmatprep.subr.mxu0 0.0
  %4729 = vmatpush1.msra.mxu0 0.0
  %4730 = vmatprep.subr.mxu0 0.0
  %4731 = vmatpush1.msra.mxu0 0.0
  %4732 = vmatprep.subr.mxu0 0.0
  %4733 = vmatpush1.msra.mxu0 0.0
  %4734 = vmatprep.subr.mxu0 0.0
  %4735 = vmatpush1.msra.mxu0 0.0
  %4736 = vmatprep.subr.mxu0 0.0
  %4737 = vmatpush1.msra.mxu0 0.0
  %4738 = vmatprep.subr.mxu0 0.0
  %4739 = vmatpush1.msra.mxu0 0.0
  %4740 = vmatprep.subr.mxu0 0.0
  %4741 = vmatpush1.msra.mxu0 0.0
  %4742 = vmatprep.subr.mxu0 0.0
  %4743 = vmatpush1.msra.mxu0 0.0
  %4744 = vmatprep.mubr.f32.mxu0 0.0
  %4745 = vmatmul.mubr.f32.gmra.mrb[0].mxu0 %v2633
  %v4746 = vpop.f32.mrb[0].mxu0
  %v4747 = vadd.f32 %v2280, %v4746
  %v4748 = vpop.f32.mrb[0].mxu0
  %v4749 = vadd.f32 %v2282, %v4748
  %4750 = vdwg.mxu0
  %4751 = vmatprep.subr.mxu0 %v2749
  %4752 = vmatpush1.msra.mxu0 %v2747
  %4753 = vmatprep.subr.mxu0 0.0
  %4754 = vmatpush1.msra.mxu0 0.0
  %4755 = vmatprep.subr.mxu0 0.0
  %4756 = vmatpush1.msra.mxu0 0.0
  %4757 = vmatprep.subr.mxu0 0.0
  %4758 = vmatpush1.msra.mxu0 0.0
  %4759 = vmatprep.subr.mxu0 0.0
  %4760 = vmatpush1.msra.mxu0 0.0
  %4761 = vmatprep.subr.mxu0 0.0
  %4762 = vmatpush1.msra.mxu0 0.0
  %4763 = vmatprep.subr.mxu0 0.0
  %4764 = vmatpush1.msra.mxu0 0.0
  %4765 = vmatprep.subr.mxu0 0.0
  %4766 = vmatpush1.msra.mxu0 0.0
  %4767 = vmatprep.subr.mxu0 0.0
  %4768 = vmatpush1.msra.mxu0 0.0
  %4769 = vmatprep.subr.mxu0 0.0
  %4770 = vmatpush1.msra.mxu0 0.0
  %4771 = vmatprep.subr.mxu0 0.0
  %4772 = vmatpush1.msra.mxu0 0.0
  %4773 = vmatprep.subr.mxu0 0.0
  %4774 = vmatpush1.msra.mxu0 0.0
  %4775 = vmatprep.subr.mxu0 0.0
  %4776 = vmatpush1.msra.mxu0 0.0
  %4777 = vmatprep.subr.mxu0 0.0
  %4778 = vmatpush1.msra.mxu0 0.0
  %4779 = vmatprep.subr.mxu0 0.0
  %4780 = vmatpush1.msra.mxu0 0.0
  %4781 = vmatprep.subr.mxu0 0.0
  %4782 = vmatpush1.msra.mxu0 0.0
  %4783 = vmatprep.subr.mxu0 0.0
  %4784 = vmatpush1.msra.mxu0 0.0
  %4785 = vmatprep.subr.mxu0 0.0
  %4786 = vmatpush1.msra.mxu0 0.0
  %4787 = vmatprep.subr.mxu0 0.0
  %4788 = vmatpush1.msra.mxu0 0.0
  %4789 = vmatprep.subr.mxu0 0.0
  %4790 = vmatpush1.msra.mxu0 0.0
  %4791 = vmatprep.subr.mxu0 0.0
  %4792 = vmatpush1.msra.mxu0 0.0
  %4793 = vmatprep.subr.mxu0 0.0
  %4794 = vmatpush1.msra.mxu0 0.0
  %4795 = vmatprep.subr.mxu0 0.0
  %4796 = vmatpush1.msra.mxu0 0.0
  %4797 = vmatprep.subr.mxu0 0.0
  %4798 = vmatpush1.msra.mxu0 0.0
  %4799 = vmatprep.subr.mxu0 0.0
  %4800 = vmatpush1.msra.mxu0 0.0
  %4801 = vmatprep.subr.mxu0 0.0
  %4802 = vmatpush1.msra.mxu0 0.0
  %4803 = vmatprep.subr.mxu0 0.0
  %4804 = vmatpush1.msra.mxu0 0.0
  %4805 = vmatprep.subr.mxu0 0.0
  %4806 = vmatpush1.msra.mxu0 0.0
  %4807 = vmatprep.subr.mxu0 0.0
  %4808 = vmatpush1.msra.mxu0 0.0
  %4809 = vmatprep.subr.mxu0 0.0
  %4810 = vmatpush1.msra.mxu0 0.0
  %4811 = vmatprep.subr.mxu0 0.0
  %4812 = vmatpush1.msra.mxu0 0.0
  %4813 = vmatprep.subr.mxu0 0.0
  %4814 = vmatpush1.msra.mxu0 0.0
  %4815 = vmatprep.mubr.f32.mxu0 0.0
  %4816 = vmatmul.mubr.f32.gmra.mrb[0].mxu0 %v2633
  %v4817 = vpop.f32.mrb[0].mxu0
  %v4818 = vadd.f32 %v2351, %v4817
  %v4819 = vpop.f32.mrb[0].mxu0
  %v4820 = vadd.f32 %v2353, %v4819
  %4821 = vdwg.mxu0
  %4822 = vmatprep.subr.mxu0 %v2753
  %4823 = vmatpush1.msra.mxu0 %v2751
  %4824 = vmatprep.subr.mxu0 0.0
  %4825 = vmatpush1.msra.mxu0 0.0
  %4826 = vmatprep.subr.mxu0 0.0
  %4827 = vmatpush1.msra.mxu0 0.0
  %4828 = vmatprep.subr.mxu0 0.0
  %4829 = vmatpush1.msra.mxu0 0.0
  %4830 = vmatprep.subr.mxu0 0.0
  %4831 = vmatpush1.msra.mxu0 0.0
  %4832 = vmatprep.subr.mxu0 0.0
  %4833 = vmatpush1.msra.mxu0 0.0
  %4834 = vmatprep.subr.mxu0 0.0
  %4835 = vmatpush1.msra.mxu0 0.0
  %4836 = vmatprep.subr.mxu0 0.0
  %4837 = vmatpush1.msra.mxu0 0.0
  %4838 = vmatprep.subr.mxu0 0.0
  %4839 = vmatpush1.msra.mxu0 0.0
  %4840 = vmatprep.subr.mxu0 0.0
  %4841 = vmatpush1.msra.mxu0 0.0
  %4842 = vmatprep.subr.mxu0 0.0
  %4843 = vmatpush1.msra.mxu0 0.0
  %4844 = vmatprep.subr.mxu0 0.0
  %4845 = vmatpush1.msra.mxu0 0.0
  %4846 = vmatprep.subr.mxu0 0.0
  %4847 = vmatpush1.msra.mxu0 0.0
  %4848 = vmatprep.subr.mxu0 0.0
  %4849 = vmatpush1.msra.mxu0 0.0
  %4850 = vmatprep.subr.mxu0 0.0
  %4851 = vmatpush1.msra.mxu0 0.0
  %4852 = vmatprep.subr.mxu0 0.0
  %4853 = vmatpush1.msra.mxu0 0.0
  %4854 = vmatprep.subr.mxu0 0.0
  %4855 = vmatpush1.msra.mxu0 0.0
  %4856 = vmatprep.subr.mxu0 0.0
  %4857 = vmatpush1.msra.mxu0 0.0
  %4858 = vmatprep.subr.mxu0 0.0
  %4859 = vmatpush1.msra.mxu0 0.0
  %4860 = vmatprep.subr.mxu0 0.0
  %4861 = vmatpush1.msra.mxu0 0.0
  %4862 = vmatprep.subr.mxu0 0.0
  %4863 = vmatpush1.msra.mxu0 0.0
  %4864 = vmatprep.subr.mxu0 0.0
  %4865 = vmatpush1.msra.mxu0 0.0
  %4866 = vmatprep.subr.mxu0 0.0
  %4867 = vmatpush1.msra.mxu0 0.0
  %4868 = vmatprep.subr.mxu0 0.0
  %4869 = vmatpush1.msra.mxu0 0.0
  %4870 = vmatprep.subr.mxu0 0.0
  %4871 = vmatpush1.msra.mxu0 0.0
  %4872 = vmatprep.subr.mxu0 0.0
  %4873 = vmatpush1.msra.mxu0 0.0
  %4874 = vmatprep.subr.mxu0 0.0
  %4875 = vmatpush1.msra.mxu0 0.0
  %4876 = vmatprep.subr.mxu0 0.0
  %4877 = vmatpush1.msra.mxu0 0.0
  %4878 = vmatprep.subr.mxu0 0.0
  %4879 = vmatpush1.msra.mxu0 0.0
  %4880 = vmatprep.subr.mxu0 0.0
  %4881 = vmatpush1.msra.mxu0 0.0
  %4882 = vmatprep.subr.mxu0 0.0
  %4883 = vmatpush1.msra.mxu0 0.0
  %4884 = vmatprep.subr.mxu0 0.0
  %4885 = vmatpush1.msra.mxu0 0.0
  %4886 = vmatprep.mubr.f32.mxu0 0.0
  %4887 = vmatmul.mubr.f32.gmra.mrb[0].mxu0 %v2633
  %v4888 = vpop.f32.mrb[0].mxu0
  %v4889 = vadd.f32 %v2422, %v4888
  %v4890 = vpop.f32.mrb[0].mxu0
  %v4891 = vadd.f32 %v2424, %v4890
  %4892 = vdwg.mxu0
  %4893 = vmatprep.subr.mxu0 %v2757
  %4894 = vmatpush1.msra.mxu0 %v2755
  %4895 = vmatprep.subr.mxu0 0.0
  %4896 = vmatpush1.msra.mxu0 0.0
  %4897 = vmatprep.subr.mxu0 0.0
  %4898 = vmatpush1.msra.mxu0 0.0
  %4899 = vmatprep.subr.mxu0 0.0
  %4900 = vmatpush1.msra.mxu0 0.0
  %4901 = vmatprep.subr.mxu0 0.0
  %4902 = vmatpush1.msra.mxu0 0.0
  %4903 = vmatprep.subr.mxu0 0.0
  %4904 = vmatpush1.msra.mxu0 0.0
  %4905 = vmatprep.subr.mxu0 0.0
  %4906 = vmatpush1.msra.mxu0 0.0
  %4907 = vmatprep.subr.mxu0 0.0
  %4908 = vmatpush1.msra.mxu0 0.0
  %4909 = vmatprep.subr.mxu0 0.0
  %4910 = vmatpush1.msra.mxu0 0.0
  %4911 = vmatprep.subr.mxu0 0.0
  %4912 = vmatpush1.msra.mxu0 0.0
  %4913 = vmatprep.subr.mxu0 0.0
  %4914 = vmatpush1.msra.mxu0 0.0
  %4915 = vmatprep.subr.mxu0 0.0
  %4916 = vmatpush1.msra.mxu0 0.0
  %4917 = vmatprep.subr.mxu0 0.0
  %4918 = vmatpush1.msra.mxu0 0.0
  %4919 = vmatprep.subr.mxu0 0.0
  %4920 = vmatpush1.msra.mxu0 0.0
  %4921 = vmatprep.subr.mxu0 0.0
  %4922 = vmatpush1.msra.mxu0 0.0
  %4923 = vmatprep.subr.mxu0 0.0
  %4924 = vmatpush1.msra.mxu0 0.0
  %4925 = vmatprep.subr.mxu0 0.0
  %4926 = vmatpush1.msra.mxu0 0.0
  %4927 = vmatprep.subr.mxu0 0.0
  %4928 = vmatpush1.msra.mxu0 0.0
  %4929 = vmatprep.subr.mxu0 0.0
  %4930 = vmatpush1.msra.mxu0 0.0
  %4931 = vmatprep.subr.mxu0 0.0
  %4932 = vmatpush1.msra.mxu0 0.0
  %4933 = vmatprep.subr.mxu0 0.0
  %4934 = vmatpush1.msra.mxu0 0.0
  %4935 = vmatprep.subr.mxu0 0.0
  %4936 = vmatpush1.msra.mxu0 0.0
  %4937 = vmatprep.subr.mxu0 0.0
  %4938 = vmatpush1.msra.mxu0 0.0
  %4939 = vmatprep.subr.mxu0 0.0
  %4940 = vmatpush1.msra.mxu0 0.0
  %4941 = vmatprep.subr.mxu0 0.0
  %4942 = vmatpush1.msra.mxu0 0.0
  %4943 = vmatprep.subr.mxu0 0.0
  %4944 = vmatpush1.msra.mxu0 0.0
  %4945 = vmatprep.subr.mxu0 0.0
  %4946 = vmatpush1.msra.mxu0 0.0
  %4947 = vmatprep.subr.mxu0 0.0
  %4948 = vmatpush1.msra.mxu0 0.0
  %4949 = vmatprep.subr.mxu0 0.0
  %4950 = vmatpush1.msra.mxu0 0.0
  %4951 = vmatprep.subr.mxu0 0.0
  %4952 = vmatpush1.msra.mxu0 0.0
  %4953 = vmatprep.subr.mxu0 0.0
  %4954 = vmatpush1.msra.mxu0 0.0
  %4955 = vmatprep.subr.mxu0 0.0
  %4956 = vmatpush1.msra.mxu0 0.0
  %4957 = vmatprep.mubr.f32.mxu0 0.0
  %4958 = vmatmul.mubr.f32.gmra.mrb[0].mxu0 %v2633
  %v4959 = vpop.f32.mrb[0].mxu0
  %v4960 = vadd.f32 %v2493, %v4959
  %v4961 = vpop.f32.mrb[0].mxu0
  %v4962 = vadd.f32 %v2495, %v4961
  %4963 = vdwg.mxu0
  %4964 = vmatprep.subr.mxu0 %v2761
  %4965 = vmatpush1.msra.mxu0 %v2759
  %4966 = vmatprep.subr.mxu0 0.0
  %4967 = vmatpush1.msra.mxu0 0.0
  %4968 = vmatprep.subr.mxu0 0.0
  %4969 = vmatpush1.msra.mxu0 0.0
  %4970 = vmatprep.subr.mxu0 0.0
  %4971 = vmatpush1.msra.mxu0 0.0
  %4972 = vmatprep.subr.mxu0 0.0
  %4973 = vmatpush1.msra.mxu0 0.0
  %4974 = vmatprep.subr.mxu0 0.0
  %4975 = vmatpush1.msra.mxu0 0.0
  %4976 = vmatprep.subr.mxu0 0.0
  %4977 = vmatpush1.msra.mxu0 0.0
  %4978 = vmatprep.subr.mxu0 0.0
  %4979 = vmatpush1.msra.mxu0 0.0
  %4980 = vmatprep.subr.mxu0 0.0
  %4981 = vmatpush1.msra.mxu0 0.0
  %4982 = vmatprep.subr.mxu0 0.0
  %4983 = vmatpush1.msra.mxu0 0.0
  %4984 = vmatprep.subr.mxu0 0.0
  %4985 = vmatpush1.msra.mxu0 0.0
  %4986 = vmatprep.subr.mxu0 0.0
  %4987 = vmatpush1.msra.mxu0 0.0
  %4988 = vmatprep.subr.mxu0 0.0
  %4989 = vmatpush1.msra.mxu0 0.0
  %4990 = vmatprep.subr.mxu0 0.0
  %4991 = vmatpush1.msra.mxu0 0.0
  %4992 = vmatprep.subr.mxu0 0.0
  %4993 = vmatpush1.msra.mxu0 0.0
  %4994 = vmatprep.subr.mxu0 0.0
  %4995 = vmatpush1.msra.mxu0 0.0
  %4996 = vmatprep.subr.mxu0 0.0
  %4997 = vmatpush1.msra.mxu0 0.0
  %4998 = vmatprep.subr.mxu0 0.0
  %4999 = vmatpush1.msra.mxu0 0.0
  %5000 = vmatprep.subr.mxu0 0.0
  %5001 = vmatpush1.msra.mxu0 0.0
  %5002 = vmatprep.subr.mxu0 0.0
  %5003 = vmatpush1.msra.mxu0 0.0
  %5004 = vmatprep.subr.mxu0 0.0
  %5005 = vmatpush1.msra.mxu0 0.0
  %5006 = vmatprep.subr.mxu0 0.0
  %5007 = vmatpush1.msra.mxu0 0.0
  %5008 = vmatprep.subr.mxu0 0.0
  %5009 = vmatpush1.msra.mxu0 0.0
  %5010 = vmatprep.subr.mxu0 0.0
  %5011 = vmatpush1.msra.mxu0 0.0
  %5012 = vmatprep.subr.mxu0 0.0
  %5013 = vmatpush1.msra.mxu0 0.0
  %5014 = vmatprep.subr.mxu0 0.0
  %5015 = vmatpush1.msra.mxu0 0.0
  %5016 = vmatprep.subr.mxu0 0.0
  %5017 = vmatpush1.msra.mxu0 0.0
  %5018 = vmatprep.subr.mxu0 0.0
  %5019 = vmatpush1.msra.mxu0 0.0
  %5020 = vmatprep.subr.mxu0 0.0
  %5021 = vmatpush1.msra.mxu0 0.0
  %5022 = vmatprep.subr.mxu0 0.0
  %5023 = vmatpush1.msra.mxu0 0.0
  %5024 = vmatprep.subr.mxu0 0.0
  %5025 = vmatpush1.msra.mxu0 0.0
  %5026 = vmatprep.subr.mxu0 0.0
  %5027 = vmatpush1.msra.mxu0 0.0
  %5028 = vmatprep.mubr.f32.mxu0 0.0
  %5029 = vmatmul.mubr.f32.gmra.mrb[0].mxu0 %v2633
  %v5030 = vpop.f32.mrb[0].mxu0
  %v5031 = vadd.f32 %v2564, %v5030
  %v5032 = vpop.f32.mrb[0].mxu0
  %v5033 = vadd.f32 %v2566, %v5032
  %5034 = vdwg.mxu0
  %s5035 = scalar_lea.vmem %s1, 16
  %v5036 = vld [vmem:[%s5035] sm:$0xff]
  %v5037 = vld [vmem:[%s0 + $0x20] sm:$0xff]
  %v5038 = vld [vmem:[%s0 + $0x28] sm:$0xff]
  %v5039 = vld [vmem:[%s0 + $0x30] sm:$0xff]
  %v5040 = vld [vmem:[%s0 + $0x38] sm:$0xff]
  %v5041 = vld [vmem:[%s0 + $0x40] sm:$0xff]
  %v5042 = vld [vmem:[%s0 + $0x48] sm:$0xff]
  %v5043 = vld [vmem:[%s0 + $0x50] sm:$0xff]
  %v5044 = vld [vmem:[%s0 + $0x58] sm:$0xff]
  %v5045 = vld [vmem:[%s0 + $0x60] sm:$0xff]
  %v5046 = vld [vmem:[%s0 + $0x68] sm:$0xff]
  %v5047 = vld [vmem:[%s0 + $0x70] sm:$0xff]
  %v5048 = vld [vmem:[%s0 + $0x78] sm:$0xff]
  %v5049 = vld [vmem:[%s0 + $0x80] sm:$0xff]
  %v5050 = vld [vmem:[%s0 + $0x88] sm:$0xff]
  %v5051 = vld [vmem:[%s0 + $0x90] sm:$0xff]
  %v5052 = vld [vmem:[%s0 + $0x98] sm:$0xff]
  %v5053 = vld [vmem:[%s0 + $0xa0] sm:$0xff]
  %v5054 = vld [vmem:[%s0 + $0xa8] sm:$0xff]
  %v5055 = vld [vmem:[%s0 + $0xb0] sm:$0xff]
  %v5056 = vld [vmem:[%s0 + $0xb8] sm:$0xff]
  %v5057 = vld [vmem:[%s0 + $0xc0] sm:$0xff]
  %v5058 = vld [vmem:[%s0 + $0xc8] sm:$0xff]
  %v5059 = vld [vmem:[%s0 + $0xd0] sm:$0xff]
  %v5060 = vld [vmem:[%s0 + $0xd8] sm:$0xff]
  %v5061 = vld [vmem:[%s0 + $0xe0] sm:$0xff]
  %v5062 = vld [vmem:[%s0 + $0xe8] sm:$0xff]
  %v5063 = vld [vmem:[%s0 + $0xf0] sm:$0xff]
  %v5064 = vld [vmem:[%s0 + $0xf8] sm:$0xff]
  %v5065 = vld [vmem:[%s0 + $0x100] sm:$0xff]
  %v5066 = vld [vmem:[%s0 + $0x108] sm:$0xff]
  %v5067 = vld [vmem:[%s0 + $0x110] sm:$0xff]
  %v5068 = vld [vmem:[%s0 + $0x118] sm:$0xff]
  %v5101 = vcombine.high %v5037, %v5037
  %v5102 = vcombine.high %v5038, %v5038
  %v5103 = vcombine.high %v5039, %v5039
  %v5104 = vcombine.high %v5040, %v5040
  %v5105 = vcombine.high %v5041, %v5041
  %v5106 = vcombine.high %v5042, %v5042
  %v5107 = vcombine.high %v5043, %v5043
  %v5108 = vcombine.high %v5044, %v5044
  %v5109 = vcombine.high %v5045, %v5045
  %v5110 = vcombine.high %v5046, %v5046
  %v5111 = vcombine.high %v5047, %v5047
  %v5112 = vcombine.high %v5048, %v5048
  %v5113 = vcombine.high %v5049, %v5049
  %v5114 = vcombine.high %v5050, %v5050
  %v5115 = vcombine.high %v5051, %v5051
  %v5116 = vcombine.high %v5052, %v5052
  %v5117 = vcombine.high %v5053, %v5053
  %v5118 = vcombine.high %v5054, %v5054
  %v5119 = vcombine.high %v5055, %v5055
  %v5120 = vcombine.high %v5056, %v5056
  %v5121 = vcombine.high %v5057, %v5057
  %v5122 = vcombine.high %v5058, %v5058
  %v5123 = vcombine.high %v5059, %v5059
  %v5124 = vcombine.high %v5060, %v5060
  %v5125 = vcombine.high %v5061, %v5061
  %v5126 = vcombine.high %v5062, %v5062
  %v5127 = vcombine.high %v5063, %v5063
  %v5128 = vcombine.high %v5064, %v5064
  %v5129 = vcombine.high %v5065, %v5065
  %v5130 = vcombine.high %v5066, %v5066
  %v5131 = vcombine.high %v5067, %v5067
  %v5132 = vcombine.high %v5068, %v5068
  %v5134 = vsel %vm163, %v5036, 0
  %v5136 = vsel %vm167, %v5037, 0
  %v5138 = vsel %vm167, %v5101, 0
  %v5140 = vsel %vm167, %v5038, 0
  %v5142 = vsel %vm167, %v5102, 0
  %v5144 = vsel %vm167, %v5039, 0
  %v5146 = vsel %vm167, %v5103, 0
  %v5148 = vsel %vm167, %v5040, 0
  %v5150 = vsel %vm167, %v5104, 0
  %v5152 = vsel %vm167, %v5041, 0
  %v5154 = vsel %vm167, %v5105, 0
  %v5156 = vsel %vm167, %v5042, 0
  %v5158 = vsel %vm167, %v5106, 0
  %v5160 = vsel %vm167, %v5043, 0
  %v5162 = vsel %vm167, %v5107, 0
  %v5164 = vsel %vm167, %v5044, 0
  %v5166 = vsel %vm167, %v5108, 0
  %v5168 = vsel %vm167, %v5045, 0
  %v5170 = vsel %vm167, %v5109, 0
  %v5172 = vsel %vm167, %v5046, 0
  %v5174 = vsel %vm167, %v5110, 0
  %v5176 = vsel %vm167, %v5047, 0
  %v5178 = vsel %vm167, %v5111, 0
  %v5180 = vsel %vm167, %v5048, 0
  %v5182 = vsel %vm167, %v5112, 0
  %v5184 = vsel %vm167, %v5049, 0
  %v5186 = vsel %vm167, %v5113, 0
  %v5188 = vsel %vm167, %v5050, 0
  %v5190 = vsel %vm167, %v5114, 0
  %v5192 = vsel %vm167, %v5051, 0
  %v5194 = vsel %vm167, %v5115, 0
  %v5196 = vsel %vm167, %v5052, 0
  %v5198 = vsel %vm167, %v5116, 0
  %v5200 = vsel %vm167, %v5053, 0
  %v5202 = vsel %vm167, %v5117, 0
  %v5204 = vsel %vm167, %v5054, 0
  %v5206 = vsel %vm167, %v5118, 0
  %v5208 = vsel %vm167, %v5055, 0
  %v5210 = vsel %vm167, %v5119, 0
  %v5212 = vsel %vm167, %v5056, 0
  %v5214 = vsel %vm167, %v5120, 0
  %v5216 = vsel %vm167, %v5057, 0
  %v5218 = vsel %vm167, %v5121, 0
  %v5220 = vsel %vm167, %v5058, 0
  %v5222 = vsel %vm167, %v5122, 0
  %v5224 = vsel %vm167, %v5059, 0
  %v5226 = vsel %vm167, %v5123, 0
  %v5228 = vsel %vm167, %v5060, 0
  %v5230 = vsel %vm167, %v5124, 0
  %v5232 = vsel %vm167, %v5061, 0
  %v5234 = vsel %vm167, %v5125, 0
  %v5236 = vsel %vm167, %v5062, 0
  %v5238 = vsel %vm167, %v5126, 0
  %v5240 = vsel %vm167, %v5063, 0
  %v5242 = vsel %vm167, %v5127, 0
  %v5244 = vsel %vm167, %v5064, 0
  %v5246 = vsel %vm167, %v5128, 0
  %v5248 = vsel %vm167, %v5065, 0
  %v5250 = vsel %vm167, %v5129, 0
  %v5252 = vsel %vm167, %v5066, 0
  %v5254 = vsel %vm167, %v5130, 0
  %v5256 = vsel %vm167, %v5067, 0
  %v5258 = vsel %vm167, %v5131, 0
  %v5260 = vsel %vm167, %v5068, 0
  %v5262 = vsel %vm167, %v5132, 0
  %5264 = vmatprep.subr.mxu0 %v5138
  %5265 = vmatpush1.msra.mxu0 %v5136
  %5266 = vmatprep.subr.mxu0 0.0
  %5267 = vmatpush1.msra.mxu0 0.0
  %5268 = vmatprep.subr.mxu0 0.0
  %5269 = vmatpush1.msra.mxu0 0.0
  %5270 = vmatprep.subr.mxu0 0.0
  %5271 = vmatpush1.msra.mxu0 0.0
  %5272 = vmatprep.subr.mxu0 0.0
  %5273 = vmatpush1.msra.mxu0 0.0
  %5274 = vmatprep.subr.mxu0 0.0
  %5275 = vmatpush1.msra.mxu0 0.0
  %5276 = vmatprep.subr.mxu0 0.0
  %5277 = vmatpush1.msra.mxu0 0.0
  %5278 = vmatprep.subr.mxu0 0.0
  %5279 = vmatpush1.msra.mxu0 0.0
  %5280 = vmatprep.subr.mxu0 0.0
  %5281 = vmatpush1.msra.mxu0 0.0
  %5282 = vmatprep.subr.mxu0 0.0
  %5283 = vmatpush1.msra.mxu0 0.0
  %5284 = vmatprep.subr.mxu0 0.0
  %5285 = vmatpush1.msra.mxu0 0.0
  %5286 = vmatprep.subr.mxu0 0.0
  %5287 = vmatpush1.msra.mxu0 0.0
  %5288 = vmatprep.subr.mxu0 0.0
  %5289 = vmatpush1.msra.mxu0 0.0
  %5290 = vmatprep.subr.mxu0 0.0
  %5291 = vmatpush1.msra.mxu0 0.0
  %5292 = vmatprep.subr.mxu0 0.0
  %5293 = vmatpush1.msra.mxu0 0.0
  %5294 = vmatprep.subr.mxu0 0.0
  %5295 = vmatpush1.msra.mxu0 0.0
  %5296 = vmatprep.subr.mxu0 0.0
  %5297 = vmatpush1.msra.mxu0 0.0
  %5298 = vmatprep.subr.mxu0 0.0
  %5299 = vmatpush1.msra.mxu0 0.0
  %5300 = vmatprep.subr.mxu0 0.0
  %5301 = vmatpush1.msra.mxu0 0.0
  %5302 = vmatprep.subr.mxu0 0.0
  %5303 = vmatpush1.msra.mxu0 0.0
  %5304 = vmatprep.subr.mxu0 0.0
  %5305 = vmatpush1.msra.mxu0 0.0
  %5306 = vmatprep.subr.mxu0 0.0
  %5307 = vmatpush1.msra.mxu0 0.0
  %5308 = vmatprep.subr.mxu0 0.0
  %5309 = vmatpush1.msra.mxu0 0.0
  %5310 = vmatprep.subr.mxu0 0.0
  %5311 = vmatpush1.msra.mxu0 0.0
  %5312 = vmatprep.subr.mxu0 0.0
  %5313 = vmatpush1.msra.mxu0 0.0
  %5314 = vmatprep.subr.mxu0 0.0
  %5315 = vmatpush1.msra.mxu0 0.0
  %5316 = vmatprep.subr.mxu0 0.0
  %5317 = vmatpush1.msra.mxu0 0.0
  %5318 = vmatprep.subr.mxu0 0.0
  %5319 = vmatpush1.msra.mxu0 0.0
  %5320 = vmatprep.subr.mxu0 0.0
  %5321 = vmatpush1.msra.mxu0 0.0
  %5322 = vmatprep.subr.mxu0 0.0
  %5323 = vmatpush1.msra.mxu0 0.0
  %5324 = vmatprep.subr.mxu0 0.0
  %5325 = vmatpush1.msra.mxu0 0.0
  %5326 = vmatprep.subr.mxu0 0.0
  %5327 = vmatpush1.msra.mxu0 0.0
  %5328 = vmatprep.mubr.f32.mxu0 0.0
  %5329 = vmatmul.mubr.f32.gmra.mrb[0].mxu0 %v5134
  %v5330 = vpop.f32.mrb[0].mxu0
  %v5331 = vadd.f32 0.0, %v5330
  %v5332 = vpop.f32.mrb[0].mxu0
  %v5333 = vadd.f32 0.0, %v5332
  %5334 = vdwg.mxu0
  %5335 = vmatprep.subr.mxu0 %v5142
  %5336 = vmatpush1.msra.mxu0 %v5140
  %5337 = vmatprep.subr.mxu0 0.0
  %5338 = vmatpush1.msra.mxu0 0.0
  %5339 = vmatprep.subr.mxu0 0.0
  %5340 = vmatpush1.msra.mxu0 0.0
  %5341 = vmatprep.subr.mxu0 0.0
  %5342 = vmatpush1.msra.mxu0 0.0
  %5343 = vmatprep.subr.mxu0 0.0
  %5344 = vmatpush1.msra.mxu0 0.0
  %5345 = vmatprep.subr.mxu0 0.0
  %5346 = vmatpush1.msra.mxu0 0.0
  %5347 = vmatprep.subr.mxu0 0.0
  %5348 = vmatpush1.msra.mxu0 0.0
  %5349 = vmatprep.subr.mxu0 0.0
  %5350 = vmatpush1.msra.mxu0 0.0
  %5351 = vmatprep.subr.mxu0 0.0
  %5352 = vmatpush1.msra.mxu0 0.0
  %5353 = vmatprep.subr.mxu0 0.0
  %5354 = vmatpush1.msra.mxu0 0.0
  %5355 = vmatprep.subr.mxu0 0.0
  %5356 = vmatpush1.msra.mxu0 0.0
  %5357 = vmatprep.subr.mxu0 0.0
  %5358 = vmatpush1.msra.mxu0 0.0
  %5359 = vmatprep.subr.mxu0 0.0
  %5360 = vmatpush1.msra.mxu0 0.0
  %5361 = vmatprep.subr.mxu0 0.0
  %5362 = vmatpush1.msra.mxu0 0.0
  %5363 = vmatprep.subr.mxu0 0.0
  %5364 = vmatpush1.msra.mxu0 0.0
  %5365 = vmatprep.subr.mxu0 0.0
  %5366 = vmatpush1.msra.mxu0 0.0
  %5367 = vmatprep.subr.mxu0 0.0
  %5368 = vmatpush1.msra.mxu0 0.0
  %5369 = vmatprep.subr.mxu0 0.0
  %5370 = vmatpush1.msra.mxu0 0.0
  %5371 = vmatprep.subr.mxu0 0.0
  %5372 = vmatpush1.msra.mxu0 0.0
  %5373 = vmatprep.subr.mxu0 0.0
  %5374 = vmatpush1.msra.mxu0 0.0
  %5375 = vmatprep.subr.mxu0 0.0
  %5376 = vmatpush1.msra.mxu0 0.0
  %5377 = vmatprep.subr.mxu0 0.0
  %5378 = vmatpush1.msra.mxu0 0.0
  %5379 = vmatprep.subr.mxu0 0.0
  %5380 = vmatpush1.msra.mxu0 0.0
  %5381 = vmatprep.subr.mxu0 0.0
  %5382 = vmatpush1.msra.mxu0 0.0
  %5383 = vmatprep.subr.mxu0 0.0
  %5384 = vmatpush1.msra.mxu0 0.0
  %5385 = vmatprep.subr.mxu0 0.0
  %5386 = vmatpush1.msra.mxu0 0.0
  %5387 = vmatprep.subr.mxu0 0.0
  %5388 = vmatpush1.msra.mxu0 0.0
  %5389 = vmatprep.subr.mxu0 0.0
  %5390 = vmatpush1.msra.mxu0 0.0
  %5391 = vmatprep.subr.mxu0 0.0
  %5392 = vmatpush1.msra.mxu0 0.0
  %5393 = vmatprep.subr.mxu0 0.0
  %5394 = vmatpush1.msra.mxu0 0.0
  %5395 = vmatprep.subr.mxu0 0.0
  %5396 = vmatpush1.msra.mxu0 0.0
  %5397 = vmatprep.subr.mxu0 0.0
  %5398 = vmatpush1.msra.mxu0 0.0
  %5399 = vmatprep.mubr.f32.mxu0 0.0
  %5400 = vmatmul.mubr.f32.gmra.mrb[0].mxu0 %v5134
  %v5401 = vpop.f32.mrb[0].mxu0
  %v5402 = vadd.f32 0.0, %v5401
  %v5403 = vpop.f32.mrb[0].mxu0
  %v5404 = vadd.f32 0.0, %v5403
  %5405 = vdwg.mxu0
  %5406 = vmatprep.subr.mxu0 %v5146
  %5407 = vmatpush1.msra.mxu0 %v5144
  %5408 = vmatprep.subr.mxu0 0.0
  %5409 = vmatpush1.msra.mxu0 0.0
  %5410 = vmatprep.subr.mxu0 0.0
  %5411 = vmatpush1.msra.mxu0 0.0
  %5412 = vmatprep.subr.mxu0 0.0
  %5413 = vmatpush1.msra.mxu0 0.0
  %5414 = vmatprep.subr.mxu0 0.0
  %5415 = vmatpush1.msra.mxu0 0.0
  %5416 = vmatprep.subr.mxu0 0.0
  %5417 = vmatpush1.msra.mxu0 0.0
  %5418 = vmatprep.subr.mxu0 0.0
  %5419 = vmatpush1.msra.mxu0 0.0
  %5420 = vmatprep.subr.mxu0 0.0
  %5421 = vmatpush1.msra.mxu0 0.0
  %5422 = vmatprep.subr.mxu0 0.0
  %5423 = vmatpush1.msra.mxu0 0.0
  %5424 = vmatprep.subr.mxu0 0.0
  %5425 = vmatpush1.msra.mxu0 0.0
  %5426 = vmatprep.subr.mxu0 0.0
  %5427 = vmatpush1.msra.mxu0 0.0
  %5428 = vmatprep.subr.mxu0 0.0
  %5429 = vmatpush1.msra.mxu0 0.0
  %5430 = vmatprep.subr.mxu0 0.0
  %5431 = vmatpush1.msra.mxu0 0.0
  %5432 = vmatprep.subr.mxu0 0.0
  %5433 = vmatpush1.msra.mxu0 0.0
  %5434 = vmatprep.subr.mxu0 0.0
  %5435 = vmatpush1.msra.mxu0 0.0
  %5436 = vmatprep.subr.mxu0 0.0
  %5437 = vmatpush1.msra.mxu0 0.0
  %5438 = vmatprep.subr.mxu0 0.0
  %5439 = vmatpush1.msra.mxu0 0.0
  %5440 = vmatprep.subr.mxu0 0.0
  %5441 = vmatpush1.msra.mxu0 0.0
  %5442 = vmatprep.subr.mxu0 0.0
  %5443 = vmatpush1.msra.mxu0 0.0
  %5444 = vmatprep.subr.mxu0 0.0
  %5445 = vmatpush1.msra.mxu0 0.0
  %5446 = vmatprep.subr.mxu0 0.0
  %5447 = vmatpush1.msra.mxu0 0.0
  %5448 = vmatprep.subr.mxu0 0.0
  %5449 = vmatpush1.msra.mxu0 0.0
  %5450 = vmatprep.subr.mxu0 0.0
  %5451 = vmatpush1.msra.mxu0 0.0
  %5452 = vmatprep.subr.mxu0 0.0
  %5453 = vmatpush1.msra.mxu0 0.0
  %5454 = vmatprep.subr.mxu0 0.0
  %5455 = vmatpush1.msra.mxu0 0.0
  %5456 = vmatprep.subr.mxu0 0.0
  %5457 = vmatpush1.msra.mxu0 0.0
  %5458 = vmatprep.subr.mxu0 0.0
  %5459 = vmatpush1.msra.mxu0 0.0
  %5460 = vmatprep.subr.mxu0 0.0
  %5461 = vmatpush1.msra.mxu0 0.0
  %5462 = vmatprep.subr.mxu0 0.0
  %5463 = vmatpush1.msra.mxu0 0.0
  %5464 = vmatprep.subr.mxu0 0.0
  %5465 = vmatpush1.msra.mxu0 0.0
  %5466 = vmatprep.subr.mxu0 0.0
  %5467 = vmatpush1.msra.mxu0 0.0
  %5468 = vmatprep.subr.mxu0 0.0
  %5469 = vmatpush1.msra.mxu0 0.0
  %5470 = vmatprep.mubr.f32.mxu0 0.0
  %5471 = vmatmul.mubr.f32.gmra.mrb[0].mxu0 %v5134
  %v5472 = vpop.f32.mrb[0].mxu0
  %v5473 = vadd.f32 0.0, %v5472
  %v5474 = vpop.f32.mrb[0].mxu0
  %v5475 = vadd.f32 0.0, %v5474
  %5476 = vdwg.mxu0
  %5477 = vmatprep.subr.mxu0 %v5150
  %5478 = vmatpush1.msra.mxu0 %v5148
  %5479 = vmatprep.subr.mxu0 0.0
  %5480 = vmatpush1.msra.mxu0 0.0
  %5481 = vmatprep.subr.mxu0 0.0
  %5482 = vmatpush1.msra.mxu0 0.0
  %5483 = vmatprep.subr.mxu0 0.0
  %5484 = vmatpush1.msra.mxu0 0.0
  %5485 = vmatprep.subr.mxu0 0.0
  %5486 = vmatpush1.msra.mxu0 0.0
  %5487 = vmatprep.subr.mxu0 0.0
  %5488 = vmatpush1.msra.mxu0 0.0
  %5489 = vmatprep.subr.mxu0 0.0
  %5490 = vmatpush1.msra.mxu0 0.0
  %5491 = vmatprep.subr.mxu0 0.0
  %5492 = vmatpush1.msra.mxu0 0.0
  %5493 = vmatprep.subr.mxu0 0.0
  %5494 = vmatpush1.msra.mxu0 0.0
  %5495 = vmatprep.subr.mxu0 0.0
  %5496 = vmatpush1.msra.mxu0 0.0
  %5497 = vmatprep.subr.mxu0 0.0
  %5498 = vmatpush1.msra.mxu0 0.0
  %5499 = vmatprep.subr.mxu0 0.0
  %5500 = vmatpush1.msra.mxu0 0.0
  %5501 = vmatprep.subr.mxu0 0.0
  %5502 = vmatpush1.msra.mxu0 0.0
  %5503 = vmatprep.subr.mxu0 0.0
  %5504 = vmatpush1.msra.mxu0 0.0
  %5505 = vmatprep.subr.mxu0 0.0
  %5506 = vmatpush1.msra.mxu0 0.0
  %5507 = vmatprep.subr.mxu0 0.0
  %5508 = vmatpush1.msra.mxu0 0.0
  %5509 = vmatprep.subr.mxu0 0.0
  %5510 = vmatpush1.msra.mxu0 0.0
  %5511 = vmatprep.subr.mxu0 0.0
  %5512 = vmatpush1.msra.mxu0 0.0
  %5513 = vmatprep.subr.mxu0 0.0
  %5514 = vmatpush1.msra.mxu0 0.0
  %5515 = vmatprep.subr.mxu0 0.0
  %5516 = vmatpush1.msra.mxu0 0.0
  %5517 = vmatprep.subr.mxu0 0.0
  %5518 = vmatpush1.msra.mxu0 0.0
  %5519 = vmatprep.subr.mxu0 0.0
  %5520 = vmatpush1.msra.mxu0 0.0
  %5521 = vmatprep.subr.mxu0 0.0
  %5522 = vmatpush1.msra.mxu0 0.0
  %5523 = vmatprep.subr.mxu0 0.0
  %5524 = vmatpush1.msra.mxu0 0.0
  %5525 = vmatprep.subr.mxu0 0.0
  %5526 = vmatpush1.msra.mxu0 0.0
  %5527 = vmatprep.subr.mxu0 0.0
  %5528 = vmatpush1.msra.mxu0 0.0
  %5529 = vmatprep.subr.mxu0 0.0
  %5530 = vmatpush1.msra.mxu0 0.0
  %5531 = vmatprep.subr.mxu0 0.0
  %5532 = vmatpush1.msra.mxu0 0.0
  %5533 = vmatprep.subr.mxu0 0.0
  %5534 = vmatpush1.msra.mxu0 0.0
  %5535 = vmatprep.subr.mxu0 0.0
  %5536 = vmatpush1.msra.mxu0 0.0
  %5537 = vmatprep.subr.mxu0 0.0
  %5538 = vmatpush1.msra.mxu0 0.0
  %5539 = vmatprep.subr.mxu0 0.0
  %5540 = vmatpush1.msra.mxu0 0.0
  %5541 = vmatprep.mubr.f32.mxu0 0.0
  %5542 = vmatmul.mubr.f32.gmra.mrb[0].mxu0 %v5134
  %v5543 = vpop.f32.mrb[0].mxu0
  %v5544 = vadd.f32 0.0, %v5543
  %v5545 = vpop.f32.mrb[0].mxu0
  %v5546 = vadd.f32 0.0, %v5545
  %5547 = vdwg.mxu0
  %5548 = vmatprep.subr.mxu0 %v5154
  %5549 = vmatpush1.msra.mxu0 %v5152
  %5550 = vmatprep.subr.mxu0 0.0
  %5551 = vmatpush1.msra.mxu0 0.0
  %5552 = vmatprep.subr.mxu0 0.0
  %5553 = vmatpush1.msra.mxu0 0.0
  %5554 = vmatprep.subr.mxu0 0.0
  %5555 = vmatpush1.msra.mxu0 0.0
  %5556 = vmatprep.subr.mxu0 0.0
  %5557 = vmatpush1.msra.mxu0 0.0
  %5558 = vmatprep.subr.mxu0 0.0
  %5559 = vmatpush1.msra.mxu0 0.0
  %5560 = vmatprep.subr.mxu0 0.0
  %5561 = vmatpush1.msra.mxu0 0.0
  %5562 = vmatprep.subr.mxu0 0.0
  %5563 = vmatpush1.msra.mxu0 0.0
  %5564 = vmatprep.subr.mxu0 0.0
  %5565 = vmatpush1.msra.mxu0 0.0
  %5566 = vmatprep.subr.mxu0 0.0
  %5567 = vmatpush1.msra.mxu0 0.0
  %5568 = vmatprep.subr.mxu0 0.0
  %5569 = vmatpush1.msra.mxu0 0.0
  %5570 = vmatprep.subr.mxu0 0.0
  %5571 = vmatpush1.msra.mxu0 0.0
  %5572 = vmatprep.subr.mxu0 0.0
  %5573 = vmatpush1.msra.mxu0 0.0
  %5574 = vmatprep.subr.mxu0 0.0
  %5575 = vmatpush1.msra.mxu0 0.0
  %5576 = vmatprep.subr.mxu0 0.0
  %5577 = vmatpush1.msra.mxu0 0.0
  %5578 = vmatprep.subr.mxu0 0.0
  %5579 = vmatpush1.msra.mxu0 0.0
  %5580 = vmatprep.subr.mxu0 0.0
  %5581 = vmatpush1.msra.mxu0 0.0
  %5582 = vmatprep.subr.mxu0 0.0
  %5583 = vmatpush1.msra.mxu0 0.0
  %5584 = vmatprep.subr.mxu0 0.0
  %5585 = vmatpush1.msra.mxu0 0.0
  %5586 = vmatprep.subr.mxu0 0.0
  %5587 = vmatpush1.msra.mxu0 0.0
  %5588 = vmatprep.subr.mxu0 0.0
  %5589 = vmatpush1.msra.mxu0 0.0
  %5590 = vmatprep.subr.mxu0 0.0
  %5591 = vmatpush1.msra.mxu0 0.0
  %5592 = vmatprep.subr.mxu0 0.0
  %5593 = vmatpush1.msra.mxu0 0.0
  %5594 = vmatprep.subr.mxu0 0.0
  %5595 = vmatpush1.msra.mxu0 0.0
  %5596 = vmatprep.subr.mxu0 0.0
  %5597 = vmatpush1.msra.mxu0 0.0
  %5598 = vmatprep.subr.mxu0 0.0
  %5599 = vmatpush1.msra.mxu0 0.0
  %5600 = vmatprep.subr.mxu0 0.0
  %5601 = vmatpush1.msra.mxu0 0.0
  %5602 = vmatprep.subr.mxu0 0.0
  %5603 = vmatpush1.msra.mxu0 0.0
  %5604 = vmatprep.subr.mxu0 0.0
  %5605 = vmatpush1.msra.mxu0 0.0
  %5606 = vmatprep.subr.mxu0 0.0
  %5607 = vmatpush1.msra.mxu0 0.0
  %5608 = vmatprep.subr.mxu0 0.0
  %5609 = vmatpush1.msra.mxu0 0.0
  %5610 = vmatprep.subr.mxu0 0.0
  %5611 = vmatpush1.msra.mxu0 0.0
  %5612 = vmatprep.mubr.f32.mxu0 0.0
  %5613 = vmatmul.mubr.f32.gmra.mrb[0].mxu0 %v5134
  %v5614 = vpop.f32.mrb[0].mxu0
  %v5615 = vadd.f32 0.0, %v5614
  %v5616 = vpop.f32.mrb[0].mxu0
  %v5617 = vadd.f32 0.0, %v5616
  %5618 = vdwg.mxu0
  %5619 = vmatprep.subr.mxu0 %v5158
  %5620 = vmatpush1.msra.mxu0 %v5156
  %5621 = vmatprep.subr.mxu0 0.0
  %5622 = vmatpush1.msra.mxu0 0.0
  %5623 = vmatprep.subr.mxu0 0.0
  %5624 = vmatpush1.msra.mxu0 0.0
  %5625 = vmatprep.subr.mxu0 0.0
  %5626 = vmatpush1.msra.mxu0 0.0
  %5627 = vmatprep.subr.mxu0 0.0
  %5628 = vmatpush1.msra.mxu0 0.0
  %5629 = vmatprep.subr.mxu0 0.0
  %5630 = vmatpush1.msra.mxu0 0.0
  %5631 = vmatprep.subr.mxu0 0.0
  %5632 = vmatpush1.msra.mxu0 0.0
  %5633 = vmatprep.subr.mxu0 0.0
  %5634 = vmatpush1.msra.mxu0 0.0
  %5635 = vmatprep.subr.mxu0 0.0
  %5636 = vmatpush1.msra.mxu0 0.0
  %5637 = vmatprep.subr.mxu0 0.0
  %5638 = vmatpush1.msra.mxu0 0.0
  %5639 = vmatprep.subr.mxu0 0.0
  %5640 = vmatpush1.msra.mxu0 0.0
  %5641 = vmatprep.subr.mxu0 0.0
  %5642 = vmatpush1.msra.mxu0 0.0
  %5643 = vmatprep.subr.mxu0 0.0
  %5644 = vmatpush1.msra.mxu0 0.0
  %5645 = vmatprep.subr.mxu0 0.0
  %5646 = vmatpush1.msra.mxu0 0.0
  %5647 = vmatprep.subr.mxu0 0.0
  %5648 = vmatpush1.msra.mxu0 0.0
  %5649 = vmatprep.subr.mxu0 0.0
  %5650 = vmatpush1.msra.mxu0 0.0
  %5651 = vmatprep.subr.mxu0 0.0
  %5652 = vmatpush1.msra.mxu0 0.0
  %5653 = vmatprep.subr.mxu0 0.0
  %5654 = vmatpush1.msra.mxu0 0.0
  %5655 = vmatprep.subr.mxu0 0.0
  %5656 = vmatpush1.msra.mxu0 0.0
  %5657 = vmatprep.subr.mxu0 0.0
  %5658 = vmatpush1.msra.mxu0 0.0
  %5659 = vmatprep.subr.mxu0 0.0
  %5660 = vmatpush1.msra.mxu0 0.0
  %5661 = vmatprep.subr.mxu0 0.0
  %5662 = vmatpush1.msra.mxu0 0.0
  %5663 = vmatprep.subr.mxu0 0.0
  %5664 = vmatpush1.msra.mxu0 0.0
  %5665 = vmatprep.subr.mxu0 0.0
  %5666 = vmatpush1.msra.mxu0 0.0
  %5667 = vmatprep.subr.mxu0 0.0
  %5668 = vmatpush1.msra.mxu0 0.0
  %5669 = vmatprep.subr.mxu0 0.0
  %5670 = vmatpush1.msra.mxu0 0.0
  %5671 = vmatprep.subr.mxu0 0.0
  %5672 = vmatpush1.msra.mxu0 0.0
  %5673 = vmatprep.subr.mxu0 0.0
  %5674 = vmatpush1.msra.mxu0 0.0
  %5675 = vmatprep.subr.mxu0 0.0
  %5676 = vmatpush1.msra.mxu0 0.0
  %5677 = vmatprep.subr.mxu0 0.0
  %5678 = vmatpush1.msra.mxu0 0.0
  %5679 = vmatprep.subr.mxu0 0.0
  %5680 = vmatpush1.msra.mxu0 0.0
  %5681 = vmatprep.subr.mxu0 0.0
  %5682 = vmatpush1.msra.mxu0 0.0
  %5683 = vmatprep.mubr.f32.mxu0 0.0
  %5684 = vmatmul.mubr.f32.gmra.mrb[0].mxu0 %v5134
  %v5685 = vpop.f32.mrb[0].mxu0
  %v5686 = vadd.f32 0.0, %v5685
  %v5687 = vpop.f32.mrb[0].mxu0
  %v5688 = vadd.f32 0.0, %v5687
  %5689 = vdwg.mxu0
  %5690 = vmatprep.subr.mxu0 %v5162
  %5691 = vmatpush1.msra.mxu0 %v5160
  %5692 = vmatprep.subr.mxu0 0.0
  %5693 = vmatpush1.msra.mxu0 0.0
  %5694 = vmatprep.subr.mxu0 0.0
  %5695 = vmatpush1.msra.mxu0 0.0
  %5696 = vmatprep.subr.mxu0 0.0
  %5697 = vmatpush1.msra.mxu0 0.0
  %5698 = vmatprep.subr.mxu0 0.0
  %5699 = vmatpush1.msra.mxu0 0.0
  %5700 = vmatprep.subr.mxu0 0.0
  %5701 = vmatpush1.msra.mxu0 0.0
  %5702 = vmatprep.subr.mxu0 0.0
  %5703 = vmatpush1.msra.mxu0 0.0
  %5704 = vmatprep.subr.mxu0 0.0
  %5705 = vmatpush1.msra.mxu0 0.0
  %5706 = vmatprep.subr.mxu0 0.0
  %5707 = vmatpush1.msra.mxu0 0.0
  %5708 = vmatprep.subr.mxu0 0.0
  %5709 = vmatpush1.msra.mxu0 0.0
  %5710 = vmatprep.subr.mxu0 0.0
  %5711 = vmatpush1.msra.mxu0 0.0
  %5712 = vmatprep.subr.mxu0 0.0
  %5713 = vmatpush1.msra.mxu0 0.0
  %5714 = vmatprep.subr.mxu0 0.0
  %5715 = vmatpush1.msra.mxu0 0.0
  %5716 = vmatprep.subr.mxu0 0.0
  %5717 = vmatpush1.msra.mxu0 0.0
  %5718 = vmatprep.subr.mxu0 0.0
  %5719 = vmatpush1.msra.mxu0 0.0
  %5720 = vmatprep.subr.mxu0 0.0
  %5721 = vmatpush1.msra.mxu0 0.0
  %5722 = vmatprep.subr.mxu0 0.0
  %5723 = vmatpush1.msra.mxu0 0.0
  %5724 = vmatprep.subr.mxu0 0.0
  %5725 = vmatpush1.msra.mxu0 0.0
  %5726 = vmatprep.subr.mxu0 0.0
  %5727 = vmatpush1.msra.mxu0 0.0
  %5728 = vmatprep.subr.mxu0 0.0
  %5729 = vmatpush1.msra.mxu0 0.0
  %5730 = vmatprep.subr.mxu0 0.0
  %5731 = vmatpush1.msra.mxu0 0.0
  %5732 = vmatprep.subr.mxu0 0.0
  %5733 = vmatpush1.msra.mxu0 0.0
  %5734 = vmatprep.subr.mxu0 0.0
  %5735 = vmatpush1.msra.mxu0 0.0
  %5736 = vmatprep.subr.mxu0 0.0
  %5737 = vmatpush1.msra.mxu0 0.0
  %5738 = vmatprep.subr.mxu0 0.0
  %5739 = vmatpush1.msra.mxu0 0.0
  %5740 = vmatprep.subr.mxu0 0.0
  %5741 = vmatpush1.msra.mxu0 0.0
  %5742 = vmatprep.subr.mxu0 0.0
  %5743 = vmatpush1.msra.mxu0 0.0
  %5744 = vmatprep.subr.mxu0 0.0
  %5745 = vmatpush1.msra.mxu0 0.0
  %5746 = vmatprep.subr.mxu0 0.0
  %5747 = vmatpush1.msra.mxu0 0.0
  %5748 = vmatprep.subr.mxu0 0.0
  %5749 = vmatpush1.msra.mxu0 0.0
  %5750 = vmatprep.subr.mxu0 0.0
  %5751 = vmatpush1.msra.mxu0 0.0
  %5752 = vmatprep.subr.mxu0 0.0
  %5753 = vmatpush1.msra.mxu0 0.0
  %5754 = vmatprep.mubr.f32.mxu0 0.0
  %5755 = vmatmul.mubr.f32.gmra.mrb[0].mxu0 %v5134
  %v5756 = vpop.f32.mrb[0].mxu0
  %v5757 = vadd.f32 0.0, %v5756
  %v5758 = vpop.f32.mrb[0].mxu0
  %v5759 = vadd.f32 0.0, %v5758
  %5760 = vdwg.mxu0
  %5761 = vmatprep.subr.mxu0 %v5166
  %5762 = vmatpush1.msra.mxu0 %v5164
  %5763 = vmatprep.subr.mxu0 0.0
  %5764 = vmatpush1.msra.mxu0 0.0
  %5765 = vmatprep.subr.mxu0 0.0
  %5766 = vmatpush1.msra.mxu0 0.0
  %5767 = vmatprep.subr.mxu0 0.0
  %5768 = vmatpush1.msra.mxu0 0.0
  %5769 = vmatprep.subr.mxu0 0.0
  %5770 = vmatpush1.msra.mxu0 0.0
  %5771 = vmatprep.subr.mxu0 0.0
  %5772 = vmatpush1.msra.mxu0 0.0
  %5773 = vmatprep.subr.mxu0 0.0
  %5774 = vmatpush1.msra.mxu0 0.0
  %5775 = vmatprep.subr.mxu0 0.0
  %5776 = vmatpush1.msra.mxu0 0.0
  %5777 = vmatprep.subr.mxu0 0.0
  %5778 = vmatpush1.msra.mxu0 0.0
  %5779 = vmatprep.subr.mxu0 0.0
  %5780 = vmatpush1.msra.mxu0 0.0
  %5781 = vmatprep.subr.mxu0 0.0
  %5782 = vmatpush1.msra.mxu0 0.0
  %5783 = vmatprep.subr.mxu0 0.0
  %5784 = vmatpush1.msra.mxu0 0.0
  %5785 = vmatprep.subr.mxu0 0.0
  %5786 = vmatpush1.msra.mxu0 0.0
  %5787 = vmatprep.subr.mxu0 0.0
  %5788 = vmatpush1.msra.mxu0 0.0
  %5789 = vmatprep.subr.mxu0 0.0
  %5790 = vmatpush1.msra.mxu0 0.0
  %5791 = vmatprep.subr.mxu0 0.0
  %5792 = vmatpush1.msra.mxu0 0.0
  %5793 = vmatprep.subr.mxu0 0.0
  %5794 = vmatpush1.msra.mxu0 0.0
  %5795 = vmatprep.subr.mxu0 0.0
  %5796 = vmatpush1.msra.mxu0 0.0
  %5797 = vmatprep.subr.mxu0 0.0
  %5798 = vmatpush1.msra.mxu0 0.0
  %5799 = vmatprep.subr.mxu0 0.0
  %5800 = vmatpush1.msra.mxu0 0.0
  %5801 = vmatprep.subr.mxu0 0.0
  %5802 = vmatpush1.msra.mxu0 0.0
  %5803 = vmatprep.subr.mxu0 0.0
  %5804 = vmatpush1.msra.mxu0 0.0
  %5805 = vmatprep.subr.mxu0 0.0
  %5806 = vmatpush1.msra.mxu0 0.0
  %5807 = vmatprep.subr.mxu0 0.0
  %5808 = vmatpush1.msra.mxu0 0.0
  %5809 = vmatprep.subr.mxu0 0.0
  %5810 = vmatpush1.msra.mxu0 0.0
  %5811 = vmatprep.subr.mxu0 0.0
  %5812 = vmatpush1.msra.mxu0 0.0
  %5813 = vmatprep.subr.mxu0 0.0
  %5814 = vmatpush1.msra.mxu0 0.0
  %5815 = vmatprep.subr.mxu0 0.0
  %5816 = vmatpush1.msra.mxu0 0.0
  %5817 = vmatprep.subr.mxu0 0.0
  %5818 = vmatpush1.msra.mxu0 0.0
  %5819 = vmatprep.subr.mxu0 0.0
  %5820 = vmatpush1.msra.mxu0 0.0
  %5821 = vmatprep.subr.mxu0 0.0
  %5822 = vmatpush1.msra.mxu0 0.0
  %5823 = vmatprep.subr.mxu0 0.0
  %5824 = vmatpush1.msra.mxu0 0.0
  %5825 = vmatprep.mubr.f32.mxu0 0.0
  %5826 = vmatmul.mubr.f32.gmra.mrb[0].mxu0 %v5134
  %v5827 = vpop.f32.mrb[0].mxu0
  %v5828 = vadd.f32 0.0, %v5827
  %v5829 = vpop.f32.mrb[0].mxu0
  %v5830 = vadd.f32 0.0, %v5829
  %5831 = vdwg.mxu0
  %5832 = vmatprep.subr.mxu0 %v5170
  %5833 = vmatpush1.msra.mxu0 %v5168
  %5834 = vmatprep.subr.mxu0 0.0
  %5835 = vmatpush1.msra.mxu0 0.0
  %5836 = vmatprep.subr.mxu0 0.0
  %5837 = vmatpush1.msra.mxu0 0.0
  %5838 = vmatprep.subr.mxu0 0.0
  %5839 = vmatpush1.msra.mxu0 0.0
  %5840 = vmatprep.subr.mxu0 0.0
  %5841 = vmatpush1.msra.mxu0 0.0
  %5842 = vmatprep.subr.mxu0 0.0
  %5843 = vmatpush1.msra.mxu0 0.0
  %5844 = vmatprep.subr.mxu0 0.0
  %5845 = vmatpush1.msra.mxu0 0.0
  %5846 = vmatprep.subr.mxu0 0.0
  %5847 = vmatpush1.msra.mxu0 0.0
  %5848 = vmatprep.subr.mxu0 0.0
  %5849 = vmatpush1.msra.mxu0 0.0
  %5850 = vmatprep.subr.mxu0 0.0
  %5851 = vmatpush1.msra.mxu0 0.0
  %5852 = vmatprep.subr.mxu0 0.0
  %5853 = vmatpush1.msra.mxu0 0.0
  %5854 = vmatprep.subr.mxu0 0.0
  %5855 = vmatpush1.msra.mxu0 0.0
  %5856 = vmatprep.subr.mxu0 0.0
  %5857 = vmatpush1.msra.mxu0 0.0
  %5858 = vmatprep.subr.mxu0 0.0
  %5859 = vmatpush1.msra.mxu0 0.0
  %5860 = vmatprep.subr.mxu0 0.0
  %5861 = vmatpush1.msra.mxu0 0.0
  %5862 = vmatprep.subr.mxu0 0.0
  %5863 = vmatpush1.msra.mxu0 0.0
  %5864 = vmatprep.subr.mxu0 0.0
  %5865 = vmatpush1.msra.mxu0 0.0
  %5866 = vmatprep.subr.mxu0 0.0
  %5867 = vmatpush1.msra.mxu0 0.0
  %5868 = vmatprep.subr.mxu0 0.0
  %5869 = vmatpush1.msra.mxu0 0.0
  %5870 = vmatprep.subr.mxu0 0.0
  %5871 = vmatpush1.msra.mxu0 0.0
  %5872 = vmatprep.subr.mxu0 0.0
  %5873 = vmatpush1.msra.mxu0 0.0
  %5874 = vmatprep.subr.mxu0 0.0
  %5875 = vmatpush1.msra.mxu0 0.0
  %5876 = vmatprep.subr.mxu0 0.0
  %5877 = vmatpush1.msra.mxu0 0.0
  %5878 = vmatprep.subr.mxu0 0.0
  %5879 = vmatpush1.msra.mxu0 0.0
  %5880 = vmatprep.subr.mxu0 0.0
  %5881 = vmatpush1.msra.mxu0 0.0
  %5882 = vmatprep.subr.mxu0 0.0
  %5883 = vmatpush1.msra.mxu0 0.0
  %5884 = vmatprep.subr.mxu0 0.0
  %5885 = vmatpush1.msra.mxu0 0.0
  %5886 = vmatprep.subr.mxu0 0.0
  %5887 = vmatpush1.msra.mxu0 0.0
  %5888 = vmatprep.subr.mxu0 0.0
  %5889 = vmatpush1.msra.mxu0 0.0
  %5890 = vmatprep.subr.mxu0 0.0
  %5891 = vmatpush1.msra.mxu0 0.0
  %5892 = vmatprep.subr.mxu0 0.0
  %5893 = vmatpush1.msra.mxu0 0.0
  %5894 = vmatprep.subr.mxu0 0.0
  %5895 = vmatpush1.msra.mxu0 0.0
  %5896 = vmatprep.mubr.f32.mxu0 0.0
  %5897 = vmatmul.mubr.f32.gmra.mrb[0].mxu0 %v5134
  %v5898 = vpop.f32.mrb[0].mxu0
  %v5899 = vadd.f32 0.0, %v5898
  %v5900 = vpop.f32.mrb[0].mxu0
  %v5901 = vadd.f32 0.0, %v5900
  %5902 = vdwg.mxu0
  %5903 = vmatprep.subr.mxu0 %v5174
  %5904 = vmatpush1.msra.mxu0 %v5172
  %5905 = vmatprep.subr.mxu0 0.0
  %5906 = vmatpush1.msra.mxu0 0.0
  %5907 = vmatprep.subr.mxu0 0.0
  %5908 = vmatpush1.msra.mxu0 0.0
  %5909 = vmatprep.subr.mxu0 0.0
  %5910 = vmatpush1.msra.mxu0 0.0
  %5911 = vmatprep.subr.mxu0 0.0
  %5912 = vmatpush1.msra.mxu0 0.0
  %5913 = vmatprep.subr.mxu0 0.0
  %5914 = vmatpush1.msra.mxu0 0.0
  %5915 = vmatprep.subr.mxu0 0.0
  %5916 = vmatpush1.msra.mxu0 0.0
  %5917 = vmatprep.subr.mxu0 0.0
  %5918 = vmatpush1.msra.mxu0 0.0
  %5919 = vmatprep.subr.mxu0 0.0
  %5920 = vmatpush1.msra.mxu0 0.0
  %5921 = vmatprep.subr.mxu0 0.0
  %5922 = vmatpush1.msra.mxu0 0.0
  %5923 = vmatprep.subr.mxu0 0.0
  %5924 = vmatpush1.msra.mxu0 0.0
  %5925 = vmatprep.subr.mxu0 0.0
  %5926 = vmatpush1.msra.mxu0 0.0
  %5927 = vmatprep.subr.mxu0 0.0
  %5928 = vmatpush1.msra.mxu0 0.0
  %5929 = vmatprep.subr.mxu0 0.0
  %5930 = vmatpush1.msra.mxu0 0.0
  %5931 = vmatprep.subr.mxu0 0.0
  %5932 = vmatpush1.msra.mxu0 0.0
  %5933 = vmatprep.subr.mxu0 0.0
  %5934 = vmatpush1.msra.mxu0 0.0
  %5935 = vmatprep.subr.mxu0 0.0
  %5936 = vmatpush1.msra.mxu0 0.0
  %5937 = vmatprep.subr.mxu0 0.0
  %5938 = vmatpush1.msra.mxu0 0.0
  %5939 = vmatprep.subr.mxu0 0.0
  %5940 = vmatpush1.msra.mxu0 0.0
  %5941 = vmatprep.subr.mxu0 0.0
  %5942 = vmatpush1.msra.mxu0 0.0
  %5943 = vmatprep.subr.mxu0 0.0
  %5944 = vmatpush1.msra.mxu0 0.0
  %5945 = vmatprep.subr.mxu0 0.0
  %5946 = vmatpush1.msra.mxu0 0.0
  %5947 = vmatprep.subr.mxu0 0.0
  %5948 = vmatpush1.msra.mxu0 0.0
  %5949 = vmatprep.subr.mxu0 0.0
  %5950 = vmatpush1.msra.mxu0 0.0
  %5951 = vmatprep.subr.mxu0 0.0
  %5952 = vmatpush1.msra.mxu0 0.0
  %5953 = vmatprep.subr.mxu0 0.0
  %5954 = vmatpush1.msra.mxu0 0.0
  %5955 = vmatprep.subr.mxu0 0.0
  %5956 = vmatpush1.msra.mxu0 0.0
  %5957 = vmatprep.subr.mxu0 0.0
  %5958 = vmatpush1.msra.mxu0 0.0
  %5959 = vmatprep.subr.mxu0 0.0
  %5960 = vmatpush1.msra.mxu0 0.0
  %5961 = vmatprep.subr.mxu0 0.0
  %5962 = vmatpush1.msra.mxu0 0.0
  %5963 = vmatprep.subr.mxu0 0.0
  %5964 = vmatpush1.msra.mxu0 0.0
  %5965 = vmatprep.subr.mxu0 0.0
  %5966 = vmatpush1.msra.mxu0 0.0
  %5967 = vmatprep.mubr.f32.mxu0 0.0
  %5968 = vmatmul.mubr.f32.gmra.mrb[0].mxu0 %v5134
  %v5969 = vpop.f32.mrb[0].mxu0
  %v5970 = vadd.f32 0.0, %v5969
  %v5971 = vpop.f32.mrb[0].mxu0
  %v5972 = vadd.f32 0.0, %v5971
  %5973 = vdwg.mxu0
  %5974 = vmatprep.subr.mxu0 %v5178
  %5975 = vmatpush1.msra.mxu0 %v5176
  %5976 = vmatprep.subr.mxu0 0.0
  %5977 = vmatpush1.msra.mxu0 0.0
  %5978 = vmatprep.subr.mxu0 0.0
  %5979 = vmatpush1.msra.mxu0 0.0
  %5980 = vmatprep.subr.mxu0 0.0
  %5981 = vmatpush1.msra.mxu0 0.0
  %5982 = vmatprep.subr.mxu0 0.0
  %5983 = vmatpush1.msra.mxu0 0.0
  %5984 = vmatprep.subr.mxu0 0.0
  %5985 = vmatpush1.msra.mxu0 0.0
  %5986 = vmatprep.subr.mxu0 0.0
  %5987 = vmatpush1.msra.mxu0 0.0
  %5988 = vmatprep.subr.mxu0 0.0
  %5989 = vmatpush1.msra.mxu0 0.0
  %5990 = vmatprep.subr.mxu0 0.0
  %5991 = vmatpush1.msra.mxu0 0.0
  %5992 = vmatprep.subr.mxu0 0.0
  %5993 = vmatpush1.msra.mxu0 0.0
  %5994 = vmatprep.subr.mxu0 0.0
  %5995 = vmatpush1.msra.mxu0 0.0
  %5996 = vmatprep.subr.mxu0 0.0
  %5997 = vmatpush1.msra.mxu0 0.0
  %5998 = vmatprep.subr.mxu0 0.0
  %5999 = vmatpush1.msra.mxu0 0.0
  %6000 = vmatprep.subr.mxu0 0.0
  %6001 = vmatpush1.msra.mxu0 0.0
  %6002 = vmatprep.subr.mxu0 0.0
  %6003 = vmatpush1.msra.mxu0 0.0
  %6004 = vmatprep.subr.mxu0 0.0
  %6005 = vmatpush1.msra.mxu0 0.0
  %6006 = vmatprep.subr.mxu0 0.0
  %6007 = vmatpush1.msra.mxu0 0.0
  %6008 = vmatprep.subr.mxu0 0.0
  %6009 = vmatpush1.msra.mxu0 0.0
  %6010 = vmatprep.subr.mxu0 0.0
  %6011 = vmatpush1.msra.mxu0 0.0
  %6012 = vmatprep.subr.mxu0 0.0
  %6013 = vmatpush1.msra.mxu0 0.0
  %6014 = vmatprep.subr.mxu0 0.0
  %6015 = vmatpush1.msra.mxu0 0.0
  %6016 = vmatprep.subr.mxu0 0.0
  %6017 = vmatpush1.msra.mxu0 0.0
  %6018 = vmatprep.subr.mxu0 0.0
  %6019 = vmatpush1.msra.mxu0 0.0
  %6020 = vmatprep.subr.mxu0 0.0
  %6021 = vmatpush1.msra.mxu0 0.0
  %6022 = vmatprep.subr.mxu0 0.0
  %6023 = vmatpush1.msra.mxu0 0.0
  %6024 = vmatprep.subr.mxu0 0.0
  %6025 = vmatpush1.msra.mxu0 0.0
  %6026 = vmatprep.subr.mxu0 0.0
  %6027 = vmatpush1.msra.mxu0 0.0
  %6028 = vmatprep.subr.mxu0 0.0
  %6029 = vmatpush1.msra.mxu0 0.0
  %6030 = vmatprep.subr.mxu0 0.0
  %6031 = vmatpush1.msra.mxu0 0.0
  %6032 = vmatprep.subr.mxu0 0.0
  %6033 = vmatpush1.msra.mxu0 0.0
  %6034 = vmatprep.subr.mxu0 0.0
  %6035 = vmatpush1.msra.mxu0 0.0
  %6036 = vmatprep.subr.mxu0 0.0
  %6037 = vmatpush1.msra.mxu0 0.0
  %6038 = vmatprep.mubr.f32.mxu0 0.0
  %6039 = vmatmul.mubr.f32.gmra.mrb[0].mxu0 %v5134
  %v6040 = vpop.f32.mrb[0].mxu0
  %v6041 = vadd.f32 0.0, %v6040
  %v6042 = vpop.f32.mrb[0].mxu0
  %v6043 = vadd.f32 0.0, %v6042
  %6044 = vdwg.mxu0
  %6045 = vmatprep.subr.mxu0 %v5182
  %6046 = vmatpush1.msra.mxu0 %v5180
  %6047 = vmatprep.subr.mxu0 0.0
  %6048 = vmatpush1.msra.mxu0 0.0
  %6049 = vmatprep.subr.mxu0 0.0
  %6050 = vmatpush1.msra.mxu0 0.0
  %6051 = vmatprep.subr.mxu0 0.0
  %6052 = vmatpush1.msra.mxu0 0.0
  %6053 = vmatprep.subr.mxu0 0.0
  %6054 = vmatpush1.msra.mxu0 0.0
  %6055 = vmatprep.subr.mxu0 0.0
  %6056 = vmatpush1.msra.mxu0 0.0
  %6057 = vmatprep.subr.mxu0 0.0
  %6058 = vmatpush1.msra.mxu0 0.0
  %6059 = vmatprep.subr.mxu0 0.0
  %6060 = vmatpush1.msra.mxu0 0.0
  %6061 = vmatprep.subr.mxu0 0.0
  %6062 = vmatpush1.msra.mxu0 0.0
  %6063 = vmatprep.subr.mxu0 0.0
  %6064 = vmatpush1.msra.mxu0 0.0
  %6065 = vmatprep.subr.mxu0 0.0
  %6066 = vmatpush1.msra.mxu0 0.0
  %6067 = vmatprep.subr.mxu0 0.0
  %6068 = vmatpush1.msra.mxu0 0.0
  %6069 = vmatprep.subr.mxu0 0.0
  %6070 = vmatpush1.msra.mxu0 0.0
  %6071 = vmatprep.subr.mxu0 0.0
  %6072 = vmatpush1.msra.mxu0 0.0
  %6073 = vmatprep.subr.mxu0 0.0
  %6074 = vmatpush1.msra.mxu0 0.0
  %6075 = vmatprep.subr.mxu0 0.0
  %6076 = vmatpush1.msra.mxu0 0.0
  %6077 = vmatprep.subr.mxu0 0.0
  %6078 = vmatpush1.msra.mxu0 0.0
  %6079 = vmatprep.subr.mxu0 0.0
  %6080 = vmatpush1.msra.mxu0 0.0
  %6081 = vmatprep.subr.mxu0 0.0
  %6082 = vmatpush1.msra.mxu0 0.0
  %6083 = vmatprep.subr.mxu0 0.0
  %6084 = vmatpush1.msra.mxu0 0.0
  %6085 = vmatprep.subr.mxu0 0.0
  %6086 = vmatpush1.msra.mxu0 0.0
  %6087 = vmatprep.subr.mxu0 0.0
  %6088 = vmatpush1.msra.mxu0 0.0
  %6089 = vmatprep.subr.mxu0 0.0
  %6090 = vmatpush1.msra.mxu0 0.0
  %6091 = vmatprep.subr.mxu0 0.0
  %6092 = vmatpush1.msra.mxu0 0.0
  %6093 = vmatprep.subr.mxu0 0.0
  %6094 = vmatpush1.msra.mxu0 0.0
  %6095 = vmatprep.subr.mxu0 0.0
  %6096 = vmatpush1.msra.mxu0 0.0
  %6097 = vmatprep.subr.mxu0 0.0
  %6098 = vmatpush1.msra.mxu0 0.0
  %6099 = vmatprep.subr.mxu0 0.0
  %6100 = vmatpush1.msra.mxu0 0.0
  %6101 = vmatprep.subr.mxu0 0.0
  %6102 = vmatpush1.msra.mxu0 0.0
  %6103 = vmatprep.subr.mxu0 0.0
  %6104 = vmatpush1.msra.mxu0 0.0
  %6105 = vmatprep.subr.mxu0 0.0
  %6106 = vmatpush1.msra.mxu0 0.0
  %6107 = vmatprep.subr.mxu0 0.0
  %6108 = vmatpush1.msra.mxu0 0.0
  %6109 = vmatprep.mubr.f32.mxu0 0.0
  %6110 = vmatmul.mubr.f32.gmra.mrb[0].mxu0 %v5134
  %v6111 = vpop.f32.mrb[0].mxu0
  %v6112 = vadd.f32 0.0, %v6111
  %v6113 = vpop.f32.mrb[0].mxu0
  %v6114 = vadd.f32 0.0, %v6113
  %6115 = vdwg.mxu0
  %6116 = vmatprep.subr.mxu0 %v5186
  %6117 = vmatpush1.msra.mxu0 %v5184
  %6118 = vmatprep.subr.mxu0 0.0
  %6119 = vmatpush1.msra.mxu0 0.0
  %6120 = vmatprep.subr.mxu0 0.0
  %6121 = vmatpush1.msra.mxu0 0.0
  %6122 = vmatprep.subr.mxu0 0.0
  %6123 = vmatpush1.msra.mxu0 0.0
  %6124 = vmatprep.subr.mxu0 0.0
  %6125 = vmatpush1.msra.mxu0 0.0
  %6126 = vmatprep.subr.mxu0 0.0
  %6127 = vmatpush1.msra.mxu0 0.0
  %6128 = vmatprep.subr.mxu0 0.0
  %6129 = vmatpush1.msra.mxu0 0.0
  %6130 = vmatprep.subr.mxu0 0.0
  %6131 = vmatpush1.msra.mxu0 0.0
  %6132 = vmatprep.subr.mxu0 0.0
  %6133 = vmatpush1.msra.mxu0 0.0
  %6134 = vmatprep.subr.mxu0 0.0
  %6135 = vmatpush1.msra.mxu0 0.0
  %6136 = vmatprep.subr.mxu0 0.0
  %6137 = vmatpush1.msra.mxu0 0.0
  %6138 = vmatprep.subr.mxu0 0.0
  %6139 = vmatpush1.msra.mxu0 0.0
  %6140 = vmatprep.subr.mxu0 0.0
  %6141 = vmatpush1.msra.mxu0 0.0
  %6142 = vmatprep.subr.mxu0 0.0
  %6143 = vmatpush1.msra.mxu0 0.0
  %6144 = vmatprep.subr.mxu0 0.0
  %6145 = vmatpush1.msra.mxu0 0.0
  %6146 = vmatprep.subr.mxu0 0.0
  %6147 = vmatpush1.msra.mxu0 0.0
  %6148 = vmatprep.subr.mxu0 0.0
  %6149 = vmatpush1.msra.mxu0 0.0
  %6150 = vmatprep.subr.mxu0 0.0
  %6151 = vmatpush1.msra.mxu0 0.0
  %6152 = vmatprep.subr.mxu0 0.0
  %6153 = vmatpush1.msra.mxu0 0.0
  %6154 = vmatprep.subr.mxu0 0.0
  %6155 = vmatpush1.msra.mxu0 0.0
  %6156 = vmatprep.subr.mxu0 0.0
  %6157 = vmatpush1.msra.mxu0 0.0
  %6158 = vmatprep.subr.mxu0 0.0
  %6159 = vmatpush1.msra.mxu0 0.0
  %6160 = vmatprep.subr.mxu0 0.0
  %6161 = vmatpush1.msra.mxu0 0.0
  %6162 = vmatprep.subr.mxu0 0.0
  %6163 = vmatpush1.msra.mxu0 0.0
  %6164 = vmatprep.subr.mxu0 0.0
  %6165 = vmatpush1.msra.mxu0 0.0
  %6166 = vmatprep.subr.mxu0 0.0
  %6167 = vmatpush1.msra.mxu0 0.0
  %6168 = vmatprep.subr.mxu0 0.0
  %6169 = vmatpush1.msra.mxu0 0.0
  %6170 = vmatprep.subr.mxu0 0.0
  %6171 = vmatpush1.msra.mxu0 0.0
  %6172 = vmatprep.subr.mxu0 0.0
  %6173 = vmatpush1.msra.mxu0 0.0
  %6174 = vmatprep.subr.mxu0 0.0
  %6175 = vmatpush1.msra.mxu0 0.0
  %6176 = vmatprep.subr.mxu0 0.0
  %6177 = vmatpush1.msra.mxu0 0.0
  %6178 = vmatprep.subr.mxu0 0.0
  %6179 = vmatpush1.msra.mxu0 0.0
  %6180 = vmatprep.mubr.f32.mxu0 0.0
  %6181 = vmatmul.mubr.f32.gmra.mrb[0].mxu0 %v5134
  %v6182 = vpop.f32.mrb[0].mxu0
  %v6183 = vadd.f32 0.0, %v6182
  %v6184 = vpop.f32.mrb[0].mxu0
  %v6185 = vadd.f32 0.0, %v6184
  %6186 = vdwg.mxu0
  %6187 = vmatprep.subr.mxu0 %v5190
  %6188 = vmatpush1.msra.mxu0 %v5188
  %6189 = vmatprep.subr.mxu0 0.0
  %6190 = vmatpush1.msra.mxu0 0.0
  %6191 = vmatprep.subr.mxu0 0.0
  %6192 = vmatpush1.msra.mxu0 0.0
  %6193 = vmatprep.subr.mxu0 0.0
  %6194 = vmatpush1.msra.mxu0 0.0
  %6195 = vmatprep.subr.mxu0 0.0
  %6196 = vmatpush1.msra.mxu0 0.0
  %6197 = vmatprep.subr.mxu0 0.0
  %6198 = vmatpush1.msra.mxu0 0.0
  %6199 = vmatprep.subr.mxu0 0.0
  %6200 = vmatpush1.msra.mxu0 0.0
  %6201 = vmatprep.subr.mxu0 0.0
  %6202 = vmatpush1.msra.mxu0 0.0
  %6203 = vmatprep.subr.mxu0 0.0
  %6204 = vmatpush1.msra.mxu0 0.0
  %6205 = vmatprep.subr.mxu0 0.0
  %6206 = vmatpush1.msra.mxu0 0.0
  %6207 = vmatprep.subr.mxu0 0.0
  %6208 = vmatpush1.msra.mxu0 0.0
  %6209 = vmatprep.subr.mxu0 0.0
  %6210 = vmatpush1.msra.mxu0 0.0
  %6211 = vmatprep.subr.mxu0 0.0
  %6212 = vmatpush1.msra.mxu0 0.0
  %6213 = vmatprep.subr.mxu0 0.0
  %6214 = vmatpush1.msra.mxu0 0.0
  %6215 = vmatprep.subr.mxu0 0.0
  %6216 = vmatpush1.msra.mxu0 0.0
  %6217 = vmatprep.subr.mxu0 0.0
  %6218 = vmatpush1.msra.mxu0 0.0
  %6219 = vmatprep.subr.mxu0 0.0
  %6220 = vmatpush1.msra.mxu0 0.0
  %6221 = vmatprep.subr.mxu0 0.0
  %6222 = vmatpush1.msra.mxu0 0.0
  %6223 = vmatprep.subr.mxu0 0.0
  %6224 = vmatpush1.msra.mxu0 0.0
  %6225 = vmatprep.subr.mxu0 0.0
  %6226 = vmatpush1.msra.mxu0 0.0
  %6227 = vmatprep.subr.mxu0 0.0
  %6228 = vmatpush1.msra.mxu0 0.0
  %6229 = vmatprep.subr.mxu0 0.0
  %6230 = vmatpush1.msra.mxu0 0.0
  %6231 = vmatprep.subr.mxu0 0.0
  %6232 = vmatpush1.msra.mxu0 0.0
  %6233 = vmatprep.subr.mxu0 0.0
  %6234 = vmatpush1.msra.mxu0 0.0
  %6235 = vmatprep.subr.mxu0 0.0
  %6236 = vmatpush1.msra.mxu0 0.0
  %6237 = vmatprep.subr.mxu0 0.0
  %6238 = vmatpush1.msra.mxu0 0.0
  %6239 = vmatprep.subr.mxu0 0.0
  %6240 = vmatpush1.msra.mxu0 0.0
  %6241 = vmatprep.subr.mxu0 0.0
  %6242 = vmatpush1.msra.mxu0 0.0
  %6243 = vmatprep.subr.mxu0 0.0
  %6244 = vmatpush1.msra.mxu0 0.0
  %6245 = vmatprep.subr.mxu0 0.0
  %6246 = vmatpush1.msra.mxu0 0.0
  %6247 = vmatprep.subr.mxu0 0.0
  %6248 = vmatpush1.msra.mxu0 0.0
  %6249 = vmatprep.subr.mxu0 0.0
  %6250 = vmatpush1.msra.mxu0 0.0
  %6251 = vmatprep.mubr.f32.mxu0 0.0
  %6252 = vmatmul.mubr.f32.gmra.mrb[0].mxu0 %v5134
  %v6253 = vpop.f32.mrb[0].mxu0
  %v6254 = vadd.f32 0.0, %v6253
  %v6255 = vpop.f32.mrb[0].mxu0
  %v6256 = vadd.f32 0.0, %v6255
  %6257 = vdwg.mxu0
  %6258 = vmatprep.subr.mxu0 %v5194
  %6259 = vmatpush1.msra.mxu0 %v5192
  %6260 = vmatprep.subr.mxu0 0.0
  %6261 = vmatpush1.msra.mxu0 0.0
  %6262 = vmatprep.subr.mxu0 0.0
  %6263 = vmatpush1.msra.mxu0 0.0
  %6264 = vmatprep.subr.mxu0 0.0
  %6265 = vmatpush1.msra.mxu0 0.0
  %6266 = vmatprep.subr.mxu0 0.0
  %6267 = vmatpush1.msra.mxu0 0.0
  %6268 = vmatprep.subr.mxu0 0.0
  %6269 = vmatpush1.msra.mxu0 0.0
  %6270 = vmatprep.subr.mxu0 0.0
  %6271 = vmatpush1.msra.mxu0 0.0
  %6272 = vmatprep.subr.mxu0 0.0
  %6273 = vmatpush1.msra.mxu0 0.0
  %6274 = vmatprep.subr.mxu0 0.0
  %6275 = vmatpush1.msra.mxu0 0.0
  %6276 = vmatprep.subr.mxu0 0.0
  %6277 = vmatpush1.msra.mxu0 0.0
  %6278 = vmatprep.subr.mxu0 0.0
  %6279 = vmatpush1.msra.mxu0 0.0
  %6280 = vmatprep.subr.mxu0 0.0
  %6281 = vmatpush1.msra.mxu0 0.0
  %6282 = vmatprep.subr.mxu0 0.0
  %6283 = vmatpush1.msra.mxu0 0.0
  %6284 = vmatprep.subr.mxu0 0.0
  %6285 = vmatpush1.msra.mxu0 0.0
  %6286 = vmatprep.subr.mxu0 0.0
  %6287 = vmatpush1.msra.mxu0 0.0
  %6288 = vmatprep.subr.mxu0 0.0
  %6289 = vmatpush1.msra.mxu0 0.0
  %6290 = vmatprep.subr.mxu0 0.0
  %6291 = vmatpush1.msra.mxu0 0.0
  %6292 = vmatprep.subr.mxu0 0.0
  %6293 = vmatpush1.msra.mxu0 0.0
  %6294 = vmatprep.subr.mxu0 0.0
  %6295 = vmatpush1.msra.mxu0 0.0
  %6296 = vmatprep.subr.mxu0 0.0
  %6297 = vmatpush1.msra.mxu0 0.0
  %6298 = vmatprep.subr.mxu0 0.0
  %6299 = vmatpush1.msra.mxu0 0.0
  %6300 = vmatprep.subr.mxu0 0.0
  %6301 = vmatpush1.msra.mxu0 0.0
  %6302 = vmatprep.subr.mxu0 0.0
  %6303 = vmatpush1.msra.mxu0 0.0
  %6304 = vmatprep.subr.mxu0 0.0
  %6305 = vmatpush1.msra.mxu0 0.0
  %6306 = vmatprep.subr.mxu0 0.0
  %6307 = vmatpush1.msra.mxu0 0.0
  %6308 = vmatprep.subr.mxu0 0.0
  %6309 = vmatpush1.msra.mxu0 0.0
  %6310 = vmatprep.subr.mxu0 0.0
  %6311 = vmatpush1.msra.mxu0 0.0
  %6312 = vmatprep.subr.mxu0 0.0
  %6313 = vmatpush1.msra.mxu0 0.0
  %6314 = vmatprep.subr.mxu0 0.0
  %6315 = vmatpush1.msra.mxu0 0.0
  %6316 = vmatprep.subr.mxu0 0.0
  %6317 = vmatpush1.msra.mxu0 0.0
  %6318 = vmatprep.subr.mxu0 0.0
  %6319 = vmatpush1.msra.mxu0 0.0
  %6320 = vmatprep.subr.mxu0 0.0
  %6321 = vmatpush1.msra.mxu0 0.0
  %6322 = vmatprep.mubr.f32.mxu0 0.0
  %6323 = vmatmul.mubr.f32.gmra.mrb[0].mxu0 %v5134
  %v6324 = vpop.f32.mrb[0].mxu0
  %v6325 = vadd.f32 0.0, %v6324
  %v6326 = vpop.f32.mrb[0].mxu0
  %v6327 = vadd.f32 0.0, %v6326
  %6328 = vdwg.mxu0
  %6329 = vmatprep.subr.mxu0 %v5198
  %6330 = vmatpush1.msra.mxu0 %v5196
  %6331 = vmatprep.subr.mxu0 0.0
  %6332 = vmatpush1.msra.mxu0 0.0
  %6333 = vmatprep.subr.mxu0 0.0
  %6334 = vmatpush1.msra.mxu0 0.0
  %6335 = vmatprep.subr.mxu0 0.0
  %6336 = vmatpush1.msra.mxu0 0.0
  %6337 = vmatprep.subr.mxu0 0.0
  %6338 = vmatpush1.msra.mxu0 0.0
  %6339 = vmatprep.subr.mxu0 0.0
  %6340 = vmatpush1.msra.mxu0 0.0
  %6341 = vmatprep.subr.mxu0 0.0
  %6342 = vmatpush1.msra.mxu0 0.0
  %6343 = vmatprep.subr.mxu0 0.0
  %6344 = vmatpush1.msra.mxu0 0.0
  %6345 = vmatprep.subr.mxu0 0.0
  %6346 = vmatpush1.msra.mxu0 0.0
  %6347 = vmatprep.subr.mxu0 0.0
  %6348 = vmatpush1.msra.mxu0 0.0
  %6349 = vmatprep.subr.mxu0 0.0
  %6350 = vmatpush1.msra.mxu0 0.0
  %6351 = vmatprep.subr.mxu0 0.0
  %6352 = vmatpush1.msra.mxu0 0.0
  %6353 = vmatprep.subr.mxu0 0.0
  %6354 = vmatpush1.msra.mxu0 0.0
  %6355 = vmatprep.subr.mxu0 0.0
  %6356 = vmatpush1.msra.mxu0 0.0
  %6357 = vmatprep.subr.mxu0 0.0
  %6358 = vmatpush1.msra.mxu0 0.0
  %6359 = vmatprep.subr.mxu0 0.0
  %6360 = vmatpush1.msra.mxu0 0.0
  %6361 = vmatprep.subr.mxu0 0.0
  %6362 = vmatpush1.msra.mxu0 0.0
  %6363 = vmatprep.subr.mxu0 0.0
  %6364 = vmatpush1.msra.mxu0 0.0
  %6365 = vmatprep.subr.mxu0 0.0
  %6366 = vmatpush1.msra.mxu0 0.0
  %6367 = vmatprep.subr.mxu0 0.0
  %6368 = vmatpush1.msra.mxu0 0.0
  %6369 = vmatprep.subr.mxu0 0.0
  %6370 = vmatpush1.msra.mxu0 0.0
  %6371 = vmatprep.subr.mxu0 0.0
  %6372 = vmatpush1.msra.mxu0 0.0
  %6373 = vmatprep.subr.mxu0 0.0
  %6374 = vmatpush1.msra.mxu0 0.0
  %6375 = vmatprep.subr.mxu0 0.0
  %6376 = vmatpush1.msra.mxu0 0.0
  %6377 = vmatprep.subr.mxu0 0.0
  %6378 = vmatpush1.msra.mxu0 0.0
  %6379 = vmatprep.subr.mxu0 0.0
  %6380 = vmatpush1.msra.mxu0 0.0
  %6381 = vmatprep.subr.mxu0 0.0
  %6382 = vmatpush1.msra.mxu0 0.0
  %6383 = vmatprep.subr.mxu0 0.0
  %6384 = vmatpush1.msra.mxu0 0.0
  %6385 = vmatprep.subr.mxu0 0.0
  %6386 = vmatpush1.msra.mxu0 0.0
  %6387 = vmatprep.subr.mxu0 0.0
  %6388 = vmatpush1.msra.mxu0 0.0
  %6389 = vmatprep.subr.mxu0 0.0
  %6390 = vmatpush1.msra.mxu0 0.0
  %6391 = vmatprep.subr.mxu0 0.0
  %6392 = vmatpush1.msra.mxu0 0.0
  %6393 = vmatprep.mubr.f32.mxu0 0.0
  %6394 = vmatmul.mubr.f32.gmra.mrb[0].mxu0 %v5134
  %v6395 = vpop.f32.mrb[0].mxu0
  %v6396 = vadd.f32 0.0, %v6395
  %v6397 = vpop.f32.mrb[0].mxu0
  %v6398 = vadd.f32 0.0, %v6397
  %6399 = vdwg.mxu0
  %6400 = vmatprep.subr.mxu0 %v5202
  %6401 = vmatpush1.msra.mxu0 %v5200
  %6402 = vmatprep.subr.mxu0 0.0
  %6403 = vmatpush1.msra.mxu0 0.0
  %6404 = vmatprep.subr.mxu0 0.0
  %6405 = vmatpush1.msra.mxu0 0.0
  %6406 = vmatprep.subr.mxu0 0.0
  %6407 = vmatpush1.msra.mxu0 0.0
  %6408 = vmatprep.subr.mxu0 0.0
  %6409 = vmatpush1.msra.mxu0 0.0
  %6410 = vmatprep.subr.mxu0 0.0
  %6411 = vmatpush1.msra.mxu0 0.0
  %6412 = vmatprep.subr.mxu0 0.0
  %6413 = vmatpush1.msra.mxu0 0.0
  %6414 = vmatprep.subr.mxu0 0.0
  %6415 = vmatpush1.msra.mxu0 0.0
  %6416 = vmatprep.subr.mxu0 0.0
  %6417 = vmatpush1.msra.mxu0 0.0
  %6418 = vmatprep.subr.mxu0 0.0
  %6419 = vmatpush1.msra.mxu0 0.0
  %6420 = vmatprep.subr.mxu0 0.0
  %6421 = vmatpush1.msra.mxu0 0.0
  %6422 = vmatprep.subr.mxu0 0.0
  %6423 = vmatpush1.msra.mxu0 0.0
  %6424 = vmatprep.subr.mxu0 0.0
  %6425 = vmatpush1.msra.mxu0 0.0
  %6426 = vmatprep.subr.mxu0 0.0
  %6427 = vmatpush1.msra.mxu0 0.0
  %6428 = vmatprep.subr.mxu0 0.0
  %6429 = vmatpush1.msra.mxu0 0.0
  %6430 = vmatprep.subr.mxu0 0.0
  %6431 = vmatpush1.msra.mxu0 0.0
  %6432 = vmatprep.subr.mxu0 0.0
  %6433 = vmatpush1.msra.mxu0 0.0
  %6434 = vmatprep.subr.mxu0 0.0
  %6435 = vmatpush1.msra.mxu0 0.0
  %6436 = vmatprep.subr.mxu0 0.0
  %6437 = vmatpush1.msra.mxu0 0.0
  %6438 = vmatprep.subr.mxu0 0.0
  %6439 = vmatpush1.msra.mxu0 0.0
  %6440 = vmatprep.subr.mxu0 0.0
  %6441 = vmatpush1.msra.mxu0 0.0
  %6442 = vmatprep.subr.mxu0 0.0
  %6443 = vmatpush1.msra.mxu0 0.0
  %6444 = vmatprep.subr.mxu0 0.0
  %6445 = vmatpush1.msra.mxu0 0.0
  %6446 = vmatprep.subr.mxu0 0.0
  %6447 = vmatpush1.msra.mxu0 0.0
  %6448 = vmatprep.subr.mxu0 0.0
  %6449 = vmatpush1.msra.mxu0 0.0
  %6450 = vmatprep.subr.mxu0 0.0
  %6451 = vmatpush1.msra.mxu0 0.0
  %6452 = vmatprep.subr.mxu0 0.0
  %6453 = vmatpush1.msra.mxu0 0.0
  %6454 = vmatprep.subr.mxu0 0.0
  %6455 = vmatpush1.msra.mxu0 0.0
  %6456 = vmatprep.subr.mxu0 0.0
  %6457 = vmatpush1.msra.mxu0 0.0
  %6458 = vmatprep.subr.mxu0 0.0
  %6459 = vmatpush1.msra.mxu0 0.0
  %6460 = vmatprep.subr.mxu0 0.0
  %6461 = vmatpush1.msra.mxu0 0.0
  %6462 = vmatprep.subr.mxu0 0.0
  %6463 = vmatpush1.msra.mxu0 0.0
  %6464 = vmatprep.mubr.f32.mxu0 0.0
  %6465 = vmatmul.mubr.f32.gmra.mrb[0].mxu0 %v5134
  %v6466 = vpop.f32.mrb[0].mxu0
  %v6467 = vadd.f32 0.0, %v6466
  %v6468 = vpop.f32.mrb[0].mxu0
  %v6469 = vadd.f32 0.0, %v6468
  %6470 = vdwg.mxu0
  %6471 = vmatprep.subr.mxu0 %v5206
  %6472 = vmatpush1.msra.mxu0 %v5204
  %6473 = vmatprep.subr.mxu0 0.0
  %6474 = vmatpush1.msra.mxu0 0.0
  %6475 = vmatprep.subr.mxu0 0.0
  %6476 = vmatpush1.msra.mxu0 0.0
  %6477 = vmatprep.subr.mxu0 0.0
  %6478 = vmatpush1.msra.mxu0 0.0
  %6479 = vmatprep.subr.mxu0 0.0
  %6480 = vmatpush1.msra.mxu0 0.0
  %6481 = vmatprep.subr.mxu0 0.0
  %6482 = vmatpush1.msra.mxu0 0.0
  %6483 = vmatprep.subr.mxu0 0.0
  %6484 = vmatpush1.msra.mxu0 0.0
  %6485 = vmatprep.subr.mxu0 0.0
  %6486 = vmatpush1.msra.mxu0 0.0
  %6487 = vmatprep.subr.mxu0 0.0
  %6488 = vmatpush1.msra.mxu0 0.0
  %6489 = vmatprep.subr.mxu0 0.0
  %6490 = vmatpush1.msra.mxu0 0.0
  %6491 = vmatprep.subr.mxu0 0.0
  %6492 = vmatpush1.msra.mxu0 0.0
  %6493 = vmatprep.subr.mxu0 0.0
  %6494 = vmatpush1.msra.mxu0 0.0
  %6495 = vmatprep.subr.mxu0 0.0
  %6496 = vmatpush1.msra.mxu0 0.0
  %6497 = vmatprep.subr.mxu0 0.0
  %6498 = vmatpush1.msra.mxu0 0.0
  %6499 = vmatprep.subr.mxu0 0.0
  %6500 = vmatpush1.msra.mxu0 0.0
  %6501 = vmatprep.subr.mxu0 0.0
  %6502 = vmatpush1.msra.mxu0 0.0
  %6503 = vmatprep.subr.mxu0 0.0
  %6504 = vmatpush1.msra.mxu0 0.0
  %6505 = vmatprep.subr.mxu0 0.0
  %6506 = vmatpush1.msra.mxu0 0.0
  %6507 = vmatprep.subr.mxu0 0.0
  %6508 = vmatpush1.msra.mxu0 0.0
  %6509 = vmatprep.subr.mxu0 0.0
  %6510 = vmatpush1.msra.mxu0 0.0
  %6511 = vmatprep.subr.mxu0 0.0
  %6512 = vmatpush1.msra.mxu0 0.0
  %6513 = vmatprep.subr.mxu0 0.0
  %6514 = vmatpush1.msra.mxu0 0.0
  %6515 = vmatprep.subr.mxu0 0.0
  %6516 = vmatpush1.msra.mxu0 0.0
  %6517 = vmatprep.subr.mxu0 0.0
  %6518 = vmatpush1.msra.mxu0 0.0
  %6519 = vmatprep.subr.mxu0 0.0
  %6520 = vmatpush1.msra.mxu0 0.0
  %6521 = vmatprep.subr.mxu0 0.0
  %6522 = vmatpush1.msra.mxu0 0.0
  %6523 = vmatprep.subr.mxu0 0.0
  %6524 = vmatpush1.msra.mxu0 0.0
  %6525 = vmatprep.subr.mxu0 0.0
  %6526 = vmatpush1.msra.mxu0 0.0
  %6527 = vmatprep.subr.mxu0 0.0
  %6528 = vmatpush1.msra.mxu0 0.0
  %6529 = vmatprep.subr.mxu0 0.0
  %6530 = vmatpush1.msra.mxu0 0.0
  %6531 = vmatprep.subr.mxu0 0.0
  %6532 = vmatpush1.msra.mxu0 0.0
  %6533 = vmatprep.subr.mxu0 0.0
  %6534 = vmatpush1.msra.mxu0 0.0
  %6535 = vmatprep.mubr.f32.mxu0 0.0
  %6536 = vmatmul.mubr.f32.gmra.mrb[0].mxu0 %v5134
  %v6537 = vpop.f32.mrb[0].mxu0
  %v6538 = vadd.f32 0.0, %v6537
  %v6539 = vpop.f32.mrb[0].mxu0
  %v6540 = vadd.f32 0.0, %v6539
  %6541 = vdwg.mxu0
  %6542 = vmatprep.subr.mxu0 %v5210
  %6543 = vmatpush1.msra.mxu0 %v5208
  %6544 = vmatprep.subr.mxu0 0.0
  %6545 = vmatpush1.msra.mxu0 0.0
  %6546 = vmatprep.subr.mxu0 0.0
  %6547 = vmatpush1.msra.mxu0 0.0
  %6548 = vmatprep.subr.mxu0 0.0
  %6549 = vmatpush1.msra.mxu0 0.0
  %6550 = vmatprep.subr.mxu0 0.0
  %6551 = vmatpush1.msra.mxu0 0.0
  %6552 = vmatprep.subr.mxu0 0.0
  %6553 = vmatpush1.msra.mxu0 0.0
  %6554 = vmatprep.subr.mxu0 0.0
  %6555 = vmatpush1.msra.mxu0 0.0
  %6556 = vmatprep.subr.mxu0 0.0
  %6557 = vmatpush1.msra.mxu0 0.0
  %6558 = vmatprep.subr.mxu0 0.0
  %6559 = vmatpush1.msra.mxu0 0.0
  %6560 = vmatprep.subr.mxu0 0.0
  %6561 = vmatpush1.msra.mxu0 0.0
  %6562 = vmatprep.subr.mxu0 0.0
  %6563 = vmatpush1.msra.mxu0 0.0
  %6564 = vmatprep.subr.mxu0 0.0
  %6565 = vmatpush1.msra.mxu0 0.0
  %6566 = vmatprep.subr.mxu0 0.0
  %6567 = vmatpush1.msra.mxu0 0.0
  %6568 = vmatprep.subr.mxu0 0.0
  %6569 = vmatpush1.msra.mxu0 0.0
  %6570 = vmatprep.subr.mxu0 0.0
  %6571 = vmatpush1.msra.mxu0 0.0
  %6572 = vmatprep.subr.mxu0 0.0
  %6573 = vmatpush1.msra.mxu0 0.0
  %6574 = vmatprep.subr.mxu0 0.0
  %6575 = vmatpush1.msra.mxu0 0.0
  %6576 = vmatprep.subr.mxu0 0.0
  %6577 = vmatpush1.msra.mxu0 0.0
  %6578 = vmatprep.subr.mxu0 0.0
  %6579 = vmatpush1.msra.mxu0 0.0
  %6580 = vmatprep.subr.mxu0 0.0
  %6581 = vmatpush1.msra.mxu0 0.0
  %6582 = vmatprep.subr.mxu0 0.0
  %6583 = vmatpush1.msra.mxu0 0.0
  %6584 = vmatprep.subr.mxu0 0.0
  %6585 = vmatpush1.msra.mxu0 0.0
  %6586 = vmatprep.subr.mxu0 0.0
  %6587 = vmatpush1.msra.mxu0 0.0
  %6588 = vmatprep.subr.mxu0 0.0
  %6589 = vmatpush1.msra.mxu0 0.0
  %6590 = vmatprep.subr.mxu0 0.0
  %6591 = vmatpush1.msra.mxu0 0.0
  %6592 = vmatprep.subr.mxu0 0.0
  %6593 = vmatpush1.msra.mxu0 0.0
  %6594 = vmatprep.subr.mxu0 0.0
  %6595 = vmatpush1.msra.mxu0 0.0
  %6596 = vmatprep.subr.mxu0 0.0
  %6597 = vmatpush1.msra.mxu0 0.0
  %6598 = vmatprep.subr.mxu0 0.0
  %6599 = vmatpush1.msra.mxu0 0.0
  %6600 = vmatprep.subr.mxu0 0.0
  %6601 = vmatpush1.msra.mxu0 0.0
  %6602 = vmatprep.subr.mxu0 0.0
  %6603 = vmatpush1.msra.mxu0 0.0
  %6604 = vmatprep.subr.mxu0 0.0
  %6605 = vmatpush1.msra.mxu0 0.0
  %6606 = vmatprep.mubr.f32.mxu0 0.0
  %6607 = vmatmul.mubr.f32.gmra.mrb[0].mxu0 %v5134
  %v6608 = vpop.f32.mrb[0].mxu0
  %v6609 = vadd.f32 0.0, %v6608
  %v6610 = vpop.f32.mrb[0].mxu0
  %v6611 = vadd.f32 0.0, %v6610
  %6612 = vdwg.mxu0
  %6613 = vmatprep.subr.mxu0 %v5214
  %6614 = vmatpush1.msra.mxu0 %v5212
  %6615 = vmatprep.subr.mxu0 0.0
  %6616 = vmatpush1.msra.mxu0 0.0
  %6617 = vmatprep.subr.mxu0 0.0
  %6618 = vmatpush1.msra.mxu0 0.0
  %6619 = vmatprep.subr.mxu0 0.0
  %6620 = vmatpush1.msra.mxu0 0.0
  %6621 = vmatprep.subr.mxu0 0.0
  %6622 = vmatpush1.msra.mxu0 0.0
  %6623 = vmatprep.subr.mxu0 0.0
  %6624 = vmatpush1.msra.mxu0 0.0
  %6625 = vmatprep.subr.mxu0 0.0
  %6626 = vmatpush1.msra.mxu0 0.0
  %6627 = vmatprep.subr.mxu0 0.0
  %6628 = vmatpush1.msra.mxu0 0.0
  %6629 = vmatprep.subr.mxu0 0.0
  %6630 = vmatpush1.msra.mxu0 0.0
  %6631 = vmatprep.subr.mxu0 0.0
  %6632 = vmatpush1.msra.mxu0 0.0
  %6633 = vmatprep.subr.mxu0 0.0
  %6634 = vmatpush1.msra.mxu0 0.0
  %6635 = vmatprep.subr.mxu0 0.0
  %6636 = vmatpush1.msra.mxu0 0.0
  %6637 = vmatprep.subr.mxu0 0.0
  %6638 = vmatpush1.msra.mxu0 0.0
  %6639 = vmatprep.subr.mxu0 0.0
  %6640 = vmatpush1.msra.mxu0 0.0
  %6641 = vmatprep.subr.mxu0 0.0
  %6642 = vmatpush1.msra.mxu0 0.0
  %6643 = vmatprep.subr.mxu0 0.0
  %6644 = vmatpush1.msra.mxu0 0.0
  %6645 = vmatprep.subr.mxu0 0.0
  %6646 = vmatpush1.msra.mxu0 0.0
  %6647 = vmatprep.subr.mxu0 0.0
  %6648 = vmatpush1.msra.mxu0 0.0
  %6649 = vmatprep.subr.mxu0 0.0
  %6650 = vmatpush1.msra.mxu0 0.0
  %6651 = vmatprep.subr.mxu0 0.0
  %6652 = vmatpush1.msra.mxu0 0.0
  %6653 = vmatprep.subr.mxu0 0.0
  %6654 = vmatpush1.msra.mxu0 0.0
  %6655 = vmatprep.subr.mxu0 0.0
  %6656 = vmatpush1.msra.mxu0 0.0
  %6657 = vmatprep.subr.mxu0 0.0
  %6658 = vmatpush1.msra.mxu0 0.0
  %6659 = vmatprep.subr.mxu0 0.0
  %6660 = vmatpush1.msra.mxu0 0.0
  %6661 = vmatprep.subr.mxu0 0.0
  %6662 = vmatpush1.msra.mxu0 0.0
  %6663 = vmatprep.subr.mxu0 0.0
  %6664 = vmatpush1.msra.mxu0 0.0
  %6665 = vmatprep.subr.mxu0 0.0
  %6666 = vmatpush1.msra.mxu0 0.0
  %6667 = vmatprep.subr.mxu0 0.0
  %6668 = vmatpush1.msra.mxu0 0.0
  %6669 = vmatprep.subr.mxu0 0.0
  %6670 = vmatpush1.msra.mxu0 0.0
  %6671 = vmatprep.subr.mxu0 0.0
  %6672 = vmatpush1.msra.mxu0 0.0
  %6673 = vmatprep.subr.mxu0 0.0
  %6674 = vmatpush1.msra.mxu0 0.0
  %6675 = vmatprep.subr.mxu0 0.0
  %6676 = vmatpush1.msra.mxu0 0.0
  %6677 = vmatprep.mubr.f32.mxu0 0.0
  %6678 = vmatmul.mubr.f32.gmra.mrb[0].mxu0 %v5134
  %v6679 = vpop.f32.mrb[0].mxu0
  %v6680 = vadd.f32 0.0, %v6679
  %v6681 = vpop.f32.mrb[0].mxu0
  %v6682 = vadd.f32 0.0, %v6681
  %6683 = vdwg.mxu0
  %6684 = vmatprep.subr.mxu0 %v5218
  %6685 = vmatpush1.msra.mxu0 %v5216
  %6686 = vmatprep.subr.mxu0 0.0
  %6687 = vmatpush1.msra.mxu0 0.0
  %6688 = vmatprep.subr.mxu0 0.0
  %6689 = vmatpush1.msra.mxu0 0.0
  %6690 = vmatprep.subr.mxu0 0.0
  %6691 = vmatpush1.msra.mxu0 0.0
  %6692 = vmatprep.subr.mxu0 0.0
  %6693 = vmatpush1.msra.mxu0 0.0
  %6694 = vmatprep.subr.mxu0 0.0
  %6695 = vmatpush1.msra.mxu0 0.0
  %6696 = vmatprep.subr.mxu0 0.0
  %6697 = vmatpush1.msra.mxu0 0.0
  %6698 = vmatprep.subr.mxu0 0.0
  %6699 = vmatpush1.msra.mxu0 0.0
  %6700 = vmatprep.subr.mxu0 0.0
  %6701 = vmatpush1.msra.mxu0 0.0
  %6702 = vmatprep.subr.mxu0 0.0
  %6703 = vmatpush1.msra.mxu0 0.0
  %6704 = vmatprep.subr.mxu0 0.0
  %6705 = vmatpush1.msra.mxu0 0.0
  %6706 = vmatprep.subr.mxu0 0.0
  %6707 = vmatpush1.msra.mxu0 0.0
  %6708 = vmatprep.subr.mxu0 0.0
  %6709 = vmatpush1.msra.mxu0 0.0
  %6710 = vmatprep.subr.mxu0 0.0
  %6711 = vmatpush1.msra.mxu0 0.0
  %6712 = vmatprep.subr.mxu0 0.0
  %6713 = vmatpush1.msra.mxu0 0.0
  %6714 = vmatprep.subr.mxu0 0.0
  %6715 = vmatpush1.msra.mxu0 0.0
  %6716 = vmatprep.subr.mxu0 0.0
  %6717 = vmatpush1.msra.mxu0 0.0
  %6718 = vmatprep.subr.mxu0 0.0
  %6719 = vmatpush1.msra.mxu0 0.0
  %6720 = vmatprep.subr.mxu0 0.0
  %6721 = vmatpush1.msra.mxu0 0.0
  %6722 = vmatprep.subr.mxu0 0.0
  %6723 = vmatpush1.msra.mxu0 0.0
  %6724 = vmatprep.subr.mxu0 0.0
  %6725 = vmatpush1.msra.mxu0 0.0
  %6726 = vmatprep.subr.mxu0 0.0
  %6727 = vmatpush1.msra.mxu0 0.0
  %6728 = vmatprep.subr.mxu0 0.0
  %6729 = vmatpush1.msra.mxu0 0.0
  %6730 = vmatprep.subr.mxu0 0.0
  %6731 = vmatpush1.msra.mxu0 0.0
  %6732 = vmatprep.subr.mxu0 0.0
  %6733 = vmatpush1.msra.mxu0 0.0
  %6734 = vmatprep.subr.mxu0 0.0
  %6735 = vmatpush1.msra.mxu0 0.0
  %6736 = vmatprep.subr.mxu0 0.0
  %6737 = vmatpush1.msra.mxu0 0.0
  %6738 = vmatprep.subr.mxu0 0.0
  %6739 = vmatpush1.msra.mxu0 0.0
  %6740 = vmatprep.subr.mxu0 0.0
  %6741 = vmatpush1.msra.mxu0 0.0
  %6742 = vmatprep.subr.mxu0 0.0
  %6743 = vmatpush1.msra.mxu0 0.0
  %6744 = vmatprep.subr.mxu0 0.0
  %6745 = vmatpush1.msra.mxu0 0.0
  %6746 = vmatprep.subr.mxu0 0.0
  %6747 = vmatpush1.msra.mxu0 0.0
  %6748 = vmatprep.mubr.f32.mxu0 0.0
  %6749 = vmatmul.mubr.f32.gmra.mrb[0].mxu0 %v5134
  %v6750 = vpop.f32.mrb[0].mxu0
  %v6751 = vadd.f32 0.0, %v6750
  %v6752 = vpop.f32.mrb[0].mxu0
  %v6753 = vadd.f32 0.0, %v6752
  %6754 = vdwg.mxu0
  %6755 = vmatprep.subr.mxu0 %v5222
  %6756 = vmatpush1.msra.mxu0 %v5220
  %6757 = vmatprep.subr.mxu0 0.0
  %6758 = vmatpush1.msra.mxu0 0.0
  %6759 = vmatprep.subr.mxu0 0.0
  %6760 = vmatpush1.msra.mxu0 0.0
  %6761 = vmatprep.subr.mxu0 0.0
  %6762 = vmatpush1.msra.mxu0 0.0
  %6763 = vmatprep.subr.mxu0 0.0
  %6764 = vmatpush1.msra.mxu0 0.0
  %6765 = vmatprep.subr.mxu0 0.0
  %6766 = vmatpush1.msra.mxu0 0.0
  %6767 = vmatprep.subr.mxu0 0.0
  %6768 = vmatpush1.msra.mxu0 0.0
  %6769 = vmatprep.subr.mxu0 0.0
  %6770 = vmatpush1.msra.mxu0 0.0
  %6771 = vmatprep.subr.mxu0 0.0
  %6772 = vmatpush1.msra.mxu0 0.0
  %6773 = vmatprep.subr.mxu0 0.0
  %6774 = vmatpush1.msra.mxu0 0.0
  %6775 = vmatprep.subr.mxu0 0.0
  %6776 = vmatpush1.msra.mxu0 0.0
  %6777 = vmatprep.subr.mxu0 0.0
  %6778 = vmatpush1.msra.mxu0 0.0
  %6779 = vmatprep.subr.mxu0 0.0
  %6780 = vmatpush1.msra.mxu0 0.0
  %6781 = vmatprep.subr.mxu0 0.0
  %6782 = vmatpush1.msra.mxu0 0.0
  %6783 = vmatprep.subr.mxu0 0.0
  %6784 = vmatpush1.msra.mxu0 0.0
  %6785 = vmatprep.subr.mxu0 0.0
  %6786 = vmatpush1.msra.mxu0 0.0
  %6787 = vmatprep.subr.mxu0 0.0
  %6788 = vmatpush1.msra.mxu0 0.0
  %6789 = vmatprep.subr.mxu0 0.0
  %6790 = vmatpush1.msra.mxu0 0.0
  %6791 = vmatprep.subr.mxu0 0.0
  %6792 = vmatpush1.msra.mxu0 0.0
  %6793 = vmatprep.subr.mxu0 0.0
  %6794 = vmatpush1.msra.mxu0 0.0
  %6795 = vmatprep.subr.mxu0 0.0
  %6796 = vmatpush1.msra.mxu0 0.0
  %6797 = vmatprep.subr.mxu0 0.0
  %6798 = vmatpush1.msra.mxu0 0.0
  %6799 = vmatprep.subr.mxu0 0.0
  %6800 = vmatpush1.msra.mxu0 0.0
  %6801 = vmatprep.subr.mxu0 0.0
  %6802 = vmatpush1.msra.mxu0 0.0
  %6803 = vmatprep.subr.mxu0 0.0
  %6804 = vmatpush1.msra.mxu0 0.0
  %6805 = vmatprep.subr.mxu0 0.0
  %6806 = vmatpush1.msra.mxu0 0.0
  %6807 = vmatprep.subr.mxu0 0.0
  %6808 = vmatpush1.msra.mxu0 0.0
  %6809 = vmatprep.subr.mxu0 0.0
  %6810 = vmatpush1.msra.mxu0 0.0
  %6811 = vmatprep.subr.mxu0 0.0
  %6812 = vmatpush1.msra.mxu0 0.0
  %6813 = vmatprep.subr.mxu0 0.0
  %6814 = vmatpush1.msra.mxu0 0.0
  %6815 = vmatprep.subr.mxu0 0.0
  %6816 = vmatpush1.msra.mxu0 0.0
  %6817 = vmatprep.subr.mxu0 0.0
  %6818 = vmatpush1.msra.mxu0 0.0
  %6819 = vmatprep.mubr.f32.mxu0 0.0
  %6820 = vmatmul.mubr.f32.gmra.mrb[0].mxu0 %v5134
  %v6821 = vpop.f32.mrb[0].mxu0
  %v6822 = vadd.f32 0.0, %v6821
  %v6823 = vpop.f32.mrb[0].mxu0
  %v6824 = vadd.f32 0.0, %v6823
  %6825 = vdwg.mxu0
  %6826 = vmatprep.subr.mxu0 %v5226
  %6827 = vmatpush1.msra.mxu0 %v5224
  %6828 = vmatprep.subr.mxu0 0.0
  %6829 = vmatpush1.msra.mxu0 0.0
  %6830 = vmatprep.subr.mxu0 0.0
  %6831 = vmatpush1.msra.mxu0 0.0
  %6832 = vmatprep.subr.mxu0 0.0
  %6833 = vmatpush1.msra.mxu0 0.0
  %6834 = vmatprep.subr.mxu0 0.0
  %6835 = vmatpush1.msra.mxu0 0.0
  %6836 = vmatprep.subr.mxu0 0.0
  %6837 = vmatpush1.msra.mxu0 0.0
  %6838 = vmatprep.subr.mxu0 0.0
  %6839 = vmatpush1.msra.mxu0 0.0
  %6840 = vmatprep.subr.mxu0 0.0
  %6841 = vmatpush1.msra.mxu0 0.0
  %6842 = vmatprep.subr.mxu0 0.0
  %6843 = vmatpush1.msra.mxu0 0.0
  %6844 = vmatprep.subr.mxu0 0.0
  %6845 = vmatpush1.msra.mxu0 0.0
  %6846 = vmatprep.subr.mxu0 0.0
  %6847 = vmatpush1.msra.mxu0 0.0
  %6848 = vmatprep.subr.mxu0 0.0
  %6849 = vmatpush1.msra.mxu0 0.0
  %6850 = vmatprep.subr.mxu0 0.0
  %6851 = vmatpush1.msra.mxu0 0.0
  %6852 = vmatprep.subr.mxu0 0.0
  %6853 = vmatpush1.msra.mxu0 0.0
  %6854 = vmatprep.subr.mxu0 0.0
  %6855 = vmatpush1.msra.mxu0 0.0
  %6856 = vmatprep.subr.mxu0 0.0
  %6857 = vmatpush1.msra.mxu0 0.0
  %6858 = vmatprep.subr.mxu0 0.0
  %6859 = vmatpush1.msra.mxu0 0.0
  %6860 = vmatprep.subr.mxu0 0.0
  %6861 = vmatpush1.msra.mxu0 0.0
  %6862 = vmatprep.subr.mxu0 0.0
  %6863 = vmatpush1.msra.mxu0 0.0
  %6864 = vmatprep.subr.mxu0 0.0
  %6865 = vmatpush1.msra.mxu0 0.0
  %6866 = vmatprep.subr.mxu0 0.0
  %6867 = vmatpush1.msra.mxu0 0.0
  %6868 = vmatprep.subr.mxu0 0.0
  %6869 = vmatpush1.msra.mxu0 0.0
  %6870 = vmatprep.subr.mxu0 0.0
  %6871 = vmatpush1.msra.mxu0 0.0
  %6872 = vmatprep.subr.mxu0 0.0
  %6873 = vmatpush1.msra.mxu0 0.0
  %6874 = vmatprep.subr.mxu0 0.0
  %6875 = vmatpush1.msra.mxu0 0.0
  %6876 = vmatprep.subr.mxu0 0.0
  %6877 = vmatpush1.msra.mxu0 0.0
  %6878 = vmatprep.subr.mxu0 0.0
  %6879 = vmatpush1.msra.mxu0 0.0
  %6880 = vmatprep.subr.mxu0 0.0
  %6881 = vmatpush1.msra.mxu0 0.0
  %6882 = vmatprep.subr.mxu0 0.0
  %6883 = vmatpush1.msra.mxu0 0.0
  %6884 = vmatprep.subr.mxu0 0.0
  %6885 = vmatpush1.msra.mxu0 0.0
  %6886 = vmatprep.subr.mxu0 0.0
  %6887 = vmatpush1.msra.mxu0 0.0
  %6888 = vmatprep.subr.mxu0 0.0
  %6889 = vmatpush1.msra.mxu0 0.0
  %6890 = vmatprep.mubr.f32.mxu0 0.0
  %6891 = vmatmul.mubr.f32.gmra.mrb[0].mxu0 %v5134
  %v6892 = vpop.f32.mrb[0].mxu0
  %v6893 = vadd.f32 0.0, %v6892
  %v6894 = vpop.f32.mrb[0].mxu0
  %v6895 = vadd.f32 0.0, %v6894
  %6896 = vdwg.mxu0
  %6897 = vmatprep.subr.mxu0 %v5230
  %6898 = vmatpush1.msra.mxu0 %v5228
  %6899 = vmatprep.subr.mxu0 0.0
  %6900 = vmatpush1.msra.mxu0 0.0
  %6901 = vmatprep.subr.mxu0 0.0
  %6902 = vmatpush1.msra.mxu0 0.0
  %6903 = vmatprep.subr.mxu0 0.0
  %6904 = vmatpush1.msra.mxu0 0.0
  %6905 = vmatprep.subr.mxu0 0.0
  %6906 = vmatpush1.msra.mxu0 0.0
  %6907 = vmatprep.subr.mxu0 0.0
  %6908 = vmatpush1.msra.mxu0 0.0
  %6909 = vmatprep.subr.mxu0 0.0
  %6910 = vmatpush1.msra.mxu0 0.0
  %6911 = vmatprep.subr.mxu0 0.0
  %6912 = vmatpush1.msra.mxu0 0.0
  %6913 = vmatprep.subr.mxu0 0.0
  %6914 = vmatpush1.msra.mxu0 0.0
  %6915 = vmatprep.subr.mxu0 0.0
  %6916 = vmatpush1.msra.mxu0 0.0
  %6917 = vmatprep.subr.mxu0 0.0
  %6918 = vmatpush1.msra.mxu0 0.0
  %6919 = vmatprep.subr.mxu0 0.0
  %6920 = vmatpush1.msra.mxu0 0.0
  %6921 = vmatprep.subr.mxu0 0.0
  %6922 = vmatpush1.msra.mxu0 0.0
  %6923 = vmatprep.subr.mxu0 0.0
  %6924 = vmatpush1.msra.mxu0 0.0
  %6925 = vmatprep.subr.mxu0 0.0
  %6926 = vmatpush1.msra.mxu0 0.0
  %6927 = vmatprep.subr.mxu0 0.0
  %6928 = vmatpush1.msra.mxu0 0.0
  %6929 = vmatprep.subr.mxu0 0.0
  %6930 = vmatpush1.msra.mxu0 0.0
  %6931 = vmatprep.subr.mxu0 0.0
  %6932 = vmatpush1.msra.mxu0 0.0
  %6933 = vmatprep.subr.mxu0 0.0
  %6934 = vmatpush1.msra.mxu0 0.0
  %6935 = vmatprep.subr.mxu0 0.0
  %6936 = vmatpush1.msra.mxu0 0.0
  %6937 = vmatprep.subr.mxu0 0.0
  %6938 = vmatpush1.msra.mxu0 0.0
  %6939 = vmatprep.subr.mxu0 0.0
  %6940 = vmatpush1.msra.mxu0 0.0
  %6941 = vmatprep.subr.mxu0 0.0
  %6942 = vmatpush1.msra.mxu0 0.0
  %6943 = vmatprep.subr.mxu0 0.0
  %6944 = vmatpush1.msra.mxu0 0.0
  %6945 = vmatprep.subr.mxu0 0.0
  %6946 = vmatpush1.msra.mxu0 0.0
  %6947 = vmatprep.subr.mxu0 0.0
  %6948 = vmatpush1.msra.mxu0 0.0
  %6949 = vmatprep.subr.mxu0 0.0
  %6950 = vmatpush1.msra.mxu0 0.0
  %6951 = vmatprep.subr.mxu0 0.0
  %6952 = vmatpush1.msra.mxu0 0.0
  %6953 = vmatprep.subr.mxu0 0.0
  %6954 = vmatpush1.msra.mxu0 0.0
  %6955 = vmatprep.subr.mxu0 0.0
  %6956 = vmatpush1.msra.mxu0 0.0
  %6957 = vmatprep.subr.mxu0 0.0
  %6958 = vmatpush1.msra.mxu0 0.0
  %6959 = vmatprep.subr.mxu0 0.0
  %6960 = vmatpush1.msra.mxu0 0.0
  %6961 = vmatprep.mubr.f32.mxu0 0.0
  %6962 = vmatmul.mubr.f32.gmra.mrb[0].mxu0 %v5134
  %v6963 = vpop.f32.mrb[0].mxu0
  %v6964 = vadd.f32 0.0, %v6963
  %v6965 = vpop.f32.mrb[0].mxu0
  %v6966 = vadd.f32 0.0, %v6965
  %6967 = vdwg.mxu0
  %6968 = vmatprep.subr.mxu0 %v5234
  %6969 = vmatpush1.msra.mxu0 %v5232
  %6970 = vmatprep.subr.mxu0 0.0
  %6971 = vmatpush1.msra.mxu0 0.0
  %6972 = vmatprep.subr.mxu0 0.0
  %6973 = vmatpush1.msra.mxu0 0.0
  %6974 = vmatprep.subr.mxu0 0.0
  %6975 = vmatpush1.msra.mxu0 0.0
  %6976 = vmatprep.subr.mxu0 0.0
  %6977 = vmatpush1.msra.mxu0 0.0
  %6978 = vmatprep.subr.mxu0 0.0
  %6979 = vmatpush1.msra.mxu0 0.0
  %6980 = vmatprep.subr.mxu0 0.0
  %6981 = vmatpush1.msra.mxu0 0.0
  %6982 = vmatprep.subr.mxu0 0.0
  %6983 = vmatpush1.msra.mxu0 0.0
  %6984 = vmatprep.subr.mxu0 0.0
  %6985 = vmatpush1.msra.mxu0 0.0
  %6986 = vmatprep.subr.mxu0 0.0
  %6987 = vmatpush1.msra.mxu0 0.0
  %6988 = vmatprep.subr.mxu0 0.0
  %6989 = vmatpush1.msra.mxu0 0.0
  %6990 = vmatprep.subr.mxu0 0.0
  %6991 = vmatpush1.msra.mxu0 0.0
  %6992 = vmatprep.subr.mxu0 0.0
  %6993 = vmatpush1.msra.mxu0 0.0
  %6994 = vmatprep.subr.mxu0 0.0
  %6995 = vmatpush1.msra.mxu0 0.0
  %6996 = vmatprep.subr.mxu0 0.0
  %6997 = vmatpush1.msra.mxu0 0.0
  %6998 = vmatprep.subr.mxu0 0.0
  %6999 = vmatpush1.msra.mxu0 0.0
  %7000 = vmatprep.subr.mxu0 0.0
  %7001 = vmatpush1.msra.mxu0 0.0
  %7002 = vmatprep.subr.mxu0 0.0
  %7003 = vmatpush1.msra.mxu0 0.0
  %7004 = vmatprep.subr.mxu0 0.0
  %7005 = vmatpush1.msra.mxu0 0.0
  %7006 = vmatprep.subr.mxu0 0.0
  %7007 = vmatpush1.msra.mxu0 0.0
  %7008 = vmatprep.subr.mxu0 0.0
  %7009 = vmatpush1.msra.mxu0 0.0
  %7010 = vmatprep.subr.mxu0 0.0
  %7011 = vmatpush1.msra.mxu0 0.0
  %7012 = vmatprep.subr.mxu0 0.0
  %7013 = vmatpush1.msra.mxu0 0.0
  %7014 = vmatprep.subr.mxu0 0.0
  %7015 = vmatpush1.msra.mxu0 0.0
  %7016 = vmatprep.subr.mxu0 0.0
  %7017 = vmatpush1.msra.mxu0 0.0
  %7018 = vmatprep.subr.mxu0 0.0
  %7019 = vmatpush1.msra.mxu0 0.0
  %7020 = vmatprep.subr.mxu0 0.0
  %7021 = vmatpush1.msra.mxu0 0.0
  %7022 = vmatprep.subr.mxu0 0.0
  %7023 = vmatpush1.msra.mxu0 0.0
  %7024 = vmatprep.subr.mxu0 0.0
  %7025 = vmatpush1.msra.mxu0 0.0
  %7026 = vmatprep.subr.mxu0 0.0
  %7027 = vmatpush1.msra.mxu0 0.0
  %7028 = vmatprep.subr.mxu0 0.0
  %7029 = vmatpush1.msra.mxu0 0.0
  %7030 = vmatprep.subr.mxu0 0.0
  %7031 = vmatpush1.msra.mxu0 0.0
  %7032 = vmatprep.mubr.f32.mxu0 0.0
  %7033 = vmatmul.mubr.f32.gmra.mrb[0].mxu0 %v5134
  %v7034 = vpop.f32.mrb[0].mxu0
  %v7035 = vadd.f32 0.0, %v7034
  %v7036 = vpop.f32.mrb[0].mxu0
  %v7037 = vadd.f32 0.0, %v7036
  %7038 = vdwg.mxu0
  %7039 = vmatprep.subr.mxu0 %v5238
  %7040 = vmatpush1.msra.mxu0 %v5236
  %7041 = vmatprep.subr.mxu0 0.0
  %7042 = vmatpush1.msra.mxu0 0.0
  %7043 = vmatprep.subr.mxu0 0.0
  %7044 = vmatpush1.msra.mxu0 0.0
  %7045 = vmatprep.subr.mxu0 0.0
  %7046 = vmatpush1.msra.mxu0 0.0
  %7047 = vmatprep.subr.mxu0 0.0
  %7048 = vmatpush1.msra.mxu0 0.0
  %7049 = vmatprep.subr.mxu0 0.0
  %7050 = vmatpush1.msra.mxu0 0.0
  %7051 = vmatprep.subr.mxu0 0.0
  %7052 = vmatpush1.msra.mxu0 0.0
  %7053 = vmatprep.subr.mxu0 0.0
  %7054 = vmatpush1.msra.mxu0 0.0
  %7055 = vmatprep.subr.mxu0 0.0
  %7056 = vmatpush1.msra.mxu0 0.0
  %7057 = vmatprep.subr.mxu0 0.0
  %7058 = vmatpush1.msra.mxu0 0.0
  %7059 = vmatprep.subr.mxu0 0.0
  %7060 = vmatpush1.msra.mxu0 0.0
  %7061 = vmatprep.subr.mxu0 0.0
  %7062 = vmatpush1.msra.mxu0 0.0
  %7063 = vmatprep.subr.mxu0 0.0
  %7064 = vmatpush1.msra.mxu0 0.0
  %7065 = vmatprep.subr.mxu0 0.0
  %7066 = vmatpush1.msra.mxu0 0.0
  %7067 = vmatprep.subr.mxu0 0.0
  %7068 = vmatpush1.msra.mxu0 0.0
  %7069 = vmatprep.subr.mxu0 0.0
  %7070 = vmatpush1.msra.mxu0 0.0
  %7071 = vmatprep.subr.mxu0 0.0
  %7072 = vmatpush1.msra.mxu0 0.0
  %7073 = vmatprep.subr.mxu0 0.0
  %7074 = vmatpush1.msra.mxu0 0.0
  %7075 = vmatprep.subr.mxu0 0.0
  %7076 = vmatpush1.msra.mxu0 0.0
  %7077 = vmatprep.subr.mxu0 0.0
  %7078 = vmatpush1.msra.mxu0 0.0
  %7079 = vmatprep.subr.mxu0 0.0
  %7080 = vmatpush1.msra.mxu0 0.0
  %7081 = vmatprep.subr.mxu0 0.0
  %7082 = vmatpush1.msra.mxu0 0.0
  %7083 = vmatprep.subr.mxu0 0.0
  %7084 = vmatpush1.msra.mxu0 0.0
  %7085 = vmatprep.subr.mxu0 0.0
  %7086 = vmatpush1.msra.mxu0 0.0
  %7087 = vmatprep.subr.mxu0 0.0
  %7088 = vmatpush1.msra.mxu0 0.0
  %7089 = vmatprep.subr.mxu0 0.0
  %7090 = vmatpush1.msra.mxu0 0.0
  %7091 = vmatprep.subr.mxu0 0.0
  %7092 = vmatpush1.msra.mxu0 0.0
  %7093 = vmatprep.subr.mxu0 0.0
  %7094 = vmatpush1.msra.mxu0 0.0
  %7095 = vmatprep.subr.mxu0 0.0
  %7096 = vmatpush1.msra.mxu0 0.0
  %7097 = vmatprep.subr.mxu0 0.0
  %7098 = vmatpush1.msra.mxu0 0.0
  %7099 = vmatprep.subr.mxu0 0.0
  %7100 = vmatpush1.msra.mxu0 0.0
  %7101 = vmatprep.subr.mxu0 0.0
  %7102 = vmatpush1.msra.mxu0 0.0
  %7103 = vmatprep.mubr.f32.mxu0 0.0
  %7104 = vmatmul.mubr.f32.gmra.mrb[0].mxu0 %v5134
  %v7105 = vpop.f32.mrb[0].mxu0
  %v7106 = vadd.f32 0.0, %v7105
  %v7107 = vpop.f32.mrb[0].mxu0
  %v7108 = vadd.f32 0.0, %v7107
  %7109 = vdwg.mxu0
  %7110 = vmatprep.subr.mxu0 %v5242
  %7111 = vmatpush1.msra.mxu0 %v5240
  %7112 = vmatprep.subr.mxu0 0.0
  %7113 = vmatpush1.msra.mxu0 0.0
  %7114 = vmatprep.subr.mxu0 0.0
  %7115 = vmatpush1.msra.mxu0 0.0
  %7116 = vmatprep.subr.mxu0 0.0
  %7117 = vmatpush1.msra.mxu0 0.0
  %7118 = vmatprep.subr.mxu0 0.0
  %7119 = vmatpush1.msra.mxu0 0.0
  %7120 = vmatprep.subr.mxu0 0.0
  %7121 = vmatpush1.msra.mxu0 0.0
  %7122 = vmatprep.subr.mxu0 0.0
  %7123 = vmatpush1.msra.mxu0 0.0
  %7124 = vmatprep.subr.mxu0 0.0
  %7125 = vmatpush1.msra.mxu0 0.0
  %7126 = vmatprep.subr.mxu0 0.0
  %7127 = vmatpush1.msra.mxu0 0.0
  %7128 = vmatprep.subr.mxu0 0.0
  %7129 = vmatpush1.msra.mxu0 0.0
  %7130 = vmatprep.subr.mxu0 0.0
  %7131 = vmatpush1.msra.mxu0 0.0
  %7132 = vmatprep.subr.mxu0 0.0
  %7133 = vmatpush1.msra.mxu0 0.0
  %7134 = vmatprep.subr.mxu0 0.0
  %7135 = vmatpush1.msra.mxu0 0.0
  %7136 = vmatprep.subr.mxu0 0.0
  %7137 = vmatpush1.msra.mxu0 0.0
  %7138 = vmatprep.subr.mxu0 0.0
  %7139 = vmatpush1.msra.mxu0 0.0
  %7140 = vmatprep.subr.mxu0 0.0
  %7141 = vmatpush1.msra.mxu0 0.0
  %7142 = vmatprep.subr.mxu0 0.0
  %7143 = vmatpush1.msra.mxu0 0.0
  %7144 = vmatprep.subr.mxu0 0.0
  %7145 = vmatpush1.msra.mxu0 0.0
  %7146 = vmatprep.subr.mxu0 0.0
  %7147 = vmatpush1.msra.mxu0 0.0
  %7148 = vmatprep.subr.mxu0 0.0
  %7149 = vmatpush1.msra.mxu0 0.0
  %7150 = vmatprep.subr.mxu0 0.0
  %7151 = vmatpush1.msra.mxu0 0.0
  %7152 = vmatprep.subr.mxu0 0.0
  %7153 = vmatpush1.msra.mxu0 0.0
  %7154 = vmatprep.subr.mxu0 0.0
  %7155 = vmatpush1.msra.mxu0 0.0
  %7156 = vmatprep.subr.mxu0 0.0
  %7157 = vmatpush1.msra.mxu0 0.0
  %7158 = vmatprep.subr.mxu0 0.0
  %7159 = vmatpush1.msra.mxu0 0.0
  %7160 = vmatprep.subr.mxu0 0.0
  %7161 = vmatpush1.msra.mxu0 0.0
  %7162 = vmatprep.subr.mxu0 0.0
  %7163 = vmatpush1.msra.mxu0 0.0
  %7164 = vmatprep.subr.mxu0 0.0
  %7165 = vmatpush1.msra.mxu0 0.0
  %7166 = vmatprep.subr.mxu0 0.0
  %7167 = vmatpush1.msra.mxu0 0.0
  %7168 = vmatprep.subr.mxu0 0.0
  %7169 = vmatpush1.msra.mxu0 0.0
  %7170 = vmatprep.subr.mxu0 0.0
  %7171 = vmatpush1.msra.mxu0 0.0
  %7172 = vmatprep.subr.mxu0 0.0
  %7173 = vmatpush1.msra.mxu0 0.0
  %7174 = vmatprep.mubr.f32.mxu0 0.0
  %7175 = vmatmul.mubr.f32.gmra.mrb[0].mxu0 %v5134
  %v7176 = vpop.f32.mrb[0].mxu0
  %v7177 = vadd.f32 0.0, %v7176
  %v7178 = vpop.f32.mrb[0].mxu0
  %v7179 = vadd.f32 0.0, %v7178
  %7180 = vdwg.mxu0
  %7181 = vmatprep.subr.mxu0 %v5246
  %7182 = vmatpush1.msra.mxu0 %v5244
  %7183 = vmatprep.subr.mxu0 0.0
  %7184 = vmatpush1.msra.mxu0 0.0
  %7185 = vmatprep.subr.mxu0 0.0
  %7186 = vmatpush1.msra.mxu0 0.0
  %7187 = vmatprep.subr.mxu0 0.0
  %7188 = vmatpush1.msra.mxu0 0.0
  %7189 = vmatprep.subr.mxu0 0.0
  %7190 = vmatpush1.msra.mxu0 0.0
  %7191 = vmatprep.subr.mxu0 0.0
  %7192 = vmatpush1.msra.mxu0 0.0
  %7193 = vmatprep.subr.mxu0 0.0
  %7194 = vmatpush1.msra.mxu0 0.0
  %7195 = vmatprep.subr.mxu0 0.0
  %7196 = vmatpush1.msra.mxu0 0.0
  %7197 = vmatprep.subr.mxu0 0.0
  %7198 = vmatpush1.msra.mxu0 0.0
  %7199 = vmatprep.subr.mxu0 0.0
  %7200 = vmatpush1.msra.mxu0 0.0
  %7201 = vmatprep.subr.mxu0 0.0
  %7202 = vmatpush1.msra.mxu0 0.0
  %7203 = vmatprep.subr.mxu0 0.0
  %7204 = vmatpush1.msra.mxu0 0.0
  %7205 = vmatprep.subr.mxu0 0.0
  %7206 = vmatpush1.msra.mxu0 0.0
  %7207 = vmatprep.subr.mxu0 0.0
  %7208 = vmatpush1.msra.mxu0 0.0
  %7209 = vmatprep.subr.mxu0 0.0
  %7210 = vmatpush1.msra.mxu0 0.0
  %7211 = vmatprep.subr.mxu0 0.0
  %7212 = vmatpush1.msra.mxu0 0.0
  %7213 = vmatprep.subr.mxu0 0.0
  %7214 = vmatpush1.msra.mxu0 0.0
  %7215 = vmatprep.subr.mxu0 0.0
  %7216 = vmatpush1.msra.mxu0 0.0
  %7217 = vmatprep.subr.mxu0 0.0
  %7218 = vmatpush1.msra.mxu0 0.0
  %7219 = vmatprep.subr.mxu0 0.0
  %7220 = vmatpush1.msra.mxu0 0.0
  %7221 = vmatprep.subr.mxu0 0.0
  %7222 = vmatpush1.msra.mxu0 0.0
  %7223 = vmatprep.subr.mxu0 0.0
  %7224 = vmatpush1.msra.mxu0 0.0
  %7225 = vmatprep.subr.mxu0 0.0
  %7226 = vmatpush1.msra.mxu0 0.0
  %7227 = vmatprep.subr.mxu0 0.0
  %7228 = vmatpush1.msra.mxu0 0.0
  %7229 = vmatprep.subr.mxu0 0.0
  %7230 = vmatpush1.msra.mxu0 0.0
  %7231 = vmatprep.subr.mxu0 0.0
  %7232 = vmatpush1.msra.mxu0 0.0
  %7233 = vmatprep.subr.mxu0 0.0
  %7234 = vmatpush1.msra.mxu0 0.0
  %7235 = vmatprep.subr.mxu0 0.0
  %7236 = vmatpush1.msra.mxu0 0.0
  %7237 = vmatprep.subr.mxu0 0.0
  %7238 = vmatpush1.msra.mxu0 0.0
  %7239 = vmatprep.subr.mxu0 0.0
  %7240 = vmatpush1.msra.mxu0 0.0
  %7241 = vmatprep.subr.mxu0 0.0
  %7242 = vmatpush1.msra.mxu0 0.0
  %7243 = vmatprep.subr.mxu0 0.0
  %7244 = vmatpush1.msra.mxu0 0.0
  %7245 = vmatprep.mubr.f32.mxu0 0.0
  %7246 = vmatmul.mubr.f32.gmra.mrb[0].mxu0 %v5134
  %v7247 = vpop.f32.mrb[0].mxu0
  %v7248 = vadd.f32 0.0, %v7247
  %v7249 = vpop.f32.mrb[0].mxu0
  %v7250 = vadd.f32 0.0, %v7249
  %7251 = vdwg.mxu0
  %7252 = vmatprep.subr.mxu0 %v5250
  %7253 = vmatpush1.msra.mxu0 %v5248
  %7254 = vmatprep.subr.mxu0 0.0
  %7255 = vmatpush1.msra.mxu0 0.0
  %7256 = vmatprep.subr.mxu0 0.0
  %7257 = vmatpush1.msra.mxu0 0.0
  %7258 = vmatprep.subr.mxu0 0.0
  %7259 = vmatpush1.msra.mxu0 0.0
  %7260 = vmatprep.subr.mxu0 0.0
  %7261 = vmatpush1.msra.mxu0 0.0
  %7262 = vmatprep.subr.mxu0 0.0
  %7263 = vmatpush1.msra.mxu0 0.0
  %7264 = vmatprep.subr.mxu0 0.0
  %7265 = vmatpush1.msra.mxu0 0.0
  %7266 = vmatprep.subr.mxu0 0.0
  %7267 = vmatpush1.msra.mxu0 0.0
  %7268 = vmatprep.subr.mxu0 0.0
  %7269 = vmatpush1.msra.mxu0 0.0
  %7270 = vmatprep.subr.mxu0 0.0
  %7271 = vmatpush1.msra.mxu0 0.0
  %7272 = vmatprep.subr.mxu0 0.0
  %7273 = vmatpush1.msra.mxu0 0.0
  %7274 = vmatprep.subr.mxu0 0.0
  %7275 = vmatpush1.msra.mxu0 0.0
  %7276 = vmatprep.subr.mxu0 0.0
  %7277 = vmatpush1.msra.mxu0 0.0
  %7278 = vmatprep.subr.mxu0 0.0
  %7279 = vmatpush1.msra.mxu0 0.0
  %7280 = vmatprep.subr.mxu0 0.0
  %7281 = vmatpush1.msra.mxu0 0.0
  %7282 = vmatprep.subr.mxu0 0.0
  %7283 = vmatpush1.msra.mxu0 0.0
  %7284 = vmatprep.subr.mxu0 0.0
  %7285 = vmatpush1.msra.mxu0 0.0
  %7286 = vmatprep.subr.mxu0 0.0
  %7287 = vmatpush1.msra.mxu0 0.0
  %7288 = vmatprep.subr.mxu0 0.0
  %7289 = vmatpush1.msra.mxu0 0.0
  %7290 = vmatprep.subr.mxu0 0.0
  %7291 = vmatpush1.msra.mxu0 0.0
  %7292 = vmatprep.subr.mxu0 0.0
  %7293 = vmatpush1.msra.mxu0 0.0
  %7294 = vmatprep.subr.mxu0 0.0
  %7295 = vmatpush1.msra.mxu0 0.0
  %7296 = vmatprep.subr.mxu0 0.0
  %7297 = vmatpush1.msra.mxu0 0.0
  %7298 = vmatprep.subr.mxu0 0.0
  %7299 = vmatpush1.msra.mxu0 0.0
  %7300 = vmatprep.subr.mxu0 0.0
  %7301 = vmatpush1.msra.mxu0 0.0
  %7302 = vmatprep.subr.mxu0 0.0
  %7303 = vmatpush1.msra.mxu0 0.0
  %7304 = vmatprep.subr.mxu0 0.0
  %7305 = vmatpush1.msra.mxu0 0.0
  %7306 = vmatprep.subr.mxu0 0.0
  %7307 = vmatpush1.msra.mxu0 0.0
  %7308 = vmatprep.subr.mxu0 0.0
  %7309 = vmatpush1.msra.mxu0 0.0
  %7310 = vmatprep.subr.mxu0 0.0
  %7311 = vmatpush1.msra.mxu0 0.0
  %7312 = vmatprep.subr.mxu0 0.0
  %7313 = vmatpush1.msra.mxu0 0.0
  %7314 = vmatprep.subr.mxu0 0.0
  %7315 = vmatpush1.msra.mxu0 0.0
  %7316 = vmatprep.mubr.f32.mxu0 0.0
  %7317 = vmatmul.mubr.f32.gmra.mrb[0].mxu0 %v5134
  %v7318 = vpop.f32.mrb[0].mxu0
  %v7319 = vadd.f32 0.0, %v7318
  %v7320 = vpop.f32.mrb[0].mxu0
  %v7321 = vadd.f32 0.0, %v7320
  %7322 = vdwg.mxu0
  %7323 = vmatprep.subr.mxu0 %v5254
  %7324 = vmatpush1.msra.mxu0 %v5252
  %7325 = vmatprep.subr.mxu0 0.0
  %7326 = vmatpush1.msra.mxu0 0.0
  %7327 = vmatprep.subr.mxu0 0.0
  %7328 = vmatpush1.msra.mxu0 0.0
  %7329 = vmatprep.subr.mxu0 0.0
  %7330 = vmatpush1.msra.mxu0 0.0
  %7331 = vmatprep.subr.mxu0 0.0
  %7332 = vmatpush1.msra.mxu0 0.0
  %7333 = vmatprep.subr.mxu0 0.0
  %7334 = vmatpush1.msra.mxu0 0.0
  %7335 = vmatprep.subr.mxu0 0.0
  %7336 = vmatpush1.msra.mxu0 0.0
  %7337 = vmatprep.subr.mxu0 0.0
  %7338 = vmatpush1.msra.mxu0 0.0
  %7339 = vmatprep.subr.mxu0 0.0
  %7340 = vmatpush1.msra.mxu0 0.0
  %7341 = vmatprep.subr.mxu0 0.0
  %7342 = vmatpush1.msra.mxu0 0.0
  %7343 = vmatprep.subr.mxu0 0.0
  %7344 = vmatpush1.msra.mxu0 0.0
  %7345 = vmatprep.subr.mxu0 0.0
  %7346 = vmatpush1.msra.mxu0 0.0
  %7347 = vmatprep.subr.mxu0 0.0
  %7348 = vmatpush1.msra.mxu0 0.0
  %7349 = vmatprep.subr.mxu0 0.0
  %7350 = vmatpush1.msra.mxu0 0.0
  %7351 = vmatprep.subr.mxu0 0.0
  %7352 = vmatpush1.msra.mxu0 0.0
  %7353 = vmatprep.subr.mxu0 0.0
  %7354 = vmatpush1.msra.mxu0 0.0
  %7355 = vmatprep.subr.mxu0 0.0
  %7356 = vmatpush1.msra.mxu0 0.0
  %7357 = vmatprep.subr.mxu0 0.0
  %7358 = vmatpush1.msra.mxu0 0.0
  %7359 = vmatprep.subr.mxu0 0.0
  %7360 = vmatpush1.msra.mxu0 0.0
  %7361 = vmatprep.subr.mxu0 0.0
  %7362 = vmatpush1.msra.mxu0 0.0
  %7363 = vmatprep.subr.mxu0 0.0
  %7364 = vmatpush1.msra.mxu0 0.0
  %7365 = vmatprep.subr.mxu0 0.0
  %7366 = vmatpush1.msra.mxu0 0.0
  %7367 = vmatprep.subr.mxu0 0.0
  %7368 = vmatpush1.msra.mxu0 0.0
  %7369 = vmatprep.subr.mxu0 0.0
  %7370 = vmatpush1.msra.mxu0 0.0
  %7371 = vmatprep.subr.mxu0 0.0
  %7372 = vmatpush1.msra.mxu0 0.0
  %7373 = vmatprep.subr.mxu0 0.0
  %7374 = vmatpush1.msra.mxu0 0.0
  %7375 = vmatprep.subr.mxu0 0.0
  %7376 = vmatpush1.msra.mxu0 0.0
  %7377 = vmatprep.subr.mxu0 0.0
  %7378 = vmatpush1.msra.mxu0 0.0
  %7379 = vmatprep.subr.mxu0 0.0
  %7380 = vmatpush1.msra.mxu0 0.0
  %7381 = vmatprep.subr.mxu0 0.0
  %7382 = vmatpush1.msra.mxu0 0.0
  %7383 = vmatprep.subr.mxu0 0.0
  %7384 = vmatpush1.msra.mxu0 0.0
  %7385 = vmatprep.subr.mxu0 0.0
  %7386 = vmatpush1.msra.mxu0 0.0
  %7387 = vmatprep.mubr.f32.mxu0 0.0
  %7388 = vmatmul.mubr.f32.gmra.mrb[0].mxu0 %v5134
  %v7389 = vpop.f32.mrb[0].mxu0
  %v7390 = vadd.f32 0.0, %v7389
  %v7391 = vpop.f32.mrb[0].mxu0
  %v7392 = vadd.f32 0.0, %v7391
  %7393 = vdwg.mxu0
  %7394 = vmatprep.subr.mxu0 %v5258
  %7395 = vmatpush1.msra.mxu0 %v5256
  %7396 = vmatprep.subr.mxu0 0.0
  %7397 = vmatpush1.msra.mxu0 0.0
  %7398 = vmatprep.subr.mxu0 0.0
  %7399 = vmatpush1.msra.mxu0 0.0
  %7400 = vmatprep.subr.mxu0 0.0
  %7401 = vmatpush1.msra.mxu0 0.0
  %7402 = vmatprep.subr.mxu0 0.0
  %7403 = vmatpush1.msra.mxu0 0.0
  %7404 = vmatprep.subr.mxu0 0.0
  %7405 = vmatpush1.msra.mxu0 0.0
  %7406 = vmatprep.subr.mxu0 0.0
  %7407 = vmatpush1.msra.mxu0 0.0
  %7408 = vmatprep.subr.mxu0 0.0
  %7409 = vmatpush1.msra.mxu0 0.0
  %7410 = vmatprep.subr.mxu0 0.0
  %7411 = vmatpush1.msra.mxu0 0.0
  %7412 = vmatprep.subr.mxu0 0.0
  %7413 = vmatpush1.msra.mxu0 0.0
  %7414 = vmatprep.subr.mxu0 0.0
  %7415 = vmatpush1.msra.mxu0 0.0
  %7416 = vmatprep.subr.mxu0 0.0
  %7417 = vmatpush1.msra.mxu0 0.0
  %7418 = vmatprep.subr.mxu0 0.0
  %7419 = vmatpush1.msra.mxu0 0.0
  %7420 = vmatprep.subr.mxu0 0.0
  %7421 = vmatpush1.msra.mxu0 0.0
  %7422 = vmatprep.subr.mxu0 0.0
  %7423 = vmatpush1.msra.mxu0 0.0
  %7424 = vmatprep.subr.mxu0 0.0
  %7425 = vmatpush1.msra.mxu0 0.0
  %7426 = vmatprep.subr.mxu0 0.0
  %7427 = vmatpush1.msra.mxu0 0.0
  %7428 = vmatprep.subr.mxu0 0.0
  %7429 = vmatpush1.msra.mxu0 0.0
  %7430 = vmatprep.subr.mxu0 0.0
  %7431 = vmatpush1.msra.mxu0 0.0
  %7432 = vmatprep.subr.mxu0 0.0
  %7433 = vmatpush1.msra.mxu0 0.0
  %7434 = vmatprep.subr.mxu0 0.0
  %7435 = vmatpush1.msra.mxu0 0.0
  %7436 = vmatprep.subr.mxu0 0.0
  %7437 = vmatpush1.msra.mxu0 0.0
  %7438 = vmatprep.subr.mxu0 0.0
  %7439 = vmatpush1.msra.mxu0 0.0
  %7440 = vmatprep.subr.mxu0 0.0
  %7441 = vmatpush1.msra.mxu0 0.0
  %7442 = vmatprep.subr.mxu0 0.0
  %7443 = vmatpush1.msra.mxu0 0.0
  %7444 = vmatprep.subr.mxu0 0.0
  %7445 = vmatpush1.msra.mxu0 0.0
  %7446 = vmatprep.subr.mxu0 0.0
  %7447 = vmatpush1.msra.mxu0 0.0
  %7448 = vmatprep.subr.mxu0 0.0
  %7449 = vmatpush1.msra.mxu0 0.0
  %7450 = vmatprep.subr.mxu0 0.0
  %7451 = vmatpush1.msra.mxu0 0.0
  %7452 = vmatprep.subr.mxu0 0.0
  %7453 = vmatpush1.msra.mxu0 0.0
  %7454 = vmatprep.subr.mxu0 0.0
  %7455 = vmatpush1.msra.mxu0 0.0
  %7456 = vmatprep.subr.mxu0 0.0
  %7457 = vmatpush1.msra.mxu0 0.0
  %7458 = vmatprep.mubr.f32.mxu0 0.0
  %7459 = vmatmul.mubr.f32.gmra.mrb[0].mxu0 %v5134
  %v7460 = vpop.f32.mrb[0].mxu0
  %v7461 = vadd.f32 0.0, %v7460
  %v7462 = vpop.f32.mrb[0].mxu0
  %v7463 = vadd.f32 0.0, %v7462
  %7464 = vdwg.mxu0
  %7465 = vmatprep.subr.mxu0 %v5262
  %7466 = vmatpush1.msra.mxu0 %v5260
  %7467 = vmatprep.subr.mxu0 0.0
  %7468 = vmatpush1.msra.mxu0 0.0
  %7469 = vmatprep.subr.mxu0 0.0
  %7470 = vmatpush1.msra.mxu0 0.0
  %7471 = vmatprep.subr.mxu0 0.0
  %7472 = vmatpush1.msra.mxu0 0.0
  %7473 = vmatprep.subr.mxu0 0.0
  %7474 = vmatpush1.msra.mxu0 0.0
  %7475 = vmatprep.subr.mxu0 0.0
  %7476 = vmatpush1.msra.mxu0 0.0
  %7477 = vmatprep.subr.mxu0 0.0
  %7478 = vmatpush1.msra.mxu0 0.0
  %7479 = vmatprep.subr.mxu0 0.0
  %7480 = vmatpush1.msra.mxu0 0.0
  %7481 = vmatprep.subr.mxu0 0.0
  %7482 = vmatpush1.msra.mxu0 0.0
  %7483 = vmatprep.subr.mxu0 0.0
  %7484 = vmatpush1.msra.mxu0 0.0
  %7485 = vmatprep.subr.mxu0 0.0
  %7486 = vmatpush1.msra.mxu0 0.0
  %7487 = vmatprep.subr.mxu0 0.0
  %7488 = vmatpush1.msra.mxu0 0.0
  %7489 = vmatprep.subr.mxu0 0.0
  %7490 = vmatpush1.msra.mxu0 0.0
  %7491 = vmatprep.subr.mxu0 0.0
  %7492 = vmatpush1.msra.mxu0 0.0
  %7493 = vmatprep.subr.mxu0 0.0
  %7494 = vmatpush1.msra.mxu0 0.0
  %7495 = vmatprep.subr.mxu0 0.0
  %7496 = vmatpush1.msra.mxu0 0.0
  %7497 = vmatprep.subr.mxu0 0.0
  %7498 = vmatpush1.msra.mxu0 0.0
  %7499 = vmatprep.subr.mxu0 0.0
  %7500 = vmatpush1.msra.mxu0 0.0
  %7501 = vmatprep.subr.mxu0 0.0
  %7502 = vmatpush1.msra.mxu0 0.0
  %7503 = vmatprep.subr.mxu0 0.0
  %7504 = vmatpush1.msra.mxu0 0.0
  %7505 = vmatprep.subr.mxu0 0.0
  %7506 = vmatpush1.msra.mxu0 0.0
  %7507 = vmatprep.subr.mxu0 0.0
  %7508 = vmatpush1.msra.mxu0 0.0
  %7509 = vmatprep.subr.mxu0 0.0
  %7510 = vmatpush1.msra.mxu0 0.0
  %7511 = vmatprep.subr.mxu0 0.0
  %7512 = vmatpush1.msra.mxu0 0.0
  %7513 = vmatprep.subr.mxu0 0.0
  %7514 = vmatpush1.msra.mxu0 0.0
  %7515 = vmatprep.subr.mxu0 0.0
  %7516 = vmatpush1.msra.mxu0 0.0
  %7517 = vmatprep.subr.mxu0 0.0
  %7518 = vmatpush1.msra.mxu0 0.0
  %7519 = vmatprep.subr.mxu0 0.0
  %7520 = vmatpush1.msra.mxu0 0.0
  %7521 = vmatprep.subr.mxu0 0.0
  %7522 = vmatpush1.msra.mxu0 0.0
  %7523 = vmatprep.subr.mxu0 0.0
  %7524 = vmatpush1.msra.mxu0 0.0
  %7525 = vmatprep.subr.mxu0 0.0
  %7526 = vmatpush1.msra.mxu0 0.0
  %7527 = vmatprep.subr.mxu0 0.0
  %7528 = vmatpush1.msra.mxu0 0.0
  %7529 = vmatprep.mubr.f32.mxu0 0.0
  %7530 = vmatmul.mubr.f32.gmra.mrb[0].mxu0 %v5134
  %v7531 = vpop.f32.mrb[0].mxu0
  %v7532 = vadd.f32 0.0, %v7531
  %v7533 = vpop.f32.mrb[0].mxu0
  %v7534 = vadd.f32 0.0, %v7533
  %7535 = vdwg.mxu0
  %v7536 = vadd.f32 %v2830, %v5331
  %v7537 = vadd.f32 %v2832, %v5333
  %v7538 = vadd.f32 %v2901, %v5402
  %v7539 = vadd.f32 %v2903, %v5404
  %v7540 = vadd.f32 %v2972, %v5473
  %v7541 = vadd.f32 %v2974, %v5475
  %v7542 = vadd.f32 %v3043, %v5544
  %v7543 = vadd.f32 %v3045, %v5546
  %v7544 = vadd.f32 %v3114, %v5615
  %v7545 = vadd.f32 %v3116, %v5617
  %v7546 = vadd.f32 %v3185, %v5686
  %v7547 = vadd.f32 %v3187, %v5688
  %v7548 = vadd.f32 %v3256, %v5757
  %v7549 = vadd.f32 %v3258, %v5759
  %v7550 = vadd.f32 %v3327, %v5828
  %v7551 = vadd.f32 %v3329, %v5830
  %v7552 = vadd.f32 %v3398, %v5899
  %v7553 = vadd.f32 %v3400, %v5901
  %v7554 = vadd.f32 %v3469, %v5970
  %v7555 = vadd.f32 %v3471, %v5972
  %v7556 = vadd.f32 %v3540, %v6041
  %v7557 = vadd.f32 %v3542, %v6043
  %v7558 = vadd.f32 %v3611, %v6112
  %v7559 = vadd.f32 %v3613, %v6114
  %v7560 = vadd.f32 %v3682, %v6183
  %v7561 = vadd.f32 %v3684, %v6185
  %v7562 = vadd.f32 %v3753, %v6254
  %v7563 = vadd.f32 %v3755, %v6256
  %v7564 = vadd.f32 %v3824, %v6325
  %v7565 = vadd.f32 %v3826, %v6327
  %v7566 = vadd.f32 %v3895, %v6396
  %v7567 = vadd.f32 %v3897, %v6398
  %v7568 = vadd.f32 %v3966, %v6467
  %v7569 = vadd.f32 %v3968, %v6469
  %v7570 = vadd.f32 %v4037, %v6538
  %v7571 = vadd.f32 %v4039, %v6540
  %v7572 = vadd.f32 %v4108, %v6609
  %v7573 = vadd.f32 %v4110, %v6611
  %v7574 = vadd.f32 %v4179, %v6680
  %v7575 = vadd.f32 %v4181, %v6682
  %v7576 = vadd.f32 %v4250, %v6751
  %v7577 = vadd.f32 %v4252, %v6753
  %v7578 = vadd.f32 %v4321, %v6822
  %v7579 = vadd.f32 %v4323, %v6824
  %v7580 = vadd.f32 %v4392, %v6893
  %v7581 = vadd.f32 %v4394, %v6895
  %v7582 = vadd.f32 %v4463, %v6964
  %v7583 = vadd.f32 %v4465, %v6966
  %v7584 = vadd.f32 %v4534, %v7035
  %v7585 = vadd.f32 %v4536, %v7037
  %v7586 = vadd.f32 %v4605, %v7106
  %v7587 = vadd.f32 %v4607, %v7108
  %v7588 = vadd.f32 %v4676, %v7177
  %v7589 = vadd.f32 %v4678, %v7179
  %v7590 = vadd.f32 %v4747, %v7248
  %v7591 = vadd.f32 %v4749, %v7250
  %v7592 = vadd.f32 %v4818, %v7319
  %v7593 = vadd.f32 %v4820, %v7321
  %v7594 = vadd.f32 %v4889, %v7390
  %v7595 = vadd.f32 %v4891, %v7392
  %v7596 = vadd.f32 %v4960, %v7461
  %v7597 = vadd.f32 %v4962, %v7463
  %v7598 = vadd.f32 %v5031, %v7532
  %v7599 = vadd.f32 %v5033, %v7534
  %s7600 = scalar_lea.vmem %s1, 24
  %v7601 = vld [vmem:[%s7600] sm:$0xff]
  %v7602 = vld [vmem:[%s0 + $0x24] sm:$0xff]
  %v7603 = vld [vmem:[%s0 + $0x2c] sm:$0xff]
  %v7604 = vld [vmem:[%s0 + $0x34] sm:$0xff]
  %v7605 = vld [vmem:[%s0 + $0x3c] sm:$0xff]
  %v7606 = vld [vmem:[%s0 + $0x44] sm:$0xff]
  %v7607 = vld [vmem:[%s0 + $0x4c] sm:$0xff]
  %v7608 = vld [vmem:[%s0 + $0x54] sm:$0xff]
  %v7609 = vld [vmem:[%s0 + $0x5c] sm:$0xff]
  %v7610 = vld [vmem:[%s0 + $0x64] sm:$0xff]
  %v7611 = vld [vmem:[%s0 + $0x6c] sm:$0xff]
  %v7612 = vld [vmem:[%s0 + $0x74] sm:$0xff]
  %v7613 = vld [vmem:[%s0 + $0x7c] sm:$0xff]
  %v7614 = vld [vmem:[%s0 + $0x84] sm:$0xff]
  %v7615 = vld [vmem:[%s0 + $0x8c] sm:$0xff]
  %v7616 = vld [vmem:[%s0 + $0x94] sm:$0xff]
  %v7617 = vld [vmem:[%s0 + $0x9c] sm:$0xff]
  %v7618 = vld [vmem:[%s0 + $0xa4] sm:$0xff]
  %v7619 = vld [vmem:[%s0 + $0xac] sm:$0xff]
  %v7620 = vld [vmem:[%s0 + $0xb4] sm:$0xff]
  %v7621 = vld [vmem:[%s0 + $0xbc] sm:$0xff]
  %v7622 = vld [vmem:[%s0 + $0xc4] sm:$0xff]
  %v7623 = vld [vmem:[%s0 + $0xcc] sm:$0xff]
  %v7624 = vld [vmem:[%s0 + $0xd4] sm:$0xff]
  %v7625 = vld [vmem:[%s0 + $0xdc] sm:$0xff]
  %v7626 = vld [vmem:[%s0 + $0xe4] sm:$0xff]
  %v7627 = vld [vmem:[%s0 + $0xec] sm:$0xff]
  %v7628 = vld [vmem:[%s0 + $0xf4] sm:$0xff]
  %v7629 = vld [vmem:[%s0 + $0xfc] sm:$0xff]
  %v7630 = vld [vmem:[%s0 + $0x104] sm:$0xff]
  %v7631 = vld [vmem:[%s0 + $0x10c] sm:$0xff]
  %v7632 = vld [vmem:[%s0 + $0x114] sm:$0xff]
  %v7633 = vld [vmem:[%s0 + $0x11c] sm:$0xff]
  %v7666 = vcombine.high %v7602, %v7602
  %v7667 = vcombine.high %v7603, %v7603
  %v7668 = vcombine.high %v7604, %v7604
  %v7669 = vcombine.high %v7605, %v7605
  %v7670 = vcombine.high %v7606, %v7606
  %v7671 = vcombine.high %v7607, %v7607
  %v7672 = vcombine.high %v7608, %v7608
  %v7673 = vcombine.high %v7609, %v7609
  %v7674 = vcombine.high %v7610, %v7610
  %v7675 = vcombine.high %v7611, %v7611
  %v7676 = vcombine.high %v7612, %v7612
  %v7677 = vcombine.high %v7613, %v7613
  %v7678 = vcombine.high %v7614, %v7614
  %v7679 = vcombine.high %v7615, %v7615
  %v7680 = vcombine.high %v7616, %v7616
  %v7681 = vcombine.high %v7617, %v7617
  %v7682 = vcombine.high %v7618, %v7618
  %v7683 = vcombine.high %v7619, %v7619
  %v7684 = vcombine.high %v7620, %v7620
  %v7685 = vcombine.high %v7621, %v7621
  %v7686 = vcombine.high %v7622, %v7622
  %v7687 = vcombine.high %v7623, %v7623
  %v7688 = vcombine.high %v7624, %v7624
  %v7689 = vcombine.high %v7625, %v7625
  %v7690 = vcombine.high %v7626, %v7626
  %v7691 = vcombine.high %v7627, %v7627
  %v7692 = vcombine.high %v7628, %v7628
  %v7693 = vcombine.high %v7629, %v7629
  %v7694 = vcombine.high %v7630, %v7630
  %v7695 = vcombine.high %v7631, %v7631
  %v7696 = vcombine.high %v7632, %v7632
  %v7697 = vcombine.high %v7633, %v7633
  %v7699 = vsel %vm163, %v7601, 0
  %v7701 = vsel %vm167, %v7602, 0
  %v7703 = vsel %vm167, %v7666, 0
  %v7705 = vsel %vm167, %v7603, 0
  %v7707 = vsel %vm167, %v7667, 0
  %v7709 = vsel %vm167, %v7604, 0
  %v7711 = vsel %vm167, %v7668, 0
  %v7713 = vsel %vm167, %v7605, 0
  %v7715 = vsel %vm167, %v7669, 0
  %v7717 = vsel %vm167, %v7606, 0
  %v7719 = vsel %vm167, %v7670, 0
  %v7721 = vsel %vm167, %v7607, 0
  %v7723 = vsel %vm167, %v7671, 0
  %v7725 = vsel %vm167, %v7608, 0
  %v7727 = vsel %vm167, %v7672, 0
  %v7729 = vsel %vm167, %v7609, 0
  %v7731 = vsel %vm167, %v7673, 0
  %v7733 = vsel %vm167, %v7610, 0
  %v7735 = vsel %vm167, %v7674, 0
  %v7737 = vsel %vm167, %v7611, 0
  %v7739 = vsel %vm167, %v7675, 0
  %v7741 = vsel %vm167, %v7612, 0
  %v7743 = vsel %vm167, %v7676, 0
  %v7745 = vsel %vm167, %v7613, 0
  %v7747 = vsel %vm167, %v7677, 0
  %v7749 = vsel %vm167, %v7614, 0
  %v7751 = vsel %vm167, %v7678, 0
  %v7753 = vsel %vm167, %v7615, 0
  %v7755 = vsel %vm167, %v7679, 0
  %v7757 = vsel %vm167, %v7616, 0
  %v7759 = vsel %vm167, %v7680, 0
  %v7761 = vsel %vm167, %v7617, 0
  %v7763 = vsel %vm167, %v7681, 0
  %v7765 = vsel %vm167, %v7618, 0
  %v7767 = vsel %vm167, %v7682, 0
  %v7769 = vsel %vm167, %v7619, 0
  %v7771 = vsel %vm167, %v7683, 0
  %v7773 = vsel %vm167, %v7620, 0
  %v7775 = vsel %vm167, %v7684, 0
  %v7777 = vsel %vm167, %v7621, 0
  %v7779 = vsel %vm167, %v7685, 0
  %v7781 = vsel %vm167, %v7622, 0
  %v7783 = vsel %vm167, %v7686, 0
  %v7785 = vsel %vm167, %v7623, 0
  %v7787 = vsel %vm167, %v7687, 0
  %v7789 = vsel %vm167, %v7624, 0
  %v7791 = vsel %vm167, %v7688, 0
  %v7793 = vsel %vm167, %v7625, 0
  %v7795 = vsel %vm167, %v7689, 0
  %v7797 = vsel %vm167, %v7626, 0
  %v7799 = vsel %vm167, %v7690, 0
  %v7801 = vsel %vm167, %v7627, 0
  %v7803 = vsel %vm167, %v7691, 0
  %v7805 = vsel %vm167, %v7628, 0
  %v7807 = vsel %vm167, %v7692, 0
  %v7809 = vsel %vm167, %v7629, 0
  %v7811 = vsel %vm167, %v7693, 0
  %v7813 = vsel %vm167, %v7630, 0
  %v7815 = vsel %vm167, %v7694, 0
  %v7817 = vsel %vm167, %v7631, 0
  %v7819 = vsel %vm167, %v7695, 0
  %v7821 = vsel %vm167, %v7632, 0
  %v7823 = vsel %vm167, %v7696, 0
  %v7825 = vsel %vm167, %v7633, 0
  %v7827 = vsel %vm167, %v7697, 0
  %7829 = vmatprep.subr.mxu0 %v7703
  %7830 = vmatpush1.msra.mxu0 %v7701
  %7831 = vmatprep.subr.mxu0 0.0
  %7832 = vmatpush1.msra.mxu0 0.0
  %7833 = vmatprep.subr.mxu0 0.0
  %7834 = vmatpush1.msra.mxu0 0.0
  %7835 = vmatprep.subr.mxu0 0.0
  %7836 = vmatpush1.msra.mxu0 0.0
  %7837 = vmatprep.subr.mxu0 0.0
  %7838 = vmatpush1.msra.mxu0 0.0
  %7839 = vmatprep.subr.mxu0 0.0
  %7840 = vmatpush1.msra.mxu0 0.0
  %7841 = vmatprep.subr.mxu0 0.0
  %7842 = vmatpush1.msra.mxu0 0.0
  %7843 = vmatprep.subr.mxu0 0.0
  %7844 = vmatpush1.msra.mxu0 0.0
  %7845 = vmatprep.subr.mxu0 0.0
  %7846 = vmatpush1.msra.mxu0 0.0
  %7847 = vmatprep.subr.mxu0 0.0
  %7848 = vmatpush1.msra.mxu0 0.0
  %7849 = vmatprep.subr.mxu0 0.0
  %7850 = vmatpush1.msra.mxu0 0.0
  %7851 = vmatprep.subr.mxu0 0.0
  %7852 = vmatpush1.msra.mxu0 0.0
  %7853 = vmatprep.subr.mxu0 0.0
  %7854 = vmatpush1.msra.mxu0 0.0
  %7855 = vmatprep.subr.mxu0 0.0
  %7856 = vmatpush1.msra.mxu0 0.0
  %7857 = vmatprep.subr.mxu0 0.0
  %7858 = vmatpush1.msra.mxu0 0.0
  %7859 = vmatprep.subr.mxu0 0.0
  %7860 = vmatpush1.msra.mxu0 0.0
  %7861 = vmatprep.subr.mxu0 0.0
  %7862 = vmatpush1.msra.mxu0 0.0
  %7863 = vmatprep.subr.mxu0 0.0
  %7864 = vmatpush1.msra.mxu0 0.0
  %7865 = vmatprep.subr.mxu0 0.0
  %7866 = vmatpush1.msra.mxu0 0.0
  %7867 = vmatprep.subr.mxu0 0.0
  %7868 = vmatpush1.msra.mxu0 0.0
  %7869 = vmatprep.subr.mxu0 0.0
  %7870 = vmatpush1.msra.mxu0 0.0
  %7871 = vmatprep.subr.mxu0 0.0
  %7872 = vmatpush1.msra.mxu0 0.0
  %7873 = vmatprep.subr.mxu0 0.0
  %7874 = vmatpush1.msra.mxu0 0.0
  %7875 = vmatprep.subr.mxu0 0.0
  %7876 = vmatpush1.msra.mxu0 0.0
  %7877 = vmatprep.subr.mxu0 0.0
  %7878 = vmatpush1.msra.mxu0 0.0
  %7879 = vmatprep.subr.mxu0 0.0
  %7880 = vmatpush1.msra.mxu0 0.0
  %7881 = vmatprep.subr.mxu0 0.0
  %7882 = vmatpush1.msra.mxu0 0.0
  %7883 = vmatprep.subr.mxu0 0.0
  %7884 = vmatpush1.msra.mxu0 0.0
  %7885 = vmatprep.subr.mxu0 0.0
  %7886 = vmatpush1.msra.mxu0 0.0
  %7887 = vmatprep.subr.mxu0 0.0
  %7888 = vmatpush1.msra.mxu0 0.0
  %7889 = vmatprep.subr.mxu0 0.0
  %7890 = vmatpush1.msra.mxu0 0.0
  %7891 = vmatprep.subr.mxu0 0.0
  %7892 = vmatpush1.msra.mxu0 0.0
  %7893 = vmatprep.mubr.f32.mxu0 0.0
  %7894 = vmatmul.mubr.f32.gmra.mrb[0].mxu0 %v7699
  %v7895 = vpop.f32.mrb[0].mxu0
  %v7896 = vadd.f32 0.0, %v7895
  %v7897 = vpop.f32.mrb[0].mxu0
  %v7898 = vadd.f32 0.0, %v7897
  %7899 = vdwg.mxu0
  %7900 = vmatprep.subr.mxu0 %v7707
  %7901 = vmatpush1.msra.mxu0 %v7705
  %7902 = vmatprep.subr.mxu0 0.0
  %7903 = vmatpush1.msra.mxu0 0.0
  %7904 = vmatprep.subr.mxu0 0.0
  %7905 = vmatpush1.msra.mxu0 0.0
  %7906 = vmatprep.subr.mxu0 0.0
  %7907 = vmatpush1.msra.mxu0 0.0
  %7908 = vmatprep.subr.mxu0 0.0
  %7909 = vmatpush1.msra.mxu0 0.0
  %7910 = vmatprep.subr.mxu0 0.0
  %7911 = vmatpush1.msra.mxu0 0.0
  %7912 = vmatprep.subr.mxu0 0.0
  %7913 = vmatpush1.msra.mxu0 0.0
  %7914 = vmatprep.subr.mxu0 0.0
  %7915 = vmatpush1.msra.mxu0 0.0
  %7916 = vmatprep.subr.mxu0 0.0
  %7917 = vmatpush1.msra.mxu0 0.0
  %7918 = vmatprep.subr.mxu0 0.0
  %7919 = vmatpush1.msra.mxu0 0.0
  %7920 = vmatprep.subr.mxu0 0.0
  %7921 = vmatpush1.msra.mxu0 0.0
  %7922 = vmatprep.subr.mxu0 0.0
  %7923 = vmatpush1.msra.mxu0 0.0
  %7924 = vmatprep.subr.mxu0 0.0
  %7925 = vmatpush1.msra.mxu0 0.0
  %7926 = vmatprep.subr.mxu0 0.0
  %7927 = vmatpush1.msra.mxu0 0.0
  %7928 = vmatprep.subr.mxu0 0.0
  %7929 = vmatpush1.msra.mxu0 0.0
  %7930 = vmatprep.subr.mxu0 0.0
  %7931 = vmatpush1.msra.mxu0 0.0
  %7932 = vmatprep.subr.mxu0 0.0
  %7933 = vmatpush1.msra.mxu0 0.0
  %7934 = vmatprep.subr.mxu0 0.0
  %7935 = vmatpush1.msra.mxu0 0.0
  %7936 = vmatprep.subr.mxu0 0.0
  %7937 = vmatpush1.msra.mxu0 0.0
  %7938 = vmatprep.subr.mxu0 0.0
  %7939 = vmatpush1.msra.mxu0 0.0
  %7940 = vmatprep.subr.mxu0 0.0
  %7941 = vmatpush1.msra.mxu0 0.0
  %7942 = vmatprep.subr.mxu0 0.0
  %7943 = vmatpush1.msra.mxu0 0.0
  %7944 = vmatprep.subr.mxu0 0.0
  %7945 = vmatpush1.msra.mxu0 0.0
  %7946 = vmatprep.subr.mxu0 0.0
  %7947 = vmatpush1.msra.mxu0 0.0
  %7948 = vmatprep.subr.mxu0 0.0
  %7949 = vmatpush1.msra.mxu0 0.0
  %7950 = vmatprep.subr.mxu0 0.0
  %7951 = vmatpush1.msra.mxu0 0.0
  %7952 = vmatprep.subr.mxu0 0.0
  %7953 = vmatpush1.msra.mxu0 0.0
  %7954 = vmatprep.subr.mxu0 0.0
  %7955 = vmatpush1.msra.mxu0 0.0
  %7956 = vmatprep.subr.mxu0 0.0
  %7957 = vmatpush1.msra.mxu0 0.0
  %7958 = vmatprep.subr.mxu0 0.0
  %7959 = vmatpush1.msra.mxu0 0.0
  %7960 = vmatprep.subr.mxu0 0.0
  %7961 = vmatpush1.msra.mxu0 0.0
  %7962 = vmatprep.subr.mxu0 0.0
  %7963 = vmatpush1.msra.mxu0 0.0
  %7964 = vmatprep.mubr.f32.mxu0 0.0
  %7965 = vmatmul.mubr.f32.gmra.mrb[0].mxu0 %v7699
  %v7966 = vpop.f32.mrb[0].mxu0
  %v7967 = vadd.f32 0.0, %v7966
  %v7968 = vpop.f32.mrb[0].mxu0
  %v7969 = vadd.f32 0.0, %v7968
  %7970 = vdwg.mxu0
  %7971 = vmatprep.subr.mxu0 %v7711
  %7972 = vmatpush1.msra.mxu0 %v7709
  %7973 = vmatprep.subr.mxu0 0.0
  %7974 = vmatpush1.msra.mxu0 0.0
  %7975 = vmatprep.subr.mxu0 0.0
  %7976 = vmatpush1.msra.mxu0 0.0
  %7977 = vmatprep.subr.mxu0 0.0
  %7978 = vmatpush1.msra.mxu0 0.0
  %7979 = vmatprep.subr.mxu0 0.0
  %7980 = vmatpush1.msra.mxu0 0.0
  %7981 = vmatprep.subr.mxu0 0.0
  %7982 = vmatpush1.msra.mxu0 0.0
  %7983 = vmatprep.subr.mxu0 0.0
  %7984 = vmatpush1.msra.mxu0 0.0
  %7985 = vmatprep.subr.mxu0 0.0
  %7986 = vmatpush1.msra.mxu0 0.0
  %7987 = vmatprep.subr.mxu0 0.0
  %7988 = vmatpush1.msra.mxu0 0.0
  %7989 = vmatprep.subr.mxu0 0.0
  %7990 = vmatpush1.msra.mxu0 0.0
  %7991 = vmatprep.subr.mxu0 0.0
  %7992 = vmatpush1.msra.mxu0 0.0
  %7993 = vmatprep.subr.mxu0 0.0
  %7994 = vmatpush1.msra.mxu0 0.0
  %7995 = vmatprep.subr.mxu0 0.0
  %7996 = vmatpush1.msra.mxu0 0.0
  %7997 = vmatprep.subr.mxu0 0.0
  %7998 = vmatpush1.msra.mxu0 0.0
  %7999 = vmatprep.subr.mxu0 0.0
  %8000 = vmatpush1.msra.mxu0 0.0
  %8001 = vmatprep.subr.mxu0 0.0
  %8002 = vmatpush1.msra.mxu0 0.0
  %8003 = vmatprep.subr.mxu0 0.0
  %8004 = vmatpush1.msra.mxu0 0.0
  %8005 = vmatprep.subr.mxu0 0.0
  %8006 = vmatpush1.msra.mxu0 0.0
  %8007 = vmatprep.subr.mxu0 0.0
  %8008 = vmatpush1.msra.mxu0 0.0
  %8009 = vmatprep.subr.mxu0 0.0
  %8010 = vmatpush1.msra.mxu0 0.0
  %8011 = vmatprep.subr.mxu0 0.0
  %8012 = vmatpush1.msra.mxu0 0.0
  %8013 = vmatprep.subr.mxu0 0.0
  %8014 = vmatpush1.msra.mxu0 0.0
  %8015 = vmatprep.subr.mxu0 0.0
  %8016 = vmatpush1.msra.mxu0 0.0
  %8017 = vmatprep.subr.mxu0 0.0
  %8018 = vmatpush1.msra.mxu0 0.0
  %8019 = vmatprep.subr.mxu0 0.0
  %8020 = vmatpush1.msra.mxu0 0.0
  %8021 = vmatprep.subr.mxu0 0.0
  %8022 = vmatpush1.msra.mxu0 0.0
  %8023 = vmatprep.subr.mxu0 0.0
  %8024 = vmatpush1.msra.mxu0 0.0
  %8025 = vmatprep.subr.mxu0 0.0
  %8026 = vmatpush1.msra.mxu0 0.0
  %8027 = vmatprep.subr.mxu0 0.0
  %8028 = vmatpush1.msra.mxu0 0.0
  %8029 = vmatprep.subr.mxu0 0.0
  %8030 = vmatpush1.msra.mxu0 0.0
  %8031 = vmatprep.subr.mxu0 0.0
  %8032 = vmatpush1.msra.mxu0 0.0
  %8033 = vmatprep.subr.mxu0 0.0
  %8034 = vmatpush1.msra.mxu0 0.0
  %8035 = vmatprep.mubr.f32.mxu0 0.0
  %8036 = vmatmul.mubr.f32.gmra.mrb[0].mxu0 %v7699
  %v8037 = vpop.f32.mrb[0].mxu0
  %v8038 = vadd.f32 0.0, %v8037
  %v8039 = vpop.f32.mrb[0].mxu0
  %v8040 = vadd.f32 0.0, %v8039
  %8041 = vdwg.mxu0
  %8042 = vmatprep.subr.mxu0 %v7715
  %8043 = vmatpush1.msra.mxu0 %v7713
  %8044 = vmatprep.subr.mxu0 0.0
  %8045 = vmatpush1.msra.mxu0 0.0
  %8046 = vmatprep.subr.mxu0 0.0
  %8047 = vmatpush1.msra.mxu0 0.0
  %8048 = vmatprep.subr.mxu0 0.0
  %8049 = vmatpush1.msra.mxu0 0.0
  %8050 = vmatprep.subr.mxu0 0.0
  %8051 = vmatpush1.msra.mxu0 0.0
  %8052 = vmatprep.subr.mxu0 0.0
  %8053 = vmatpush1.msra.mxu0 0.0
  %8054 = vmatprep.subr.mxu0 0.0
  %8055 = vmatpush1.msra.mxu0 0.0
  %8056 = vmatprep.subr.mxu0 0.0
  %8057 = vmatpush1.msra.mxu0 0.0
  %8058 = vmatprep.subr.mxu0 0.0
  %8059 = vmatpush1.msra.mxu0 0.0
  %8060 = vmatprep.subr.mxu0 0.0
  %8061 = vmatpush1.msra.mxu0 0.0
  %8062 = vmatprep.subr.mxu0 0.0
  %8063 = vmatpush1.msra.mxu0 0.0
  %8064 = vmatprep.subr.mxu0 0.0
  %8065 = vmatpush1.msra.mxu0 0.0
  %8066 = vmatprep.subr.mxu0 0.0
  %8067 = vmatpush1.msra.mxu0 0.0
  %8068 = vmatprep.subr.mxu0 0.0
  %8069 = vmatpush1.msra.mxu0 0.0
  %8070 = vmatprep.subr.mxu0 0.0
  %8071 = vmatpush1.msra.mxu0 0.0
  %8072 = vmatprep.subr.mxu0 0.0
  %8073 = vmatpush1.msra.mxu0 0.0
  %8074 = vmatprep.subr.mxu0 0.0
  %8075 = vmatpush1.msra.mxu0 0.0
  %8076 = vmatprep.subr.mxu0 0.0
  %8077 = vmatpush1.msra.mxu0 0.0
  %8078 = vmatprep.subr.mxu0 0.0
  %8079 = vmatpush1.msra.mxu0 0.0
  %8080 = vmatprep.subr.mxu0 0.0
  %8081 = vmatpush1.msra.mxu0 0.0
  %8082 = vmatprep.subr.mxu0 0.0
  %8083 = vmatpush1.msra.mxu0 0.0
  %8084 = vmatprep.subr.mxu0 0.0
  %8085 = vmatpush1.msra.mxu0 0.0
  %8086 = vmatprep.subr.mxu0 0.0
  %8087 = vmatpush1.msra.mxu0 0.0
  %8088 = vmatprep.subr.mxu0 0.0
  %8089 = vmatpush1.msra.mxu0 0.0
  %8090 = vmatprep.subr.mxu0 0.0
  %8091 = vmatpush1.msra.mxu0 0.0
  %8092 = vmatprep.subr.mxu0 0.0
  %8093 = vmatpush1.msra.mxu0 0.0
  %8094 = vmatprep.subr.mxu0 0.0
  %8095 = vmatpush1.msra.mxu0 0.0
  %8096 = vmatprep.subr.mxu0 0.0
  %8097 = vmatpush1.msra.mxu0 0.0
  %8098 = vmatprep.subr.mxu0 0.0
  %8099 = vmatpush1.msra.mxu0 0.0
  %8100 = vmatprep.subr.mxu0 0.0
  %8101 = vmatpush1.msra.mxu0 0.0
  %8102 = vmatprep.subr.mxu0 0.0
  %8103 = vmatpush1.msra.mxu0 0.0
  %8104 = vmatprep.subr.mxu0 0.0
  %8105 = vmatpush1.msra.mxu0 0.0
  %8106 = vmatprep.mubr.f32.mxu0 0.0
  %8107 = vmatmul.mubr.f32.gmra.mrb[0].mxu0 %v7699
  %v8108 = vpop.f32.mrb[0].mxu0
  %v8109 = vadd.f32 0.0, %v8108
  %v8110 = vpop.f32.mrb[0].mxu0
  %v8111 = vadd.f32 0.0, %v8110
  %8112 = vdwg.mxu0
  %8113 = vmatprep.subr.mxu0 %v7719
  %8114 = vmatpush1.msra.mxu0 %v7717
  %8115 = vmatprep.subr.mxu0 0.0
  %8116 = vmatpush1.msra.mxu0 0.0
  %8117 = vmatprep.subr.mxu0 0.0
  %8118 = vmatpush1.msra.mxu0 0.0
  %8119 = vmatprep.subr.mxu0 0.0
  %8120 = vmatpush1.msra.mxu0 0.0
  %8121 = vmatprep.subr.mxu0 0.0
  %8122 = vmatpush1.msra.mxu0 0.0
  %8123 = vmatprep.subr.mxu0 0.0
  %8124 = vmatpush1.msra.mxu0 0.0
  %8125 = vmatprep.subr.mxu0 0.0
  %8126 = vmatpush1.msra.mxu0 0.0
  %8127 = vmatprep.subr.mxu0 0.0
  %8128 = vmatpush1.msra.mxu0 0.0
  %8129 = vmatprep.subr.mxu0 0.0
  %8130 = vmatpush1.msra.mxu0 0.0
  %8131 = vmatprep.subr.mxu0 0.0
  %8132 = vmatpush1.msra.mxu0 0.0
  %8133 = vmatprep.subr.mxu0 0.0
  %8134 = vmatpush1.msra.mxu0 0.0
  %8135 = vmatprep.subr.mxu0 0.0
  %8136 = vmatpush1.msra.mxu0 0.0
  %8137 = vmatprep.subr.mxu0 0.0
  %8138 = vmatpush1.msra.mxu0 0.0
  %8139 = vmatprep.subr.mxu0 0.0
  %8140 = vmatpush1.msra.mxu0 0.0
  %8141 = vmatprep.subr.mxu0 0.0
  %8142 = vmatpush1.msra.mxu0 0.0
  %8143 = vmatprep.subr.mxu0 0.0
  %8144 = vmatpush1.msra.mxu0 0.0
  %8145 = vmatprep.subr.mxu0 0.0
  %8146 = vmatpush1.msra.mxu0 0.0
  %8147 = vmatprep.subr.mxu0 0.0
  %8148 = vmatpush1.msra.mxu0 0.0
  %8149 = vmatprep.subr.mxu0 0.0
  %8150 = vmatpush1.msra.mxu0 0.0
  %8151 = vmatprep.subr.mxu0 0.0
  %8152 = vmatpush1.msra.mxu0 0.0
  %8153 = vmatprep.subr.mxu0 0.0
  %8154 = vmatpush1.msra.mxu0 0.0
  %8155 = vmatprep.subr.mxu0 0.0
  %8156 = vmatpush1.msra.mxu0 0.0
  %8157 = vmatprep.subr.mxu0 0.0
  %8158 = vmatpush1.msra.mxu0 0.0
  %8159 = vmatprep.subr.mxu0 0.0
  %8160 = vmatpush1.msra.mxu0 0.0
  %8161 = vmatprep.subr.mxu0 0.0
  %8162 = vmatpush1.msra.mxu0 0.0
  %8163 = vmatprep.subr.mxu0 0.0
  %8164 = vmatpush1.msra.mxu0 0.0
  %8165 = vmatprep.subr.mxu0 0.0
  %8166 = vmatpush1.msra.mxu0 0.0
  %8167 = vmatprep.subr.mxu0 0.0
  %8168 = vmatpush1.msra.mxu0 0.0
  %8169 = vmatprep.subr.mxu0 0.0
  %8170 = vmatpush1.msra.mxu0 0.0
  %8171 = vmatprep.subr.mxu0 0.0
  %8172 = vmatpush1.msra.mxu0 0.0
  %8173 = vmatprep.subr.mxu0 0.0
  %8174 = vmatpush1.msra.mxu0 0.0
  %8175 = vmatprep.subr.mxu0 0.0
  %8176 = vmatpush1.msra.mxu0 0.0
  %8177 = vmatprep.mubr.f32.mxu0 0.0
  %8178 = vmatmul.mubr.f32.gmra.mrb[0].mxu0 %v7699
  %v8179 = vpop.f32.mrb[0].mxu0
  %v8180 = vadd.f32 0.0, %v8179
  %v8181 = vpop.f32.mrb[0].mxu0
  %v8182 = vadd.f32 0.0, %v8181
  %8183 = vdwg.mxu0
  %8184 = vmatprep.subr.mxu0 %v7723
  %8185 = vmatpush1.msra.mxu0 %v7721
  %8186 = vmatprep.subr.mxu0 0.0
  %8187 = vmatpush1.msra.mxu0 0.0
  %8188 = vmatprep.subr.mxu0 0.0
  %8189 = vmatpush1.msra.mxu0 0.0
  %8190 = vmatprep.subr.mxu0 0.0
  %8191 = vmatpush1.msra.mxu0 0.0
  %8192 = vmatprep.subr.mxu0 0.0
  %8193 = vmatpush1.msra.mxu0 0.0
  %8194 = vmatprep.subr.mxu0 0.0
  %8195 = vmatpush1.msra.mxu0 0.0
  %8196 = vmatprep.subr.mxu0 0.0
  %8197 = vmatpush1.msra.mxu0 0.0
  %8198 = vmatprep.subr.mxu0 0.0
  %8199 = vmatpush1.msra.mxu0 0.0
  %8200 = vmatprep.subr.mxu0 0.0
  %8201 = vmatpush1.msra.mxu0 0.0
  %8202 = vmatprep.subr.mxu0 0.0
  %8203 = vmatpush1.msra.mxu0 0.0
  %8204 = vmatprep.subr.mxu0 0.0
  %8205 = vmatpush1.msra.mxu0 0.0
  %8206 = vmatprep.subr.mxu0 0.0
  %8207 = vmatpush1.msra.mxu0 0.0
  %8208 = vmatprep.subr.mxu0 0.0
  %8209 = vmatpush1.msra.mxu0 0.0
  %8210 = vmatprep.subr.mxu0 0.0
  %8211 = vmatpush1.msra.mxu0 0.0
  %8212 = vmatprep.subr.mxu0 0.0
  %8213 = vmatpush1.msra.mxu0 0.0
  %8214 = vmatprep.subr.mxu0 0.0
  %8215 = vmatpush1.msra.mxu0 0.0
  %8216 = vmatprep.subr.mxu0 0.0
  %8217 = vmatpush1.msra.mxu0 0.0
  %8218 = vmatprep.subr.mxu0 0.0
  %8219 = vmatpush1.msra.mxu0 0.0
  %8220 = vmatprep.subr.mxu0 0.0
  %8221 = vmatpush1.msra.mxu0 0.0
  %8222 = vmatprep.subr.mxu0 0.0
  %8223 = vmatpush1.msra.mxu0 0.0
  %8224 = vmatprep.subr.mxu0 0.0
  %8225 = vmatpush1.msra.mxu0 0.0
  %8226 = vmatprep.subr.mxu0 0.0
  %8227 = vmatpush1.msra.mxu0 0.0
  %8228 = vmatprep.subr.mxu0 0.0
  %8229 = vmatpush1.msra.mxu0 0.0
  %8230 = vmatprep.subr.mxu0 0.0
  %8231 = vmatpush1.msra.mxu0 0.0
  %8232 = vmatprep.subr.mxu0 0.0
  %8233 = vmatpush1.msra.mxu0 0.0
  %8234 = vmatprep.subr.mxu0 0.0
  %8235 = vmatpush1.msra.mxu0 0.0
  %8236 = vmatprep.subr.mxu0 0.0
  %8237 = vmatpush1.msra.mxu0 0.0
  %8238 = vmatprep.subr.mxu0 0.0
  %8239 = vmatpush1.msra.mxu0 0.0
  %8240 = vmatprep.subr.mxu0 0.0
  %8241 = vmatpush1.msra.mxu0 0.0
  %8242 = vmatprep.subr.mxu0 0.0
  %8243 = vmatpush1.msra.mxu0 0.0
  %8244 = vmatprep.subr.mxu0 0.0
  %8245 = vmatpush1.msra.mxu0 0.0
  %8246 = vmatprep.subr.mxu0 0.0
  %8247 = vmatpush1.msra.mxu0 0.0
  %8248 = vmatprep.mubr.f32.mxu0 0.0
  %8249 = vmatmul.mubr.f32.gmra.mrb[0].mxu0 %v7699
  %v8250 = vpop.f32.mrb[0].mxu0
  %v8251 = vadd.f32 0.0, %v8250
  %v8252 = vpop.f32.mrb[0].mxu0
  %v8253 = vadd.f32 0.0, %v8252
  %8254 = vdwg.mxu0
  %8255 = vmatprep.subr.mxu0 %v7727
  %8256 = vmatpush1.msra.mxu0 %v7725
  %8257 = vmatprep.subr.mxu0 0.0
  %8258 = vmatpush1.msra.mxu0 0.0
  %8259 = vmatprep.subr.mxu0 0.0
  %8260 = vmatpush1.msra.mxu0 0.0
  %8261 = vmatprep.subr.mxu0 0.0
  %8262 = vmatpush1.msra.mxu0 0.0
  %8263 = vmatprep.subr.mxu0 0.0
  %8264 = vmatpush1.msra.mxu0 0.0
  %8265 = vmatprep.subr.mxu0 0.0
  %8266 = vmatpush1.msra.mxu0 0.0
  %8267 = vmatprep.subr.mxu0 0.0
  %8268 = vmatpush1.msra.mxu0 0.0
  %8269 = vmatprep.subr.mxu0 0.0
  %8270 = vmatpush1.msra.mxu0 0.0
  %8271 = vmatprep.subr.mxu0 0.0
  %8272 = vmatpush1.msra.mxu0 0.0
  %8273 = vmatprep.subr.mxu0 0.0
  %8274 = vmatpush1.msra.mxu0 0.0
  %8275 = vmatprep.subr.mxu0 0.0
  %8276 = vmatpush1.msra.mxu0 0.0
  %8277 = vmatprep.subr.mxu0 0.0
  %8278 = vmatpush1.msra.mxu0 0.0
  %8279 = vmatprep.subr.mxu0 0.0
  %8280 = vmatpush1.msra.mxu0 0.0
  %8281 = vmatprep.subr.mxu0 0.0
  %8282 = vmatpush1.msra.mxu0 0.0
  %8283 = vmatprep.subr.mxu0 0.0
  %8284 = vmatpush1.msra.mxu0 0.0
  %8285 = vmatprep.subr.mxu0 0.0
  %8286 = vmatpush1.msra.mxu0 0.0
  %8287 = vmatprep.subr.mxu0 0.0
  %8288 = vmatpush1.msra.mxu0 0.0
  %8289 = vmatprep.subr.mxu0 0.0
  %8290 = vmatpush1.msra.mxu0 0.0
  %8291 = vmatprep.subr.mxu0 0.0
  %8292 = vmatpush1.msra.mxu0 0.0
  %8293 = vmatprep.subr.mxu0 0.0
  %8294 = vmatpush1.msra.mxu0 0.0
  %8295 = vmatprep.subr.mxu0 0.0
  %8296 = vmatpush1.msra.mxu0 0.0
  %8297 = vmatprep.subr.mxu0 0.0
  %8298 = vmatpush1.msra.mxu0 0.0
  %8299 = vmatprep.subr.mxu0 0.0
  %8300 = vmatpush1.msra.mxu0 0.0
  %8301 = vmatprep.subr.mxu0 0.0
  %8302 = vmatpush1.msra.mxu0 0.0
  %8303 = vmatprep.subr.mxu0 0.0
  %8304 = vmatpush1.msra.mxu0 0.0
  %8305 = vmatprep.subr.mxu0 0.0
  %8306 = vmatpush1.msra.mxu0 0.0
  %8307 = vmatprep.subr.mxu0 0.0
  %8308 = vmatpush1.msra.mxu0 0.0
  %8309 = vmatprep.subr.mxu0 0.0
  %8310 = vmatpush1.msra.mxu0 0.0
  %8311 = vmatprep.subr.mxu0 0.0
  %8312 = vmatpush1.msra.mxu0 0.0
  %8313 = vmatprep.subr.mxu0 0.0
  %8314 = vmatpush1.msra.mxu0 0.0
  %8315 = vmatprep.subr.mxu0 0.0
  %8316 = vmatpush1.msra.mxu0 0.0
  %8317 = vmatprep.subr.mxu0 0.0
  %8318 = vmatpush1.msra.mxu0 0.0
  %8319 = vmatprep.mubr.f32.mxu0 0.0
  %8320 = vmatmul.mubr.f32.gmra.mrb[0].mxu0 %v7699
  %v8321 = vpop.f32.mrb[0].mxu0
  %v8322 = vadd.f32 0.0, %v8321
  %v8323 = vpop.f32.mrb[0].mxu0
  %v8324 = vadd.f32 0.0, %v8323
  %8325 = vdwg.mxu0
  %8326 = vmatprep.subr.mxu0 %v7731
  %8327 = vmatpush1.msra.mxu0 %v7729
  %8328 = vmatprep.subr.mxu0 0.0
  %8329 = vmatpush1.msra.mxu0 0.0
  %8330 = vmatprep.subr.mxu0 0.0
  %8331 = vmatpush1.msra.mxu0 0.0
  %8332 = vmatprep.subr.mxu0 0.0
  %8333 = vmatpush1.msra.mxu0 0.0
  %8334 = vmatprep.subr.mxu0 0.0
  %8335 = vmatpush1.msra.mxu0 0.0
  %8336 = vmatprep.subr.mxu0 0.0
  %8337 = vmatpush1.msra.mxu0 0.0
  %8338 = vmatprep.subr.mxu0 0.0
  %8339 = vmatpush1.msra.mxu0 0.0
  %8340 = vmatprep.subr.mxu0 0.0
  %8341 = vmatpush1.msra.mxu0 0.0
  %8342 = vmatprep.subr.mxu0 0.0
  %8343 = vmatpush1.msra.mxu0 0.0
  %8344 = vmatprep.subr.mxu0 0.0
  %8345 = vmatpush1.msra.mxu0 0.0
  %8346 = vmatprep.subr.mxu0 0.0
  %8347 = vmatpush1.msra.mxu0 0.0
  %8348 = vmatprep.subr.mxu0 0.0
  %8349 = vmatpush1.msra.mxu0 0.0
  %8350 = vmatprep.subr.mxu0 0.0
  %8351 = vmatpush1.msra.mxu0 0.0
  %8352 = vmatprep.subr.mxu0 0.0
  %8353 = vmatpush1.msra.mxu0 0.0
  %8354 = vmatprep.subr.mxu0 0.0
  %8355 = vmatpush1.msra.mxu0 0.0
  %8356 = vmatprep.subr.mxu0 0.0
  %8357 = vmatpush1.msra.mxu0 0.0
  %8358 = vmatprep.subr.mxu0 0.0
  %8359 = vmatpush1.msra.mxu0 0.0
  %8360 = vmatprep.subr.mxu0 0.0
  %8361 = vmatpush1.msra.mxu0 0.0
  %8362 = vmatprep.subr.mxu0 0.0
  %8363 = vmatpush1.msra.mxu0 0.0
  %8364 = vmatprep.subr.mxu0 0.0
  %8365 = vmatpush1.msra.mxu0 0.0
  %8366 = vmatprep.subr.mxu0 0.0
  %8367 = vmatpush1.msra.mxu0 0.0
  %8368 = vmatprep.subr.mxu0 0.0
  %8369 = vmatpush1.msra.mxu0 0.0
  %8370 = vmatprep.subr.mxu0 0.0
  %8371 = vmatpush1.msra.mxu0 0.0
  %8372 = vmatprep.subr.mxu0 0.0
  %8373 = vmatpush1.msra.mxu0 0.0
  %8374 = vmatprep.subr.mxu0 0.0
  %8375 = vmatpush1.msra.mxu0 0.0
  %8376 = vmatprep.subr.mxu0 0.0
  %8377 = vmatpush1.msra.mxu0 0.0
  %8378 = vmatprep.subr.mxu0 0.0
  %8379 = vmatpush1.msra.mxu0 0.0
  %8380 = vmatprep.subr.mxu0 0.0
  %8381 = vmatpush1.msra.mxu0 0.0
  %8382 = vmatprep.subr.mxu0 0.0
  %8383 = vmatpush1.msra.mxu0 0.0
  %8384 = vmatprep.subr.mxu0 0.0
  %8385 = vmatpush1.msra.mxu0 0.0
  %8386 = vmatprep.subr.mxu0 0.0
  %8387 = vmatpush1.msra.mxu0 0.0
  %8388 = vmatprep.subr.mxu0 0.0
  %8389 = vmatpush1.msra.mxu0 0.0
  %8390 = vmatprep.mubr.f32.mxu0 0.0
  %8391 = vmatmul.mubr.f32.gmra.mrb[0].mxu0 %v7699
  %v8392 = vpop.f32.mrb[0].mxu0
  %v8393 = vadd.f32 0.0, %v8392
  %v8394 = vpop.f32.mrb[0].mxu0
  %v8395 = vadd.f32 0.0, %v8394
  %8396 = vdwg.mxu0
  %8397 = vmatprep.subr.mxu0 %v7735
  %8398 = vmatpush1.msra.mxu0 %v7733
  %8399 = vmatprep.subr.mxu0 0.0
  %8400 = vmatpush1.msra.mxu0 0.0
  %8401 = vmatprep.subr.mxu0 0.0
  %8402 = vmatpush1.msra.mxu0 0.0
  %8403 = vmatprep.subr.mxu0 0.0
  %8404 = vmatpush1.msra.mxu0 0.0
  %8405 = vmatprep.subr.mxu0 0.0
  %8406 = vmatpush1.msra.mxu0 0.0
  %8407 = vmatprep.subr.mxu0 0.0
  %8408 = vmatpush1.msra.mxu0 0.0
  %8409 = vmatprep.subr.mxu0 0.0
  %8410 = vmatpush1.msra.mxu0 0.0
  %8411 = vmatprep.subr.mxu0 0.0
  %8412 = vmatpush1.msra.mxu0 0.0
  %8413 = vmatprep.subr.mxu0 0.0
  %8414 = vmatpush1.msra.mxu0 0.0
  %8415 = vmatprep.subr.mxu0 0.0
  %8416 = vmatpush1.msra.mxu0 0.0
  %8417 = vmatprep.subr.mxu0 0.0
  %8418 = vmatpush1.msra.mxu0 0.0
  %8419 = vmatprep.subr.mxu0 0.0
  %8420 = vmatpush1.msra.mxu0 0.0
  %8421 = vmatprep.subr.mxu0 0.0
  %8422 = vmatpush1.msra.mxu0 0.0
  %8423 = vmatprep.subr.mxu0 0.0
  %8424 = vmatpush1.msra.mxu0 0.0
  %8425 = vmatprep.subr.mxu0 0.0
  %8426 = vmatpush1.msra.mxu0 0.0
  %8427 = vmatprep.subr.mxu0 0.0
  %8428 = vmatpush1.msra.mxu0 0.0
  %8429 = vmatprep.subr.mxu0 0.0
  %8430 = vmatpush1.msra.mxu0 0.0
  %8431 = vmatprep.subr.mxu0 0.0
  %8432 = vmatpush1.msra.mxu0 0.0
  %8433 = vmatprep.subr.mxu0 0.0
  %8434 = vmatpush1.msra.mxu0 0.0
  %8435 = vmatprep.subr.mxu0 0.0
  %8436 = vmatpush1.msra.mxu0 0.0
  %8437 = vmatprep.subr.mxu0 0.0
  %8438 = vmatpush1.msra.mxu0 0.0
  %8439 = vmatprep.subr.mxu0 0.0
  %8440 = vmatpush1.msra.mxu0 0.0
  %8441 = vmatprep.subr.mxu0 0.0
  %8442 = vmatpush1.msra.mxu0 0.0
  %8443 = vmatprep.subr.mxu0 0.0
  %8444 = vmatpush1.msra.mxu0 0.0
  %8445 = vmatprep.subr.mxu0 0.0
  %8446 = vmatpush1.msra.mxu0 0.0
  %8447 = vmatprep.subr.mxu0 0.0
  %8448 = vmatpush1.msra.mxu0 0.0
  %8449 = vmatprep.subr.mxu0 0.0
  %8450 = vmatpush1.msra.mxu0 0.0
  %8451 = vmatprep.subr.mxu0 0.0
  %8452 = vmatpush1.msra.mxu0 0.0
  %8453 = vmatprep.subr.mxu0 0.0
  %8454 = vmatpush1.msra.mxu0 0.0
  %8455 = vmatprep.subr.mxu0 0.0
  %8456 = vmatpush1.msra.mxu0 0.0
  %8457 = vmatprep.subr.mxu0 0.0
  %8458 = vmatpush1.msra.mxu0 0.0
  %8459 = vmatprep.subr.mxu0 0.0
  %8460 = vmatpush1.msra.mxu0 0.0
  %8461 = vmatprep.mubr.f32.mxu0 0.0
  %8462 = vmatmul.mubr.f32.gmra.mrb[0].mxu0 %v7699
  %v8463 = vpop.f32.mrb[0].mxu0
  %v8464 = vadd.f32 0.0, %v8463
  %v8465 = vpop.f32.mrb[0].mxu0
  %v8466 = vadd.f32 0.0, %v8465
  %8467 = vdwg.mxu0
  %8468 = vmatprep.subr.mxu0 %v7739
  %8469 = vmatpush1.msra.mxu0 %v7737
  %8470 = vmatprep.subr.mxu0 0.0
  %8471 = vmatpush1.msra.mxu0 0.0
  %8472 = vmatprep.subr.mxu0 0.0
  %8473 = vmatpush1.msra.mxu0 0.0
  %8474 = vmatprep.subr.mxu0 0.0
  %8475 = vmatpush1.msra.mxu0 0.0
  %8476 = vmatprep.subr.mxu0 0.0
  %8477 = vmatpush1.msra.mxu0 0.0
  %8478 = vmatprep.subr.mxu0 0.0
  %8479 = vmatpush1.msra.mxu0 0.0
  %8480 = vmatprep.subr.mxu0 0.0
  %8481 = vmatpush1.msra.mxu0 0.0
  %8482 = vmatprep.subr.mxu0 0.0
  %8483 = vmatpush1.msra.mxu0 0.0
  %8484 = vmatprep.subr.mxu0 0.0
  %8485 = vmatpush1.msra.mxu0 0.0
  %8486 = vmatprep.subr.mxu0 0.0
  %8487 = vmatpush1.msra.mxu0 0.0
  %8488 = vmatprep.subr.mxu0 0.0
  %8489 = vmatpush1.msra.mxu0 0.0
  %8490 = vmatprep.subr.mxu0 0.0
  %8491 = vmatpush1.msra.mxu0 0.0
  %8492 = vmatprep.subr.mxu0 0.0
  %8493 = vmatpush1.msra.mxu0 0.0
  %8494 = vmatprep.subr.mxu0 0.0
  %8495 = vmatpush1.msra.mxu0 0.0
  %8496 = vmatprep.subr.mxu0 0.0
  %8497 = vmatpush1.msra.mxu0 0.0
  %8498 = vmatprep.subr.mxu0 0.0
  %8499 = vmatpush1.msra.mxu0 0.0
  %8500 = vmatprep.subr.mxu0 0.0
  %8501 = vmatpush1.msra.mxu0 0.0
  %8502 = vmatprep.subr.mxu0 0.0
  %8503 = vmatpush1.msra.mxu0 0.0
  %8504 = vmatprep.subr.mxu0 0.0
  %8505 = vmatpush1.msra.mxu0 0.0
  %8506 = vmatprep.subr.mxu0 0.0
  %8507 = vmatpush1.msra.mxu0 0.0
  %8508 = vmatprep.subr.mxu0 0.0
  %8509 = vmatpush1.msra.mxu0 0.0
  %8510 = vmatprep.subr.mxu0 0.0
  %8511 = vmatpush1.msra.mxu0 0.0
  %8512 = vmatprep.subr.mxu0 0.0
  %8513 = vmatpush1.msra.mxu0 0.0
  %8514 = vmatprep.subr.mxu0 0.0
  %8515 = vmatpush1.msra.mxu0 0.0
  %8516 = vmatprep.subr.mxu0 0.0
  %8517 = vmatpush1.msra.mxu0 0.0
  %8518 = vmatprep.subr.mxu0 0.0
  %8519 = vmatpush1.msra.mxu0 0.0
  %8520 = vmatprep.subr.mxu0 0.0
  %8521 = vmatpush1.msra.mxu0 0.0
  %8522 = vmatprep.subr.mxu0 0.0
  %8523 = vmatpush1.msra.mxu0 0.0
  %8524 = vmatprep.subr.mxu0 0.0
  %8525 = vmatpush1.msra.mxu0 0.0
  %8526 = vmatprep.subr.mxu0 0.0
  %8527 = vmatpush1.msra.mxu0 0.0
  %8528 = vmatprep.subr.mxu0 0.0
  %8529 = vmatpush1.msra.mxu0 0.0
  %8530 = vmatprep.subr.mxu0 0.0
  %8531 = vmatpush1.msra.mxu0 0.0
  %8532 = vmatprep.mubr.f32.mxu0 0.0
  %8533 = vmatmul.mubr.f32.gmra.mrb[0].mxu0 %v7699
  %v8534 = vpop.f32.mrb[0].mxu0
  %v8535 = vadd.f32 0.0, %v8534
  %v8536 = vpop.f32.mrb[0].mxu0
  %v8537 = vadd.f32 0.0, %v8536
  %8538 = vdwg.mxu0
  %8539 = vmatprep.subr.mxu0 %v7743
  %8540 = vmatpush1.msra.mxu0 %v7741
  %8541 = vmatprep.subr.mxu0 0.0
  %8542 = vmatpush1.msra.mxu0 0.0
  %8543 = vmatprep.subr.mxu0 0.0
  %8544 = vmatpush1.msra.mxu0 0.0
  %8545 = vmatprep.subr.mxu0 0.0
  %8546 = vmatpush1.msra.mxu0 0.0
  %8547 = vmatprep.subr.mxu0 0.0
  %8548 = vmatpush1.msra.mxu0 0.0
  %8549 = vmatprep.subr.mxu0 0.0
  %8550 = vmatpush1.msra.mxu0 0.0
  %8551 = vmatprep.subr.mxu0 0.0
  %8552 = vmatpush1.msra.mxu0 0.0
  %8553 = vmatprep.subr.mxu0 0.0
  %8554 = vmatpush1.msra.mxu0 0.0
  %8555 = vmatprep.subr.mxu0 0.0
  %8556 = vmatpush1.msra.mxu0 0.0
  %8557 = vmatprep.subr.mxu0 0.0
  %8558 = vmatpush1.msra.mxu0 0.0
  %8559 = vmatprep.subr.mxu0 0.0
  %8560 = vmatpush1.msra.mxu0 0.0
  %8561 = vmatprep.subr.mxu0 0.0
  %8562 = vmatpush1.msra.mxu0 0.0
  %8563 = vmatprep.subr.mxu0 0.0
  %8564 = vmatpush1.msra.mxu0 0.0
  %8565 = vmatprep.subr.mxu0 0.0
  %8566 = vmatpush1.msra.mxu0 0.0
  %8567 = vmatprep.subr.mxu0 0.0
  %8568 = vmatpush1.msra.mxu0 0.0
  %8569 = vmatprep.subr.mxu0 0.0
  %8570 = vmatpush1.msra.mxu0 0.0
  %8571 = vmatprep.subr.mxu0 0.0
  %8572 = vmatpush1.msra.mxu0 0.0
  %8573 = vmatprep.subr.mxu0 0.0
  %8574 = vmatpush1.msra.mxu0 0.0
  %8575 = vmatprep.subr.mxu0 0.0
  %8576 = vmatpush1.msra.mxu0 0.0
  %8577 = vmatprep.subr.mxu0 0.0
  %8578 = vmatpush1.msra.mxu0 0.0
  %8579 = vmatprep.subr.mxu0 0.0
  %8580 = vmatpush1.msra.mxu0 0.0
  %8581 = vmatprep.subr.mxu0 0.0
  %8582 = vmatpush1.msra.mxu0 0.0
  %8583 = vmatprep.subr.mxu0 0.0
  %8584 = vmatpush1.msra.mxu0 0.0
  %8585 = vmatprep.subr.mxu0 0.0
  %8586 = vmatpush1.msra.mxu0 0.0
  %8587 = vmatprep.subr.mxu0 0.0
  %8588 = vmatpush1.msra.mxu0 0.0
  %8589 = vmatprep.subr.mxu0 0.0
  %8590 = vmatpush1.msra.mxu0 0.0
  %8591 = vmatprep.subr.mxu0 0.0
  %8592 = vmatpush1.msra.mxu0 0.0
  %8593 = vmatprep.subr.mxu0 0.0
  %8594 = vmatpush1.msra.mxu0 0.0
  %8595 = vmatprep.subr.mxu0 0.0
  %8596 = vmatpush1.msra.mxu0 0.0
  %8597 = vmatprep.subr.mxu0 0.0
  %8598 = vmatpush1.msra.mxu0 0.0
  %8599 = vmatprep.subr.mxu0 0.0
  %8600 = vmatpush1.msra.mxu0 0.0
  %8601 = vmatprep.subr.mxu0 0.0
  %8602 = vmatpush1.msra.mxu0 0.0
  %8603 = vmatprep.mubr.f32.mxu0 0.0
  %8604 = vmatmul.mubr.f32.gmra.mrb[0].mxu0 %v7699
  %v8605 = vpop.f32.mrb[0].mxu0
  %v8606 = vadd.f32 0.0, %v8605
  %v8607 = vpop.f32.mrb[0].mxu0
  %v8608 = vadd.f32 0.0, %v8607
  %8609 = vdwg.mxu0
  %8610 = vmatprep.subr.mxu0 %v7747
  %8611 = vmatpush1.msra.mxu0 %v7745
  %8612 = vmatprep.subr.mxu0 0.0
  %8613 = vmatpush1.msra.mxu0 0.0
  %8614 = vmatprep.subr.mxu0 0.0
  %8615 = vmatpush1.msra.mxu0 0.0
  %8616 = vmatprep.subr.mxu0 0.0
  %8617 = vmatpush1.msra.mxu0 0.0
  %8618 = vmatprep.subr.mxu0 0.0
  %8619 = vmatpush1.msra.mxu0 0.0
  %8620 = vmatprep.subr.mxu0 0.0
  %8621 = vmatpush1.msra.mxu0 0.0
  %8622 = vmatprep.subr.mxu0 0.0
  %8623 = vmatpush1.msra.mxu0 0.0
  %8624 = vmatprep.subr.mxu0 0.0
  %8625 = vmatpush1.msra.mxu0 0.0
  %8626 = vmatprep.subr.mxu0 0.0
  %8627 = vmatpush1.msra.mxu0 0.0
  %8628 = vmatprep.subr.mxu0 0.0
  %8629 = vmatpush1.msra.mxu0 0.0
  %8630 = vmatprep.subr.mxu0 0.0
  %8631 = vmatpush1.msra.mxu0 0.0
  %8632 = vmatprep.subr.mxu0 0.0
  %8633 = vmatpush1.msra.mxu0 0.0
  %8634 = vmatprep.subr.mxu0 0.0
  %8635 = vmatpush1.msra.mxu0 0.0
  %8636 = vmatprep.subr.mxu0 0.0
  %8637 = vmatpush1.msra.mxu0 0.0
  %8638 = vmatprep.subr.mxu0 0.0
  %8639 = vmatpush1.msra.mxu0 0.0
  %8640 = vmatprep.subr.mxu0 0.0
  %8641 = vmatpush1.msra.mxu0 0.0
  %8642 = vmatprep.subr.mxu0 0.0
  %8643 = vmatpush1.msra.mxu0 0.0
  %8644 = vmatprep.subr.mxu0 0.0
  %8645 = vmatpush1.msra.mxu0 0.0
  %8646 = vmatprep.subr.mxu0 0.0
  %8647 = vmatpush1.msra.mxu0 0.0
  %8648 = vmatprep.subr.mxu0 0.0
  %8649 = vmatpush1.msra.mxu0 0.0
  %8650 = vmatprep.subr.mxu0 0.0
  %8651 = vmatpush1.msra.mxu0 0.0
  %8652 = vmatprep.subr.mxu0 0.0
  %8653 = vmatpush1.msra.mxu0 0.0
  %8654 = vmatprep.subr.mxu0 0.0
  %8655 = vmatpush1.msra.mxu0 0.0
  %8656 = vmatprep.subr.mxu0 0.0
  %8657 = vmatpush1.msra.mxu0 0.0
  %8658 = vmatprep.subr.mxu0 0.0
  %8659 = vmatpush1.msra.mxu0 0.0
  %8660 = vmatprep.subr.mxu0 0.0
  %8661 = vmatpush1.msra.mxu0 0.0
  %8662 = vmatprep.subr.mxu0 0.0
  %8663 = vmatpush1.msra.mxu0 0.0
  %8664 = vmatprep.subr.mxu0 0.0
  %8665 = vmatpush1.msra.mxu0 0.0
  %8666 = vmatprep.subr.mxu0 0.0
  %8667 = vmatpush1.msra.mxu0 0.0
  %8668 = vmatprep.subr.mxu0 0.0
  %8669 = vmatpush1.msra.mxu0 0.0
  %8670 = vmatprep.subr.mxu0 0.0
  %8671 = vmatpush1.msra.mxu0 0.0
  %8672 = vmatprep.subr.mxu0 0.0
  %8673 = vmatpush1.msra.mxu0 0.0
  %8674 = vmatprep.mubr.f32.mxu0 0.0
  %8675 = vmatmul.mubr.f32.gmra.mrb[0].mxu0 %v7699
  %v8676 = vpop.f32.mrb[0].mxu0
  %v8677 = vadd.f32 0.0, %v8676
  %v8678 = vpop.f32.mrb[0].mxu0
  %v8679 = vadd.f32 0.0, %v8678
  %8680 = vdwg.mxu0
  %8681 = vmatprep.subr.mxu0 %v7751
  %8682 = vmatpush1.msra.mxu0 %v7749
  %8683 = vmatprep.subr.mxu0 0.0
  %8684 = vmatpush1.msra.mxu0 0.0
  %8685 = vmatprep.subr.mxu0 0.0
  %8686 = vmatpush1.msra.mxu0 0.0
  %8687 = vmatprep.subr.mxu0 0.0
  %8688 = vmatpush1.msra.mxu0 0.0
  %8689 = vmatprep.subr.mxu0 0.0
  %8690 = vmatpush1.msra.mxu0 0.0
  %8691 = vmatprep.subr.mxu0 0.0
  %8692 = vmatpush1.msra.mxu0 0.0
  %8693 = vmatprep.subr.mxu0 0.0
  %8694 = vmatpush1.msra.mxu0 0.0
  %8695 = vmatprep.subr.mxu0 0.0
  %8696 = vmatpush1.msra.mxu0 0.0
  %8697 = vmatprep.subr.mxu0 0.0
  %8698 = vmatpush1.msra.mxu0 0.0
  %8699 = vmatprep.subr.mxu0 0.0
  %8700 = vmatpush1.msra.mxu0 0.0
  %8701 = vmatprep.subr.mxu0 0.0
  %8702 = vmatpush1.msra.mxu0 0.0
  %8703 = vmatprep.subr.mxu0 0.0
  %8704 = vmatpush1.msra.mxu0 0.0
  %8705 = vmatprep.subr.mxu0 0.0
  %8706 = vmatpush1.msra.mxu0 0.0
  %8707 = vmatprep.subr.mxu0 0.0
  %8708 = vmatpush1.msra.mxu0 0.0
  %8709 = vmatprep.subr.mxu0 0.0
  %8710 = vmatpush1.msra.mxu0 0.0
  %8711 = vmatprep.subr.mxu0 0.0
  %8712 = vmatpush1.msra.mxu0 0.0
  %8713 = vmatprep.subr.mxu0 0.0
  %8714 = vmatpush1.msra.mxu0 0.0
  %8715 = vmatprep.subr.mxu0 0.0
  %8716 = vmatpush1.msra.mxu0 0.0
  %8717 = vmatprep.subr.mxu0 0.0
  %8718 = vmatpush1.msra.mxu0 0.0
  %8719 = vmatprep.subr.mxu0 0.0
  %8720 = vmatpush1.msra.mxu0 0.0
  %8721 = vmatprep.subr.mxu0 0.0
  %8722 = vmatpush1.msra.mxu0 0.0
  %8723 = vmatprep.subr.mxu0 0.0
  %8724 = vmatpush1.msra.mxu0 0.0
  %8725 = vmatprep.subr.mxu0 0.0
  %8726 = vmatpush1.msra.mxu0 0.0
  %8727 = vmatprep.subr.mxu0 0.0
  %8728 = vmatpush1.msra.mxu0 0.0
  %8729 = vmatprep.subr.mxu0 0.0
  %8730 = vmatpush1.msra.mxu0 0.0
  %8731 = vmatprep.subr.mxu0 0.0
  %8732 = vmatpush1.msra.mxu0 0.0
  %8733 = vmatprep.subr.mxu0 0.0
  %8734 = vmatpush1.msra.mxu0 0.0
  %8735 = vmatprep.subr.mxu0 0.0
  %8736 = vmatpush1.msra.mxu0 0.0
  %8737 = vmatprep.subr.mxu0 0.0
  %8738 = vmatpush1.msra.mxu0 0.0
  %8739 = vmatprep.subr.mxu0 0.0
  %8740 = vmatpush1.msra.mxu0 0.0
  %8741 = vmatprep.subr.mxu0 0.0
  %8742 = vmatpush1.msra.mxu0 0.0
  %8743 = vmatprep.subr.mxu0 0.0
  %8744 = vmatpush1.msra.mxu0 0.0
  %8745 = vmatprep.mubr.f32.mxu0 0.0
  %8746 = vmatmul.mubr.f32.gmra.mrb[0].mxu0 %v7699
  %v8747 = vpop.f32.mrb[0].mxu0
  %v8748 = vadd.f32 0.0, %v8747
  %v8749 = vpop.f32.mrb[0].mxu0
  %v8750 = vadd.f32 0.0, %v8749
  %8751 = vdwg.mxu0
  %8752 = vmatprep.subr.mxu0 %v7755
  %8753 = vmatpush1.msra.mxu0 %v7753
  %8754 = vmatprep.subr.mxu0 0.0
  %8755 = vmatpush1.msra.mxu0 0.0
  %8756 = vmatprep.subr.mxu0 0.0
  %8757 = vmatpush1.msra.mxu0 0.0
  %8758 = vmatprep.subr.mxu0 0.0
  %8759 = vmatpush1.msra.mxu0 0.0
  %8760 = vmatprep.subr.mxu0 0.0
  %8761 = vmatpush1.msra.mxu0 0.0
  %8762 = vmatprep.subr.mxu0 0.0
  %8763 = vmatpush1.msra.mxu0 0.0
  %8764 = vmatprep.subr.mxu0 0.0
  %8765 = vmatpush1.msra.mxu0 0.0
  %8766 = vmatprep.subr.mxu0 0.0
  %8767 = vmatpush1.msra.mxu0 0.0
  %8768 = vmatprep.subr.mxu0 0.0
  %8769 = vmatpush1.msra.mxu0 0.0
  %8770 = vmatprep.subr.mxu0 0.0
  %8771 = vmatpush1.msra.mxu0 0.0
  %8772 = vmatprep.subr.mxu0 0.0
  %8773 = vmatpush1.msra.mxu0 0.0
  %8774 = vmatprep.subr.mxu0 0.0
  %8775 = vmatpush1.msra.mxu0 0.0
  %8776 = vmatprep.subr.mxu0 0.0
  %8777 = vmatpush1.msra.mxu0 0.0
  %8778 = vmatprep.subr.mxu0 0.0
  %8779 = vmatpush1.msra.mxu0 0.0
  %8780 = vmatprep.subr.mxu0 0.0
  %8781 = vmatpush1.msra.mxu0 0.0
  %8782 = vmatprep.subr.mxu0 0.0
  %8783 = vmatpush1.msra.mxu0 0.0
  %8784 = vmatprep.subr.mxu0 0.0
  %8785 = vmatpush1.msra.mxu0 0.0
  %8786 = vmatprep.subr.mxu0 0.0
  %8787 = vmatpush1.msra.mxu0 0.0
  %8788 = vmatprep.subr.mxu0 0.0
  %8789 = vmatpush1.msra.mxu0 0.0
  %8790 = vmatprep.subr.mxu0 0.0
  %8791 = vmatpush1.msra.mxu0 0.0
  %8792 = vmatprep.subr.mxu0 0.0
  %8793 = vmatpush1.msra.mxu0 0.0
  %8794 = vmatprep.subr.mxu0 0.0
  %8795 = vmatpush1.msra.mxu0 0.0
  %8796 = vmatprep.subr.mxu0 0.0
  %8797 = vmatpush1.msra.mxu0 0.0
  %8798 = vmatprep.subr.mxu0 0.0
  %8799 = vmatpush1.msra.mxu0 0.0
  %8800 = vmatprep.subr.mxu0 0.0
  %8801 = vmatpush1.msra.mxu0 0.0
  %8802 = vmatprep.subr.mxu0 0.0
  %8803 = vmatpush1.msra.mxu0 0.0
  %8804 = vmatprep.subr.mxu0 0.0
  %8805 = vmatpush1.msra.mxu0 0.0
  %8806 = vmatprep.subr.mxu0 0.0
  %8807 = vmatpush1.msra.mxu0 0.0
  %8808 = vmatprep.subr.mxu0 0.0
  %8809 = vmatpush1.msra.mxu0 0.0
  %8810 = vmatprep.subr.mxu0 0.0
  %8811 = vmatpush1.msra.mxu0 0.0
  %8812 = vmatprep.subr.mxu0 0.0
  %8813 = vmatpush1.msra.mxu0 0.0
  %8814 = vmatprep.subr.mxu0 0.0
  %8815 = vmatpush1.msra.mxu0 0.0
  %8816 = vmatprep.mubr.f32.mxu0 0.0
  %8817 = vmatmul.mubr.f32.gmra.mrb[0].mxu0 %v7699
  %v8818 = vpop.f32.mrb[0].mxu0
  %v8819 = vadd.f32 0.0, %v8818
  %v8820 = vpop.f32.mrb[0].mxu0
  %v8821 = vadd.f32 0.0, %v8820
  %8822 = vdwg.mxu0
  %8823 = vmatprep.subr.mxu0 %v7759
  %8824 = vmatpush1.msra.mxu0 %v7757
  %8825 = vmatprep.subr.mxu0 0.0
  %8826 = vmatpush1.msra.mxu0 0.0
  %8827 = vmatprep.subr.mxu0 0.0
  %8828 = vmatpush1.msra.mxu0 0.0
  %8829 = vmatprep.subr.mxu0 0.0
  %8830 = vmatpush1.msra.mxu0 0.0
  %8831 = vmatprep.subr.mxu0 0.0
  %8832 = vmatpush1.msra.mxu0 0.0
  %8833 = vmatprep.subr.mxu0 0.0
  %8834 = vmatpush1.msra.mxu0 0.0
  %8835 = vmatprep.subr.mxu0 0.0
  %8836 = vmatpush1.msra.mxu0 0.0
  %8837 = vmatprep.subr.mxu0 0.0
  %8838 = vmatpush1.msra.mxu0 0.0
  %8839 = vmatprep.subr.mxu0 0.0
  %8840 = vmatpush1.msra.mxu0 0.0
  %8841 = vmatprep.subr.mxu0 0.0
  %8842 = vmatpush1.msra.mxu0 0.0
  %8843 = vmatprep.subr.mxu0 0.0
  %8844 = vmatpush1.msra.mxu0 0.0
  %8845 = vmatprep.subr.mxu0 0.0
  %8846 = vmatpush1.msra.mxu0 0.0
  %8847 = vmatprep.subr.mxu0 0.0
  %8848 = vmatpush1.msra.mxu0 0.0
  %8849 = vmatprep.subr.mxu0 0.0
  %8850 = vmatpush1.msra.mxu0 0.0
  %8851 = vmatprep.subr.mxu0 0.0
  %8852 = vmatpush1.msra.mxu0 0.0
  %8853 = vmatprep.subr.mxu0 0.0
  %8854 = vmatpush1.msra.mxu0 0.0
  %8855 = vmatprep.subr.mxu0 0.0
  %8856 = vmatpush1.msra.mxu0 0.0
  %8857 = vmatprep.subr.mxu0 0.0
  %8858 = vmatpush1.msra.mxu0 0.0
  %8859 = vmatprep.subr.mxu0 0.0
  %8860 = vmatpush1.msra.mxu0 0.0
  %8861 = vmatprep.subr.mxu0 0.0
  %8862 = vmatpush1.msra.mxu0 0.0
  %8863 = vmatprep.subr.mxu0 0.0
  %8864 = vmatpush1.msra.mxu0 0.0
  %8865 = vmatprep.subr.mxu0 0.0
  %8866 = vmatpush1.msra.mxu0 0.0
  %8867 = vmatprep.subr.mxu0 0.0
  %8868 = vmatpush1.msra.mxu0 0.0
  %8869 = vmatprep.subr.mxu0 0.0
  %8870 = vmatpush1.msra.mxu0 0.0
  %8871 = vmatprep.subr.mxu0 0.0
  %8872 = vmatpush1.msra.mxu0 0.0
  %8873 = vmatprep.subr.mxu0 0.0
  %8874 = vmatpush1.msra.mxu0 0.0
  %8875 = vmatprep.subr.mxu0 0.0
  %8876 = vmatpush1.msra.mxu0 0.0
  %8877 = vmatprep.subr.mxu0 0.0
  %8878 = vmatpush1.msra.mxu0 0.0
  %8879 = vmatprep.subr.mxu0 0.0
  %8880 = vmatpush1.msra.mxu0 0.0
  %8881 = vmatprep.subr.mxu0 0.0
  %8882 = vmatpush1.msra.mxu0 0.0
  %8883 = vmatprep.subr.mxu0 0.0
  %8884 = vmatpush1.msra.mxu0 0.0
  %8885 = vmatprep.subr.mxu0 0.0
  %8886 = vmatpush1.msra.mxu0 0.0
  %8887 = vmatprep.mubr.f32.mxu0 0.0
  %8888 = vmatmul.mubr.f32.gmra.mrb[0].mxu0 %v7699
  %v8889 = vpop.f32.mrb[0].mxu0
  %v8890 = vadd.f32 0.0, %v8889
  %v8891 = vpop.f32.mrb[0].mxu0
  %v8892 = vadd.f32 0.0, %v8891
  %8893 = vdwg.mxu0
  %8894 = vmatprep.subr.mxu0 %v7763
  %8895 = vmatpush1.msra.mxu0 %v7761
  %8896 = vmatprep.subr.mxu0 0.0
  %8897 = vmatpush1.msra.mxu0 0.0
  %8898 = vmatprep.subr.mxu0 0.0
  %8899 = vmatpush1.msra.mxu0 0.0
  %8900 = vmatprep.subr.mxu0 0.0
  %8901 = vmatpush1.msra.mxu0 0.0
  %8902 = vmatprep.subr.mxu0 0.0
  %8903 = vmatpush1.msra.mxu0 0.0
  %8904 = vmatprep.subr.mxu0 0.0
  %8905 = vmatpush1.msra.mxu0 0.0
  %8906 = vmatprep.subr.mxu0 0.0
  %8907 = vmatpush1.msra.mxu0 0.0
  %8908 = vmatprep.subr.mxu0 0.0
  %8909 = vmatpush1.msra.mxu0 0.0
  %8910 = vmatprep.subr.mxu0 0.0
  %8911 = vmatpush1.msra.mxu0 0.0
  %8912 = vmatprep.subr.mxu0 0.0
  %8913 = vmatpush1.msra.mxu0 0.0
  %8914 = vmatprep.subr.mxu0 0.0
  %8915 = vmatpush1.msra.mxu0 0.0
  %8916 = vmatprep.subr.mxu0 0.0
  %8917 = vmatpush1.msra.mxu0 0.0
  %8918 = vmatprep.subr.mxu0 0.0
  %8919 = vmatpush1.msra.mxu0 0.0
  %8920 = vmatprep.subr.mxu0 0.0
  %8921 = vmatpush1.msra.mxu0 0.0
  %8922 = vmatprep.subr.mxu0 0.0
  %8923 = vmatpush1.msra.mxu0 0.0
  %8924 = vmatprep.subr.mxu0 0.0
  %8925 = vmatpush1.msra.mxu0 0.0
  %8926 = vmatprep.subr.mxu0 0.0
  %8927 = vmatpush1.msra.mxu0 0.0
  %8928 = vmatprep.subr.mxu0 0.0
  %8929 = vmatpush1.msra.mxu0 0.0
  %8930 = vmatprep.subr.mxu0 0.0
  %8931 = vmatpush1.msra.mxu0 0.0
  %8932 = vmatprep.subr.mxu0 0.0
  %8933 = vmatpush1.msra.mxu0 0.0
  %8934 = vmatprep.subr.mxu0 0.0
  %8935 = vmatpush1.msra.mxu0 0.0
  %8936 = vmatprep.subr.mxu0 0.0
  %8937 = vmatpush1.msra.mxu0 0.0
  %8938 = vmatprep.subr.mxu0 0.0
  %8939 = vmatpush1.msra.mxu0 0.0
  %8940 = vmatprep.subr.mxu0 0.0
  %8941 = vmatpush1.msra.mxu0 0.0
  %8942 = vmatprep.subr.mxu0 0.0
  %8943 = vmatpush1.msra.mxu0 0.0
  %8944 = vmatprep.subr.mxu0 0.0
  %8945 = vmatpush1.msra.mxu0 0.0
  %8946 = vmatprep.subr.mxu0 0.0
  %8947 = vmatpush1.msra.mxu0 0.0
  %8948 = vmatprep.subr.mxu0 0.0
  %8949 = vmatpush1.msra.mxu0 0.0
  %8950 = vmatprep.subr.mxu0 0.0
  %8951 = vmatpush1.msra.mxu0 0.0
  %8952 = vmatprep.subr.mxu0 0.0
  %8953 = vmatpush1.msra.mxu0 0.0
  %8954 = vmatprep.subr.mxu0 0.0
  %8955 = vmatpush1.msra.mxu0 0.0
  %8956 = vmatprep.subr.mxu0 0.0
  %8957 = vmatpush1.msra.mxu0 0.0
  %8958 = vmatprep.mubr.f32.mxu0 0.0
  %8959 = vmatmul.mubr.f32.gmra.mrb[0].mxu0 %v7699
  %v8960 = vpop.f32.mrb[0].mxu0
  %v8961 = vadd.f32 0.0, %v8960
  %v8962 = vpop.f32.mrb[0].mxu0
  %v8963 = vadd.f32 0.0, %v8962
  %8964 = vdwg.mxu0
  %8965 = vmatprep.subr.mxu0 %v7767
  %8966 = vmatpush1.msra.mxu0 %v7765
  %8967 = vmatprep.subr.mxu0 0.0
  %8968 = vmatpush1.msra.mxu0 0.0
  %8969 = vmatprep.subr.mxu0 0.0
  %8970 = vmatpush1.msra.mxu0 0.0
  %8971 = vmatprep.subr.mxu0 0.0
  %8972 = vmatpush1.msra.mxu0 0.0
  %8973 = vmatprep.subr.mxu0 0.0
  %8974 = vmatpush1.msra.mxu0 0.0
  %8975 = vmatprep.subr.mxu0 0.0
  %8976 = vmatpush1.msra.mxu0 0.0
  %8977 = vmatprep.subr.mxu0 0.0
  %8978 = vmatpush1.msra.mxu0 0.0
  %8979 = vmatprep.subr.mxu0 0.0
  %8980 = vmatpush1.msra.mxu0 0.0
  %8981 = vmatprep.subr.mxu0 0.0
  %8982 = vmatpush1.msra.mxu0 0.0
  %8983 = vmatprep.subr.mxu0 0.0
  %8984 = vmatpush1.msra.mxu0 0.0
  %8985 = vmatprep.subr.mxu0 0.0
  %8986 = vmatpush1.msra.mxu0 0.0
  %8987 = vmatprep.subr.mxu0 0.0
  %8988 = vmatpush1.msra.mxu0 0.0
  %8989 = vmatprep.subr.mxu0 0.0
  %8990 = vmatpush1.msra.mxu0 0.0
  %8991 = vmatprep.subr.mxu0 0.0
  %8992 = vmatpush1.msra.mxu0 0.0
  %8993 = vmatprep.subr.mxu0 0.0
  %8994 = vmatpush1.msra.mxu0 0.0
  %8995 = vmatprep.subr.mxu0 0.0
  %8996 = vmatpush1.msra.mxu0 0.0
  %8997 = vmatprep.subr.mxu0 0.0
  %8998 = vmatpush1.msra.mxu0 0.0
  %8999 = vmatprep.subr.mxu0 0.0
  %9000 = vmatpush1.msra.mxu0 0.0
  %9001 = vmatprep.subr.mxu0 0.0
  %9002 = vmatpush1.msra.mxu0 0.0
  %9003 = vmatprep.subr.mxu0 0.0
  %9004 = vmatpush1.msra.mxu0 0.0
  %9005 = vmatprep.subr.mxu0 0.0
  %9006 = vmatpush1.msra.mxu0 0.0
  %9007 = vmatprep.subr.mxu0 0.0
  %9008 = vmatpush1.msra.mxu0 0.0
  %9009 = vmatprep.subr.mxu0 0.0
  %9010 = vmatpush1.msra.mxu0 0.0
  %9011 = vmatprep.subr.mxu0 0.0
  %9012 = vmatpush1.msra.mxu0 0.0
  %9013 = vmatprep.subr.mxu0 0.0
  %9014 = vmatpush1.msra.mxu0 0.0
  %9015 = vmatprep.subr.mxu0 0.0
  %9016 = vmatpush1.msra.mxu0 0.0
  %9017 = vmatprep.subr.mxu0 0.0
  %9018 = vmatpush1.msra.mxu0 0.0
  %9019 = vmatprep.subr.mxu0 0.0
  %9020 = vmatpush1.msra.mxu0 0.0
  %9021 = vmatprep.subr.mxu0 0.0
  %9022 = vmatpush1.msra.mxu0 0.0
  %9023 = vmatprep.subr.mxu0 0.0
  %9024 = vmatpush1.msra.mxu0 0.0
  %9025 = vmatprep.subr.mxu0 0.0
  %9026 = vmatpush1.msra.mxu0 0.0
  %9027 = vmatprep.subr.mxu0 0.0
  %9028 = vmatpush1.msra.mxu0 0.0
  %9029 = vmatprep.mubr.f32.mxu0 0.0
  %9030 = vmatmul.mubr.f32.gmra.mrb[0].mxu0 %v7699
  %v9031 = vpop.f32.mrb[0].mxu0
  %v9032 = vadd.f32 0.0, %v9031
  %v9033 = vpop.f32.mrb[0].mxu0
  %v9034 = vadd.f32 0.0, %v9033
  %9035 = vdwg.mxu0
  %9036 = vmatprep.subr.mxu0 %v7771
  %9037 = vmatpush1.msra.mxu0 %v7769
  %9038 = vmatprep.subr.mxu0 0.0
  %9039 = vmatpush1.msra.mxu0 0.0
  %9040 = vmatprep.subr.mxu0 0.0
  %9041 = vmatpush1.msra.mxu0 0.0
  %9042 = vmatprep.subr.mxu0 0.0
  %9043 = vmatpush1.msra.mxu0 0.0
  %9044 = vmatprep.subr.mxu0 0.0
  %9045 = vmatpush1.msra.mxu0 0.0
  %9046 = vmatprep.subr.mxu0 0.0
  %9047 = vmatpush1.msra.mxu0 0.0
  %9048 = vmatprep.subr.mxu0 0.0
  %9049 = vmatpush1.msra.mxu0 0.0
  %9050 = vmatprep.subr.mxu0 0.0
  %9051 = vmatpush1.msra.mxu0 0.0
  %9052 = vmatprep.subr.mxu0 0.0
  %9053 = vmatpush1.msra.mxu0 0.0
  %9054 = vmatprep.subr.mxu0 0.0
  %9055 = vmatpush1.msra.mxu0 0.0
  %9056 = vmatprep.subr.mxu0 0.0
  %9057 = vmatpush1.msra.mxu0 0.0
  %9058 = vmatprep.subr.mxu0 0.0
  %9059 = vmatpush1.msra.mxu0 0.0
  %9060 = vmatprep.subr.mxu0 0.0
  %9061 = vmatpush1.msra.mxu0 0.0
  %9062 = vmatprep.subr.mxu0 0.0
  %9063 = vmatpush1.msra.mxu0 0.0
  %9064 = vmatprep.subr.mxu0 0.0
  %9065 = vmatpush1.msra.mxu0 0.0
  %9066 = vmatprep.subr.mxu0 0.0
  %9067 = vmatpush1.msra.mxu0 0.0
  %9068 = vmatprep.subr.mxu0 0.0
  %9069 = vmatpush1.msra.mxu0 0.0
  %9070 = vmatprep.subr.mxu0 0.0
  %9071 = vmatpush1.msra.mxu0 0.0
  %9072 = vmatprep.subr.mxu0 0.0
  %9073 = vmatpush1.msra.mxu0 0.0
  %9074 = vmatprep.subr.mxu0 0.0
  %9075 = vmatpush1.msra.mxu0 0.0
  %9076 = vmatprep.subr.mxu0 0.0
  %9077 = vmatpush1.msra.mxu0 0.0
  %9078 = vmatprep.subr.mxu0 0.0
  %9079 = vmatpush1.msra.mxu0 0.0
  %9080 = vmatprep.subr.mxu0 0.0
  %9081 = vmatpush1.msra.mxu0 0.0
  %9082 = vmatprep.subr.mxu0 0.0
  %9083 = vmatpush1.msra.mxu0 0.0
  %9084 = vmatprep.subr.mxu0 0.0
  %9085 = vmatpush1.msra.mxu0 0.0
  %9086 = vmatprep.subr.mxu0 0.0
  %9087 = vmatpush1.msra.mxu0 0.0
  %9088 = vmatprep.subr.mxu0 0.0
  %9089 = vmatpush1.msra.mxu0 0.0
  %9090 = vmatprep.subr.mxu0 0.0
  %9091 = vmatpush1.msra.mxu0 0.0
  %9092 = vmatprep.subr.mxu0 0.0
  %9093 = vmatpush1.msra.mxu0 0.0
  %9094 = vmatprep.subr.mxu0 0.0
  %9095 = vmatpush1.msra.mxu0 0.0
  %9096 = vmatprep.subr.mxu0 0.0
  %9097 = vmatpush1.msra.mxu0 0.0
  %9098 = vmatprep.subr.mxu0 0.0
  %9099 = vmatpush1.msra.mxu0 0.0
  %9100 = vmatprep.mubr.f32.mxu0 0.0
  %9101 = vmatmul.mubr.f32.gmra.mrb[0].mxu0 %v7699
  %v9102 = vpop.f32.mrb[0].mxu0
  %v9103 = vadd.f32 0.0, %v9102
  %v9104 = vpop.f32.mrb[0].mxu0
  %v9105 = vadd.f32 0.0, %v9104
  %9106 = vdwg.mxu0
  %9107 = vmatprep.subr.mxu0 %v7775
  %9108 = vmatpush1.msra.mxu0 %v7773
  %9109 = vmatprep.subr.mxu0 0.0
  %9110 = vmatpush1.msra.mxu0 0.0
  %9111 = vmatprep.subr.mxu0 0.0
  %9112 = vmatpush1.msra.mxu0 0.0
  %9113 = vmatprep.subr.mxu0 0.0
  %9114 = vmatpush1.msra.mxu0 0.0
  %9115 = vmatprep.subr.mxu0 0.0
  %9116 = vmatpush1.msra.mxu0 0.0
  %9117 = vmatprep.subr.mxu0 0.0
  %9118 = vmatpush1.msra.mxu0 0.0
  %9119 = vmatprep.subr.mxu0 0.0
  %9120 = vmatpush1.msra.mxu0 0.0
  %9121 = vmatprep.subr.mxu0 0.0
  %9122 = vmatpush1.msra.mxu0 0.0
  %9123 = vmatprep.subr.mxu0 0.0
  %9124 = vmatpush1.msra.mxu0 0.0
  %9125 = vmatprep.subr.mxu0 0.0
  %9126 = vmatpush1.msra.mxu0 0.0
  %9127 = vmatprep.subr.mxu0 0.0
  %9128 = vmatpush1.msra.mxu0 0.0
  %9129 = vmatprep.subr.mxu0 0.0
  %9130 = vmatpush1.msra.mxu0 0.0
  %9131 = vmatprep.subr.mxu0 0.0
  %9132 = vmatpush1.msra.mxu0 0.0
  %9133 = vmatprep.subr.mxu0 0.0
  %9134 = vmatpush1.msra.mxu0 0.0
  %9135 = vmatprep.subr.mxu0 0.0
  %9136 = vmatpush1.msra.mxu0 0.0
  %9137 = vmatprep.subr.mxu0 0.0
  %9138 = vmatpush1.msra.mxu0 0.0
  %9139 = vmatprep.subr.mxu0 0.0
  %9140 = vmatpush1.msra.mxu0 0.0
  %9141 = vmatprep.subr.mxu0 0.0
  %9142 = vmatpush1.msra.mxu0 0.0
  %9143 = vmatprep.subr.mxu0 0.0
  %9144 = vmatpush1.msra.mxu0 0.0
  %9145 = vmatprep.subr.mxu0 0.0
  %9146 = vmatpush1.msra.mxu0 0.0
  %9147 = vmatprep.subr.mxu0 0.0
  %9148 = vmatpush1.msra.mxu0 0.0
  %9149 = vmatprep.subr.mxu0 0.0
  %9150 = vmatpush1.msra.mxu0 0.0
  %9151 = vmatprep.subr.mxu0 0.0
  %9152 = vmatpush1.msra.mxu0 0.0
  %9153 = vmatprep.subr.mxu0 0.0
  %9154 = vmatpush1.msra.mxu0 0.0
  %9155 = vmatprep.subr.mxu0 0.0
  %9156 = vmatpush1.msra.mxu0 0.0
  %9157 = vmatprep.subr.mxu0 0.0
  %9158 = vmatpush1.msra.mxu0 0.0
  %9159 = vmatprep.subr.mxu0 0.0
  %9160 = vmatpush1.msra.mxu0 0.0
  %9161 = vmatprep.subr.mxu0 0.0
  %9162 = vmatpush1.msra.mxu0 0.0
  %9163 = vmatprep.subr.mxu0 0.0
  %9164 = vmatpush1.msra.mxu0 0.0
  %9165 = vmatprep.subr.mxu0 0.0
  %9166 = vmatpush1.msra.mxu0 0.0
  %9167 = vmatprep.subr.mxu0 0.0
  %9168 = vmatpush1.msra.mxu0 0.0
  %9169 = vmatprep.subr.mxu0 0.0
  %9170 = vmatpush1.msra.mxu0 0.0
  %9171 = vmatprep.mubr.f32.mxu0 0.0
  %9172 = vmatmul.mubr.f32.gmra.mrb[0].mxu0 %v7699
  %v9173 = vpop.f32.mrb[0].mxu0
  %v9174 = vadd.f32 0.0, %v9173
  %v9175 = vpop.f32.mrb[0].mxu0
  %v9176 = vadd.f32 0.0, %v9175
  %9177 = vdwg.mxu0
  %9178 = vmatprep.subr.mxu0 %v7779
  %9179 = vmatpush1.msra.mxu0 %v7777
  %9180 = vmatprep.subr.mxu0 0.0
  %9181 = vmatpush1.msra.mxu0 0.0
  %9182 = vmatprep.subr.mxu0 0.0
  %9183 = vmatpush1.msra.mxu0 0.0
  %9184 = vmatprep.subr.mxu0 0.0
  %9185 = vmatpush1.msra.mxu0 0.0
  %9186 = vmatprep.subr.mxu0 0.0
  %9187 = vmatpush1.msra.mxu0 0.0
  %9188 = vmatprep.subr.mxu0 0.0
  %9189 = vmatpush1.msra.mxu0 0.0
  %9190 = vmatprep.subr.mxu0 0.0
  %9191 = vmatpush1.msra.mxu0 0.0
  %9192 = vmatprep.subr.mxu0 0.0
  %9193 = vmatpush1.msra.mxu0 0.0
  %9194 = vmatprep.subr.mxu0 0.0
  %9195 = vmatpush1.msra.mxu0 0.0
  %9196 = vmatprep.subr.mxu0 0.0
  %9197 = vmatpush1.msra.mxu0 0.0
  %9198 = vmatprep.subr.mxu0 0.0
  %9199 = vmatpush1.msra.mxu0 0.0
  %9200 = vmatprep.subr.mxu0 0.0
  %9201 = vmatpush1.msra.mxu0 0.0
  %9202 = vmatprep.subr.mxu0 0.0
  %9203 = vmatpush1.msra.mxu0 0.0
  %9204 = vmatprep.subr.mxu0 0.0
  %9205 = vmatpush1.msra.mxu0 0.0
  %9206 = vmatprep.subr.mxu0 0.0
  %9207 = vmatpush1.msra.mxu0 0.0
  %9208 = vmatprep.subr.mxu0 0.0
  %9209 = vmatpush1.msra.mxu0 0.0
  %9210 = vmatprep.subr.mxu0 0.0
  %9211 = vmatpush1.msra.mxu0 0.0
  %9212 = vmatprep.subr.mxu0 0.0
  %9213 = vmatpush1.msra.mxu0 0.0
  %9214 = vmatprep.subr.mxu0 0.0
  %9215 = vmatpush1.msra.mxu0 0.0
  %9216 = vmatprep.subr.mxu0 0.0
  %9217 = vmatpush1.msra.mxu0 0.0
  %9218 = vmatprep.subr.mxu0 0.0
  %9219 = vmatpush1.msra.mxu0 0.0
  %9220 = vmatprep.subr.mxu0 0.0
  %9221 = vmatpush1.msra.mxu0 0.0
  %9222 = vmatprep.subr.mxu0 0.0
  %9223 = vmatpush1.msra.mxu0 0.0
  %9224 = vmatprep.subr.mxu0 0.0
  %9225 = vmatpush1.msra.mxu0 0.0
  %9226 = vmatprep.subr.mxu0 0.0
  %9227 = vmatpush1.msra.mxu0 0.0
  %9228 = vmatprep.subr.mxu0 0.0
  %9229 = vmatpush1.msra.mxu0 0.0
  %9230 = vmatprep.subr.mxu0 0.0
  %9231 = vmatpush1.msra.mxu0 0.0
  %9232 = vmatprep.subr.mxu0 0.0
  %9233 = vmatpush1.msra.mxu0 0.0
  %9234 = vmatprep.subr.mxu0 0.0
  %9235 = vmatpush1.msra.mxu0 0.0
  %9236 = vmatprep.subr.mxu0 0.0
  %9237 = vmatpush1.msra.mxu0 0.0
  %9238 = vmatprep.subr.mxu0 0.0
  %9239 = vmatpush1.msra.mxu0 0.0
  %9240 = vmatprep.subr.mxu0 0.0
  %9241 = vmatpush1.msra.mxu0 0.0
  %9242 = vmatprep.mubr.f32.mxu0 0.0
  %9243 = vmatmul.mubr.f32.gmra.mrb[0].mxu0 %v7699
  %v9244 = vpop.f32.mrb[0].mxu0
  %v9245 = vadd.f32 0.0, %v9244
  %v9246 = vpop.f32.mrb[0].mxu0
  %v9247 = vadd.f32 0.0, %v9246
  %9248 = vdwg.mxu0
  %9249 = vmatprep.subr.mxu0 %v7783
  %9250 = vmatpush1.msra.mxu0 %v7781
  %9251 = vmatprep.subr.mxu0 0.0
  %9252 = vmatpush1.msra.mxu0 0.0
  %9253 = vmatprep.subr.mxu0 0.0
  %9254 = vmatpush1.msra.mxu0 0.0
  %9255 = vmatprep.subr.mxu0 0.0
  %9256 = vmatpush1.msra.mxu0 0.0
  %9257 = vmatprep.subr.mxu0 0.0
  %9258 = vmatpush1.msra.mxu0 0.0
  %9259 = vmatprep.subr.mxu0 0.0
  %9260 = vmatpush1.msra.mxu0 0.0
  %9261 = vmatprep.subr.mxu0 0.0
  %9262 = vmatpush1.msra.mxu0 0.0
  %9263 = vmatprep.subr.mxu0 0.0
  %9264 = vmatpush1.msra.mxu0 0.0
  %9265 = vmatprep.subr.mxu0 0.0
  %9266 = vmatpush1.msra.mxu0 0.0
  %9267 = vmatprep.subr.mxu0 0.0
  %9268 = vmatpush1.msra.mxu0 0.0
  %9269 = vmatprep.subr.mxu0 0.0
  %9270 = vmatpush1.msra.mxu0 0.0
  %9271 = vmatprep.subr.mxu0 0.0
  %9272 = vmatpush1.msra.mxu0 0.0
  %9273 = vmatprep.subr.mxu0 0.0
  %9274 = vmatpush1.msra.mxu0 0.0
  %9275 = vmatprep.subr.mxu0 0.0
  %9276 = vmatpush1.msra.mxu0 0.0
  %9277 = vmatprep.subr.mxu0 0.0
  %9278 = vmatpush1.msra.mxu0 0.0
  %9279 = vmatprep.subr.mxu0 0.0
  %9280 = vmatpush1.msra.mxu0 0.0
  %9281 = vmatprep.subr.mxu0 0.0
  %9282 = vmatpush1.msra.mxu0 0.0
  %9283 = vmatprep.subr.mxu0 0.0
  %9284 = vmatpush1.msra.mxu0 0.0
  %9285 = vmatprep.subr.mxu0 0.0
  %9286 = vmatpush1.msra.mxu0 0.0
  %9287 = vmatprep.subr.mxu0 0.0
  %9288 = vmatpush1.msra.mxu0 0.0
  %9289 = vmatprep.subr.mxu0 0.0
  %9290 = vmatpush1.msra.mxu0 0.0
  %9291 = vmatprep.subr.mxu0 0.0
  %9292 = vmatpush1.msra.mxu0 0.0
  %9293 = vmatprep.subr.mxu0 0.0
  %9294 = vmatpush1.msra.mxu0 0.0
  %9295 = vmatprep.subr.mxu0 0.0
  %9296 = vmatpush1.msra.mxu0 0.0
  %9297 = vmatprep.subr.mxu0 0.0
  %9298 = vmatpush1.msra.mxu0 0.0
  %9299 = vmatprep.subr.mxu0 0.0
  %9300 = vmatpush1.msra.mxu0 0.0
  %9301 = vmatprep.subr.mxu0 0.0
  %9302 = vmatpush1.msra.mxu0 0.0
  %9303 = vmatprep.subr.mxu0 0.0
  %9304 = vmatpush1.msra.mxu0 0.0
  %9305 = vmatprep.subr.mxu0 0.0
  %9306 = vmatpush1.msra.mxu0 0.0
  %9307 = vmatprep.subr.mxu0 0.0
  %9308 = vmatpush1.msra.mxu0 0.0
  %9309 = vmatprep.subr.mxu0 0.0
  %9310 = vmatpush1.msra.mxu0 0.0
  %9311 = vmatprep.subr.mxu0 0.0
  %9312 = vmatpush1.msra.mxu0 0.0
  %9313 = vmatprep.mubr.f32.mxu0 0.0
  %9314 = vmatmul.mubr.f32.gmra.mrb[0].mxu0 %v7699
  %v9315 = vpop.f32.mrb[0].mxu0
  %v9316 = vadd.f32 0.0, %v9315
  %v9317 = vpop.f32.mrb[0].mxu0
  %v9318 = vadd.f32 0.0, %v9317
  %9319 = vdwg.mxu0
  %9320 = vmatprep.subr.mxu0 %v7787
  %9321 = vmatpush1.msra.mxu0 %v7785
  %9322 = vmatprep.subr.mxu0 0.0
  %9323 = vmatpush1.msra.mxu0 0.0
  %9324 = vmatprep.subr.mxu0 0.0
  %9325 = vmatpush1.msra.mxu0 0.0
  %9326 = vmatprep.subr.mxu0 0.0
  %9327 = vmatpush1.msra.mxu0 0.0
  %9328 = vmatprep.subr.mxu0 0.0
  %9329 = vmatpush1.msra.mxu0 0.0
  %9330 = vmatprep.subr.mxu0 0.0
  %9331 = vmatpush1.msra.mxu0 0.0
  %9332 = vmatprep.subr.mxu0 0.0
  %9333 = vmatpush1.msra.mxu0 0.0
  %9334 = vmatprep.subr.mxu0 0.0
  %9335 = vmatpush1.msra.mxu0 0.0
  %9336 = vmatprep.subr.mxu0 0.0
  %9337 = vmatpush1.msra.mxu0 0.0
  %9338 = vmatprep.subr.mxu0 0.0
  %9339 = vmatpush1.msra.mxu0 0.0
  %9340 = vmatprep.subr.mxu0 0.0
  %9341 = vmatpush1.msra.mxu0 0.0
  %9342 = vmatprep.subr.mxu0 0.0
  %9343 = vmatpush1.msra.mxu0 0.0
  %9344 = vmatprep.subr.mxu0 0.0
  %9345 = vmatpush1.msra.mxu0 0.0
  %9346 = vmatprep.subr.mxu0 0.0
  %9347 = vmatpush1.msra.mxu0 0.0
  %9348 = vmatprep.subr.mxu0 0.0
  %9349 = vmatpush1.msra.mxu0 0.0
  %9350 = vmatprep.subr.mxu0 0.0
  %9351 = vmatpush1.msra.mxu0 0.0
  %9352 = vmatprep.subr.mxu0 0.0
  %9353 = vmatpush1.msra.mxu0 0.0
  %9354 = vmatprep.subr.mxu0 0.0
  %9355 = vmatpush1.msra.mxu0 0.0
  %9356 = vmatprep.subr.mxu0 0.0
  %9357 = vmatpush1.msra.mxu0 0.0
  %9358 = vmatprep.subr.mxu0 0.0
  %9359 = vmatpush1.msra.mxu0 0.0
  %9360 = vmatprep.subr.mxu0 0.0
  %9361 = vmatpush1.msra.mxu0 0.0
  %9362 = vmatprep.subr.mxu0 0.0
  %9363 = vmatpush1.msra.mxu0 0.0
  %9364 = vmatprep.subr.mxu0 0.0
  %9365 = vmatpush1.msra.mxu0 0.0
  %9366 = vmatprep.subr.mxu0 0.0
  %9367 = vmatpush1.msra.mxu0 0.0
  %9368 = vmatprep.subr.mxu0 0.0
  %9369 = vmatpush1.msra.mxu0 0.0
  %9370 = vmatprep.subr.mxu0 0.0
  %9371 = vmatpush1.msra.mxu0 0.0
  %9372 = vmatprep.subr.mxu0 0.0
  %9373 = vmatpush1.msra.mxu0 0.0
  %9374 = vmatprep.subr.mxu0 0.0
  %9375 = vmatpush1.msra.mxu0 0.0
  %9376 = vmatprep.subr.mxu0 0.0
  %9377 = vmatpush1.msra.mxu0 0.0
  %9378 = vmatprep.subr.mxu0 0.0
  %9379 = vmatpush1.msra.mxu0 0.0
  %9380 = vmatprep.subr.mxu0 0.0
  %9381 = vmatpush1.msra.mxu0 0.0
  %9382 = vmatprep.subr.mxu0 0.0
  %9383 = vmatpush1.msra.mxu0 0.0
  %9384 = vmatprep.mubr.f32.mxu0 0.0
  %9385 = vmatmul.mubr.f32.gmra.mrb[0].mxu0 %v7699
  %v9386 = vpop.f32.mrb[0].mxu0
  %v9387 = vadd.f32 0.0, %v9386
  %v9388 = vpop.f32.mrb[0].mxu0
  %v9389 = vadd.f32 0.0, %v9388
  %9390 = vdwg.mxu0
  %9391 = vmatprep.subr.mxu0 %v7791
  %9392 = vmatpush1.msra.mxu0 %v7789
  %9393 = vmatprep.subr.mxu0 0.0
  %9394 = vmatpush1.msra.mxu0 0.0
  %9395 = vmatprep.subr.mxu0 0.0
  %9396 = vmatpush1.msra.mxu0 0.0
  %9397 = vmatprep.subr.mxu0 0.0
  %9398 = vmatpush1.msra.mxu0 0.0
  %9399 = vmatprep.subr.mxu0 0.0
  %9400 = vmatpush1.msra.mxu0 0.0
  %9401 = vmatprep.subr.mxu0 0.0
  %9402 = vmatpush1.msra.mxu0 0.0
  %9403 = vmatprep.subr.mxu0 0.0
  %9404 = vmatpush1.msra.mxu0 0.0
  %9405 = vmatprep.subr.mxu0 0.0
  %9406 = vmatpush1.msra.mxu0 0.0
  %9407 = vmatprep.subr.mxu0 0.0
  %9408 = vmatpush1.msra.mxu0 0.0
  %9409 = vmatprep.subr.mxu0 0.0
  %9410 = vmatpush1.msra.mxu0 0.0
  %9411 = vmatprep.subr.mxu0 0.0
  %9412 = vmatpush1.msra.mxu0 0.0
  %9413 = vmatprep.subr.mxu0 0.0
  %9414 = vmatpush1.msra.mxu0 0.0
  %9415 = vmatprep.subr.mxu0 0.0
  %9416 = vmatpush1.msra.mxu0 0.0
  %9417 = vmatprep.subr.mxu0 0.0
  %9418 = vmatpush1.msra.mxu0 0.0
  %9419 = vmatprep.subr.mxu0 0.0
  %9420 = vmatpush1.msra.mxu0 0.0
  %9421 = vmatprep.subr.mxu0 0.0
  %9422 = vmatpush1.msra.mxu0 0.0
  %9423 = vmatprep.subr.mxu0 0.0
  %9424 = vmatpush1.msra.mxu0 0.0
  %9425 = vmatprep.subr.mxu0 0.0
  %9426 = vmatpush1.msra.mxu0 0.0
  %9427 = vmatprep.subr.mxu0 0.0
  %9428 = vmatpush1.msra.mxu0 0.0
  %9429 = vmatprep.subr.mxu0 0.0
  %9430 = vmatpush1.msra.mxu0 0.0
  %9431 = vmatprep.subr.mxu0 0.0
  %9432 = vmatpush1.msra.mxu0 0.0
  %9433 = vmatprep.subr.mxu0 0.0
  %9434 = vmatpush1.msra.mxu0 0.0
  %9435 = vmatprep.subr.mxu0 0.0
  %9436 = vmatpush1.msra.mxu0 0.0
  %9437 = vmatprep.subr.mxu0 0.0
  %9438 = vmatpush1.msra.mxu0 0.0
  %9439 = vmatprep.subr.mxu0 0.0
  %9440 = vmatpush1.msra.mxu0 0.0
  %9441 = vmatprep.subr.mxu0 0.0
  %9442 = vmatpush1.msra.mxu0 0.0
  %9443 = vmatprep.subr.mxu0 0.0
  %9444 = vmatpush1.msra.mxu0 0.0
  %9445 = vmatprep.subr.mxu0 0.0
  %9446 = vmatpush1.msra.mxu0 0.0
  %9447 = vmatprep.subr.mxu0 0.0
  %9448 = vmatpush1.msra.mxu0 0.0
  %9449 = vmatprep.subr.mxu0 0.0
  %9450 = vmatpush1.msra.mxu0 0.0
  %9451 = vmatprep.subr.mxu0 0.0
  %9452 = vmatpush1.msra.mxu0 0.0
  %9453 = vmatprep.subr.mxu0 0.0
  %9454 = vmatpush1.msra.mxu0 0.0
  %9455 = vmatprep.mubr.f32.mxu0 0.0
  %9456 = vmatmul.mubr.f32.gmra.mrb[0].mxu0 %v7699
  %v9457 = vpop.f32.mrb[0].mxu0
  %v9458 = vadd.f32 0.0, %v9457
  %v9459 = vpop.f32.mrb[0].mxu0
  %v9460 = vadd.f32 0.0, %v9459
  %9461 = vdwg.mxu0
  %9462 = vmatprep.subr.mxu0 %v7795
  %9463 = vmatpush1.msra.mxu0 %v7793
  %9464 = vmatprep.subr.mxu0 0.0
  %9465 = vmatpush1.msra.mxu0 0.0
  %9466 = vmatprep.subr.mxu0 0.0
  %9467 = vmatpush1.msra.mxu0 0.0
  %9468 = vmatprep.subr.mxu0 0.0
  %9469 = vmatpush1.msra.mxu0 0.0
  %9470 = vmatprep.subr.mxu0 0.0
  %9471 = vmatpush1.msra.mxu0 0.0
  %9472 = vmatprep.subr.mxu0 0.0
  %9473 = vmatpush1.msra.mxu0 0.0
  %9474 = vmatprep.subr.mxu0 0.0
  %9475 = vmatpush1.msra.mxu0 0.0
  %9476 = vmatprep.subr.mxu0 0.0
  %9477 = vmatpush1.msra.mxu0 0.0
  %9478 = vmatprep.subr.mxu0 0.0
  %9479 = vmatpush1.msra.mxu0 0.0
  %9480 = vmatprep.subr.mxu0 0.0
  %9481 = vmatpush1.msra.mxu0 0.0
  %9482 = vmatprep.subr.mxu0 0.0
  %9483 = vmatpush1.msra.mxu0 0.0
  %9484 = vmatprep.subr.mxu0 0.0
  %9485 = vmatpush1.msra.mxu0 0.0
  %9486 = vmatprep.subr.mxu0 0.0
  %9487 = vmatpush1.msra.mxu0 0.0
  %9488 = vmatprep.subr.mxu0 0.0
  %9489 = vmatpush1.msra.mxu0 0.0
  %9490 = vmatprep.subr.mxu0 0.0
  %9491 = vmatpush1.msra.mxu0 0.0
  %9492 = vmatprep.subr.mxu0 0.0
  %9493 = vmatpush1.msra.mxu0 0.0
  %9494 = vmatprep.subr.mxu0 0.0
  %9495 = vmatpush1.msra.mxu0 0.0
  %9496 = vmatprep.subr.mxu0 0.0
  %9497 = vmatpush1.msra.mxu0 0.0
  %9498 = vmatprep.subr.mxu0 0.0
  %9499 = vmatpush1.msra.mxu0 0.0
  %9500 = vmatprep.subr.mxu0 0.0
  %9501 = vmatpush1.msra.mxu0 0.0
  %9502 = vmatprep.subr.mxu0 0.0
  %9503 = vmatpush1.msra.mxu0 0.0
  %9504 = vmatprep.subr.mxu0 0.0
  %9505 = vmatpush1.msra.mxu0 0.0
  %9506 = vmatprep.subr.mxu0 0.0
  %9507 = vmatpush1.msra.mxu0 0.0
  %9508 = vmatprep.subr.mxu0 0.0
  %9509 = vmatpush1.msra.mxu0 0.0
  %9510 = vmatprep.subr.mxu0 0.0
  %9511 = vmatpush1.msra.mxu0 0.0
  %9512 = vmatprep.subr.mxu0 0.0
  %9513 = vmatpush1.msra.mxu0 0.0
  %9514 = vmatprep.subr.mxu0 0.0
  %9515 = vmatpush1.msra.mxu0 0.0
  %9516 = vmatprep.subr.mxu0 0.0
  %9517 = vmatpush1.msra.mxu0 0.0
  %9518 = vmatprep.subr.mxu0 0.0
  %9519 = vmatpush1.msra.mxu0 0.0
  %9520 = vmatprep.subr.mxu0 0.0
  %9521 = vmatpush1.msra.mxu0 0.0
  %9522 = vmatprep.subr.mxu0 0.0
  %9523 = vmatpush1.msra.mxu0 0.0
  %9524 = vmatprep.subr.mxu0 0.0
  %9525 = vmatpush1.msra.mxu0 0.0
  %9526 = vmatprep.mubr.f32.mxu0 0.0
  %9527 = vmatmul.mubr.f32.gmra.mrb[0].mxu0 %v7699
  %v9528 = vpop.f32.mrb[0].mxu0
  %v9529 = vadd.f32 0.0, %v9528
  %v9530 = vpop.f32.mrb[0].mxu0
  %v9531 = vadd.f32 0.0, %v9530
  %9532 = vdwg.mxu0
  %9533 = vmatprep.subr.mxu0 %v7799
  %9534 = vmatpush1.msra.mxu0 %v7797
  %9535 = vmatprep.subr.mxu0 0.0
  %9536 = vmatpush1.msra.mxu0 0.0
  %9537 = vmatprep.subr.mxu0 0.0
  %9538 = vmatpush1.msra.mxu0 0.0
  %9539 = vmatprep.subr.mxu0 0.0
  %9540 = vmatpush1.msra.mxu0 0.0
  %9541 = vmatprep.subr.mxu0 0.0
  %9542 = vmatpush1.msra.mxu0 0.0
  %9543 = vmatprep.subr.mxu0 0.0
  %9544 = vmatpush1.msra.mxu0 0.0
  %9545 = vmatprep.subr.mxu0 0.0
  %9546 = vmatpush1.msra.mxu0 0.0
  %9547 = vmatprep.subr.mxu0 0.0
  %9548 = vmatpush1.msra.mxu0 0.0
  %9549 = vmatprep.subr.mxu0 0.0
  %9550 = vmatpush1.msra.mxu0 0.0
  %9551 = vmatprep.subr.mxu0 0.0
  %9552 = vmatpush1.msra.mxu0 0.0
  %9553 = vmatprep.subr.mxu0 0.0
  %9554 = vmatpush1.msra.mxu0 0.0
  %9555 = vmatprep.subr.mxu0 0.0
  %9556 = vmatpush1.msra.mxu0 0.0
  %9557 = vmatprep.subr.mxu0 0.0
  %9558 = vmatpush1.msra.mxu0 0.0
  %9559 = vmatprep.subr.mxu0 0.0
  %9560 = vmatpush1.msra.mxu0 0.0
  %9561 = vmatprep.subr.mxu0 0.0
  %9562 = vmatpush1.msra.mxu0 0.0
  %9563 = vmatprep.subr.mxu0 0.0
  %9564 = vmatpush1.msra.mxu0 0.0
  %9565 = vmatprep.subr.mxu0 0.0
  %9566 = vmatpush1.msra.mxu0 0.0
  %9567 = vmatprep.subr.mxu0 0.0
  %9568 = vmatpush1.msra.mxu0 0.0
  %9569 = vmatprep.subr.mxu0 0.0
  %9570 = vmatpush1.msra.mxu0 0.0
  %9571 = vmatprep.subr.mxu0 0.0
  %9572 = vmatpush1.msra.mxu0 0.0
  %9573 = vmatprep.subr.mxu0 0.0
  %9574 = vmatpush1.msra.mxu0 0.0
  %9575 = vmatprep.subr.mxu0 0.0
  %9576 = vmatpush1.msra.mxu0 0.0
  %9577 = vmatprep.subr.mxu0 0.0
  %9578 = vmatpush1.msra.mxu0 0.0
  %9579 = vmatprep.subr.mxu0 0.0
  %9580 = vmatpush1.msra.mxu0 0.0
  %9581 = vmatprep.subr.mxu0 0.0
  %9582 = vmatpush1.msra.mxu0 0.0
  %9583 = vmatprep.subr.mxu0 0.0
  %9584 = vmatpush1.msra.mxu0 0.0
  %9585 = vmatprep.subr.mxu0 0.0
  %9586 = vmatpush1.msra.mxu0 0.0
  %9587 = vmatprep.subr.mxu0 0.0
  %9588 = vmatpush1.msra.mxu0 0.0
  %9589 = vmatprep.subr.mxu0 0.0
  %9590 = vmatpush1.msra.mxu0 0.0
  %9591 = vmatprep.subr.mxu0 0.0
  %9592 = vmatpush1.msra.mxu0 0.0
  %9593 = vmatprep.subr.mxu0 0.0
  %9594 = vmatpush1.msra.mxu0 0.0
  %9595 = vmatprep.subr.mxu0 0.0
  %9596 = vmatpush1.msra.mxu0 0.0
  %9597 = vmatprep.mubr.f32.mxu0 0.0
  %9598 = vmatmul.mubr.f32.gmra.mrb[0].mxu0 %v7699
  %v9599 = vpop.f32.mrb[0].mxu0
  %v9600 = vadd.f32 0.0, %v9599
  %v9601 = vpop.f32.mrb[0].mxu0
  %v9602 = vadd.f32 0.0, %v9601
  %9603 = vdwg.mxu0
  %9604 = vmatprep.subr.mxu0 %v7803
  %9605 = vmatpush1.msra.mxu0 %v7801
  %9606 = vmatprep.subr.mxu0 0.0
  %9607 = vmatpush1.msra.mxu0 0.0
  %9608 = vmatprep.subr.mxu0 0.0
  %9609 = vmatpush1.msra.mxu0 0.0
  %9610 = vmatprep.subr.mxu0 0.0
  %9611 = vmatpush1.msra.mxu0 0.0
  %9612 = vmatprep.subr.mxu0 0.0
  %9613 = vmatpush1.msra.mxu0 0.0
  %9614 = vmatprep.subr.mxu0 0.0
  %9615 = vmatpush1.msra.mxu0 0.0
  %9616 = vmatprep.subr.mxu0 0.0
  %9617 = vmatpush1.msra.mxu0 0.0
  %9618 = vmatprep.subr.mxu0 0.0
  %9619 = vmatpush1.msra.mxu0 0.0
  %9620 = vmatprep.subr.mxu0 0.0
  %9621 = vmatpush1.msra.mxu0 0.0
  %9622 = vmatprep.subr.mxu0 0.0
  %9623 = vmatpush1.msra.mxu0 0.0
  %9624 = vmatprep.subr.mxu0 0.0
  %9625 = vmatpush1.msra.mxu0 0.0
  %9626 = vmatprep.subr.mxu0 0.0
  %9627 = vmatpush1.msra.mxu0 0.0
  %9628 = vmatprep.subr.mxu0 0.0
  %9629 = vmatpush1.msra.mxu0 0.0
  %9630 = vmatprep.subr.mxu0 0.0
  %9631 = vmatpush1.msra.mxu0 0.0
  %9632 = vmatprep.subr.mxu0 0.0
  %9633 = vmatpush1.msra.mxu0 0.0
  %9634 = vmatprep.subr.mxu0 0.0
  %9635 = vmatpush1.msra.mxu0 0.0
  %9636 = vmatprep.subr.mxu0 0.0
  %9637 = vmatpush1.msra.mxu0 0.0
  %9638 = vmatprep.subr.mxu0 0.0
  %9639 = vmatpush1.msra.mxu0 0.0
  %9640 = vmatprep.subr.mxu0 0.0
  %9641 = vmatpush1.msra.mxu0 0.0
  %9642 = vmatprep.subr.mxu0 0.0
  %9643 = vmatpush1.msra.mxu0 0.0
  %9644 = vmatprep.subr.mxu0 0.0
  %9645 = vmatpush1.msra.mxu0 0.0
  %9646 = vmatprep.subr.mxu0 0.0
  %9647 = vmatpush1.msra.mxu0 0.0
  %9648 = vmatprep.subr.mxu0 0.0
  %9649 = vmatpush1.msra.mxu0 0.0
  %9650 = vmatprep.subr.mxu0 0.0
  %9651 = vmatpush1.msra.mxu0 0.0
  %9652 = vmatprep.subr.mxu0 0.0
  %9653 = vmatpush1.msra.mxu0 0.0
  %9654 = vmatprep.subr.mxu0 0.0
  %9655 = vmatpush1.msra.mxu0 0.0
  %9656 = vmatprep.subr.mxu0 0.0
  %9657 = vmatpush1.msra.mxu0 0.0
  %9658 = vmatprep.subr.mxu0 0.0
  %9659 = vmatpush1.msra.mxu0 0.0
  %9660 = vmatprep.subr.mxu0 0.0
  %9661 = vmatpush1.msra.mxu0 0.0
  %9662 = vmatprep.subr.mxu0 0.0
  %9663 = vmatpush1.msra.mxu0 0.0
  %9664 = vmatprep.subr.mxu0 0.0
  %9665 = vmatpush1.msra.mxu0 0.0
  %9666 = vmatprep.subr.mxu0 0.0
  %9667 = vmatpush1.msra.mxu0 0.0
  %9668 = vmatprep.mubr.f32.mxu0 0.0
  %9669 = vmatmul.mubr.f32.gmra.mrb[0].mxu0 %v7699
  %v9670 = vpop.f32.mrb[0].mxu0
  %v9671 = vadd.f32 0.0, %v9670
  %v9672 = vpop.f32.mrb[0].mxu0
  %v9673 = vadd.f32 0.0, %v9672
  %9674 = vdwg.mxu0
  %9675 = vmatprep.subr.mxu0 %v7807
  %9676 = vmatpush1.msra.mxu0 %v7805
  %9677 = vmatprep.subr.mxu0 0.0
  %9678 = vmatpush1.msra.mxu0 0.0
  %9679 = vmatprep.subr.mxu0 0.0
  %9680 = vmatpush1.msra.mxu0 0.0
  %9681 = vmatprep.subr.mxu0 0.0
  %9682 = vmatpush1.msra.mxu0 0.0
  %9683 = vmatprep.subr.mxu0 0.0
  %9684 = vmatpush1.msra.mxu0 0.0
  %9685 = vmatprep.subr.mxu0 0.0
  %9686 = vmatpush1.msra.mxu0 0.0
  %9687 = vmatprep.subr.mxu0 0.0
  %9688 = vmatpush1.msra.mxu0 0.0
  %9689 = vmatprep.subr.mxu0 0.0
  %9690 = vmatpush1.msra.mxu0 0.0
  %9691 = vmatprep.subr.mxu0 0.0
  %9692 = vmatpush1.msra.mxu0 0.0
  %9693 = vmatprep.subr.mxu0 0.0
  %9694 = vmatpush1.msra.mxu0 0.0
  %9695 = vmatprep.subr.mxu0 0.0
  %9696 = vmatpush1.msra.mxu0 0.0
  %9697 = vmatprep.subr.mxu0 0.0
  %9698 = vmatpush1.msra.mxu0 0.0
  %9699 = vmatprep.subr.mxu0 0.0
  %9700 = vmatpush1.msra.mxu0 0.0
  %9701 = vmatprep.subr.mxu0 0.0
  %9702 = vmatpush1.msra.mxu0 0.0
  %9703 = vmatprep.subr.mxu0 0.0
  %9704 = vmatpush1.msra.mxu0 0.0
  %9705 = vmatprep.subr.mxu0 0.0
  %9706 = vmatpush1.msra.mxu0 0.0
  %9707 = vmatprep.subr.mxu0 0.0
  %9708 = vmatpush1.msra.mxu0 0.0
  %9709 = vmatprep.subr.mxu0 0.0
  %9710 = vmatpush1.msra.mxu0 0.0
  %9711 = vmatprep.subr.mxu0 0.0
  %9712 = vmatpush1.msra.mxu0 0.0
  %9713 = vmatprep.subr.mxu0 0.0
  %9714 = vmatpush1.msra.mxu0 0.0
  %9715 = vmatprep.subr.mxu0 0.0
  %9716 = vmatpush1.msra.mxu0 0.0
  %9717 = vmatprep.subr.mxu0 0.0
  %9718 = vmatpush1.msra.mxu0 0.0
  %9719 = vmatprep.subr.mxu0 0.0
  %9720 = vmatpush1.msra.mxu0 0.0
  %9721 = vmatprep.subr.mxu0 0.0
  %9722 = vmatpush1.msra.mxu0 0.0
  %9723 = vmatprep.subr.mxu0 0.0
  %9724 = vmatpush1.msra.mxu0 0.0
  %9725 = vmatprep.subr.mxu0 0.0
  %9726 = vmatpush1.msra.mxu0 0.0
  %9727 = vmatprep.subr.mxu0 0.0
  %9728 = vmatpush1.msra.mxu0 0.0
  %9729 = vmatprep.subr.mxu0 0.0
  %9730 = vmatpush1.msra.mxu0 0.0
  %9731 = vmatprep.subr.mxu0 0.0
  %9732 = vmatpush1.msra.mxu0 0.0
  %9733 = vmatprep.subr.mxu0 0.0
  %9734 = vmatpush1.msra.mxu0 0.0
  %9735 = vmatprep.subr.mxu0 0.0
  %9736 = vmatpush1.msra.mxu0 0.0
  %9737 = vmatprep.subr.mxu0 0.0
  %9738 = vmatpush1.msra.mxu0 0.0
  %9739 = vmatprep.mubr.f32.mxu0 0.0
  %9740 = vmatmul.mubr.f32.gmra.mrb[0].mxu0 %v7699
  %v9741 = vpop.f32.mrb[0].mxu0
  %v9742 = vadd.f32 0.0, %v9741
  %v9743 = vpop.f32.mrb[0].mxu0
  %v9744 = vadd.f32 0.0, %v9743
  %9745 = vdwg.mxu0
  %9746 = vmatprep.subr.mxu0 %v7811
  %9747 = vmatpush1.msra.mxu0 %v7809
  %9748 = vmatprep.subr.mxu0 0.0
  %9749 = vmatpush1.msra.mxu0 0.0
  %9750 = vmatprep.subr.mxu0 0.0
  %9751 = vmatpush1.msra.mxu0 0.0
  %9752 = vmatprep.subr.mxu0 0.0
  %9753 = vmatpush1.msra.mxu0 0.0
  %9754 = vmatprep.subr.mxu0 0.0
  %9755 = vmatpush1.msra.mxu0 0.0
  %9756 = vmatprep.subr.mxu0 0.0
  %9757 = vmatpush1.msra.mxu0 0.0
  %9758 = vmatprep.subr.mxu0 0.0
  %9759 = vmatpush1.msra.mxu0 0.0
  %9760 = vmatprep.subr.mxu0 0.0
  %9761 = vmatpush1.msra.mxu0 0.0
  %9762 = vmatprep.subr.mxu0 0.0
  %9763 = vmatpush1.msra.mxu0 0.0
  %9764 = vmatprep.subr.mxu0 0.0
  %9765 = vmatpush1.msra.mxu0 0.0
  %9766 = vmatprep.subr.mxu0 0.0
  %9767 = vmatpush1.msra.mxu0 0.0
  %9768 = vmatprep.subr.mxu0 0.0
  %9769 = vmatpush1.msra.mxu0 0.0
  %9770 = vmatprep.subr.mxu0 0.0
  %9771 = vmatpush1.msra.mxu0 0.0
  %9772 = vmatprep.subr.mxu0 0.0
  %9773 = vmatpush1.msra.mxu0 0.0
  %9774 = vmatprep.subr.mxu0 0.0
  %9775 = vmatpush1.msra.mxu0 0.0
  %9776 = vmatprep.subr.mxu0 0.0
  %9777 = vmatpush1.msra.mxu0 0.0
  %9778 = vmatprep.subr.mxu0 0.0
  %9779 = vmatpush1.msra.mxu0 0.0
  %9780 = vmatprep.subr.mxu0 0.0
  %9781 = vmatpush1.msra.mxu0 0.0
  %9782 = vmatprep.subr.mxu0 0.0
  %9783 = vmatpush1.msra.mxu0 0.0
  %9784 = vmatprep.subr.mxu0 0.0
  %9785 = vmatpush1.msra.mxu0 0.0
  %9786 = vmatprep.subr.mxu0 0.0
  %9787 = vmatpush1.msra.mxu0 0.0
  %9788 = vmatprep.subr.mxu0 0.0
  %9789 = vmatpush1.msra.mxu0 0.0
  %9790 = vmatprep.subr.mxu0 0.0
  %9791 = vmatpush1.msra.mxu0 0.0
  %9792 = vmatprep.subr.mxu0 0.0
  %9793 = vmatpush1.msra.mxu0 0.0
  %9794 = vmatprep.subr.mxu0 0.0
  %9795 = vmatpush1.msra.mxu0 0.0
  %9796 = vmatprep.subr.mxu0 0.0
  %9797 = vmatpush1.msra.mxu0 0.0
  %9798 = vmatprep.subr.mxu0 0.0
  %9799 = vmatpush1.msra.mxu0 0.0
  %9800 = vmatprep.subr.mxu0 0.0
  %9801 = vmatpush1.msra.mxu0 0.0
  %9802 = vmatprep.subr.mxu0 0.0
  %9803 = vmatpush1.msra.mxu0 0.0
  %9804 = vmatprep.subr.mxu0 0.0
  %9805 = vmatpush1.msra.mxu0 0.0
  %9806 = vmatprep.subr.mxu0 0.0
  %9807 = vmatpush1.msra.mxu0 0.0
  %9808 = vmatprep.subr.mxu0 0.0
  %9809 = vmatpush1.msra.mxu0 0.0
  %9810 = vmatprep.mubr.f32.mxu0 0.0
  %9811 = vmatmul.mubr.f32.gmra.mrb[0].mxu0 %v7699
  %v9812 = vpop.f32.mrb[0].mxu0
  %v9813 = vadd.f32 0.0, %v9812
  %v9814 = vpop.f32.mrb[0].mxu0
  %v9815 = vadd.f32 0.0, %v9814
  %9816 = vdwg.mxu0
  %9817 = vmatprep.subr.mxu0 %v7815
  %9818 = vmatpush1.msra.mxu0 %v7813
  %9819 = vmatprep.subr.mxu0 0.0
  %9820 = vmatpush1.msra.mxu0 0.0
  %9821 = vmatprep.subr.mxu0 0.0
  %9822 = vmatpush1.msra.mxu0 0.0
  %9823 = vmatprep.subr.mxu0 0.0
  %9824 = vmatpush1.msra.mxu0 0.0
  %9825 = vmatprep.subr.mxu0 0.0
  %9826 = vmatpush1.msra.mxu0 0.0
  %9827 = vmatprep.subr.mxu0 0.0
  %9828 = vmatpush1.msra.mxu0 0.0
  %9829 = vmatprep.subr.mxu0 0.0
  %9830 = vmatpush1.msra.mxu0 0.0
  %9831 = vmatprep.subr.mxu0 0.0
  %9832 = vmatpush1.msra.mxu0 0.0
  %9833 = vmatprep.subr.mxu0 0.0
  %9834 = vmatpush1.msra.mxu0 0.0
  %9835 = vmatprep.subr.mxu0 0.0
  %9836 = vmatpush1.msra.mxu0 0.0
  %9837 = vmatprep.subr.mxu0 0.0
  %9838 = vmatpush1.msra.mxu0 0.0
  %9839 = vmatprep.subr.mxu0 0.0
  %9840 = vmatpush1.msra.mxu0 0.0
  %9841 = vmatprep.subr.mxu0 0.0
  %9842 = vmatpush1.msra.mxu0 0.0
  %9843 = vmatprep.subr.mxu0 0.0
  %9844 = vmatpush1.msra.mxu0 0.0
  %9845 = vmatprep.subr.mxu0 0.0
  %9846 = vmatpush1.msra.mxu0 0.0
  %9847 = vmatprep.subr.mxu0 0.0
  %9848 = vmatpush1.msra.mxu0 0.0
  %9849 = vmatprep.subr.mxu0 0.0
  %9850 = vmatpush1.msra.mxu0 0.0
  %9851 = vmatprep.subr.mxu0 0.0
  %9852 = vmatpush1.msra.mxu0 0.0
  %9853 = vmatprep.subr.mxu0 0.0
  %9854 = vmatpush1.msra.mxu0 0.0
  %9855 = vmatprep.subr.mxu0 0.0
  %9856 = vmatpush1.msra.mxu0 0.0
  %9857 = vmatprep.subr.mxu0 0.0
  %9858 = vmatpush1.msra.mxu0 0.0
  %9859 = vmatprep.subr.mxu0 0.0
  %9860 = vmatpush1.msra.mxu0 0.0
  %9861 = vmatprep.subr.mxu0 0.0
  %9862 = vmatpush1.msra.mxu0 0.0
  %9863 = vmatprep.subr.mxu0 0.0
  %9864 = vmatpush1.msra.mxu0 0.0
  %9865 = vmatprep.subr.mxu0 0.0
  %9866 = vmatpush1.msra.mxu0 0.0
  %9867 = vmatprep.subr.mxu0 0.0
  %9868 = vmatpush1.msra.mxu0 0.0
  %9869 = vmatprep.subr.mxu0 0.0
  %9870 = vmatpush1.msra.mxu0 0.0
  %9871 = vmatprep.subr.mxu0 0.0
  %9872 = vmatpush1.msra.mxu0 0.0
  %9873 = vmatprep.subr.mxu0 0.0
  %9874 = vmatpush1.msra.mxu0 0.0
  %9875 = vmatprep.subr.mxu0 0.0
  %9876 = vmatpush1.msra.mxu0 0.0
  %9877 = vmatprep.subr.mxu0 0.0
  %9878 = vmatpush1.msra.mxu0 0.0
  %9879 = vmatprep.subr.mxu0 0.0
  %9880 = vmatpush1.msra.mxu0 0.0
  %9881 = vmatprep.mubr.f32.mxu0 0.0
  %9882 = vmatmul.mubr.f32.gmra.mrb[0].mxu0 %v7699
  %v9883 = vpop.f32.mrb[0].mxu0
  %v9884 = vadd.f32 0.0, %v9883
  %v9885 = vpop.f32.mrb[0].mxu0
  %v9886 = vadd.f32 0.0, %v9885
  %9887 = vdwg.mxu0
  %9888 = vmatprep.subr.mxu0 %v7819
  %9889 = vmatpush1.msra.mxu0 %v7817
  %9890 = vmatprep.subr.mxu0 0.0
  %9891 = vmatpush1.msra.mxu0 0.0
  %9892 = vmatprep.subr.mxu0 0.0
  %9893 = vmatpush1.msra.mxu0 0.0
  %9894 = vmatprep.subr.mxu0 0.0
  %9895 = vmatpush1.msra.mxu0 0.0
  %9896 = vmatprep.subr.mxu0 0.0
  %9897 = vmatpush1.msra.mxu0 0.0
  %9898 = vmatprep.subr.mxu0 0.0
  %9899 = vmatpush1.msra.mxu0 0.0
  %9900 = vmatprep.subr.mxu0 0.0
  %9901 = vmatpush1.msra.mxu0 0.0
  %9902 = vmatprep.subr.mxu0 0.0
  %9903 = vmatpush1.msra.mxu0 0.0
  %9904 = vmatprep.subr.mxu0 0.0
  %9905 = vmatpush1.msra.mxu0 0.0
  %9906 = vmatprep.subr.mxu0 0.0
  %9907 = vmatpush1.msra.mxu0 0.0
  %9908 = vmatprep.subr.mxu0 0.0
  %9909 = vmatpush1.msra.mxu0 0.0
  %9910 = vmatprep.subr.mxu0 0.0
  %9911 = vmatpush1.msra.mxu0 0.0
  %9912 = vmatprep.subr.mxu0 0.0
  %9913 = vmatpush1.msra.mxu0 0.0
  %9914 = vmatprep.subr.mxu0 0.0
  %9915 = vmatpush1.msra.mxu0 0.0
  %9916 = vmatprep.subr.mxu0 0.0
  %9917 = vmatpush1.msra.mxu0 0.0
  %9918 = vmatprep.subr.mxu0 0.0
  %9919 = vmatpush1.msra.mxu0 0.0
  %9920 = vmatprep.subr.mxu0 0.0
  %9921 = vmatpush1.msra.mxu0 0.0
  %9922 = vmatprep.subr.mxu0 0.0
  %9923 = vmatpush1.msra.mxu0 0.0
  %9924 = vmatprep.subr.mxu0 0.0
  %9925 = vmatpush1.msra.mxu0 0.0
  %9926 = vmatprep.subr.mxu0 0.0
  %9927 = vmatpush1.msra.mxu0 0.0
  %9928 = vmatprep.subr.mxu0 0.0
  %9929 = vmatpush1.msra.mxu0 0.0
  %9930 = vmatprep.subr.mxu0 0.0
  %9931 = vmatpush1.msra.mxu0 0.0
  %9932 = vmatprep.subr.mxu0 0.0
  %9933 = vmatpush1.msra.mxu0 0.0
  %9934 = vmatprep.subr.mxu0 0.0
  %9935 = vmatpush1.msra.mxu0 0.0
  %9936 = vmatprep.subr.mxu0 0.0
  %9937 = vmatpush1.msra.mxu0 0.0
  %9938 = vmatprep.subr.mxu0 0.0
  %9939 = vmatpush1.msra.mxu0 0.0
  %9940 = vmatprep.subr.mxu0 0.0
  %9941 = vmatpush1.msra.mxu0 0.0
  %9942 = vmatprep.subr.mxu0 0.0
  %9943 = vmatpush1.msra.mxu0 0.0
  %9944 = vmatprep.subr.mxu0 0.0
  %9945 = vmatpush1.msra.mxu0 0.0
  %9946 = vmatprep.subr.mxu0 0.0
  %9947 = vmatpush1.msra.mxu0 0.0
  %9948 = vmatprep.subr.mxu0 0.0
  %9949 = vmatpush1.msra.mxu0 0.0
  %9950 = vmatprep.subr.mxu0 0.0
  %9951 = vmatpush1.msra.mxu0 0.0
  %9952 = vmatprep.mubr.f32.mxu0 0.0
  %9953 = vmatmul.mubr.f32.gmra.mrb[0].mxu0 %v7699
  %v9954 = vpop.f32.mrb[0].mxu0
  %v9955 = vadd.f32 0.0, %v9954
  %v9956 = vpop.f32.mrb[0].mxu0
  %v9957 = vadd.f32 0.0, %v9956
  %9958 = vdwg.mxu0
  %9959 = vmatprep.subr.mxu0 %v7823
  %9960 = vmatpush1.msra.mxu0 %v7821
  %9961 = vmatprep.subr.mxu0 0.0
  %9962 = vmatpush1.msra.mxu0 0.0
  %9963 = vmatprep.subr.mxu0 0.0
  %9964 = vmatpush1.msra.mxu0 0.0
  %9965 = vmatprep.subr.mxu0 0.0
  %9966 = vmatpush1.msra.mxu0 0.0
  %9967 = vmatprep.subr.mxu0 0.0
  %9968 = vmatpush1.msra.mxu0 0.0
  %9969 = vmatprep.subr.mxu0 0.0
  %9970 = vmatpush1.msra.mxu0 0.0
  %9971 = vmatprep.subr.mxu0 0.0
  %9972 = vmatpush1.msra.mxu0 0.0
  %9973 = vmatprep.subr.mxu0 0.0
  %9974 = vmatpush1.msra.mxu0 0.0
  %9975 = vmatprep.subr.mxu0 0.0
  %9976 = vmatpush1.msra.mxu0 0.0
  %9977 = vmatprep.subr.mxu0 0.0
  %9978 = vmatpush1.msra.mxu0 0.0
  %9979 = vmatprep.subr.mxu0 0.0
  %9980 = vmatpush1.msra.mxu0 0.0
  %9981 = vmatprep.subr.mxu0 0.0
  %9982 = vmatpush1.msra.mxu0 0.0
  %9983 = vmatprep.subr.mxu0 0.0
  %9984 = vmatpush1.msra.mxu0 0.0
  %9985 = vmatprep.subr.mxu0 0.0
  %9986 = vmatpush1.msra.mxu0 0.0
  %9987 = vmatprep.subr.mxu0 0.0
  %9988 = vmatpush1.msra.mxu0 0.0
  %9989 = vmatprep.subr.mxu0 0.0
  %9990 = vmatpush1.msra.mxu0 0.0
  %9991 = vmatprep.subr.mxu0 0.0
  %9992 = vmatpush1.msra.mxu0 0.0
  %9993 = vmatprep.subr.mxu0 0.0
  %9994 = vmatpush1.msra.mxu0 0.0
  %9995 = vmatprep.subr.mxu0 0.0
  %9996 = vmatpush1.msra.mxu0 0.0
  %9997 = vmatprep.subr.mxu0 0.0
  %9998 = vmatpush1.msra.mxu0 0.0
  %9999 = vmatprep.subr.mxu0 0.0
  %10000 = vmatpush1.msra.mxu0 0.0
  %10001 = vmatprep.subr.mxu0 0.0
  %10002 = vmatpush1.msra.mxu0 0.0
  %10003 = vmatprep.subr.mxu0 0.0
  %10004 = vmatpush1.msra.mxu0 0.0
  %10005 = vmatprep.subr.mxu0 0.0
  %10006 = vmatpush1.msra.mxu0 0.0
  %10007 = vmatprep.subr.mxu0 0.0
  %10008 = vmatpush1.msra.mxu0 0.0
  %10009 = vmatprep.subr.mxu0 0.0
  %10010 = vmatpush1.msra.mxu0 0.0
  %10011 = vmatprep.subr.mxu0 0.0
  %10012 = vmatpush1.msra.mxu0 0.0
  %10013 = vmatprep.subr.mxu0 0.0
  %10014 = vmatpush1.msra.mxu0 0.0
  %10015 = vmatprep.subr.mxu0 0.0
  %10016 = vmatpush1.msra.mxu0 0.0
  %10017 = vmatprep.subr.mxu0 0.0
  %10018 = vmatpush1.msra.mxu0 0.0
  %10019 = vmatprep.subr.mxu0 0.0
  %10020 = vmatpush1.msra.mxu0 0.0
  %10021 = vmatprep.subr.mxu0 0.0
  %10022 = vmatpush1.msra.mxu0 0.0
  %10023 = vmatprep.mubr.f32.mxu0 0.0
  %10024 = vmatmul.mubr.f32.gmra.mrb[0].mxu0 %v7699
  %v10025 = vpop.f32.mrb[0].mxu0
  %v10026 = vadd.f32 0.0, %v10025
  %v10027 = vpop.f32.mrb[0].mxu0
  %v10028 = vadd.f32 0.0, %v10027
  %10029 = vdwg.mxu0
  %10030 = vmatprep.subr.mxu0 %v7827
  %10031 = vmatpush1.msra.mxu0 %v7825
  %10032 = vmatprep.subr.mxu0 0.0
  %10033 = vmatpush1.msra.mxu0 0.0
  %10034 = vmatprep.subr.mxu0 0.0
  %10035 = vmatpush1.msra.mxu0 0.0
  %10036 = vmatprep.subr.mxu0 0.0
  %10037 = vmatpush1.msra.mxu0 0.0
  %10038 = vmatprep.subr.mxu0 0.0
  %10039 = vmatpush1.msra.mxu0 0.0
  %10040 = vmatprep.subr.mxu0 0.0
  %10041 = vmatpush1.msra.mxu0 0.0
  %10042 = vmatprep.subr.mxu0 0.0
  %10043 = vmatpush1.msra.mxu0 0.0
  %10044 = vmatprep.subr.mxu0 0.0
  %10045 = vmatpush1.msra.mxu0 0.0
  %10046 = vmatprep.subr.mxu0 0.0
  %10047 = vmatpush1.msra.mxu0 0.0
  %10048 = vmatprep.subr.mxu0 0.0
  %10049 = vmatpush1.msra.mxu0 0.0
  %10050 = vmatprep.subr.mxu0 0.0
  %10051 = vmatpush1.msra.mxu0 0.0
  %10052 = vmatprep.subr.mxu0 0.0
  %10053 = vmatpush1.msra.mxu0 0.0
  %10054 = vmatprep.subr.mxu0 0.0
  %10055 = vmatpush1.msra.mxu0 0.0
  %10056 = vmatprep.subr.mxu0 0.0
  %10057 = vmatpush1.msra.mxu0 0.0
  %10058 = vmatprep.subr.mxu0 0.0
  %10059 = vmatpush1.msra.mxu0 0.0
  %10060 = vmatprep.subr.mxu0 0.0
  %10061 = vmatpush1.msra.mxu0 0.0
  %10062 = vmatprep.subr.mxu0 0.0
  %10063 = vmatpush1.msra.mxu0 0.0
  %10064 = vmatprep.subr.mxu0 0.0
  %10065 = vmatpush1.msra.mxu0 0.0
  %10066 = vmatprep.subr.mxu0 0.0
  %10067 = vmatpush1.msra.mxu0 0.0
  %10068 = vmatprep.subr.mxu0 0.0
  %10069 = vmatpush1.msra.mxu0 0.0
  %10070 = vmatprep.subr.mxu0 0.0
  %10071 = vmatpush1.msra.mxu0 0.0
  %10072 = vmatprep.subr.mxu0 0.0
  %10073 = vmatpush1.msra.mxu0 0.0
  %10074 = vmatprep.subr.mxu0 0.0
  %10075 = vmatpush1.msra.mxu0 0.0
  %10076 = vmatprep.subr.mxu0 0.0
  %10077 = vmatpush1.msra.mxu0 0.0
  %10078 = vmatprep.subr.mxu0 0.0
  %10079 = vmatpush1.msra.mxu0 0.0
  %10080 = vmatprep.subr.mxu0 0.0
  %10081 = vmatpush1.msra.mxu0 0.0
  %10082 = vmatprep.subr.mxu0 0.0
  %10083 = vmatpush1.msra.mxu0 0.0
  %10084 = vmatprep.subr.mxu0 0.0
  %10085 = vmatpush1.msra.mxu0 0.0
  %10086 = vmatprep.subr.mxu0 0.0
  %10087 = vmatpush1.msra.mxu0 0.0
  %10088 = vmatprep.subr.mxu0 0.0
  %10089 = vmatpush1.msra.mxu0 0.0
  %10090 = vmatprep.subr.mxu0 0.0
  %10091 = vmatpush1.msra.mxu0 0.0
  %10092 = vmatprep.subr.mxu0 0.0
  %10093 = vmatpush1.msra.mxu0 0.0
  %10094 = vmatprep.mubr.f32.mxu0 0.0
  %10095 = vmatmul.mubr.f32.gmra.mrb[0].mxu0 %v7699
  %v10096 = vpop.f32.mrb[0].mxu0
  %v10097 = vadd.f32 0.0, %v10096
  %v10098 = vpop.f32.mrb[0].mxu0
  %v10099 = vadd.f32 0.0, %v10098
  %10100 = vdwg.mxu0
  %v10101 = vadd.f32 %v7536, %v7896
  %v10102 = vadd.f32 %v7537, %v7898
  %v10103 = vadd.f32 %v7538, %v7967
  %v10104 = vadd.f32 %v7539, %v7969
  %v10105 = vadd.f32 %v7540, %v8038
  %v10106 = vadd.f32 %v7541, %v8040
  %v10107 = vadd.f32 %v7542, %v8109
  %v10108 = vadd.f32 %v7543, %v8111
  %v10109 = vadd.f32 %v7544, %v8180
  %v10110 = vadd.f32 %v7545, %v8182
  %v10111 = vadd.f32 %v7546, %v8251
  %v10112 = vadd.f32 %v7547, %v8253
  %v10113 = vadd.f32 %v7548, %v8322
  %v10114 = vadd.f32 %v7549, %v8324
  %v10115 = vadd.f32 %v7550, %v8393
  %v10116 = vadd.f32 %v7551, %v8395
  %v10117 = vadd.f32 %v7552, %v8464
  %v10118 = vadd.f32 %v7553, %v8466
  %v10119 = vadd.f32 %v7554, %v8535
  %v10120 = vadd.f32 %v7555, %v8537
  %v10121 = vadd.f32 %v7556, %v8606
  %v10122 = vadd.f32 %v7557, %v8608
  %v10123 = vadd.f32 %v7558, %v8677
  %v10124 = vadd.f32 %v7559, %v8679
  %v10125 = vadd.f32 %v7560, %v8748
  %v10126 = vadd.f32 %v7561, %v8750
  %v10127 = vadd.f32 %v7562, %v8819
  %v10128 = vadd.f32 %v7563, %v8821
  %v10129 = vadd.f32 %v7564, %v8890
  %v10130 = vadd.f32 %v7565, %v8892
  %v10131 = vadd.f32 %v7566, %v8961
  %v10132 = vadd.f32 %v7567, %v8963
  %v10133 = vadd.f32 %v7568, %v9032
  %v10134 = vadd.f32 %v7569, %v9034
  %v10135 = vadd.f32 %v7570, %v9103
  %v10136 = vadd.f32 %v7571, %v9105
  %v10137 = vadd.f32 %v7572, %v9174
  %v10138 = vadd.f32 %v7573, %v9176
  %v10139 = vadd.f32 %v7574, %v9245
  %v10140 = vadd.f32 %v7575, %v9247
  %v10141 = vadd.f32 %v7576, %v9316
  %v10142 = vadd.f32 %v7577, %v9318
  %v10143 = vadd.f32 %v7578, %v9387
  %v10144 = vadd.f32 %v7579, %v9389
  %v10145 = vadd.f32 %v7580, %v9458
  %v10146 = vadd.f32 %v7581, %v9460
  %v10147 = vadd.f32 %v7582, %v9529
  %v10148 = vadd.f32 %v7583, %v9531
  %v10149 = vadd.f32 %v7584, %v9600
  %v10150 = vadd.f32 %v7585, %v9602
  %v10151 = vadd.f32 %v7586, %v9671
  %v10152 = vadd.f32 %v7587, %v9673
  %v10153 = vadd.f32 %v7588, %v9742
  %v10154 = vadd.f32 %v7589, %v9744
  %v10155 = vadd.f32 %v7590, %v9813
  %v10156 = vadd.f32 %v7591, %v9815
  %v10157 = vadd.f32 %v7592, %v9884
  %v10158 = vadd.f32 %v7593, %v9886
  %v10159 = vadd.f32 %v7594, %v9955
  %v10160 = vadd.f32 %v7595, %v9957
  %v10161 = vadd.f32 %v7596, %v10026
  %v10162 = vadd.f32 %v7597, %v10028
  %v10163 = vadd.f32 %v7598, %v10097
  %v10164 = vadd.f32 %v7599, %v10099
  %v10165 = vld [vmem:[%s5] sm:$0xff]
  %10167 = vset.pattern.permute.xlu0 0
  %10168 = vperm.xlu0 %10167, %v10165
  %v10169 = vpop.permute.xlu0 %10168
  %v10171 = vadd.f32 %v10101, %v10169
  %v10172 = vadd.f32 %v10102, %v10169
  %v10173 = vadd.f32 %v10103, %v10169
  %v10174 = vadd.f32 %v10104, %v10169
  %v10175 = vadd.f32 %v10105, %v10169
  %v10176 = vadd.f32 %v10106, %v10169
  %v10177 = vadd.f32 %v10107, %v10169
  %v10178 = vadd.f32 %v10108, %v10169
  %v10179 = vadd.f32 %v10109, %v10169
  %v10180 = vadd.f32 %v10110, %v10169
  %v10181 = vadd.f32 %v10111, %v10169
  %v10182 = vadd.f32 %v10112, %v10169
  %v10183 = vadd.f32 %v10113, %v10169
  %v10184 = vadd.f32 %v10114, %v10169
  %v10185 = vadd.f32 %v10115, %v10169
  %v10186 = vadd.f32 %v10116, %v10169
  %v10187 = vadd.f32 %v10117, %v10169
  %v10188 = vadd.f32 %v10118, %v10169
  %v10189 = vadd.f32 %v10119, %v10169
  %v10190 = vadd.f32 %v10120, %v10169
  %v10191 = vadd.f32 %v10121, %v10169
  %v10192 = vadd.f32 %v10122, %v10169
  %v10193 = vadd.f32 %v10123, %v10169
  %v10194 = vadd.f32 %v10124, %v10169
  %v10195 = vadd.f32 %v10125, %v10169
  %v10196 = vadd.f32 %v10126, %v10169
  %v10197 = vadd.f32 %v10127, %v10169
  %v10198 = vadd.f32 %v10128, %v10169
  %v10199 = vadd.f32 %v10129, %v10169
  %v10200 = vadd.f32 %v10130, %v10169
  %v10201 = vadd.f32 %v10131, %v10169
  %v10202 = vadd.f32 %v10132, %v10169
  %v10203 = vadd.f32 %v10133, %v10169
  %v10204 = vadd.f32 %v10134, %v10169
  %v10205 = vadd.f32 %v10135, %v10169
  %v10206 = vadd.f32 %v10136, %v10169
  %v10207 = vadd.f32 %v10137, %v10169
  %v10208 = vadd.f32 %v10138, %v10169
  %v10209 = vadd.f32 %v10139, %v10169
  %v10210 = vadd.f32 %v10140, %v10169
  %v10211 = vadd.f32 %v10141, %v10169
  %v10212 = vadd.f32 %v10142, %v10169
  %v10213 = vadd.f32 %v10143, %v10169
  %v10214 = vadd.f32 %v10144, %v10169
  %v10215 = vadd.f32 %v10145, %v10169
  %v10216 = vadd.f32 %v10146, %v10169
  %v10217 = vadd.f32 %v10147, %v10169
  %v10218 = vadd.f32 %v10148, %v10169
  %v10219 = vadd.f32 %v10149, %v10169
  %v10220 = vadd.f32 %v10150, %v10169
  %v10221 = vadd.f32 %v10151, %v10169
  %v10222 = vadd.f32 %v10152, %v10169
  %v10223 = vadd.f32 %v10153, %v10169
  %v10224 = vadd.f32 %v10154, %v10169
  %v10225 = vadd.f32 %v10155, %v10169
  %v10226 = vadd.f32 %v10156, %v10169
  %v10227 = vadd.f32 %v10157, %v10169
  %v10228 = vadd.f32 %v10158, %v10169
  %v10229 = vadd.f32 %v10159, %v10169
  %v10230 = vadd.f32 %v10160, %v10169
  %v10231 = vadd.f32 %v10161, %v10169
  %v10232 = vadd.f32 %v10162, %v10169
  %v10233 = vadd.f32 %v10163, %v10169
  %v10234 = vadd.f32 %v10164, %v10169
  %v10235 = vmax.f32 %v10171, 0.0
  %v10236 = vmax.f32 %v10172, 0.0
  %v10237 = vmax.f32 %v10173, 0.0
  %v10238 = vmax.f32 %v10174, 0.0
  %v10239 = vmax.f32 %v10175, 0.0
  %v10240 = vmax.f32 %v10176, 0.0
  %v10241 = vmax.f32 %v10177, 0.0
  %v10242 = vmax.f32 %v10178, 0.0
  %v10243 = vmax.f32 %v10179, 0.0
  %v10244 = vmax.f32 %v10180, 0.0
  %v10245 = vmax.f32 %v10181, 0.0
  %v10246 = vmax.f32 %v10182, 0.0
  %v10247 = vmax.f32 %v10183, 0.0
  %v10248 = vmax.f32 %v10184, 0.0
  %v10249 = vmax.f32 %v10185, 0.0
  %v10250 = vmax.f32 %v10186, 0.0
  %v10251 = vmax.f32 %v10187, 0.0
  %v10252 = vmax.f32 %v10188, 0.0
  %v10253 = vmax.f32 %v10189, 0.0
  %v10254 = vmax.f32 %v10190, 0.0
  %v10255 = vmax.f32 %v10191, 0.0
  %v10256 = vmax.f32 %v10192, 0.0
  %v10257 = vmax.f32 %v10193, 0.0
  %v10258 = vmax.f32 %v10194, 0.0
  %v10259 = vmax.f32 %v10195, 0.0
  %v10260 = vmax.f32 %v10196, 0.0
  %v10261 = vmax.f32 %v10197, 0.0
  %v10262 = vmax.f32 %v10198, 0.0
  %v10263 = vmax.f32 %v10199, 0.0
  %v10264 = vmax.f32 %v10200, 0.0
  %v10265 = vmax.f32 %v10201, 0.0
  %v10266 = vmax.f32 %v10202, 0.0
  %v10267 = vmax.f32 %v10203, 0.0
  %v10268 = vmax.f32 %v10204, 0.0
  %v10269 = vmax.f32 %v10205, 0.0
  %v10270 = vmax.f32 %v10206, 0.0
  %v10271 = vmax.f32 %v10207, 0.0
  %v10272 = vmax.f32 %v10208, 0.0
  %v10273 = vmax.f32 %v10209, 0.0
  %v10274 = vmax.f32 %v10210, 0.0
  %v10275 = vmax.f32 %v10211, 0.0
  %v10276 = vmax.f32 %v10212, 0.0
  %v10277 = vmax.f32 %v10213, 0.0
  %v10278 = vmax.f32 %v10214, 0.0
  %v10279 = vmax.f32 %v10215, 0.0
  %v10280 = vmax.f32 %v10216, 0.0
  %v10281 = vmax.f32 %v10217, 0.0
  %v10282 = vmax.f32 %v10218, 0.0
  %v10283 = vmax.f32 %v10219, 0.0
  %v10284 = vmax.f32 %v10220, 0.0
  %v10285 = vmax.f32 %v10221, 0.0
  %v10286 = vmax.f32 %v10222, 0.0
  %v10287 = vmax.f32 %v10223, 0.0
  %v10288 = vmax.f32 %v10224, 0.0
  %v10289 = vmax.f32 %v10225, 0.0
  %v10290 = vmax.f32 %v10226, 0.0
  %v10291 = vmax.f32 %v10227, 0.0
  %v10292 = vmax.f32 %v10228, 0.0
  %v10293 = vmax.f32 %v10229, 0.0
  %v10294 = vmax.f32 %v10230, 0.0
  %v10295 = vmax.f32 %v10231, 0.0
  %v10296 = vmax.f32 %v10232, 0.0
  %v10297 = vmax.f32 %v10233, 0.0
  %v10298 = vmax.f32 %v10234, 0.0
  %10299 = vst [vmem:[#allocation2] sm:$0xff] %v10235
  %10300 = vst [vmem:[#allocation2 + $0x8] sm:$0xff] %v10236
  %10301 = vst [vmem:[#allocation2 + $0x10] sm:$0xff] %v10237
  %10302 = vst [vmem:[#allocation2 + $0x18] sm:$0xff] %v10238
  %10303 = vst [vmem:[#allocation2 + $0x20] sm:$0xff] %v10239
  %10304 = vst [vmem:[#allocation2 + $0x28] sm:$0xff] %v10240
  %10305 = vst [vmem:[#allocation2 + $0x30] sm:$0xff] %v10241
  %10306 = vst [vmem:[#allocation2 + $0x38] sm:$0xff] %v10242
  %10307 = vst [vmem:[#allocation2 + $0x40] sm:$0xff] %v10243
  %10308 = vst [vmem:[#allocation2 + $0x48] sm:$0xff] %v10244
  %10309 = vst [vmem:[#allocation2 + $0x50] sm:$0xff] %v10245
  %10310 = vst [vmem:[#allocation2 + $0x58] sm:$0xff] %v10246
  %10311 = vst [vmem:[#allocation2 + $0x60] sm:$0xff] %v10247
  %10312 = vst [vmem:[#allocation2 + $0x68] sm:$0xff] %v10248
  %10313 = vst [vmem:[#allocation2 + $0x70] sm:$0xff] %v10249
  %10314 = vst [vmem:[#allocation2 + $0x78] sm:$0xff] %v10250
  %10315 = vst [vmem:[#allocation2 + $0x80] sm:$0xff] %v10251
  %10316 = vst [vmem:[#allocation2 + $0x88] sm:$0xff] %v10252
  %10317 = vst [vmem:[#allocation2 + $0x90] sm:$0xff] %v10253
  %10318 = vst [vmem:[#allocation2 + $0x98] sm:$0xff] %v10254
  %10319 = vst [vmem:[#allocation2 + $0xa0] sm:$0xff] %v10255
  %10320 = vst [vmem:[#allocation2 + $0xa8] sm:$0xff] %v10256
  %10321 = vst [vmem:[#allocation2 + $0xb0] sm:$0xff] %v10257
  %10322 = vst [vmem:[#allocation2 + $0xb8] sm:$0xff] %v10258
  %10323 = vst [vmem:[#allocation2 + $0xc0] sm:$0xff] %v10259
  %10324 = vst [vmem:[#allocation2 + $0xc8] sm:$0xff] %v10260
  %10325 = vst [vmem:[#allocation2 + $0xd0] sm:$0xff] %v10261
  %10326 = vst [vmem:[#allocation2 + $0xd8] sm:$0xff] %v10262
  %10327 = vst [vmem:[#allocation2 + $0xe0] sm:$0xff] %v10263
  %10328 = vst [vmem:[#allocation2 + $0xe8] sm:$0xff] %v10264
  %10329 = vst [vmem:[#allocation2 + $0xf0] sm:$0xff] %v10265
  %10330 = vst [vmem:[#allocation2 + $0xf8] sm:$0xff] %v10266
  %10331 = vst [vmem:[#allocation2 + $0x100] sm:$0xff] %v10267
  %10332 = vst [vmem:[#allocation2 + $0x108] sm:$0xff] %v10268
  %10333 = vst [vmem:[#allocation2 + $0x110] sm:$0xff] %v10269
  %10334 = vst [vmem:[#allocation2 + $0x118] sm:$0xff] %v10270
  %10335 = vst [vmem:[#allocation2 + $0x120] sm:$0xff] %v10271
  %10336 = vst [vmem:[#allocation2 + $0x128] sm:$0xff] %v10272
  %10337 = vst [vmem:[#allocation2 + $0x130] sm:$0xff] %v10273
  %10338 = vst [vmem:[#allocation2 + $0x138] sm:$0xff] %v10274
  %10339 = vst [vmem:[#allocation2 + $0x140] sm:$0xff] %v10275
  %10340 = vst [vmem:[#allocation2 + $0x148] sm:$0xff] %v10276
  %10341 = vst [vmem:[#allocation2 + $0x150] sm:$0xff] %v10277
  %10342 = vst [vmem:[#allocation2 + $0x158] sm:$0xff] %v10278
  %10343 = vst [vmem:[#allocation2 + $0x160] sm:$0xff] %v10279
  %10344 = vst [vmem:[#allocation2 + $0x168] sm:$0xff] %v10280
  %10345 = vst [vmem:[#allocation2 + $0x170] sm:$0xff] %v10281
  %10346 = vst [vmem:[#allocation2 + $0x178] sm:$0xff] %v10282
  %10347 = vst [vmem:[#allocation2 + $0x180] sm:$0xff] %v10283
  %10348 = vst [vmem:[#allocation2 + $0x188] sm:$0xff] %v10284
  %10349 = vst [vmem:[#allocation2 + $0x190] sm:$0xff] %v10285
  %10350 = vst [vmem:[#allocation2 + $0x198] sm:$0xff] %v10286
  %10351 = vst [vmem:[#allocation2 + $0x1a0] sm:$0xff] %v10287
  %10352 = vst [vmem:[#allocation2 + $0x1a8] sm:$0xff] %v10288
  %10353 = vst [vmem:[#allocation2 + $0x1b0] sm:$0xff] %v10289
  %10354 = vst [vmem:[#allocation2 + $0x1b8] sm:$0xff] %v10290
  %10355 = vst [vmem:[#allocation2 + $0x1c0] sm:$0xff] %v10291
  %10356 = vst [vmem:[#allocation2 + $0x1c8] sm:$0xff] %v10292
  %10357 = vst [vmem:[#allocation2 + $0x1d0] sm:$0xff] %v10293
  %10358 = vst [vmem:[#allocation2 + $0x1d8] sm:$0xff] %v10294
  %10359 = vst [vmem:[#allocation2 + $0x1e0] sm:$0xff] %v10295
  %10360 = vst [vmem:[#allocation2 + $0x1e8] sm:$0xff] %v10296
  %10361 = vst [vmem:[#allocation2 + $0x1f0] sm:$0xff] %v10297
  %10362 = vst [vmem:[#allocation2 + $0x1f8] sm:$0xff] %v10298
  %v10363 = vld [vmem:[#allocation2] sm:$0xff]
  %v10364 = vld [vmem:[#allocation2 + $0x8] sm:$0xff]
  %v10365 = vld [vmem:[#allocation2 + $0x10] sm:$0xff]
  %v10366 = vld [vmem:[#allocation2 + $0x18] sm:$0xff]
  %v10367 = vld [vmem:[#allocation2 + $0x20] sm:$0xff]
  %v10368 = vld [vmem:[#allocation2 + $0x28] sm:$0xff]
  %v10369 = vld [vmem:[#allocation2 + $0x30] sm:$0xff]
  %v10370 = vld [vmem:[#allocation2 + $0x38] sm:$0xff]
  %v10371 = vld [vmem:[#allocation2 + $0x40] sm:$0xff]
  %v10372 = vld [vmem:[#allocation2 + $0x48] sm:$0xff]
  %v10373 = vld [vmem:[#allocation2 + $0x50] sm:$0xff]
  %v10374 = vld [vmem:[#allocation2 + $0x58] sm:$0xff]
  %v10375 = vld [vmem:[#allocation2 + $0x60] sm:$0xff]
  %v10376 = vld [vmem:[#allocation2 + $0x68] sm:$0xff]
  %v10377 = vld [vmem:[#allocation2 + $0x70] sm:$0xff]
  %v10378 = vld [vmem:[#allocation2 + $0x78] sm:$0xff]
  %v10379 = vld [vmem:[#allocation2 + $0x80] sm:$0xff]
  %v10380 = vld [vmem:[#allocation2 + $0x88] sm:$0xff]
  %v10381 = vld [vmem:[#allocation2 + $0x90] sm:$0xff]
  %v10382 = vld [vmem:[#allocation2 + $0x98] sm:$0xff]
  %v10383 = vld [vmem:[#allocation2 + $0xa0] sm:$0xff]
  %v10384 = vld [vmem:[#allocation2 + $0xa8] sm:$0xff]
  %v10385 = vld [vmem:[#allocation2 + $0xb0] sm:$0xff]
  %v10386 = vld [vmem:[#allocation2 + $0xb8] sm:$0xff]
  %v10387 = vld [vmem:[#allocation2 + $0xc0] sm:$0xff]
  %v10388 = vld [vmem:[#allocation2 + $0xc8] sm:$0xff]
  %v10389 = vld [vmem:[#allocation2 + $0xd0] sm:$0xff]
  %v10390 = vld [vmem:[#allocation2 + $0xd8] sm:$0xff]
  %v10391 = vld [vmem:[#allocation2 + $0xe0] sm:$0xff]
  %v10392 = vld [vmem:[#allocation2 + $0xe8] sm:$0xff]
  %v10393 = vld [vmem:[#allocation2 + $0xf0] sm:$0xff]
  %v10394 = vld [vmem:[#allocation2 + $0xf8] sm:$0xff]
  %v10395 = vld [vmem:[#allocation2 + $0x100] sm:$0xff]
  %v10396 = vld [vmem:[#allocation2 + $0x108] sm:$0xff]
  %v10397 = vld [vmem:[#allocation2 + $0x110] sm:$0xff]
  %v10398 = vld [vmem:[#allocation2 + $0x118] sm:$0xff]
  %v10399 = vld [vmem:[#allocation2 + $0x120] sm:$0xff]
  %v10400 = vld [vmem:[#allocation2 + $0x128] sm:$0xff]
  %v10401 = vld [vmem:[#allocation2 + $0x130] sm:$0xff]
  %v10402 = vld [vmem:[#allocation2 + $0x138] sm:$0xff]
  %v10403 = vld [vmem:[#allocation2 + $0x140] sm:$0xff]
  %v10404 = vld [vmem:[#allocation2 + $0x148] sm:$0xff]
  %v10405 = vld [vmem:[#allocation2 + $0x150] sm:$0xff]
  %v10406 = vld [vmem:[#allocation2 + $0x158] sm:$0xff]
  %v10407 = vld [vmem:[#allocation2 + $0x160] sm:$0xff]
  %v10408 = vld [vmem:[#allocation2 + $0x168] sm:$0xff]
  %v10409 = vld [vmem:[#allocation2 + $0x170] sm:$0xff]
  %v10410 = vld [vmem:[#allocation2 + $0x178] sm:$0xff]
  %v10411 = vld [vmem:[#allocation2 + $0x180] sm:$0xff]
  %v10412 = vld [vmem:[#allocation2 + $0x188] sm:$0xff]
  %v10413 = vld [vmem:[#allocation2 + $0x190] sm:$0xff]
  %v10414 = vld [vmem:[#allocation2 + $0x198] sm:$0xff]
  %v10415 = vld [vmem:[#allocation2 + $0x1a0] sm:$0xff]
  %v10416 = vld [vmem:[#allocation2 + $0x1a8] sm:$0xff]
  %v10417 = vld [vmem:[#allocation2 + $0x1b0] sm:$0xff]
  %v10418 = vld [vmem:[#allocation2 + $0x1b8] sm:$0xff]
  %v10419 = vld [vmem:[#allocation2 + $0x1c0] sm:$0xff]
  %v10420 = vld [vmem:[%s2] sm:$0xff]
  %v10421 = vld [vmem:[%s6] sm:$0xff]
  %10423 = vset.pattern.permute.xlu0 0
  %10424 = vperm.xlu0 %10423, %v10421
  %v10425 = vpop.permute.xlu0 %10424
  %vm10427 = vcmask 261120
  %v10429 = vsel %vm10427, %v10420, 0
  %10431 = vmatprep.subr.mxu0 %v10364
  %10432 = vmatpush1.msra.mxu0 %v10363
  %10433 = vmatprep.subr.mxu0 %v10365
  %10434 = vmatpush1.msra.mxu0 %v10364
  %10435 = vmatprep.subr.mxu0 %v10372
  %10436 = vmatpush1.msra.mxu0 %v10371
  %10437 = vmatprep.subr.mxu0 %v10373
  %10438 = vmatpush1.msra.mxu0 %v10372
  %10439 = vmatprep.subr.mxu0 0.0
  %10440 = vmatpush1.msra.mxu0 0.0
  %10441 = vmatprep.subr.mxu0 0.0
  %10442 = vmatpush1.msra.mxu0 0.0
  %10443 = vmatprep.subr.mxu0 0.0
  %10444 = vmatpush1.msra.mxu0 0.0
  %10445 = vmatprep.subr.mxu0 0.0
  %10446 = vmatpush1.msra.mxu0 0.0
  %10447 = vmatprep.subr.mxu0 0.0
  %10448 = vmatpush1.msra.mxu0 0.0
  %10449 = vmatprep.subr.mxu0 0.0
  %10450 = vmatpush1.msra.mxu0 0.0
  %10451 = vmatprep.subr.mxu0 0.0
  %10452 = vmatpush1.msra.mxu0 0.0
  %10453 = vmatprep.subr.mxu0 0.0
  %10454 = vmatpush1.msra.mxu0 0.0
  %10455 = vmatprep.subr.mxu0 0.0
  %10456 = vmatpush1.msra.mxu0 0.0
  %10457 = vmatprep.subr.mxu0 0.0
  %10458 = vmatpush1.msra.mxu0 0.0
  %10459 = vmatprep.subr.mxu0 0.0
  %10460 = vmatpush1.msra.mxu0 0.0
  %10461 = vmatprep.subr.mxu0 0.0
  %10462 = vmatpush1.msra.mxu0 0.0
  %10463 = vmatprep.subr.mxu0 0.0
  %10464 = vmatpush1.msra.mxu0 0.0
  %10465 = vmatprep.subr.mxu0 0.0
  %10466 = vmatpush1.msra.mxu0 0.0
  %10467 = vmatprep.subr.mxu0 0.0
  %10468 = vmatpush1.msra.mxu0 0.0
  %10469 = vmatprep.subr.mxu0 0.0
  %10470 = vmatpush1.msra.mxu0 0.0
  %10471 = vmatprep.subr.mxu0 0.0
  %10472 = vmatpush1.msra.mxu0 0.0
  %10473 = vmatprep.subr.mxu0 0.0
  %10474 = vmatpush1.msra.mxu0 0.0
  %10475 = vmatprep.subr.mxu0 0.0
  %10476 = vmatpush1.msra.mxu0 0.0
  %10477 = vmatprep.subr.mxu0 0.0
  %10478 = vmatpush1.msra.mxu0 0.0
  %10479 = vmatprep.subr.mxu0 0.0
  %10480 = vmatpush1.msra.mxu0 0.0
  %10481 = vmatprep.subr.mxu0 0.0
  %10482 = vmatpush1.msra.mxu0 0.0
  %10483 = vmatprep.subr.mxu0 0.0
  %10484 = vmatpush1.msra.mxu0 0.0
  %10485 = vmatprep.subr.mxu0 0.0
  %10486 = vmatpush1.msra.mxu0 0.0
  %10487 = vmatprep.subr.mxu0 0.0
  %10488 = vmatpush1.msra.mxu0 0.0
  %10489 = vmatprep.subr.mxu0 0.0
  %10490 = vmatpush1.msra.mxu0 0.0
  %10491 = vmatprep.subr.mxu0 0.0
  %10492 = vmatpush1.msra.mxu0 0.0
  %10493 = vmatprep.subr.mxu0 0.0
  %10494 = vmatpush1.msra.mxu0 0.0
  %10495 = vmatprep.mubr.f32.mxu0 0.0
  %10496 = vmatmul.mubr.f32.gmra.mrb[0].mxu0 %v10429
  %v10497 = vpop.f32.mrb[0].mxu0
  %v10498 = vadd.f32 %v10425, %v10497
  %v10499 = vpop.f32.mrb[0].mxu0
  %v10500 = vadd.f32 %v10425, %v10499
  %10501 = vdwg.mxu0
  %10502 = vmatprep.subr.mxu0 %v10366
  %10503 = vmatpush1.msra.mxu0 %v10365
  %10504 = vmatprep.subr.mxu0 %v10367
  %10505 = vmatpush1.msra.mxu0 %v10366
  %10506 = vmatprep.subr.mxu0 %v10374
  %10507 = vmatpush1.msra.mxu0 %v10373
  %10508 = vmatprep.subr.mxu0 %v10375
  %10509 = vmatpush1.msra.mxu0 %v10374
  %10510 = vmatprep.subr.mxu0 0.0
  %10511 = vmatpush1.msra.mxu0 0.0
  %10512 = vmatprep.subr.mxu0 0.0
  %10513 = vmatpush1.msra.mxu0 0.0
  %10514 = vmatprep.subr.mxu0 0.0
  %10515 = vmatpush1.msra.mxu0 0.0
  %10516 = vmatprep.subr.mxu0 0.0
  %10517 = vmatpush1.msra.mxu0 0.0
  %10518 = vmatprep.subr.mxu0 0.0
  %10519 = vmatpush1.msra.mxu0 0.0
  %10520 = vmatprep.subr.mxu0 0.0
  %10521 = vmatpush1.msra.mxu0 0.0
  %10522 = vmatprep.subr.mxu0 0.0
  %10523 = vmatpush1.msra.mxu0 0.0
  %10524 = vmatprep.subr.mxu0 0.0
  %10525 = vmatpush1.msra.mxu0 0.0
  %10526 = vmatprep.subr.mxu0 0.0
  %10527 = vmatpush1.msra.mxu0 0.0
  %10528 = vmatprep.subr.mxu0 0.0
  %10529 = vmatpush1.msra.mxu0 0.0
  %10530 = vmatprep.subr.mxu0 0.0
  %10531 = vmatpush1.msra.mxu0 0.0
  %10532 = vmatprep.subr.mxu0 0.0
  %10533 = vmatpush1.msra.mxu0 0.0
  %10534 = vmatprep.subr.mxu0 0.0
  %10535 = vmatpush1.msra.mxu0 0.0
  %10536 = vmatprep.subr.mxu0 0.0
  %10537 = vmatpush1.msra.mxu0 0.0
  %10538 = vmatprep.subr.mxu0 0.0
  %10539 = vmatpush1.msra.mxu0 0.0
  %10540 = vmatprep.subr.mxu0 0.0
  %10541 = vmatpush1.msra.mxu0 0.0
  %10542 = vmatprep.subr.mxu0 0.0
  %10543 = vmatpush1.msra.mxu0 0.0
  %10544 = vmatprep.subr.mxu0 0.0
  %10545 = vmatpush1.msra.mxu0 0.0
  %10546 = vmatprep.subr.mxu0 0.0
  %10547 = vmatpush1.msra.mxu0 0.0
  %10548 = vmatprep.subr.mxu0 0.0
  %10549 = vmatpush1.msra.mxu0 0.0
  %10550 = vmatprep.subr.mxu0 0.0
  %10551 = vmatpush1.msra.mxu0 0.0
  %10552 = vmatprep.subr.mxu0 0.0
  %10553 = vmatpush1.msra.mxu0 0.0
  %10554 = vmatprep.subr.mxu0 0.0
  %10555 = vmatpush1.msra.mxu0 0.0
  %10556 = vmatprep.subr.mxu0 0.0
  %10557 = vmatpush1.msra.mxu0 0.0
  %10558 = vmatprep.subr.mxu0 0.0
  %10559 = vmatpush1.msra.mxu0 0.0
  %10560 = vmatprep.subr.mxu0 0.0
  %10561 = vmatpush1.msra.mxu0 0.0
  %10562 = vmatprep.subr.mxu0 0.0
  %10563 = vmatpush1.msra.mxu0 0.0
  %10564 = vmatprep.subr.mxu0 0.0
  %10565 = vmatpush1.msra.mxu0 0.0
  %10566 = vmatprep.mubr.f32.mxu0 0.0
  %10567 = vmatmul.mubr.f32.gmra.mrb[0].mxu0 %v10429
  %v10568 = vpop.f32.mrb[0].mxu0
  %v10569 = vadd.f32 %v10425, %v10568
  %v10570 = vpop.f32.mrb[0].mxu0
  %v10571 = vadd.f32 %v10425, %v10570
  %10572 = vdwg.mxu0
  %10573 = vmatprep.subr.mxu0 %v10368
  %10574 = vmatpush1.msra.mxu0 %v10367
  %10575 = vmatprep.subr.mxu0 %v10369
  %10576 = vmatpush1.msra.mxu0 %v10368
  %10577 = vmatprep.subr.mxu0 %v10376
  %10578 = vmatpush1.msra.mxu0 %v10375
  %10579 = vmatprep.subr.mxu0 %v10377
  %10580 = vmatpush1.msra.mxu0 %v10376
  %10581 = vmatprep.subr.mxu0 0.0
  %10582 = vmatpush1.msra.mxu0 0.0
  %10583 = vmatprep.subr.mxu0 0.0
  %10584 = vmatpush1.msra.mxu0 0.0
  %10585 = vmatprep.subr.mxu0 0.0
  %10586 = vmatpush1.msra.mxu0 0.0
  %10587 = vmatprep.subr.mxu0 0.0
  %10588 = vmatpush1.msra.mxu0 0.0
  %10589 = vmatprep.subr.mxu0 0.0
  %10590 = vmatpush1.msra.mxu0 0.0
  %10591 = vmatprep.subr.mxu0 0.0
  %10592 = vmatpush1.msra.mxu0 0.0
  %10593 = vmatprep.subr.mxu0 0.0
  %10594 = vmatpush1.msra.mxu0 0.0
  %10595 = vmatprep.subr.mxu0 0.0
  %10596 = vmatpush1.msra.mxu0 0.0
  %10597 = vmatprep.subr.mxu0 0.0
  %10598 = vmatpush1.msra.mxu0 0.0
  %10599 = vmatprep.subr.mxu0 0.0
  %10600 = vmatpush1.msra.mxu0 0.0
  %10601 = vmatprep.subr.mxu0 0.0
  %10602 = vmatpush1.msra.mxu0 0.0
  %10603 = vmatprep.subr.mxu0 0.0
  %10604 = vmatpush1.msra.mxu0 0.0
  %10605 = vmatprep.subr.mxu0 0.0
  %10606 = vmatpush1.msra.mxu0 0.0
  %10607 = vmatprep.subr.mxu0 0.0
  %10608 = vmatpush1.msra.mxu0 0.0
  %10609 = vmatprep.subr.mxu0 0.0
  %10610 = vmatpush1.msra.mxu0 0.0
  %10611 = vmatprep.subr.mxu0 0.0
  %10612 = vmatpush1.msra.mxu0 0.0
  %10613 = vmatprep.subr.mxu0 0.0
  %10614 = vmatpush1.msra.mxu0 0.0
  %10615 = vmatprep.subr.mxu0 0.0
  %10616 = vmatpush1.msra.mxu0 0.0
  %10617 = vmatprep.subr.mxu0 0.0
  %10618 = vmatpush1.msra.mxu0 0.0
  %10619 = vmatprep.subr.mxu0 0.0
  %10620 = vmatpush1.msra.mxu0 0.0
  %10621 = vmatprep.subr.mxu0 0.0
  %10622 = vmatpush1.msra.mxu0 0.0
  %10623 = vmatprep.subr.mxu0 0.0
  %10624 = vmatpush1.msra.mxu0 0.0
  %10625 = vmatprep.subr.mxu0 0.0
  %10626 = vmatpush1.msra.mxu0 0.0
  %10627 = vmatprep.subr.mxu0 0.0
  %10628 = vmatpush1.msra.mxu0 0.0
  %10629 = vmatprep.subr.mxu0 0.0
  %10630 = vmatpush1.msra.mxu0 0.0
  %10631 = vmatprep.subr.mxu0 0.0
  %10632 = vmatpush1.msra.mxu0 0.0
  %10633 = vmatprep.subr.mxu0 0.0
  %10634 = vmatpush1.msra.mxu0 0.0
  %10635 = vmatprep.subr.mxu0 0.0
  %10636 = vmatpush1.msra.mxu0 0.0
  %10637 = vmatprep.mubr.f32.mxu0 0.0
  %10638 = vmatmul.mubr.f32.gmra.mrb[0].mxu0 %v10429
  %v10639 = vpop.f32.mrb[0].mxu0
  %v10640 = vadd.f32 %v10425, %v10639
  %v10641 = vpop.f32.mrb[0].mxu0
  %v10642 = vadd.f32 %v10425, %v10641
  %10643 = vdwg.mxu0
  %10644 = vmatprep.subr.mxu0 %v10370
  %10645 = vmatpush1.msra.mxu0 %v10369
  %10646 = vmatprep.subr.mxu0 %v10371
  %10647 = vmatpush1.msra.mxu0 %v10370
  %10648 = vmatprep.subr.mxu0 %v10378
  %10649 = vmatpush1.msra.mxu0 %v10377
  %10650 = vmatprep.subr.mxu0 %v10379
  %10651 = vmatpush1.msra.mxu0 %v10378
  %10652 = vmatprep.subr.mxu0 0.0
  %10653 = vmatpush1.msra.mxu0 0.0
  %10654 = vmatprep.subr.mxu0 0.0
  %10655 = vmatpush1.msra.mxu0 0.0
  %10656 = vmatprep.subr.mxu0 0.0
  %10657 = vmatpush1.msra.mxu0 0.0
  %10658 = vmatprep.subr.mxu0 0.0
  %10659 = vmatpush1.msra.mxu0 0.0
  %10660 = vmatprep.subr.mxu0 0.0
  %10661 = vmatpush1.msra.mxu0 0.0
  %10662 = vmatprep.subr.mxu0 0.0
  %10663 = vmatpush1.msra.mxu0 0.0
  %10664 = vmatprep.subr.mxu0 0.0
  %10665 = vmatpush1.msra.mxu0 0.0
  %10666 = vmatprep.subr.mxu0 0.0
  %10667 = vmatpush1.msra.mxu0 0.0
  %10668 = vmatprep.subr.mxu0 0.0
  %10669 = vmatpush1.msra.mxu0 0.0
  %10670 = vmatprep.subr.mxu0 0.0
  %10671 = vmatpush1.msra.mxu0 0.0
  %10672 = vmatprep.subr.mxu0 0.0
  %10673 = vmatpush1.msra.mxu0 0.0
  %10674 = vmatprep.subr.mxu0 0.0
  %10675 = vmatpush1.msra.mxu0 0.0
  %10676 = vmatprep.subr.mxu0 0.0
  %10677 = vmatpush1.msra.mxu0 0.0
  %10678 = vmatprep.subr.mxu0 0.0
  %10679 = vmatpush1.msra.mxu0 0.0
  %10680 = vmatprep.subr.mxu0 0.0
  %10681 = vmatpush1.msra.mxu0 0.0
  %10682 = vmatprep.subr.mxu0 0.0
  %10683 = vmatpush1.msra.mxu0 0.0
  %10684 = vmatprep.subr.mxu0 0.0
  %10685 = vmatpush1.msra.mxu0 0.0
  %10686 = vmatprep.subr.mxu0 0.0
  %10687 = vmatpush1.msra.mxu0 0.0
  %10688 = vmatprep.subr.mxu0 0.0
  %10689 = vmatpush1.msra.mxu0 0.0
  %10690 = vmatprep.subr.mxu0 0.0
  %10691 = vmatpush1.msra.mxu0 0.0
  %10692 = vmatprep.subr.mxu0 0.0
  %10693 = vmatpush1.msra.mxu0 0.0
  %10694 = vmatprep.subr.mxu0 0.0
  %10695 = vmatpush1.msra.mxu0 0.0
  %10696 = vmatprep.subr.mxu0 0.0
  %10697 = vmatpush1.msra.mxu0 0.0
  %10698 = vmatprep.subr.mxu0 0.0
  %10699 = vmatpush1.msra.mxu0 0.0
  %10700 = vmatprep.subr.mxu0 0.0
  %10701 = vmatpush1.msra.mxu0 0.0
  %10702 = vmatprep.subr.mxu0 0.0
  %10703 = vmatpush1.msra.mxu0 0.0
  %10704 = vmatprep.subr.mxu0 0.0
  %10705 = vmatpush1.msra.mxu0 0.0
  %10706 = vmatprep.subr.mxu0 0.0
  %10707 = vmatpush1.msra.mxu0 0.0
  %10708 = vmatprep.mubr.f32.mxu0 0.0
  %10709 = vmatmul.mubr.f32.gmra.mrb[0].mxu0 %v10429
  %v10710 = vpop.f32.mrb[0].mxu0
  %v10711 = vadd.f32 %v10425, %v10710
  %v10712 = vpop.f32.mrb[0].mxu0
  %v10713 = vadd.f32 %v10425, %v10712
  %10714 = vdwg.mxu0
  %10715 = vmatprep.subr.mxu0 %v10372
  %10716 = vmatpush1.msra.mxu0 %v10371
  %10717 = vmatprep.subr.mxu0 %v10373
  %10718 = vmatpush1.msra.mxu0 %v10372
  %10719 = vmatprep.subr.mxu0 %v10380
  %10720 = vmatpush1.msra.mxu0 %v10379
  %10721 = vmatprep.subr.mxu0 %v10381
  %10722 = vmatpush1.msra.mxu0 %v10380
  %10723 = vmatprep.subr.mxu0 0.0
  %10724 = vmatpush1.msra.mxu0 0.0
  %10725 = vmatprep.subr.mxu0 0.0
  %10726 = vmatpush1.msra.mxu0 0.0
  %10727 = vmatprep.subr.mxu0 0.0
  %10728 = vmatpush1.msra.mxu0 0.0
  %10729 = vmatprep.subr.mxu0 0.0
  %10730 = vmatpush1.msra.mxu0 0.0
  %10731 = vmatprep.subr.mxu0 0.0
  %10732 = vmatpush1.msra.mxu0 0.0
  %10733 = vmatprep.subr.mxu0 0.0
  %10734 = vmatpush1.msra.mxu0 0.0
  %10735 = vmatprep.subr.mxu0 0.0
  %10736 = vmatpush1.msra.mxu0 0.0
  %10737 = vmatprep.subr.mxu0 0.0
  %10738 = vmatpush1.msra.mxu0 0.0
  %10739 = vmatprep.subr.mxu0 0.0
  %10740 = vmatpush1.msra.mxu0 0.0
  %10741 = vmatprep.subr.mxu0 0.0
  %10742 = vmatpush1.msra.mxu0 0.0
  %10743 = vmatprep.subr.mxu0 0.0
  %10744 = vmatpush1.msra.mxu0 0.0
  %10745 = vmatprep.subr.mxu0 0.0
  %10746 = vmatpush1.msra.mxu0 0.0
  %10747 = vmatprep.subr.mxu0 0.0
  %10748 = vmatpush1.msra.mxu0 0.0
  %10749 = vmatprep.subr.mxu0 0.0
  %10750 = vmatpush1.msra.mxu0 0.0
  %10751 = vmatprep.subr.mxu0 0.0
  %10752 = vmatpush1.msra.mxu0 0.0
  %10753 = vmatprep.subr.mxu0 0.0
  %10754 = vmatpush1.msra.mxu0 0.0
  %10755 = vmatprep.subr.mxu0 0.0
  %10756 = vmatpush1.msra.mxu0 0.0
  %10757 = vmatprep.subr.mxu0 0.0
  %10758 = vmatpush1.msra.mxu0 0.0
  %10759 = vmatprep.subr.mxu0 0.0
  %10760 = vmatpush1.msra.mxu0 0.0
  %10761 = vmatprep.subr.mxu0 0.0
  %10762 = vmatpush1.msra.mxu0 0.0
  %10763 = vmatprep.subr.mxu0 0.0
  %10764 = vmatpush1.msra.mxu0 0.0
  %10765 = vmatprep.subr.mxu0 0.0
  %10766 = vmatpush1.msra.mxu0 0.0
  %10767 = vmatprep.subr.mxu0 0.0
  %10768 = vmatpush1.msra.mxu0 0.0
  %10769 = vmatprep.subr.mxu0 0.0
  %10770 = vmatpush1.msra.mxu0 0.0
  %10771 = vmatprep.subr.mxu0 0.0
  %10772 = vmatpush1.msra.mxu0 0.0
  %10773 = vmatprep.subr.mxu0 0.0
  %10774 = vmatpush1.msra.mxu0 0.0
  %10775 = vmatprep.subr.mxu0 0.0
  %10776 = vmatpush1.msra.mxu0 0.0
  %10777 = vmatprep.subr.mxu0 0.0
  %10778 = vmatpush1.msra.mxu0 0.0
  %10779 = vmatprep.mubr.f32.mxu0 0.0
  %10780 = vmatmul.mubr.f32.gmra.mrb[0].mxu0 %v10429
  %v10781 = vpop.f32.mrb[0].mxu0
  %v10782 = vadd.f32 %v10425, %v10781
  %v10783 = vpop.f32.mrb[0].mxu0
  %v10784 = vadd.f32 %v10425, %v10783
  %10785 = vdwg.mxu0
  %10786 = vmatprep.subr.mxu0 %v10374
  %10787 = vmatpush1.msra.mxu0 %v10373
  %10788 = vmatprep.subr.mxu0 %v10375
  %10789 = vmatpush1.msra.mxu0 %v10374
  %10790 = vmatprep.subr.mxu0 %v10382
  %10791 = vmatpush1.msra.mxu0 %v10381
  %10792 = vmatprep.subr.mxu0 %v10383
  %10793 = vmatpush1.msra.mxu0 %v10382
  %10794 = vmatprep.subr.mxu0 0.0
  %10795 = vmatpush1.msra.mxu0 0.0
  %10796 = vmatprep.subr.mxu0 0.0
  %10797 = vmatpush1.msra.mxu0 0.0
  %10798 = vmatprep.subr.mxu0 0.0
  %10799 = vmatpush1.msra.mxu0 0.0
  %10800 = vmatprep.subr.mxu0 0.0
  %10801 = vmatpush1.msra.mxu0 0.0
  %10802 = vmatprep.subr.mxu0 0.0
  %10803 = vmatpush1.msra.mxu0 0.0
  %10804 = vmatprep.subr.mxu0 0.0
  %10805 = vmatpush1.msra.mxu0 0.0
  %10806 = vmatprep.subr.mxu0 0.0
  %10807 = vmatpush1.msra.mxu0 0.0
  %10808 = vmatprep.subr.mxu0 0.0
  %10809 = vmatpush1.msra.mxu0 0.0
  %10810 = vmatprep.subr.mxu0 0.0
  %10811 = vmatpush1.msra.mxu0 0.0
  %10812 = vmatprep.subr.mxu0 0.0
  %10813 = vmatpush1.msra.mxu0 0.0
  %10814 = vmatprep.subr.mxu0 0.0
  %10815 = vmatpush1.msra.mxu0 0.0
  %10816 = vmatprep.subr.mxu0 0.0
  %10817 = vmatpush1.msra.mxu0 0.0
  %10818 = vmatprep.subr.mxu0 0.0
  %10819 = vmatpush1.msra.mxu0 0.0
  %10820 = vmatprep.subr.mxu0 0.0
  %10821 = vmatpush1.msra.mxu0 0.0
  %10822 = vmatprep.subr.mxu0 0.0
  %10823 = vmatpush1.msra.mxu0 0.0
  %10824 = vmatprep.subr.mxu0 0.0
  %10825 = vmatpush1.msra.mxu0 0.0
  %10826 = vmatprep.subr.mxu0 0.0
  %10827 = vmatpush1.msra.mxu0 0.0
  %10828 = vmatprep.subr.mxu0 0.0
  %10829 = vmatpush1.msra.mxu0 0.0
  %10830 = vmatprep.subr.mxu0 0.0
  %10831 = vmatpush1.msra.mxu0 0.0
  %10832 = vmatprep.subr.mxu0 0.0
  %10833 = vmatpush1.msra.mxu0 0.0
  %10834 = vmatprep.subr.mxu0 0.0
  %10835 = vmatpush1.msra.mxu0 0.0
  %10836 = vmatprep.subr.mxu0 0.0
  %10837 = vmatpush1.msra.mxu0 0.0
  %10838 = vmatprep.subr.mxu0 0.0
  %10839 = vmatpush1.msra.mxu0 0.0
  %10840 = vmatprep.subr.mxu0 0.0
  %10841 = vmatpush1.msra.mxu0 0.0
  %10842 = vmatprep.subr.mxu0 0.0
  %10843 = vmatpush1.msra.mxu0 0.0
  %10844 = vmatprep.subr.mxu0 0.0
  %10845 = vmatpush1.msra.mxu0 0.0
  %10846 = vmatprep.subr.mxu0 0.0
  %10847 = vmatpush1.msra.mxu0 0.0
  %10848 = vmatprep.subr.mxu0 0.0
  %10849 = vmatpush1.msra.mxu0 0.0
  %10850 = vmatprep.mubr.f32.mxu0 0.0
  %10851 = vmatmul.mubr.f32.gmra.mrb[0].mxu0 %v10429
  %v10852 = vpop.f32.mrb[0].mxu0
  %v10853 = vadd.f32 %v10425, %v10852
  %v10854 = vpop.f32.mrb[0].mxu0
  %v10855 = vadd.f32 %v10425, %v10854
  %10856 = vdwg.mxu0
  %10857 = vmatprep.subr.mxu0 %v10376
  %10858 = vmatpush1.msra.mxu0 %v10375
  %10859 = vmatprep.subr.mxu0 %v10377
  %10860 = vmatpush1.msra.mxu0 %v10376
  %10861 = vmatprep.subr.mxu0 %v10384
  %10862 = vmatpush1.msra.mxu0 %v10383
  %10863 = vmatprep.subr.mxu0 %v10385
  %10864 = vmatpush1.msra.mxu0 %v10384
  %10865 = vmatprep.subr.mxu0 0.0
  %10866 = vmatpush1.msra.mxu0 0.0
  %10867 = vmatprep.subr.mxu0 0.0
  %10868 = vmatpush1.msra.mxu0 0.0
  %10869 = vmatprep.subr.mxu0 0.0
  %10870 = vmatpush1.msra.mxu0 0.0
  %10871 = vmatprep.subr.mxu0 0.0
  %10872 = vmatpush1.msra.mxu0 0.0
  %10873 = vmatprep.subr.mxu0 0.0
  %10874 = vmatpush1.msra.mxu0 0.0
  %10875 = vmatprep.subr.mxu0 0.0
  %10876 = vmatpush1.msra.mxu0 0.0
  %10877 = vmatprep.subr.mxu0 0.0
  %10878 = vmatpush1.msra.mxu0 0.0
  %10879 = vmatprep.subr.mxu0 0.0
  %10880 = vmatpush1.msra.mxu0 0.0
  %10881 = vmatprep.subr.mxu0 0.0
  %10882 = vmatpush1.msra.mxu0 0.0
  %10883 = vmatprep.subr.mxu0 0.0
  %10884 = vmatpush1.msra.mxu0 0.0
  %10885 = vmatprep.subr.mxu0 0.0
  %10886 = vmatpush1.msra.mxu0 0.0
  %10887 = vmatprep.subr.mxu0 0.0
  %10888 = vmatpush1.msra.mxu0 0.0
  %10889 = vmatprep.subr.mxu0 0.0
  %10890 = vmatpush1.msra.mxu0 0.0
  %10891 = vmatprep.subr.mxu0 0.0
  %10892 = vmatpush1.msra.mxu0 0.0
  %10893 = vmatprep.subr.mxu0 0.0
  %10894 = vmatpush1.msra.mxu0 0.0
  %10895 = vmatprep.subr.mxu0 0.0
  %10896 = vmatpush1.msra.mxu0 0.0
  %10897 = vmatprep.subr.mxu0 0.0
  %10898 = vmatpush1.msra.mxu0 0.0
  %10899 = vmatprep.subr.mxu0 0.0
  %10900 = vmatpush1.msra.mxu0 0.0
  %10901 = vmatprep.subr.mxu0 0.0
  %10902 = vmatpush1.msra.mxu0 0.0
  %10903 = vmatprep.subr.mxu0 0.0
  %10904 = vmatpush1.msra.mxu0 0.0
  %10905 = vmatprep.subr.mxu0 0.0
  %10906 = vmatpush1.msra.mxu0 0.0
  %10907 = vmatprep.subr.mxu0 0.0
  %10908 = vmatpush1.msra.mxu0 0.0
  %10909 = vmatprep.subr.mxu0 0.0
  %10910 = vmatpush1.msra.mxu0 0.0
  %10911 = vmatprep.subr.mxu0 0.0
  %10912 = vmatpush1.msra.mxu0 0.0
  %10913 = vmatprep.subr.mxu0 0.0
  %10914 = vmatpush1.msra.mxu0 0.0
  %10915 = vmatprep.subr.mxu0 0.0
  %10916 = vmatpush1.msra.mxu0 0.0
  %10917 = vmatprep.subr.mxu0 0.0
  %10918 = vmatpush1.msra.mxu0 0.0
  %10919 = vmatprep.subr.mxu0 0.0
  %10920 = vmatpush1.msra.mxu0 0.0
  %10921 = vmatprep.mubr.f32.mxu0 0.0
  %10922 = vmatmul.mubr.f32.gmra.mrb[0].mxu0 %v10429
  %v10923 = vpop.f32.mrb[0].mxu0
  %v10924 = vadd.f32 %v10425, %v10923
  %v10925 = vpop.f32.mrb[0].mxu0
  %v10926 = vadd.f32 %v10425, %v10925
  %10927 = vdwg.mxu0
  %10928 = vmatprep.subr.mxu0 %v10378
  %10929 = vmatpush1.msra.mxu0 %v10377
  %10930 = vmatprep.subr.mxu0 %v10379
  %10931 = vmatpush1.msra.mxu0 %v10378
  %10932 = vmatprep.subr.mxu0 %v10386
  %10933 = vmatpush1.msra.mxu0 %v10385
  %10934 = vmatprep.subr.mxu0 %v10387
  %10935 = vmatpush1.msra.mxu0 %v10386
  %10936 = vmatprep.subr.mxu0 0.0
  %10937 = vmatpush1.msra.mxu0 0.0
  %10938 = vmatprep.subr.mxu0 0.0
  %10939 = vmatpush1.msra.mxu0 0.0
  %10940 = vmatprep.subr.mxu0 0.0
  %10941 = vmatpush1.msra.mxu0 0.0
  %10942 = vmatprep.subr.mxu0 0.0
  %10943 = vmatpush1.msra.mxu0 0.0
  %10944 = vmatprep.subr.mxu0 0.0
  %10945 = vmatpush1.msra.mxu0 0.0
  %10946 = vmatprep.subr.mxu0 0.0
  %10947 = vmatpush1.msra.mxu0 0.0
  %10948 = vmatprep.subr.mxu0 0.0
  %10949 = vmatpush1.msra.mxu0 0.0
  %10950 = vmatprep.subr.mxu0 0.0
  %10951 = vmatpush1.msra.mxu0 0.0
  %10952 = vmatprep.subr.mxu0 0.0
  %10953 = vmatpush1.msra.mxu0 0.0
  %10954 = vmatprep.subr.mxu0 0.0
  %10955 = vmatpush1.msra.mxu0 0.0
  %10956 = vmatprep.subr.mxu0 0.0
  %10957 = vmatpush1.msra.mxu0 0.0
  %10958 = vmatprep.subr.mxu0 0.0
  %10959 = vmatpush1.msra.mxu0 0.0
  %10960 = vmatprep.subr.mxu0 0.0
  %10961 = vmatpush1.msra.mxu0 0.0
  %10962 = vmatprep.subr.mxu0 0.0
  %10963 = vmatpush1.msra.mxu0 0.0
  %10964 = vmatprep.subr.mxu0 0.0
  %10965 = vmatpush1.msra.mxu0 0.0
  %10966 = vmatprep.subr.mxu0 0.0
  %10967 = vmatpush1.msra.mxu0 0.0
  %10968 = vmatprep.subr.mxu0 0.0
  %10969 = vmatpush1.msra.mxu0 0.0
  %10970 = vmatprep.subr.mxu0 0.0
  %10971 = vmatpush1.msra.mxu0 0.0
  %10972 = vmatprep.subr.mxu0 0.0
  %10973 = vmatpush1.msra.mxu0 0.0
  %10974 = vmatprep.subr.mxu0 0.0
  %10975 = vmatpush1.msra.mxu0 0.0
  %10976 = vmatprep.subr.mxu0 0.0
  %10977 = vmatpush1.msra.mxu0 0.0
  %10978 = vmatprep.subr.mxu0 0.0
  %10979 = vmatpush1.msra.mxu0 0.0
  %10980 = vmatprep.subr.mxu0 0.0
  %10981 = vmatpush1.msra.mxu0 0.0
  %10982 = vmatprep.subr.mxu0 0.0
  %10983 = vmatpush1.msra.mxu0 0.0
  %10984 = vmatprep.subr.mxu0 0.0
  %10985 = vmatpush1.msra.mxu0 0.0
  %10986 = vmatprep.subr.mxu0 0.0
  %10987 = vmatpush1.msra.mxu0 0.0
  %10988 = vmatprep.subr.mxu0 0.0
  %10989 = vmatpush1.msra.mxu0 0.0
  %10990 = vmatprep.subr.mxu0 0.0
  %10991 = vmatpush1.msra.mxu0 0.0
  %10992 = vmatprep.mubr.f32.mxu0 0.0
  %10993 = vmatmul.mubr.f32.gmra.mrb[0].mxu0 %v10429
  %v10994 = vpop.f32.mrb[0].mxu0
  %v10995 = vadd.f32 %v10425, %v10994
  %v10996 = vpop.f32.mrb[0].mxu0
  %v10997 = vadd.f32 %v10425, %v10996
  %10998 = vdwg.mxu0
  %10999 = vmatprep.subr.mxu0 %v10380
  %11000 = vmatpush1.msra.mxu0 %v10379
  %11001 = vmatprep.subr.mxu0 %v10381
  %11002 = vmatpush1.msra.mxu0 %v10380
  %11003 = vmatprep.subr.mxu0 %v10388
  %11004 = vmatpush1.msra.mxu0 %v10387
  %11005 = vmatprep.subr.mxu0 %v10389
  %11006 = vmatpush1.msra.mxu0 %v10388
  %11007 = vmatprep.subr.mxu0 0.0
  %11008 = vmatpush1.msra.mxu0 0.0
  %11009 = vmatprep.subr.mxu0 0.0
  %11010 = vmatpush1.msra.mxu0 0.0
  %11011 = vmatprep.subr.mxu0 0.0
  %11012 = vmatpush1.msra.mxu0 0.0
  %11013 = vmatprep.subr.mxu0 0.0
  %11014 = vmatpush1.msra.mxu0 0.0
  %11015 = vmatprep.subr.mxu0 0.0
  %11016 = vmatpush1.msra.mxu0 0.0
  %11017 = vmatprep.subr.mxu0 0.0
  %11018 = vmatpush1.msra.mxu0 0.0
  %11019 = vmatprep.subr.mxu0 0.0
  %11020 = vmatpush1.msra.mxu0 0.0
  %11021 = vmatprep.subr.mxu0 0.0
  %11022 = vmatpush1.msra.mxu0 0.0
  %11023 = vmatprep.subr.mxu0 0.0
  %11024 = vmatpush1.msra.mxu0 0.0
  %11025 = vmatprep.subr.mxu0 0.0
  %11026 = vmatpush1.msra.mxu0 0.0
  %11027 = vmatprep.subr.mxu0 0.0
  %11028 = vmatpush1.msra.mxu0 0.0
  %11029 = vmatprep.subr.mxu0 0.0
  %11030 = vmatpush1.msra.mxu0 0.0
  %11031 = vmatprep.subr.mxu0 0.0
  %11032 = vmatpush1.msra.mxu0 0.0
  %11033 = vmatprep.subr.mxu0 0.0
  %11034 = vmatpush1.msra.mxu0 0.0
  %11035 = vmatprep.subr.mxu0 0.0
  %11036 = vmatpush1.msra.mxu0 0.0
  %11037 = vmatprep.subr.mxu0 0.0
  %11038 = vmatpush1.msra.mxu0 0.0
  %11039 = vmatprep.subr.mxu0 0.0
  %11040 = vmatpush1.msra.mxu0 0.0
  %11041 = vmatprep.subr.mxu0 0.0
  %11042 = vmatpush1.msra.mxu0 0.0
  %11043 = vmatprep.subr.mxu0 0.0
  %11044 = vmatpush1.msra.mxu0 0.0
  %11045 = vmatprep.subr.mxu0 0.0
  %11046 = vmatpush1.msra.mxu0 0.0
  %11047 = vmatprep.subr.mxu0 0.0
  %11048 = vmatpush1.msra.mxu0 0.0
  %11049 = vmatprep.subr.mxu0 0.0
  %11050 = vmatpush1.msra.mxu0 0.0
  %11051 = vmatprep.subr.mxu0 0.0
  %11052 = vmatpush1.msra.mxu0 0.0
  %11053 = vmatprep.subr.mxu0 0.0
  %11054 = vmatpush1.msra.mxu0 0.0
  %11055 = vmatprep.subr.mxu0 0.0
  %11056 = vmatpush1.msra.mxu0 0.0
  %11057 = vmatprep.subr.mxu0 0.0
  %11058 = vmatpush1.msra.mxu0 0.0
  %11059 = vmatprep.subr.mxu0 0.0
  %11060 = vmatpush1.msra.mxu0 0.0
  %11061 = vmatprep.subr.mxu0 0.0
  %11062 = vmatpush1.msra.mxu0 0.0
  %11063 = vmatprep.mubr.f32.mxu0 0.0
  %11064 = vmatmul.mubr.f32.gmra.mrb[0].mxu0 %v10429
  %v11065 = vpop.f32.mrb[0].mxu0
  %v11066 = vadd.f32 %v10425, %v11065
  %v11067 = vpop.f32.mrb[0].mxu0
  %v11068 = vadd.f32 %v10425, %v11067
  %11069 = vdwg.mxu0
  %11070 = vmatprep.subr.mxu0 %v10382
  %11071 = vmatpush1.msra.mxu0 %v10381
  %11072 = vmatprep.subr.mxu0 %v10383
  %11073 = vmatpush1.msra.mxu0 %v10382
  %11074 = vmatprep.subr.mxu0 %v10390
  %11075 = vmatpush1.msra.mxu0 %v10389
  %11076 = vmatprep.subr.mxu0 %v10391
  %11077 = vmatpush1.msra.mxu0 %v10390
  %11078 = vmatprep.subr.mxu0 0.0
  %11079 = vmatpush1.msra.mxu0 0.0
  %11080 = vmatprep.subr.mxu0 0.0
  %11081 = vmatpush1.msra.mxu0 0.0
  %11082 = vmatprep.subr.mxu0 0.0
  %11083 = vmatpush1.msra.mxu0 0.0
  %11084 = vmatprep.subr.mxu0 0.0
  %11085 = vmatpush1.msra.mxu0 0.0
  %11086 = vmatprep.subr.mxu0 0.0
  %11087 = vmatpush1.msra.mxu0 0.0
  %11088 = vmatprep.subr.mxu0 0.0
  %11089 = vmatpush1.msra.mxu0 0.0
  %11090 = vmatprep.subr.mxu0 0.0
  %11091 = vmatpush1.msra.mxu0 0.0
  %11092 = vmatprep.subr.mxu0 0.0
  %11093 = vmatpush1.msra.mxu0 0.0
  %11094 = vmatprep.subr.mxu0 0.0
  %11095 = vmatpush1.msra.mxu0 0.0
  %11096 = vmatprep.subr.mxu0 0.0
  %11097 = vmatpush1.msra.mxu0 0.0
  %11098 = vmatprep.subr.mxu0 0.0
  %11099 = vmatpush1.msra.mxu0 0.0
  %11100 = vmatprep.subr.mxu0 0.0
  %11101 = vmatpush1.msra.mxu0 0.0
  %11102 = vmatprep.subr.mxu0 0.0
  %11103 = vmatpush1.msra.mxu0 0.0
  %11104 = vmatprep.subr.mxu0 0.0
  %11105 = vmatpush1.msra.mxu0 0.0
  %11106 = vmatprep.subr.mxu0 0.0
  %11107 = vmatpush1.msra.mxu0 0.0
  %11108 = vmatprep.subr.mxu0 0.0
  %11109 = vmatpush1.msra.mxu0 0.0
  %11110 = vmatprep.subr.mxu0 0.0
  %11111 = vmatpush1.msra.mxu0 0.0
  %11112 = vmatprep.subr.mxu0 0.0
  %11113 = vmatpush1.msra.mxu0 0.0
  %11114 = vmatprep.subr.mxu0 0.0
  %11115 = vmatpush1.msra.mxu0 0.0
  %11116 = vmatprep.subr.mxu0 0.0
  %11117 = vmatpush1.msra.mxu0 0.0
  %11118 = vmatprep.subr.mxu0 0.0
  %11119 = vmatpush1.msra.mxu0 0.0
  %11120 = vmatprep.subr.mxu0 0.0
  %11121 = vmatpush1.msra.mxu0 0.0
  %11122 = vmatprep.subr.mxu0 0.0
  %11123 = vmatpush1.msra.mxu0 0.0
  %11124 = vmatprep.subr.mxu0 0.0
  %11125 = vmatpush1.msra.mxu0 0.0
  %11126 = vmatprep.subr.mxu0 0.0
  %11127 = vmatpush1.msra.mxu0 0.0
  %11128 = vmatprep.subr.mxu0 0.0
  %11129 = vmatpush1.msra.mxu0 0.0
  %11130 = vmatprep.subr.mxu0 0.0
  %11131 = vmatpush1.msra.mxu0 0.0
  %11132 = vmatprep.subr.mxu0 0.0
  %11133 = vmatpush1.msra.mxu0 0.0
  %11134 = vmatprep.mubr.f32.mxu0 0.0
  %11135 = vmatmul.mubr.f32.gmra.mrb[0].mxu0 %v10429
  %v11136 = vpop.f32.mrb[0].mxu0
  %v11137 = vadd.f32 %v10425, %v11136
  %v11138 = vpop.f32.mrb[0].mxu0
  %v11139 = vadd.f32 %v10425, %v11138
  %11140 = vdwg.mxu0
  %11141 = vmatprep.subr.mxu0 %v10384
  %11142 = vmatpush1.msra.mxu0 %v10383
  %11143 = vmatprep.subr.mxu0 %v10385
  %11144 = vmatpush1.msra.mxu0 %v10384
  %11145 = vmatprep.subr.mxu0 %v10392
  %11146 = vmatpush1.msra.mxu0 %v10391
  %11147 = vmatprep.subr.mxu0 %v10393
  %11148 = vmatpush1.msra.mxu0 %v10392
  %11149 = vmatprep.subr.mxu0 0.0
  %11150 = vmatpush1.msra.mxu0 0.0
  %11151 = vmatprep.subr.mxu0 0.0
  %11152 = vmatpush1.msra.mxu0 0.0
  %11153 = vmatprep.subr.mxu0 0.0
  %11154 = vmatpush1.msra.mxu0 0.0
  %11155 = vmatprep.subr.mxu0 0.0
  %11156 = vmatpush1.msra.mxu0 0.0
  %11157 = vmatprep.subr.mxu0 0.0
  %11158 = vmatpush1.msra.mxu0 0.0
  %11159 = vmatprep.subr.mxu0 0.0
  %11160 = vmatpush1.msra.mxu0 0.0
  %11161 = vmatprep.subr.mxu0 0.0
  %11162 = vmatpush1.msra.mxu0 0.0
  %11163 = vmatprep.subr.mxu0 0.0
  %11164 = vmatpush1.msra.mxu0 0.0
  %11165 = vmatprep.subr.mxu0 0.0
  %11166 = vmatpush1.msra.mxu0 0.0
  %11167 = vmatprep.subr.mxu0 0.0
  %11168 = vmatpush1.msra.mxu0 0.0
  %11169 = vmatprep.subr.mxu0 0.0
  %11170 = vmatpush1.msra.mxu0 0.0
  %11171 = vmatprep.subr.mxu0 0.0
  %11172 = vmatpush1.msra.mxu0 0.0
  %11173 = vmatprep.subr.mxu0 0.0
  %11174 = vmatpush1.msra.mxu0 0.0
  %11175 = vmatprep.subr.mxu0 0.0
  %11176 = vmatpush1.msra.mxu0 0.0
  %11177 = vmatprep.subr.mxu0 0.0
  %11178 = vmatpush1.msra.mxu0 0.0
  %11179 = vmatprep.subr.mxu0 0.0
  %11180 = vmatpush1.msra.mxu0 0.0
  %11181 = vmatprep.subr.mxu0 0.0
  %11182 = vmatpush1.msra.mxu0 0.0
  %11183 = vmatprep.subr.mxu0 0.0
  %11184 = vmatpush1.msra.mxu0 0.0
  %11185 = vmatprep.subr.mxu0 0.0
  %11186 = vmatpush1.msra.mxu0 0.0
  %11187 = vmatprep.subr.mxu0 0.0
  %11188 = vmatpush1.msra.mxu0 0.0
  %11189 = vmatprep.subr.mxu0 0.0
  %11190 = vmatpush1.msra.mxu0 0.0
  %11191 = vmatprep.subr.mxu0 0.0
  %11192 = vmatpush1.msra.mxu0 0.0
  %11193 = vmatprep.subr.mxu0 0.0
  %11194 = vmatpush1.msra.mxu0 0.0
  %11195 = vmatprep.subr.mxu0 0.0
  %11196 = vmatpush1.msra.mxu0 0.0
  %11197 = vmatprep.subr.mxu0 0.0
  %11198 = vmatpush1.msra.mxu0 0.0
  %11199 = vmatprep.subr.mxu0 0.0
  %11200 = vmatpush1.msra.mxu0 0.0
  %11201 = vmatprep.subr.mxu0 0.0
  %11202 = vmatpush1.msra.mxu0 0.0
  %11203 = vmatprep.subr.mxu0 0.0
  %11204 = vmatpush1.msra.mxu0 0.0
  %11205 = vmatprep.mubr.f32.mxu0 0.0
  %11206 = vmatmul.mubr.f32.gmra.mrb[0].mxu0 %v10429
  %v11207 = vpop.f32.mrb[0].mxu0
  %v11208 = vadd.f32 %v10425, %v11207
  %v11209 = vpop.f32.mrb[0].mxu0
  %v11210 = vadd.f32 %v10425, %v11209
  %11211 = vdwg.mxu0
  %11212 = vmatprep.subr.mxu0 %v10386
  %11213 = vmatpush1.msra.mxu0 %v10385
  %11214 = vmatprep.subr.mxu0 %v10387
  %11215 = vmatpush1.msra.mxu0 %v10386
  %11216 = vmatprep.subr.mxu0 %v10394
  %11217 = vmatpush1.msra.mxu0 %v10393
  %11218 = vmatprep.subr.mxu0 %v10395
  %11219 = vmatpush1.msra.mxu0 %v10394
  %11220 = vmatprep.subr.mxu0 0.0
  %11221 = vmatpush1.msra.mxu0 0.0
  %11222 = vmatprep.subr.mxu0 0.0
  %11223 = vmatpush1.msra.mxu0 0.0
  %11224 = vmatprep.subr.mxu0 0.0
  %11225 = vmatpush1.msra.mxu0 0.0
  %11226 = vmatprep.subr.mxu0 0.0
  %11227 = vmatpush1.msra.mxu0 0.0
  %11228 = vmatprep.subr.mxu0 0.0
  %11229 = vmatpush1.msra.mxu0 0.0
  %11230 = vmatprep.subr.mxu0 0.0
  %11231 = vmatpush1.msra.mxu0 0.0
  %11232 = vmatprep.subr.mxu0 0.0
  %11233 = vmatpush1.msra.mxu0 0.0
  %11234 = vmatprep.subr.mxu0 0.0
  %11235 = vmatpush1.msra.mxu0 0.0
  %11236 = vmatprep.subr.mxu0 0.0
  %11237 = vmatpush1.msra.mxu0 0.0
  %11238 = vmatprep.subr.mxu0 0.0
  %11239 = vmatpush1.msra.mxu0 0.0
  %11240 = vmatprep.subr.mxu0 0.0
  %11241 = vmatpush1.msra.mxu0 0.0
  %11242 = vmatprep.subr.mxu0 0.0
  %11243 = vmatpush1.msra.mxu0 0.0
  %11244 = vmatprep.subr.mxu0 0.0
  %11245 = vmatpush1.msra.mxu0 0.0
  %11246 = vmatprep.subr.mxu0 0.0
  %11247 = vmatpush1.msra.mxu0 0.0
  %11248 = vmatprep.subr.mxu0 0.0
  %11249 = vmatpush1.msra.mxu0 0.0
  %11250 = vmatprep.subr.mxu0 0.0
  %11251 = vmatpush1.msra.mxu0 0.0
  %11252 = vmatprep.subr.mxu0 0.0
  %11253 = vmatpush1.msra.mxu0 0.0
  %11254 = vmatprep.subr.mxu0 0.0
  %11255 = vmatpush1.msra.mxu0 0.0
  %11256 = vmatprep.subr.mxu0 0.0
  %11257 = vmatpush1.msra.mxu0 0.0
  %11258 = vmatprep.subr.mxu0 0.0
  %11259 = vmatpush1.msra.mxu0 0.0
  %11260 = vmatprep.subr.mxu0 0.0
  %11261 = vmatpush1.msra.mxu0 0.0
  %11262 = vmatprep.subr.mxu0 0.0
  %11263 = vmatpush1.msra.mxu0 0.0
  %11264 = vmatprep.subr.mxu0 0.0
  %11265 = vmatpush1.msra.mxu0 0.0
  %11266 = vmatprep.subr.mxu0 0.0
  %11267 = vmatpush1.msra.mxu0 0.0
  %11268 = vmatprep.subr.mxu0 0.0
  %11269 = vmatpush1.msra.mxu0 0.0
  %11270 = vmatprep.subr.mxu0 0.0
  %11271 = vmatpush1.msra.mxu0 0.0
  %11272 = vmatprep.subr.mxu0 0.0
  %11273 = vmatpush1.msra.mxu0 0.0
  %11274 = vmatprep.subr.mxu0 0.0
  %11275 = vmatpush1.msra.mxu0 0.0
  %11276 = vmatprep.mubr.f32.mxu0 0.0
  %11277 = vmatmul.mubr.f32.gmra.mrb[0].mxu0 %v10429
  %v11278 = vpop.f32.mrb[0].mxu0
  %v11279 = vadd.f32 %v10425, %v11278
  %v11280 = vpop.f32.mrb[0].mxu0
  %v11281 = vadd.f32 %v10425, %v11280
  %11282 = vdwg.mxu0
  %11283 = vmatprep.subr.mxu0 %v10388
  %11284 = vmatpush1.msra.mxu0 %v10387
  %11285 = vmatprep.subr.mxu0 %v10389
  %11286 = vmatpush1.msra.mxu0 %v10388
  %11287 = vmatprep.subr.mxu0 %v10396
  %11288 = vmatpush1.msra.mxu0 %v10395
  %11289 = vmatprep.subr.mxu0 %v10397
  %11290 = vmatpush1.msra.mxu0 %v10396
  %11291 = vmatprep.subr.mxu0 0.0
  %11292 = vmatpush1.msra.mxu0 0.0
  %11293 = vmatprep.subr.mxu0 0.0
  %11294 = vmatpush1.msra.mxu0 0.0
  %11295 = vmatprep.subr.mxu0 0.0
  %11296 = vmatpush1.msra.mxu0 0.0
  %11297 = vmatprep.subr.mxu0 0.0
  %11298 = vmatpush1.msra.mxu0 0.0
  %11299 = vmatprep.subr.mxu0 0.0
  %11300 = vmatpush1.msra.mxu0 0.0
  %11301 = vmatprep.subr.mxu0 0.0
  %11302 = vmatpush1.msra.mxu0 0.0
  %11303 = vmatprep.subr.mxu0 0.0
  %11304 = vmatpush1.msra.mxu0 0.0
  %11305 = vmatprep.subr.mxu0 0.0
  %11306 = vmatpush1.msra.mxu0 0.0
  %11307 = vmatprep.subr.mxu0 0.0
  %11308 = vmatpush1.msra.mxu0 0.0
  %11309 = vmatprep.subr.mxu0 0.0
  %11310 = vmatpush1.msra.mxu0 0.0
  %11311 = vmatprep.subr.mxu0 0.0
  %11312 = vmatpush1.msra.mxu0 0.0
  %11313 = vmatprep.subr.mxu0 0.0
  %11314 = vmatpush1.msra.mxu0 0.0
  %11315 = vmatprep.subr.mxu0 0.0
  %11316 = vmatpush1.msra.mxu0 0.0
  %11317 = vmatprep.subr.mxu0 0.0
  %11318 = vmatpush1.msra.mxu0 0.0
  %11319 = vmatprep.subr.mxu0 0.0
  %11320 = vmatpush1.msra.mxu0 0.0
  %11321 = vmatprep.subr.mxu0 0.0
  %11322 = vmatpush1.msra.mxu0 0.0
  %11323 = vmatprep.subr.mxu0 0.0
  %11324 = vmatpush1.msra.mxu0 0.0
  %11325 = vmatprep.subr.mxu0 0.0
  %11326 = vmatpush1.msra.mxu0 0.0
  %11327 = vmatprep.subr.mxu0 0.0
  %11328 = vmatpush1.msra.mxu0 0.0
  %11329 = vmatprep.subr.mxu0 0.0
  %11330 = vmatpush1.msra.mxu0 0.0
  %11331 = vmatprep.subr.mxu0 0.0
  %11332 = vmatpush1.msra.mxu0 0.0
  %11333 = vmatprep.subr.mxu0 0.0
  %11334 = vmatpush1.msra.mxu0 0.0
  %11335 = vmatprep.subr.mxu0 0.0
  %11336 = vmatpush1.msra.mxu0 0.0
  %11337 = vmatprep.subr.mxu0 0.0
  %11338 = vmatpush1.msra.mxu0 0.0
  %11339 = vmatprep.subr.mxu0 0.0
  %11340 = vmatpush1.msra.mxu0 0.0
  %11341 = vmatprep.subr.mxu0 0.0
  %11342 = vmatpush1.msra.mxu0 0.0
  %11343 = vmatprep.subr.mxu0 0.0
  %11344 = vmatpush1.msra.mxu0 0.0
  %11345 = vmatprep.subr.mxu0 0.0
  %11346 = vmatpush1.msra.mxu0 0.0
  %11347 = vmatprep.mubr.f32.mxu0 0.0
  %11348 = vmatmul.mubr.f32.gmra.mrb[0].mxu0 %v10429
  %v11349 = vpop.f32.mrb[0].mxu0
  %v11350 = vadd.f32 %v10425, %v11349
  %v11351 = vpop.f32.mrb[0].mxu0
  %v11352 = vadd.f32 %v10425, %v11351
  %11353 = vdwg.mxu0
  %11354 = vmatprep.subr.mxu0 %v10390
  %11355 = vmatpush1.msra.mxu0 %v10389
  %11356 = vmatprep.subr.mxu0 %v10391
  %11357 = vmatpush1.msra.mxu0 %v10390
  %11358 = vmatprep.subr.mxu0 %v10398
  %11359 = vmatpush1.msra.mxu0 %v10397
  %11360 = vmatprep.subr.mxu0 %v10399
  %11361 = vmatpush1.msra.mxu0 %v10398
  %11362 = vmatprep.subr.mxu0 0.0
  %11363 = vmatpush1.msra.mxu0 0.0
  %11364 = vmatprep.subr.mxu0 0.0
  %11365 = vmatpush1.msra.mxu0 0.0
  %11366 = vmatprep.subr.mxu0 0.0
  %11367 = vmatpush1.msra.mxu0 0.0
  %11368 = vmatprep.subr.mxu0 0.0
  %11369 = vmatpush1.msra.mxu0 0.0
  %11370 = vmatprep.subr.mxu0 0.0
  %11371 = vmatpush1.msra.mxu0 0.0
  %11372 = vmatprep.subr.mxu0 0.0
  %11373 = vmatpush1.msra.mxu0 0.0
  %11374 = vmatprep.subr.mxu0 0.0
  %11375 = vmatpush1.msra.mxu0 0.0
  %11376 = vmatprep.subr.mxu0 0.0
  %11377 = vmatpush1.msra.mxu0 0.0
  %11378 = vmatprep.subr.mxu0 0.0
  %11379 = vmatpush1.msra.mxu0 0.0
  %11380 = vmatprep.subr.mxu0 0.0
  %11381 = vmatpush1.msra.mxu0 0.0
  %11382 = vmatprep.subr.mxu0 0.0
  %11383 = vmatpush1.msra.mxu0 0.0
  %11384 = vmatprep.subr.mxu0 0.0
  %11385 = vmatpush1.msra.mxu0 0.0
  %11386 = vmatprep.subr.mxu0 0.0
  %11387 = vmatpush1.msra.mxu0 0.0
  %11388 = vmatprep.subr.mxu0 0.0
  %11389 = vmatpush1.msra.mxu0 0.0
  %11390 = vmatprep.subr.mxu0 0.0
  %11391 = vmatpush1.msra.mxu0 0.0
  %11392 = vmatprep.subr.mxu0 0.0
  %11393 = vmatpush1.msra.mxu0 0.0
  %11394 = vmatprep.subr.mxu0 0.0
  %11395 = vmatpush1.msra.mxu0 0.0
  %11396 = vmatprep.subr.mxu0 0.0
  %11397 = vmatpush1.msra.mxu0 0.0
  %11398 = vmatprep.subr.mxu0 0.0
  %11399 = vmatpush1.msra.mxu0 0.0
  %11400 = vmatprep.subr.mxu0 0.0
  %11401 = vmatpush1.msra.mxu0 0.0
  %11402 = vmatprep.subr.mxu0 0.0
  %11403 = vmatpush1.msra.mxu0 0.0
  %11404 = vmatprep.subr.mxu0 0.0
  %11405 = vmatpush1.msra.mxu0 0.0
  %11406 = vmatprep.subr.mxu0 0.0
  %11407 = vmatpush1.msra.mxu0 0.0
  %11408 = vmatprep.subr.mxu0 0.0
  %11409 = vmatpush1.msra.mxu0 0.0
  %11410 = vmatprep.subr.mxu0 0.0
  %11411 = vmatpush1.msra.mxu0 0.0
  %11412 = vmatprep.subr.mxu0 0.0
  %11413 = vmatpush1.msra.mxu0 0.0
  %11414 = vmatprep.subr.mxu0 0.0
  %11415 = vmatpush1.msra.mxu0 0.0
  %11416 = vmatprep.subr.mxu0 0.0
  %11417 = vmatpush1.msra.mxu0 0.0
  %11418 = vmatprep.mubr.f32.mxu0 0.0
  %11419 = vmatmul.mubr.f32.gmra.mrb[0].mxu0 %v10429
  %v11420 = vpop.f32.mrb[0].mxu0
  %v11421 = vadd.f32 %v10425, %v11420
  %v11422 = vpop.f32.mrb[0].mxu0
  %v11423 = vadd.f32 %v10425, %v11422
  %11424 = vdwg.mxu0
  %11425 = vmatprep.subr.mxu0 %v10392
  %11426 = vmatpush1.msra.mxu0 %v10391
  %11427 = vmatprep.subr.mxu0 %v10393
  %11428 = vmatpush1.msra.mxu0 %v10392
  %11429 = vmatprep.subr.mxu0 %v10400
  %11430 = vmatpush1.msra.mxu0 %v10399
  %11431 = vmatprep.subr.mxu0 %v10401
  %11432 = vmatpush1.msra.mxu0 %v10400
  %11433 = vmatprep.subr.mxu0 0.0
  %11434 = vmatpush1.msra.mxu0 0.0
  %11435 = vmatprep.subr.mxu0 0.0
  %11436 = vmatpush1.msra.mxu0 0.0
  %11437 = vmatprep.subr.mxu0 0.0
  %11438 = vmatpush1.msra.mxu0 0.0
  %11439 = vmatprep.subr.mxu0 0.0
  %11440 = vmatpush1.msra.mxu0 0.0
  %11441 = vmatprep.subr.mxu0 0.0
  %11442 = vmatpush1.msra.mxu0 0.0
  %11443 = vmatprep.subr.mxu0 0.0
  %11444 = vmatpush1.msra.mxu0 0.0
  %11445 = vmatprep.subr.mxu0 0.0
  %11446 = vmatpush1.msra.mxu0 0.0
  %11447 = vmatprep.subr.mxu0 0.0
  %11448 = vmatpush1.msra.mxu0 0.0
  %11449 = vmatprep.subr.mxu0 0.0
  %11450 = vmatpush1.msra.mxu0 0.0
  %11451 = vmatprep.subr.mxu0 0.0
  %11452 = vmatpush1.msra.mxu0 0.0
  %11453 = vmatprep.subr.mxu0 0.0
  %11454 = vmatpush1.msra.mxu0 0.0
  %11455 = vmatprep.subr.mxu0 0.0
  %11456 = vmatpush1.msra.mxu0 0.0
  %11457 = vmatprep.subr.mxu0 0.0
  %11458 = vmatpush1.msra.mxu0 0.0
  %11459 = vmatprep.subr.mxu0 0.0
  %11460 = vmatpush1.msra.mxu0 0.0
  %11461 = vmatprep.subr.mxu0 0.0
  %11462 = vmatpush1.msra.mxu0 0.0
  %11463 = vmatprep.subr.mxu0 0.0
  %11464 = vmatpush1.msra.mxu0 0.0
  %11465 = vmatprep.subr.mxu0 0.0
  %11466 = vmatpush1.msra.mxu0 0.0
  %11467 = vmatprep.subr.mxu0 0.0
  %11468 = vmatpush1.msra.mxu0 0.0
  %11469 = vmatprep.subr.mxu0 0.0
  %11470 = vmatpush1.msra.mxu0 0.0
  %11471 = vmatprep.subr.mxu0 0.0
  %11472 = vmatpush1.msra.mxu0 0.0
  %11473 = vmatprep.subr.mxu0 0.0
  %11474 = vmatpush1.msra.mxu0 0.0
  %11475 = vmatprep.subr.mxu0 0.0
  %11476 = vmatpush1.msra.mxu0 0.0
  %11477 = vmatprep.subr.mxu0 0.0
  %11478 = vmatpush1.msra.mxu0 0.0
  %11479 = vmatprep.subr.mxu0 0.0
  %11480 = vmatpush1.msra.mxu0 0.0
  %11481 = vmatprep.subr.mxu0 0.0
  %11482 = vmatpush1.msra.mxu0 0.0
  %11483 = vmatprep.subr.mxu0 0.0
  %11484 = vmatpush1.msra.mxu0 0.0
  %11485 = vmatprep.subr.mxu0 0.0
  %11486 = vmatpush1.msra.mxu0 0.0
  %11487 = vmatprep.subr.mxu0 0.0
  %11488 = vmatpush1.msra.mxu0 0.0
  %11489 = vmatprep.mubr.f32.mxu0 0.0
  %11490 = vmatmul.mubr.f32.gmra.mrb[0].mxu0 %v10429
  %v11491 = vpop.f32.mrb[0].mxu0
  %v11492 = vadd.f32 %v10425, %v11491
  %v11493 = vpop.f32.mrb[0].mxu0
  %v11494 = vadd.f32 %v10425, %v11493
  %11495 = vdwg.mxu0
  %11496 = vmatprep.subr.mxu0 %v10394
  %11497 = vmatpush1.msra.mxu0 %v10393
  %11498 = vmatprep.subr.mxu0 %v10395
  %11499 = vmatpush1.msra.mxu0 %v10394
  %11500 = vmatprep.subr.mxu0 %v10402
  %11501 = vmatpush1.msra.mxu0 %v10401
  %11502 = vmatprep.subr.mxu0 %v10403
  %11503 = vmatpush1.msra.mxu0 %v10402
  %11504 = vmatprep.subr.mxu0 0.0
  %11505 = vmatpush1.msra.mxu0 0.0
  %11506 = vmatprep.subr.mxu0 0.0
  %11507 = vmatpush1.msra.mxu0 0.0
  %11508 = vmatprep.subr.mxu0 0.0
  %11509 = vmatpush1.msra.mxu0 0.0
  %11510 = vmatprep.subr.mxu0 0.0
  %11511 = vmatpush1.msra.mxu0 0.0
  %11512 = vmatprep.subr.mxu0 0.0
  %11513 = vmatpush1.msra.mxu0 0.0
  %11514 = vmatprep.subr.mxu0 0.0
  %11515 = vmatpush1.msra.mxu0 0.0
  %11516 = vmatprep.subr.mxu0 0.0
  %11517 = vmatpush1.msra.mxu0 0.0
  %11518 = vmatprep.subr.mxu0 0.0
  %11519 = vmatpush1.msra.mxu0 0.0
  %11520 = vmatprep.subr.mxu0 0.0
  %11521 = vmatpush1.msra.mxu0 0.0
  %11522 = vmatprep.subr.mxu0 0.0
  %11523 = vmatpush1.msra.mxu0 0.0
  %11524 = vmatprep.subr.mxu0 0.0
  %11525 = vmatpush1.msra.mxu0 0.0
  %11526 = vmatprep.subr.mxu0 0.0
  %11527 = vmatpush1.msra.mxu0 0.0
  %11528 = vmatprep.subr.mxu0 0.0
  %11529 = vmatpush1.msra.mxu0 0.0
  %11530 = vmatprep.subr.mxu0 0.0
  %11531 = vmatpush1.msra.mxu0 0.0
  %11532 = vmatprep.subr.mxu0 0.0
  %11533 = vmatpush1.msra.mxu0 0.0
  %11534 = vmatprep.subr.mxu0 0.0
  %11535 = vmatpush1.msra.mxu0 0.0
  %11536 = vmatprep.subr.mxu0 0.0
  %11537 = vmatpush1.msra.mxu0 0.0
  %11538 = vmatprep.subr.mxu0 0.0
  %11539 = vmatpush1.msra.mxu0 0.0
  %11540 = vmatprep.subr.mxu0 0.0
  %11541 = vmatpush1.msra.mxu0 0.0
  %11542 = vmatprep.subr.mxu0 0.0
  %11543 = vmatpush1.msra.mxu0 0.0
  %11544 = vmatprep.subr.mxu0 0.0
  %11545 = vmatpush1.msra.mxu0 0.0
  %11546 = vmatprep.subr.mxu0 0.0
  %11547 = vmatpush1.msra.mxu0 0.0
  %11548 = vmatprep.subr.mxu0 0.0
  %11549 = vmatpush1.msra.mxu0 0.0
  %11550 = vmatprep.subr.mxu0 0.0
  %11551 = vmatpush1.msra.mxu0 0.0
  %11552 = vmatprep.subr.mxu0 0.0
  %11553 = vmatpush1.msra.mxu0 0.0
  %11554 = vmatprep.subr.mxu0 0.0
  %11555 = vmatpush1.msra.mxu0 0.0
  %11556 = vmatprep.subr.mxu0 0.0
  %11557 = vmatpush1.msra.mxu0 0.0
  %11558 = vmatprep.subr.mxu0 0.0
  %11559 = vmatpush1.msra.mxu0 0.0
  %11560 = vmatprep.mubr.f32.mxu0 0.0
  %11561 = vmatmul.mubr.f32.gmra.mrb[0].mxu0 %v10429
  %v11562 = vpop.f32.mrb[0].mxu0
  %v11563 = vadd.f32 %v10425, %v11562
  %v11564 = vpop.f32.mrb[0].mxu0
  %v11565 = vadd.f32 %v10425, %v11564
  %11566 = vdwg.mxu0
  %11567 = vmatprep.subr.mxu0 %v10396
  %11568 = vmatpush1.msra.mxu0 %v10395
  %11569 = vmatprep.subr.mxu0 %v10397
  %11570 = vmatpush1.msra.mxu0 %v10396
  %11571 = vmatprep.subr.mxu0 %v10404
  %11572 = vmatpush1.msra.mxu0 %v10403
  %11573 = vmatprep.subr.mxu0 %v10405
  %11574 = vmatpush1.msra.mxu0 %v10404
  %11575 = vmatprep.subr.mxu0 0.0
  %11576 = vmatpush1.msra.mxu0 0.0
  %11577 = vmatprep.subr.mxu0 0.0
  %11578 = vmatpush1.msra.mxu0 0.0
  %11579 = vmatprep.subr.mxu0 0.0
  %11580 = vmatpush1.msra.mxu0 0.0
  %11581 = vmatprep.subr.mxu0 0.0
  %11582 = vmatpush1.msra.mxu0 0.0
  %11583 = vmatprep.subr.mxu0 0.0
  %11584 = vmatpush1.msra.mxu0 0.0
  %11585 = vmatprep.subr.mxu0 0.0
  %11586 = vmatpush1.msra.mxu0 0.0
  %11587 = vmatprep.subr.mxu0 0.0
  %11588 = vmatpush1.msra.mxu0 0.0
  %11589 = vmatprep.subr.mxu0 0.0
  %11590 = vmatpush1.msra.mxu0 0.0
  %11591 = vmatprep.subr.mxu0 0.0
  %11592 = vmatpush1.msra.mxu0 0.0
  %11593 = vmatprep.subr.mxu0 0.0
  %11594 = vmatpush1.msra.mxu0 0.0
  %11595 = vmatprep.subr.mxu0 0.0
  %11596 = vmatpush1.msra.mxu0 0.0
  %11597 = vmatprep.subr.mxu0 0.0
  %11598 = vmatpush1.msra.mxu0 0.0
  %11599 = vmatprep.subr.mxu0 0.0
  %11600 = vmatpush1.msra.mxu0 0.0
  %11601 = vmatprep.subr.mxu0 0.0
  %11602 = vmatpush1.msra.mxu0 0.0
  %11603 = vmatprep.subr.mxu0 0.0
  %11604 = vmatpush1.msra.mxu0 0.0
  %11605 = vmatprep.subr.mxu0 0.0
  %11606 = vmatpush1.msra.mxu0 0.0
  %11607 = vmatprep.subr.mxu0 0.0
  %11608 = vmatpush1.msra.mxu0 0.0
  %11609 = vmatprep.subr.mxu0 0.0
  %11610 = vmatpush1.msra.mxu0 0.0
  %11611 = vmatprep.subr.mxu0 0.0
  %11612 = vmatpush1.msra.mxu0 0.0
  %11613 = vmatprep.subr.mxu0 0.0
  %11614 = vmatpush1.msra.mxu0 0.0
  %11615 = vmatprep.subr.mxu0 0.0
  %11616 = vmatpush1.msra.mxu0 0.0
  %11617 = vmatprep.subr.mxu0 0.0
  %11618 = vmatpush1.msra.mxu0 0.0
  %11619 = vmatprep.subr.mxu0 0.0
  %11620 = vmatpush1.msra.mxu0 0.0
  %11621 = vmatprep.subr.mxu0 0.0
  %11622 = vmatpush1.msra.mxu0 0.0
  %11623 = vmatprep.subr.mxu0 0.0
  %11624 = vmatpush1.msra.mxu0 0.0
  %11625 = vmatprep.subr.mxu0 0.0
  %11626 = vmatpush1.msra.mxu0 0.0
  %11627 = vmatprep.subr.mxu0 0.0
  %11628 = vmatpush1.msra.mxu0 0.0
  %11629 = vmatprep.subr.mxu0 0.0
  %11630 = vmatpush1.msra.mxu0 0.0
  %11631 = vmatprep.mubr.f32.mxu0 0.0
  %11632 = vmatmul.mubr.f32.gmra.mrb[0].mxu0 %v10429
  %v11633 = vpop.f32.mrb[0].mxu0
  %v11634 = vadd.f32 %v10425, %v11633
  %v11635 = vpop.f32.mrb[0].mxu0
  %v11636 = vadd.f32 %v10425, %v11635
  %11637 = vdwg.mxu0
  %11638 = vmatprep.subr.mxu0 %v10398
  %11639 = vmatpush1.msra.mxu0 %v10397
  %11640 = vmatprep.subr.mxu0 %v10399
  %11641 = vmatpush1.msra.mxu0 %v10398
  %11642 = vmatprep.subr.mxu0 %v10406
  %11643 = vmatpush1.msra.mxu0 %v10405
  %11644 = vmatprep.subr.mxu0 %v10407
  %11645 = vmatpush1.msra.mxu0 %v10406
  %11646 = vmatprep.subr.mxu0 0.0
  %11647 = vmatpush1.msra.mxu0 0.0
  %11648 = vmatprep.subr.mxu0 0.0
  %11649 = vmatpush1.msra.mxu0 0.0
  %11650 = vmatprep.subr.mxu0 0.0
  %11651 = vmatpush1.msra.mxu0 0.0
  %11652 = vmatprep.subr.mxu0 0.0
  %11653 = vmatpush1.msra.mxu0 0.0
  %11654 = vmatprep.subr.mxu0 0.0
  %11655 = vmatpush1.msra.mxu0 0.0
  %11656 = vmatprep.subr.mxu0 0.0
  %11657 = vmatpush1.msra.mxu0 0.0
  %11658 = vmatprep.subr.mxu0 0.0
  %11659 = vmatpush1.msra.mxu0 0.0
  %11660 = vmatprep.subr.mxu0 0.0
  %11661 = vmatpush1.msra.mxu0 0.0
  %11662 = vmatprep.subr.mxu0 0.0
  %11663 = vmatpush1.msra.mxu0 0.0
  %11664 = vmatprep.subr.mxu0 0.0
  %11665 = vmatpush1.msra.mxu0 0.0
  %11666 = vmatprep.subr.mxu0 0.0
  %11667 = vmatpush1.msra.mxu0 0.0
  %11668 = vmatprep.subr.mxu0 0.0
  %11669 = vmatpush1.msra.mxu0 0.0
  %11670 = vmatprep.subr.mxu0 0.0
  %11671 = vmatpush1.msra.mxu0 0.0
  %11672 = vmatprep.subr.mxu0 0.0
  %11673 = vmatpush1.msra.mxu0 0.0
  %11674 = vmatprep.subr.mxu0 0.0
  %11675 = vmatpush1.msra.mxu0 0.0
  %11676 = vmatprep.subr.mxu0 0.0
  %11677 = vmatpush1.msra.mxu0 0.0
  %11678 = vmatprep.subr.mxu0 0.0
  %11679 = vmatpush1.msra.mxu0 0.0
  %11680 = vmatprep.subr.mxu0 0.0
  %11681 = vmatpush1.msra.mxu0 0.0
  %11682 = vmatprep.subr.mxu0 0.0
  %11683 = vmatpush1.msra.mxu0 0.0
  %11684 = vmatprep.subr.mxu0 0.0
  %11685 = vmatpush1.msra.mxu0 0.0
  %11686 = vmatprep.subr.mxu0 0.0
  %11687 = vmatpush1.msra.mxu0 0.0
  %11688 = vmatprep.subr.mxu0 0.0
  %11689 = vmatpush1.msra.mxu0 0.0
  %11690 = vmatprep.subr.mxu0 0.0
  %11691 = vmatpush1.msra.mxu0 0.0
  %11692 = vmatprep.subr.mxu0 0.0
  %11693 = vmatpush1.msra.mxu0 0.0
  %11694 = vmatprep.subr.mxu0 0.0
  %11695 = vmatpush1.msra.mxu0 0.0
  %11696 = vmatprep.subr.mxu0 0.0
  %11697 = vmatpush1.msra.mxu0 0.0
  %11698 = vmatprep.subr.mxu0 0.0
  %11699 = vmatpush1.msra.mxu0 0.0
  %11700 = vmatprep.subr.mxu0 0.0
  %11701 = vmatpush1.msra.mxu0 0.0
  %11702 = vmatprep.mubr.f32.mxu0 0.0
  %11703 = vmatmul.mubr.f32.gmra.mrb[0].mxu0 %v10429
  %v11704 = vpop.f32.mrb[0].mxu0
  %v11705 = vadd.f32 %v10425, %v11704
  %v11706 = vpop.f32.mrb[0].mxu0
  %v11707 = vadd.f32 %v10425, %v11706
  %11708 = vdwg.mxu0
  %11709 = vmatprep.subr.mxu0 %v10400
  %11710 = vmatpush1.msra.mxu0 %v10399
  %11711 = vmatprep.subr.mxu0 %v10401
  %11712 = vmatpush1.msra.mxu0 %v10400
  %11713 = vmatprep.subr.mxu0 %v10408
  %11714 = vmatpush1.msra.mxu0 %v10407
  %11715 = vmatprep.subr.mxu0 %v10409
  %11716 = vmatpush1.msra.mxu0 %v10408
  %11717 = vmatprep.subr.mxu0 0.0
  %11718 = vmatpush1.msra.mxu0 0.0
  %11719 = vmatprep.subr.mxu0 0.0
  %11720 = vmatpush1.msra.mxu0 0.0
  %11721 = vmatprep.subr.mxu0 0.0
  %11722 = vmatpush1.msra.mxu0 0.0
  %11723 = vmatprep.subr.mxu0 0.0
  %11724 = vmatpush1.msra.mxu0 0.0
  %11725 = vmatprep.subr.mxu0 0.0
  %11726 = vmatpush1.msra.mxu0 0.0
  %11727 = vmatprep.subr.mxu0 0.0
  %11728 = vmatpush1.msra.mxu0 0.0
  %11729 = vmatprep.subr.mxu0 0.0
  %11730 = vmatpush1.msra.mxu0 0.0
  %11731 = vmatprep.subr.mxu0 0.0
  %11732 = vmatpush1.msra.mxu0 0.0
  %11733 = vmatprep.subr.mxu0 0.0
  %11734 = vmatpush1.msra.mxu0 0.0
  %11735 = vmatprep.subr.mxu0 0.0
  %11736 = vmatpush1.msra.mxu0 0.0
  %11737 = vmatprep.subr.mxu0 0.0
  %11738 = vmatpush1.msra.mxu0 0.0
  %11739 = vmatprep.subr.mxu0 0.0
  %11740 = vmatpush1.msra.mxu0 0.0
  %11741 = vmatprep.subr.mxu0 0.0
  %11742 = vmatpush1.msra.mxu0 0.0
  %11743 = vmatprep.subr.mxu0 0.0
  %11744 = vmatpush1.msra.mxu0 0.0
  %11745 = vmatprep.subr.mxu0 0.0
  %11746 = vmatpush1.msra.mxu0 0.0
  %11747 = vmatprep.subr.mxu0 0.0
  %11748 = vmatpush1.msra.mxu0 0.0
  %11749 = vmatprep.subr.mxu0 0.0
  %11750 = vmatpush1.msra.mxu0 0.0
  %11751 = vmatprep.subr.mxu0 0.0
  %11752 = vmatpush1.msra.mxu0 0.0
  %11753 = vmatprep.subr.mxu0 0.0
  %11754 = vmatpush1.msra.mxu0 0.0
  %11755 = vmatprep.subr.mxu0 0.0
  %11756 = vmatpush1.msra.mxu0 0.0
  %11757 = vmatprep.subr.mxu0 0.0
  %11758 = vmatpush1.msra.mxu0 0.0
  %11759 = vmatprep.subr.mxu0 0.0
  %11760 = vmatpush1.msra.mxu0 0.0
  %11761 = vmatprep.subr.mxu0 0.0
  %11762 = vmatpush1.msra.mxu0 0.0
  %11763 = vmatprep.subr.mxu0 0.0
  %11764 = vmatpush1.msra.mxu0 0.0
  %11765 = vmatprep.subr.mxu0 0.0
  %11766 = vmatpush1.msra.mxu0 0.0
  %11767 = vmatprep.subr.mxu0 0.0
  %11768 = vmatpush1.msra.mxu0 0.0
  %11769 = vmatprep.subr.mxu0 0.0
  %11770 = vmatpush1.msra.mxu0 0.0
  %11771 = vmatprep.subr.mxu0 0.0
  %11772 = vmatpush1.msra.mxu0 0.0
  %11773 = vmatprep.mubr.f32.mxu0 0.0
  %11774 = vmatmul.mubr.f32.gmra.mrb[0].mxu0 %v10429
  %v11775 = vpop.f32.mrb[0].mxu0
  %v11776 = vadd.f32 %v10425, %v11775
  %v11777 = vpop.f32.mrb[0].mxu0
  %v11778 = vadd.f32 %v10425, %v11777
  %11779 = vdwg.mxu0
  %11780 = vmatprep.subr.mxu0 %v10402
  %11781 = vmatpush1.msra.mxu0 %v10401
  %11782 = vmatprep.subr.mxu0 %v10403
  %11783 = vmatpush1.msra.mxu0 %v10402
  %11784 = vmatprep.subr.mxu0 %v10410
  %11785 = vmatpush1.msra.mxu0 %v10409
  %11786 = vmatprep.subr.mxu0 %v10411
  %11787 = vmatpush1.msra.mxu0 %v10410
  %11788 = vmatprep.subr.mxu0 0.0
  %11789 = vmatpush1.msra.mxu0 0.0
  %11790 = vmatprep.subr.mxu0 0.0
  %11791 = vmatpush1.msra.mxu0 0.0
  %11792 = vmatprep.subr.mxu0 0.0
  %11793 = vmatpush1.msra.mxu0 0.0
  %11794 = vmatprep.subr.mxu0 0.0
  %11795 = vmatpush1.msra.mxu0 0.0
  %11796 = vmatprep.subr.mxu0 0.0
  %11797 = vmatpush1.msra.mxu0 0.0
  %11798 = vmatprep.subr.mxu0 0.0
  %11799 = vmatpush1.msra.mxu0 0.0
  %11800 = vmatprep.subr.mxu0 0.0
  %11801 = vmatpush1.msra.mxu0 0.0
  %11802 = vmatprep.subr.mxu0 0.0
  %11803 = vmatpush1.msra.mxu0 0.0
  %11804 = vmatprep.subr.mxu0 0.0
  %11805 = vmatpush1.msra.mxu0 0.0
  %11806 = vmatprep.subr.mxu0 0.0
  %11807 = vmatpush1.msra.mxu0 0.0
  %11808 = vmatprep.subr.mxu0 0.0
  %11809 = vmatpush1.msra.mxu0 0.0
  %11810 = vmatprep.subr.mxu0 0.0
  %11811 = vmatpush1.msra.mxu0 0.0
  %11812 = vmatprep.subr.mxu0 0.0
  %11813 = vmatpush1.msra.mxu0 0.0
  %11814 = vmatprep.subr.mxu0 0.0
  %11815 = vmatpush1.msra.mxu0 0.0
  %11816 = vmatprep.subr.mxu0 0.0
  %11817 = vmatpush1.msra.mxu0 0.0
  %11818 = vmatprep.subr.mxu0 0.0
  %11819 = vmatpush1.msra.mxu0 0.0
  %11820 = vmatprep.subr.mxu0 0.0
  %11821 = vmatpush1.msra.mxu0 0.0
  %11822 = vmatprep.subr.mxu0 0.0
  %11823 = vmatpush1.msra.mxu0 0.0
  %11824 = vmatprep.subr.mxu0 0.0
  %11825 = vmatpush1.msra.mxu0 0.0
  %11826 = vmatprep.subr.mxu0 0.0
  %11827 = vmatpush1.msra.mxu0 0.0
  %11828 = vmatprep.subr.mxu0 0.0
  %11829 = vmatpush1.msra.mxu0 0.0
  %11830 = vmatprep.subr.mxu0 0.0
  %11831 = vmatpush1.msra.mxu0 0.0
  %11832 = vmatprep.subr.mxu0 0.0
  %11833 = vmatpush1.msra.mxu0 0.0
  %11834 = vmatprep.subr.mxu0 0.0
  %11835 = vmatpush1.msra.mxu0 0.0
  %11836 = vmatprep.subr.mxu0 0.0
  %11837 = vmatpush1.msra.mxu0 0.0
  %11838 = vmatprep.subr.mxu0 0.0
  %11839 = vmatpush1.msra.mxu0 0.0
  %11840 = vmatprep.subr.mxu0 0.0
  %11841 = vmatpush1.msra.mxu0 0.0
  %11842 = vmatprep.subr.mxu0 0.0
  %11843 = vmatpush1.msra.mxu0 0.0
  %11844 = vmatprep.mubr.f32.mxu0 0.0
  %11845 = vmatmul.mubr.f32.gmra.mrb[0].mxu0 %v10429
  %v11846 = vpop.f32.mrb[0].mxu0
  %v11847 = vadd.f32 %v10425, %v11846
  %v11848 = vpop.f32.mrb[0].mxu0
  %v11849 = vadd.f32 %v10425, %v11848
  %11850 = vdwg.mxu0
  %11851 = vmatprep.subr.mxu0 %v10404
  %11852 = vmatpush1.msra.mxu0 %v10403
  %11853 = vmatprep.subr.mxu0 %v10405
  %11854 = vmatpush1.msra.mxu0 %v10404
  %11855 = vmatprep.subr.mxu0 %v10412
  %11856 = vmatpush1.msra.mxu0 %v10411
  %11857 = vmatprep.subr.mxu0 %v10413
  %11858 = vmatpush1.msra.mxu0 %v10412
  %11859 = vmatprep.subr.mxu0 0.0
  %11860 = vmatpush1.msra.mxu0 0.0
  %11861 = vmatprep.subr.mxu0 0.0
  %11862 = vmatpush1.msra.mxu0 0.0
  %11863 = vmatprep.subr.mxu0 0.0
  %11864 = vmatpush1.msra.mxu0 0.0
  %11865 = vmatprep.subr.mxu0 0.0
  %11866 = vmatpush1.msra.mxu0 0.0
  %11867 = vmatprep.subr.mxu0 0.0
  %11868 = vmatpush1.msra.mxu0 0.0
  %11869 = vmatprep.subr.mxu0 0.0
  %11870 = vmatpush1.msra.mxu0 0.0
  %11871 = vmatprep.subr.mxu0 0.0
  %11872 = vmatpush1.msra.mxu0 0.0
  %11873 = vmatprep.subr.mxu0 0.0
  %11874 = vmatpush1.msra.mxu0 0.0
  %11875 = vmatprep.subr.mxu0 0.0
  %11876 = vmatpush1.msra.mxu0 0.0
  %11877 = vmatprep.subr.mxu0 0.0
  %11878 = vmatpush1.msra.mxu0 0.0
  %11879 = vmatprep.subr.mxu0 0.0
  %11880 = vmatpush1.msra.mxu0 0.0
  %11881 = vmatprep.subr.mxu0 0.0
  %11882 = vmatpush1.msra.mxu0 0.0
  %11883 = vmatprep.subr.mxu0 0.0
  %11884 = vmatpush1.msra.mxu0 0.0
  %11885 = vmatprep.subr.mxu0 0.0
  %11886 = vmatpush1.msra.mxu0 0.0
  %11887 = vmatprep.subr.mxu0 0.0
  %11888 = vmatpush1.msra.mxu0 0.0
  %11889 = vmatprep.subr.mxu0 0.0
  %11890 = vmatpush1.msra.mxu0 0.0
  %11891 = vmatprep.subr.mxu0 0.0
  %11892 = vmatpush1.msra.mxu0 0.0
  %11893 = vmatprep.subr.mxu0 0.0
  %11894 = vmatpush1.msra.mxu0 0.0
  %11895 = vmatprep.subr.mxu0 0.0
  %11896 = vmatpush1.msra.mxu0 0.0
  %11897 = vmatprep.subr.mxu0 0.0
  %11898 = vmatpush1.msra.mxu0 0.0
  %11899 = vmatprep.subr.mxu0 0.0
  %11900 = vmatpush1.msra.mxu0 0.0
  %11901 = vmatprep.subr.mxu0 0.0
  %11902 = vmatpush1.msra.mxu0 0.0
  %11903 = vmatprep.subr.mxu0 0.0
  %11904 = vmatpush1.msra.mxu0 0.0
  %11905 = vmatprep.subr.mxu0 0.0
  %11906 = vmatpush1.msra.mxu0 0.0
  %11907 = vmatprep.subr.mxu0 0.0
  %11908 = vmatpush1.msra.mxu0 0.0
  %11909 = vmatprep.subr.mxu0 0.0
  %11910 = vmatpush1.msra.mxu0 0.0
  %11911 = vmatprep.subr.mxu0 0.0
  %11912 = vmatpush1.msra.mxu0 0.0
  %11913 = vmatprep.subr.mxu0 0.0
  %11914 = vmatpush1.msra.mxu0 0.0
  %11915 = vmatprep.mubr.f32.mxu0 0.0
  %11916 = vmatmul.mubr.f32.gmra.mrb[0].mxu0 %v10429
  %v11917 = vpop.f32.mrb[0].mxu0
  %v11918 = vadd.f32 %v10425, %v11917
  %v11919 = vpop.f32.mrb[0].mxu0
  %v11920 = vadd.f32 %v10425, %v11919
  %11921 = vdwg.mxu0
  %11922 = vmatprep.subr.mxu0 %v10406
  %11923 = vmatpush1.msra.mxu0 %v10405
  %11924 = vmatprep.subr.mxu0 %v10407
  %11925 = vmatpush1.msra.mxu0 %v10406
  %11926 = vmatprep.subr.mxu0 %v10414
  %11927 = vmatpush1.msra.mxu0 %v10413
  %11928 = vmatprep.subr.mxu0 %v10415
  %11929 = vmatpush1.msra.mxu0 %v10414
  %11930 = vmatprep.subr.mxu0 0.0
  %11931 = vmatpush1.msra.mxu0 0.0
  %11932 = vmatprep.subr.mxu0 0.0
  %11933 = vmatpush1.msra.mxu0 0.0
  %11934 = vmatprep.subr.mxu0 0.0
  %11935 = vmatpush1.msra.mxu0 0.0
  %11936 = vmatprep.subr.mxu0 0.0
  %11937 = vmatpush1.msra.mxu0 0.0
  %11938 = vmatprep.subr.mxu0 0.0
  %11939 = vmatpush1.msra.mxu0 0.0
  %11940 = vmatprep.subr.mxu0 0.0
  %11941 = vmatpush1.msra.mxu0 0.0
  %11942 = vmatprep.subr.mxu0 0.0
  %11943 = vmatpush1.msra.mxu0 0.0
  %11944 = vmatprep.subr.mxu0 0.0
  %11945 = vmatpush1.msra.mxu0 0.0
  %11946 = vmatprep.subr.mxu0 0.0
  %11947 = vmatpush1.msra.mxu0 0.0
  %11948 = vmatprep.subr.mxu0 0.0
  %11949 = vmatpush1.msra.mxu0 0.0
  %11950 = vmatprep.subr.mxu0 0.0
  %11951 = vmatpush1.msra.mxu0 0.0
  %11952 = vmatprep.subr.mxu0 0.0
  %11953 = vmatpush1.msra.mxu0 0.0
  %11954 = vmatprep.subr.mxu0 0.0
  %11955 = vmatpush1.msra.mxu0 0.0
  %11956 = vmatprep.subr.mxu0 0.0
  %11957 = vmatpush1.msra.mxu0 0.0
  %11958 = vmatprep.subr.mxu0 0.0
  %11959 = vmatpush1.msra.mxu0 0.0
  %11960 = vmatprep.subr.mxu0 0.0
  %11961 = vmatpush1.msra.mxu0 0.0
  %11962 = vmatprep.subr.mxu0 0.0
  %11963 = vmatpush1.msra.mxu0 0.0
  %11964 = vmatprep.subr.mxu0 0.0
  %11965 = vmatpush1.msra.mxu0 0.0
  %11966 = vmatprep.subr.mxu0 0.0
  %11967 = vmatpush1.msra.mxu0 0.0
  %11968 = vmatprep.subr.mxu0 0.0
  %11969 = vmatpush1.msra.mxu0 0.0
  %11970 = vmatprep.subr.mxu0 0.0
  %11971 = vmatpush1.msra.mxu0 0.0
  %11972 = vmatprep.subr.mxu0 0.0
  %11973 = vmatpush1.msra.mxu0 0.0
  %11974 = vmatprep.subr.mxu0 0.0
  %11975 = vmatpush1.msra.mxu0 0.0
  %11976 = vmatprep.subr.mxu0 0.0
  %11977 = vmatpush1.msra.mxu0 0.0
  %11978 = vmatprep.subr.mxu0 0.0
  %11979 = vmatpush1.msra.mxu0 0.0
  %11980 = vmatprep.subr.mxu0 0.0
  %11981 = vmatpush1.msra.mxu0 0.0
  %11982 = vmatprep.subr.mxu0 0.0
  %11983 = vmatpush1.msra.mxu0 0.0
  %11984 = vmatprep.subr.mxu0 0.0
  %11985 = vmatpush1.msra.mxu0 0.0
  %11986 = vmatprep.mubr.f32.mxu0 0.0
  %11987 = vmatmul.mubr.f32.gmra.mrb[0].mxu0 %v10429
  %v11988 = vpop.f32.mrb[0].mxu0
  %v11989 = vadd.f32 %v10425, %v11988
  %v11990 = vpop.f32.mrb[0].mxu0
  %v11991 = vadd.f32 %v10425, %v11990
  %11992 = vdwg.mxu0
  %11993 = vmatprep.subr.mxu0 %v10408
  %11994 = vmatpush1.msra.mxu0 %v10407
  %11995 = vmatprep.subr.mxu0 %v10409
  %11996 = vmatpush1.msra.mxu0 %v10408
  %11997 = vmatprep.subr.mxu0 %v10416
  %11998 = vmatpush1.msra.mxu0 %v10415
  %11999 = vmatprep.subr.mxu0 %v10417
  %12000 = vmatpush1.msra.mxu0 %v10416
  %12001 = vmatprep.subr.mxu0 0.0
  %12002 = vmatpush1.msra.mxu0 0.0
  %12003 = vmatprep.subr.mxu0 0.0
  %12004 = vmatpush1.msra.mxu0 0.0
  %12005 = vmatprep.subr.mxu0 0.0
  %12006 = vmatpush1.msra.mxu0 0.0
  %12007 = vmatprep.subr.mxu0 0.0
  %12008 = vmatpush1.msra.mxu0 0.0
  %12009 = vmatprep.subr.mxu0 0.0
  %12010 = vmatpush1.msra.mxu0 0.0
  %12011 = vmatprep.subr.mxu0 0.0
  %12012 = vmatpush1.msra.mxu0 0.0
  %12013 = vmatprep.subr.mxu0 0.0
  %12014 = vmatpush1.msra.mxu0 0.0
  %12015 = vmatprep.subr.mxu0 0.0
  %12016 = vmatpush1.msra.mxu0 0.0
  %12017 = vmatprep.subr.mxu0 0.0
  %12018 = vmatpush1.msra.mxu0 0.0
  %12019 = vmatprep.subr.mxu0 0.0
  %12020 = vmatpush1.msra.mxu0 0.0
  %12021 = vmatprep.subr.mxu0 0.0
  %12022 = vmatpush1.msra.mxu0 0.0
  %12023 = vmatprep.subr.mxu0 0.0
  %12024 = vmatpush1.msra.mxu0 0.0
  %12025 = vmatprep.subr.mxu0 0.0
  %12026 = vmatpush1.msra.mxu0 0.0
  %12027 = vmatprep.subr.mxu0 0.0
  %12028 = vmatpush1.msra.mxu0 0.0
  %12029 = vmatprep.subr.mxu0 0.0
  %12030 = vmatpush1.msra.mxu0 0.0
  %12031 = vmatprep.subr.mxu0 0.0
  %12032 = vmatpush1.msra.mxu0 0.0
  %12033 = vmatprep.subr.mxu0 0.0
  %12034 = vmatpush1.msra.mxu0 0.0
  %12035 = vmatprep.subr.mxu0 0.0
  %12036 = vmatpush1.msra.mxu0 0.0
  %12037 = vmatprep.subr.mxu0 0.0
  %12038 = vmatpush1.msra.mxu0 0.0
  %12039 = vmatprep.subr.mxu0 0.0
  %12040 = vmatpush1.msra.mxu0 0.0
  %12041 = vmatprep.subr.mxu0 0.0
  %12042 = vmatpush1.msra.mxu0 0.0
  %12043 = vmatprep.subr.mxu0 0.0
  %12044 = vmatpush1.msra.mxu0 0.0
  %12045 = vmatprep.subr.mxu0 0.0
  %12046 = vmatpush1.msra.mxu0 0.0
  %12047 = vmatprep.subr.mxu0 0.0
  %12048 = vmatpush1.msra.mxu0 0.0
  %12049 = vmatprep.subr.mxu0 0.0
  %12050 = vmatpush1.msra.mxu0 0.0
  %12051 = vmatprep.subr.mxu0 0.0
  %12052 = vmatpush1.msra.mxu0 0.0
  %12053 = vmatprep.subr.mxu0 0.0
  %12054 = vmatpush1.msra.mxu0 0.0
  %12055 = vmatprep.subr.mxu0 0.0
  %12056 = vmatpush1.msra.mxu0 0.0
  %12057 = vmatprep.mubr.f32.mxu0 0.0
  %12058 = vmatmul.mubr.f32.gmra.mrb[0].mxu0 %v10429
  %v12059 = vpop.f32.mrb[0].mxu0
  %v12060 = vadd.f32 %v10425, %v12059
  %v12061 = vpop.f32.mrb[0].mxu0
  %v12062 = vadd.f32 %v10425, %v12061
  %12063 = vdwg.mxu0
  %12064 = vmatprep.subr.mxu0 %v10410
  %12065 = vmatpush1.msra.mxu0 %v10409
  %12066 = vmatprep.subr.mxu0 %v10411
  %12067 = vmatpush1.msra.mxu0 %v10410
  %12068 = vmatprep.subr.mxu0 %v10418
  %12069 = vmatpush1.msra.mxu0 %v10417
  %12070 = vmatprep.subr.mxu0 %v10419
  %12071 = vmatpush1.msra.mxu0 %v10418
  %12072 = vmatprep.subr.mxu0 0.0
  %12073 = vmatpush1.msra.mxu0 0.0
  %12074 = vmatprep.subr.mxu0 0.0
  %12075 = vmatpush1.msra.mxu0 0.0
  %12076 = vmatprep.subr.mxu0 0.0
  %12077 = vmatpush1.msra.mxu0 0.0
  %12078 = vmatprep.subr.mxu0 0.0
  %12079 = vmatpush1.msra.mxu0 0.0
  %12080 = vmatprep.subr.mxu0 0.0
  %12081 = vmatpush1.msra.mxu0 0.0
  %12082 = vmatprep.subr.mxu0 0.0
  %12083 = vmatpush1.msra.mxu0 0.0
  %12084 = vmatprep.subr.mxu0 0.0
  %12085 = vmatpush1.msra.mxu0 0.0
  %12086 = vmatprep.subr.mxu0 0.0
  %12087 = vmatpush1.msra.mxu0 0.0
  %12088 = vmatprep.subr.mxu0 0.0
  %12089 = vmatpush1.msra.mxu0 0.0
  %12090 = vmatprep.subr.mxu0 0.0
  %12091 = vmatpush1.msra.mxu0 0.0
  %12092 = vmatprep.subr.mxu0 0.0
  %12093 = vmatpush1.msra.mxu0 0.0
  %12094 = vmatprep.subr.mxu0 0.0
  %12095 = vmatpush1.msra.mxu0 0.0
  %12096 = vmatprep.subr.mxu0 0.0
  %12097 = vmatpush1.msra.mxu0 0.0
  %12098 = vmatprep.subr.mxu0 0.0
  %12099 = vmatpush1.msra.mxu0 0.0
  %12100 = vmatprep.subr.mxu0 0.0
  %12101 = vmatpush1.msra.mxu0 0.0
  %12102 = vmatprep.subr.mxu0 0.0
  %12103 = vmatpush1.msra.mxu0 0.0
  %12104 = vmatprep.subr.mxu0 0.0
  %12105 = vmatpush1.msra.mxu0 0.0
  %12106 = vmatprep.subr.mxu0 0.0
  %12107 = vmatpush1.msra.mxu0 0.0
  %12108 = vmatprep.subr.mxu0 0.0
  %12109 = vmatpush1.msra.mxu0 0.0
  %12110 = vmatprep.subr.mxu0 0.0
  %12111 = vmatpush1.msra.mxu0 0.0
  %12112 = vmatprep.subr.mxu0 0.0
  %12113 = vmatpush1.msra.mxu0 0.0
  %12114 = vmatprep.subr.mxu0 0.0
  %12115 = vmatpush1.msra.mxu0 0.0
  %12116 = vmatprep.subr.mxu0 0.0
  %12117 = vmatpush1.msra.mxu0 0.0
  %12118 = vmatprep.subr.mxu0 0.0
  %12119 = vmatpush1.msra.mxu0 0.0
  %12120 = vmatprep.subr.mxu0 0.0
  %12121 = vmatpush1.msra.mxu0 0.0
  %12122 = vmatprep.subr.mxu0 0.0
  %12123 = vmatpush1.msra.mxu0 0.0
  %12124 = vmatprep.subr.mxu0 0.0
  %12125 = vmatpush1.msra.mxu0 0.0
  %12126 = vmatprep.subr.mxu0 0.0
  %12127 = vmatpush1.msra.mxu0 0.0
  %12128 = vmatprep.mubr.f32.mxu0 0.0
  %12129 = vmatmul.mubr.f32.gmra.mrb[0].mxu0 %v10429
  %v12130 = vpop.f32.mrb[0].mxu0
  %v12131 = vadd.f32 %v10425, %v12130
  %v12132 = vpop.f32.mrb[0].mxu0
  %v12133 = vadd.f32 %v10425, %v12132
  %12134 = vdwg.mxu0
  %v12135 = vmax.f32 %v10498, 0.0
  %v12136 = vmax.f32 %v10500, 0.0
  %v12137 = vmax.f32 %v10569, 0.0
  %v12138 = vmax.f32 %v10571, 0.0
  %v12139 = vmax.f32 %v10640, 0.0
  %v12140 = vmax.f32 %v10642, 0.0
  %v12141 = vmax.f32 %v10711, 0.0
  %v12142 = vmax.f32 %v10713, 0.0
  %v12143 = vmax.f32 %v10782, 0.0
  %v12144 = vmax.f32 %v10784, 0.0
  %v12145 = vmax.f32 %v10853, 0.0
  %v12146 = vmax.f32 %v10855, 0.0
  %v12147 = vmax.f32 %v10924, 0.0
  %v12148 = vmax.f32 %v10926, 0.0
  %v12149 = vmax.f32 %v10995, 0.0
  %v12150 = vmax.f32 %v10997, 0.0
  %v12151 = vmax.f32 %v11066, 0.0
  %v12152 = vmax.f32 %v11068, 0.0
  %v12153 = vmax.f32 %v11137, 0.0
  %v12154 = vmax.f32 %v11139, 0.0
  %v12155 = vmax.f32 %v11208, 0.0
  %v12156 = vmax.f32 %v11210, 0.0
  %v12157 = vmax.f32 %v11279, 0.0
  %v12158 = vmax.f32 %v11281, 0.0
  %v12159 = vmax.f32 %v11350, 0.0
  %v12160 = vmax.f32 %v11352, 0.0
  %v12161 = vmax.f32 %v11421, 0.0
  %v12162 = vmax.f32 %v11423, 0.0
  %v12163 = vmax.f32 %v11492, 0.0
  %v12164 = vmax.f32 %v11494, 0.0
  %v12165 = vmax.f32 %v11563, 0.0
  %v12166 = vmax.f32 %v11565, 0.0
  %v12167 = vmax.f32 %v11634, 0.0
  %v12168 = vmax.f32 %v11636, 0.0
  %v12169 = vmax.f32 %v11705, 0.0
  %v12170 = vmax.f32 %v11707, 0.0
  %v12171 = vmax.f32 %v11776, 0.0
  %v12172 = vmax.f32 %v11778, 0.0
  %v12173 = vmax.f32 %v11847, 0.0
  %v12174 = vmax.f32 %v11849, 0.0
  %v12175 = vmax.f32 %v11918, 0.0
  %v12176 = vmax.f32 %v11920, 0.0
  %v12177 = vmax.f32 %v11989, 0.0
  %v12178 = vmax.f32 %v11991, 0.0
  %v12179 = vmax.f32 %v12060, 0.0
  %v12180 = vmax.f32 %v12062, 0.0
  %v12181 = vmax.f32 %v12131, 0.0
  %v12182 = vmax.f32 %v12133, 0.0
  %12183 = vst [vmem:[#allocation3] sm:$0xff] %v12135
  %12184 = vst [vmem:[#allocation3 + $0x8] sm:$0xff] %v12136
  %12185 = vst [vmem:[#allocation3 + $0x10] sm:$0xff] %v12137
  %12186 = vst [vmem:[#allocation3 + $0x18] sm:$0xff] %v12138
  %12187 = vst [vmem:[#allocation3 + $0x20] sm:$0xff] %v12139
  %12188 = vst [vmem:[#allocation3 + $0x28] sm:$0xff] %v12140
  %12189 = vst [vmem:[#allocation3 + $0x30] sm:$0xff] %v12141
  %12190 = vst [vmem:[#allocation3 + $0x38] sm:$0xff] %v12142
  %12191 = vst [vmem:[#allocation3 + $0x40] sm:$0xff] %v12143
  %12192 = vst [vmem:[#allocation3 + $0x48] sm:$0xff] %v12144
  %12193 = vst [vmem:[#allocation3 + $0x50] sm:$0xff] %v12145
  %12194 = vst [vmem:[#allocation3 + $0x58] sm:$0xff] %v12146
  %12195 = vst [vmem:[#allocation3 + $0x60] sm:$0xff] %v12147
  %12196 = vst [vmem:[#allocation3 + $0x68] sm:$0xff] %v12148
  %12197 = vst [vmem:[#allocation3 + $0x70] sm:$0xff] %v12149
  %12198 = vst [vmem:[#allocation3 + $0x78] sm:$0xff] %v12150
  %12199 = vst [vmem:[#allocation3 + $0x80] sm:$0xff] %v12151
  %12200 = vst [vmem:[#allocation3 + $0x88] sm:$0xff] %v12152
  %12201 = vst [vmem:[#allocation3 + $0x90] sm:$0xff] %v12153
  %12202 = vst [vmem:[#allocation3 + $0x98] sm:$0xff] %v12154
  %12203 = vst [vmem:[#allocation3 + $0xa0] sm:$0xff] %v12155
  %12204 = vst [vmem:[#allocation3 + $0xa8] sm:$0xff] %v12156
  %12205 = vst [vmem:[#allocation3 + $0xb0] sm:$0xff] %v12157
  %12206 = vst [vmem:[#allocation3 + $0xb8] sm:$0xff] %v12158
  %12207 = vst [vmem:[#allocation3 + $0xc0] sm:$0xff] %v12159
  %12208 = vst [vmem:[#allocation3 + $0xc8] sm:$0xff] %v12160
  %12209 = vst [vmem:[#allocation3 + $0xd0] sm:$0xff] %v12161
  %12210 = vst [vmem:[#allocation3 + $0xd8] sm:$0xff] %v12162
  %12211 = vst [vmem:[#allocation3 + $0xe0] sm:$0xff] %v12163
  %12212 = vst [vmem:[#allocation3 + $0xe8] sm:$0xff] %v12164
  %12213 = vst [vmem:[#allocation3 + $0xf0] sm:$0xff] %v12165
  %12214 = vst [vmem:[#allocation3 + $0xf8] sm:$0xff] %v12166
  %12215 = vst [vmem:[#allocation3 + $0x100] sm:$0xff] %v12167
  %12216 = vst [vmem:[#allocation3 + $0x108] sm:$0xff] %v12168
  %12217 = vst [vmem:[#allocation3 + $0x110] sm:$0xff] %v12169
  %12218 = vst [vmem:[#allocation3 + $0x118] sm:$0xff] %v12170
  %12219 = vst [vmem:[#allocation3 + $0x120] sm:$0xff] %v12171
  %12220 = vst [vmem:[#allocation3 + $0x128] sm:$0xff] %v12172
  %12221 = vst [vmem:[#allocation3 + $0x130] sm:$0xff] %v12173
  %12222 = vst [vmem:[#allocation3 + $0x138] sm:$0xff] %v12174
  %12223 = vst [vmem:[#allocation3 + $0x140] sm:$0xff] %v12175
  %12224 = vst [vmem:[#allocation3 + $0x148] sm:$0xff] %v12176
  %12225 = vst [vmem:[#allocation3 + $0x150] sm:$0xff] %v12177
  %12226 = vst [vmem:[#allocation3 + $0x158] sm:$0xff] %v12178
  %12227 = vst [vmem:[#allocation3 + $0x160] sm:$0xff] %v12179
  %12228 = vst [vmem:[#allocation3 + $0x168] sm:$0xff] %v12180
  %12229 = vst [vmem:[#allocation3 + $0x170] sm:$0xff] %v12181
  %12230 = vst [vmem:[#allocation3 + $0x178] sm:$0xff] %v12182
  %v12231 = vld [vmem:[#allocation3] sm:$0xff]
  %v12232 = vld [vmem:[#allocation3 + $0x8] sm:$0xff]
  %v12233 = vld [vmem:[#allocation3 + $0x10] sm:$0xff]
  %v12234 = vld [vmem:[#allocation3 + $0x18] sm:$0xff]
  %v12235 = vld [vmem:[#allocation3 + $0x20] sm:$0xff]
  %v12236 = vld [vmem:[#allocation3 + $0x28] sm:$0xff]
  %v12237 = vld [vmem:[#allocation3 + $0x40] sm:$0xff]
  %v12238 = vld [vmem:[#allocation3 + $0x48] sm:$0xff]
  %v12239 = vld [vmem:[#allocation3 + $0x50] sm:$0xff]
  %v12240 = vld [vmem:[#allocation3 + $0x58] sm:$0xff]
  %v12241 = vld [vmem:[#allocation3 + $0x60] sm:$0xff]
  %v12242 = vld [vmem:[#allocation3 + $0x68] sm:$0xff]
  %v12243 = vld [vmem:[#allocation3 + $0x80] sm:$0xff]
  %v12244 = vld [vmem:[#allocation3 + $0x88] sm:$0xff]
  %v12245 = vld [vmem:[#allocation3 + $0x90] sm:$0xff]
  %v12246 = vld [vmem:[#allocation3 + $0x98] sm:$0xff]
  %v12247 = vld [vmem:[#allocation3 + $0xa0] sm:$0xff]
  %v12248 = vld [vmem:[#allocation3 + $0xa8] sm:$0xff]
  %v12249 = vld [vmem:[#allocation3 + $0xc0] sm:$0xff]
  %v12250 = vld [vmem:[#allocation3 + $0xc8] sm:$0xff]
  %v12251 = vld [vmem:[#allocation3 + $0xd0] sm:$0xff]
  %v12252 = vld [vmem:[#allocation3 + $0xd8] sm:$0xff]
  %v12253 = vld [vmem:[#allocation3 + $0xe0] sm:$0xff]
  %v12254 = vld [vmem:[#allocation3 + $0xe8] sm:$0xff]
  %v12255 = vld [vmem:[#allocation3 + $0x100] sm:$0xff]
  %v12256 = vld [vmem:[#allocation3 + $0x108] sm:$0xff]
  %v12257 = vld [vmem:[#allocation3 + $0x110] sm:$0xff]
  %v12258 = vld [vmem:[#allocation3 + $0x118] sm:$0xff]
  %v12259 = vld [vmem:[#allocation3 + $0x120] sm:$0xff]
  %v12260 = vld [vmem:[#allocation3 + $0x128] sm:$0xff]
  %v12261 = vld [vmem:[#allocation3 + $0x140] sm:$0xff]
  %v12262 = vld [vmem:[#allocation3 + $0x148] sm:$0xff]
  %v12263 = vld [vmem:[#allocation3 + $0x150] sm:$0xff]
  %v12264 = vld [vmem:[#allocation3 + $0x158] sm:$0xff]
  %v12265 = vld [vmem:[#allocation3 + $0x160] sm:$0xff]
  %v12266 = vld [vmem:[#allocation3 + $0x168] sm:$0xff]
  %v12267 = vld [vmem:[%s3] sm:$0xff]
  %v12268 = vld [vmem:[%s3 + $0x8] sm:$0xff]
  %v12269 = vld [vmem:[%s3 + $0x10] sm:$0xff]
  %v12270 = vld [vmem:[%s3 + $0x18] sm:$0xff]
  %v12271 = vld [vmem:[%s3 + $0x20] sm:$0xff]
  %v12272 = vld [vmem:[%s3 + $0x28] sm:$0xff]
  %v12273 = vld [vmem:[%s3 + $0x30] sm:$0xff]
  %v12274 = vld [vmem:[%s3 + $0x38] sm:$0xff]
  %v12275 = vld [vmem:[%s3 + $0x40] sm:$0xff]
  %v12276 = vld [vmem:[%s3 + $0x48] sm:$0xff]
  %v12277 = vld [vmem:[%s3 + $0x50] sm:$0xff]
  %v12278 = vld [vmem:[%s3 + $0x58] sm:$0xff]
  %v12279 = vld [vmem:[%s7] sm:$0xff]
  %v12280 = vld [vmem:[%s7 + $0x8] sm:$0xff]
  %v12281 = vld [vmem:[%s7 + $0x10] sm:$0xff]
  %v12282 = vld [vmem:[%s7 + $0x18] sm:$0xff]
  %12284 = vset.pattern.permute.xlu0 0
  %12285 = vperm.xlu0 %12284, %v12279
  %v12286 = vpop.permute.xlu0 %12285
  %12289 = vset.pattern.permute.xlu0 0
  %12290 = vperm.xlu0 %12289, %v12280
  %v12291 = vpop.permute.xlu0 %12290
  %12294 = vset.pattern.permute.xlu0 0
  %12295 = vperm.xlu0 %12294, %v12281
  %v12296 = vpop.permute.xlu0 %12295
  %12299 = vset.pattern.permute.xlu0 0
  %12300 = vperm.xlu0 %12299, %v12282
  %v12301 = vpop.permute.xlu0 %12300
  %v12304 = vsel %vm10427, %v12269, 0
  %v12307 = vsel %vm10427, %v12272, 0
  %v12310 = vsel %vm10427, %v12275, 0
  %v12313 = vsel %vm10427, %v12278, 0
  %12315 = vmatprep.subr.mxu0 0.0
  %12316 = vmatpush1.msra.mxu0 %v12231
  %12317 = vmatprep.subr.mxu0 0.0
  %12318 = vmatpush1.msra.mxu0 %v12232
  %12319 = vmatprep.subr.mxu0 0.0
  %12320 = vmatpush1.msra.mxu0 %v12233
  %12321 = vmatprep.subr.mxu0 0.0
  %12322 = vmatpush1.msra.mxu0 %v12234
  %12323 = vmatprep.subr.mxu0 0.0
  %12324 = vmatpush1.msra.mxu0 %v12235
  %12325 = vmatprep.subr.mxu0 0.0
  %12326 = vmatpush1.msra.mxu0 %v12236
  %12327 = vmatprep.subr.mxu0 0.0
  %12328 = vmatpush1.msra.mxu0 %v12237
  %12329 = vmatprep.subr.mxu0 0.0
  %12330 = vmatpush1.msra.mxu0 %v12238
  %12331 = vmatprep.subr.mxu0 0.0
  %12332 = vmatpush1.msra.mxu0 %v12239
  %12333 = vmatprep.subr.mxu0 0.0
  %12334 = vmatpush1.msra.mxu0 %v12240
  %12335 = vmatprep.subr.mxu0 0.0
  %12336 = vmatpush1.msra.mxu0 %v12241
  %12337 = vmatprep.subr.mxu0 0.0
  %12338 = vmatpush1.msra.mxu0 %v12242
  %12339 = vmatprep.subr.mxu0 0.0
  %12340 = vmatpush1.msra.mxu0 %v12243
  %12341 = vmatprep.subr.mxu0 0.0
  %12342 = vmatpush1.msra.mxu0 %v12244
  %12343 = vmatprep.subr.mxu0 0.0
  %12344 = vmatpush1.msra.mxu0 %v12245
  %12345 = vmatprep.subr.mxu0 0.0
  %12346 = vmatpush1.msra.mxu0 %v12246
  %12347 = vmatprep.subr.mxu0 0.0
  %12348 = vmatpush1.msra.mxu0 %v12247
  %12349 = vmatprep.subr.mxu0 0.0
  %12350 = vmatpush1.msra.mxu0 %v12248
  %12351 = vmatprep.subr.mxu0 0.0
  %12352 = vmatpush1.msra.mxu0 %v12249
  %12353 = vmatprep.subr.mxu0 0.0
  %12354 = vmatpush1.msra.mxu0 %v12250
  %12355 = vmatprep.subr.mxu0 0.0
  %12356 = vmatpush1.msra.mxu0 %v12251
  %12357 = vmatprep.subr.mxu0 0.0
  %12358 = vmatpush1.msra.mxu0 %v12252
  %12359 = vmatprep.subr.mxu0 0.0
  %12360 = vmatpush1.msra.mxu0 %v12253
  %12361 = vmatprep.subr.mxu0 0.0
  %12362 = vmatpush1.msra.mxu0 %v12254
  %12363 = vmatprep.subr.mxu0 0.0
  %12364 = vmatpush1.msra.mxu0 %v12255
  %12365 = vmatprep.subr.mxu0 0.0
  %12366 = vmatpush1.msra.mxu0 %v12256
  %12367 = vmatprep.subr.mxu0 0.0
  %12368 = vmatpush1.msra.mxu0 %v12257
  %12369 = vmatprep.subr.mxu0 0.0
  %12370 = vmatpush1.msra.mxu0 %v12258
  %12371 = vmatprep.subr.mxu0 0.0
  %12372 = vmatpush1.msra.mxu0 %v12259
  %12373 = vmatprep.subr.mxu0 0.0
  %12374 = vmatpush1.msra.mxu0 %v12260
  %12375 = vmatprep.subr.mxu0 0.0
  %12376 = vmatpush1.msra.mxu0 %v12261
  %12377 = vmatprep.subr.mxu0 0.0
  %12378 = vmatpush1.msra.mxu0 %v12262
  %12379 = vmatprep.mubr.f32.mxu0 %v12268
  %12380 = vmatmul.mubr.f32.gmra.mrb[0].mxu0 %v12267
  %v12381 = vpop.f32.mrb[0].mxu0
  %v12382 = vadd.f32 %v12286, %v12381
  %v12383 = vpop.f32.mrb[0].mxu0
  %12384 = vmatprep.mubr.f32.mxu0 %v12271
  %12385 = vmatmul.mubr.f32.gmra.mrb[0].mxu0 %v12270
  %v12386 = vpop.f32.mrb[0].mxu0
  %v12387 = vadd.f32 %v12291, %v12386
  %v12388 = vpop.f32.mrb[0].mxu0
  %12389 = vmatprep.mubr.f32.mxu0 %v12274
  %12390 = vmatmul.mubr.f32.gmra.mrb[0].mxu0 %v12273
  %v12391 = vpop.f32.mrb[0].mxu0
  %v12392 = vadd.f32 %v12296, %v12391
  %v12393 = vpop.f32.mrb[0].mxu0
  %12394 = vmatprep.mubr.f32.mxu0 %v12277
  %12395 = vmatmul.mubr.f32.gmra.mrb[0].mxu0 %v12276
  %v12396 = vpop.f32.mrb[0].mxu0
  %v12397 = vadd.f32 %v12301, %v12396
  %v12398 = vpop.f32.mrb[0].mxu0
  %12399 = vdwg.mxu0
  %12400 = vmatprep.subr.mxu0 0.0
  %12401 = vmatpush1.msra.mxu0 %v12263
  %12402 = vmatprep.subr.mxu0 0.0
  %12403 = vmatpush1.msra.mxu0 %v12264
  %12404 = vmatprep.subr.mxu0 0.0
  %12405 = vmatpush1.msra.mxu0 %v12265
  %12406 = vmatprep.subr.mxu0 0.0
  %12407 = vmatpush1.msra.mxu0 %v12266
  %12408 = vmatprep.subr.mxu0 0.0
  %12409 = vmatpush1.msra.mxu0 0.0
  %12410 = vmatprep.subr.mxu0 0.0
  %12411 = vmatpush1.msra.mxu0 0.0
  %12412 = vmatprep.subr.mxu0 0.0
  %12413 = vmatpush1.msra.mxu0 0.0
  %12414 = vmatprep.subr.mxu0 0.0
  %12415 = vmatpush1.msra.mxu0 0.0
  %12416 = vmatprep.subr.mxu0 0.0
  %12417 = vmatpush1.msra.mxu0 0.0
  %12418 = vmatprep.subr.mxu0 0.0
  %12419 = vmatpush1.msra.mxu0 0.0
  %12420 = vmatprep.subr.mxu0 0.0
  %12421 = vmatpush1.msra.mxu0 0.0
  %12422 = vmatprep.subr.mxu0 0.0
  %12423 = vmatpush1.msra.mxu0 0.0
  %12424 = vmatprep.subr.mxu0 0.0
  %12425 = vmatpush1.msra.mxu0 0.0
  %12426 = vmatprep.subr.mxu0 0.0
  %12427 = vmatpush1.msra.mxu0 0.0
  %12428 = vmatprep.subr.mxu0 0.0
  %12429 = vmatpush1.msra.mxu0 0.0
  %12430 = vmatprep.subr.mxu0 0.0
  %12431 = vmatpush1.msra.mxu0 0.0
  %12432 = vmatprep.subr.mxu0 0.0
  %12433 = vmatpush1.msra.mxu0 0.0
  %12434 = vmatprep.subr.mxu0 0.0
  %12435 = vmatpush1.msra.mxu0 0.0
  %12436 = vmatprep.subr.mxu0 0.0
  %12437 = vmatpush1.msra.mxu0 0.0
  %12438 = vmatprep.subr.mxu0 0.0
  %12439 = vmatpush1.msra.mxu0 0.0
  %12440 = vmatprep.subr.mxu0 0.0
  %12441 = vmatpush1.msra.mxu0 0.0
  %12442 = vmatprep.subr.mxu0 0.0
  %12443 = vmatpush1.msra.mxu0 0.0
  %12444 = vmatprep.subr.mxu0 0.0
  %12445 = vmatpush1.msra.mxu0 0.0
  %12446 = vmatprep.subr.mxu0 0.0
  %12447 = vmatpush1.msra.mxu0 0.0
  %12448 = vmatprep.subr.mxu0 0.0
  %12449 = vmatpush1.msra.mxu0 0.0
  %12450 = vmatprep.subr.mxu0 0.0
  %12451 = vmatpush1.msra.mxu0 0.0
  %12452 = vmatprep.subr.mxu0 0.0
  %12453 = vmatpush1.msra.mxu0 0.0
  %12454 = vmatprep.subr.mxu0 0.0
  %12455 = vmatpush1.msra.mxu0 0.0
  %12456 = vmatprep.subr.mxu0 0.0
  %12457 = vmatpush1.msra.mxu0 0.0
  %12458 = vmatprep.subr.mxu0 0.0
  %12459 = vmatpush1.msra.mxu0 0.0
  %12460 = vmatprep.subr.mxu0 0.0
  %12461 = vmatpush1.msra.mxu0 0.0
  %12462 = vmatprep.subr.mxu0 0.0
  %12463 = vmatpush1.msra.mxu0 0.0
  %12464 = vmatprep.mubr.f32.mxu0 0.0
  %12465 = vmatmul.mubr.f32.gmra.mrb[0].mxu0 %v12304
  %v12466 = vpop.f32.mrb[0].mxu0
  %v12467 = vadd.f32 %v12382, %v12466
  %v12468 = vpop.f32.mrb[0].mxu0
  %12469 = vmatprep.mubr.f32.mxu0 0.0
  %12470 = vmatmul.mubr.f32.gmra.mrb[0].mxu0 %v12307
  %v12471 = vpop.f32.mrb[0].mxu0
  %v12472 = vadd.f32 %v12387, %v12471
  %v12473 = vpop.f32.mrb[0].mxu0
  %12474 = vmatprep.mubr.f32.mxu0 0.0
  %12475 = vmatmul.mubr.f32.gmra.mrb[0].mxu0 %v12310
  %v12476 = vpop.f32.mrb[0].mxu0
  %v12477 = vadd.f32 %v12392, %v12476
  %v12478 = vpop.f32.mrb[0].mxu0
  %12479 = vmatprep.mubr.f32.mxu0 0.0
  %12480 = vmatmul.mubr.f32.gmra.mrb[0].mxu0 %v12313
  %v12481 = vpop.f32.mrb[0].mxu0
  %v12482 = vadd.f32 %v12397, %v12481
  %v12483 = vpop.f32.mrb[0].mxu0
  %12484 = vdwg.mxu0
  %v12485 = vmax.f32 %v12467, 0.0
  %v12486 = vmax.f32 %v12472, 0.0
  %v12487 = vmax.f32 %v12477, 0.0
  %v12488 = vmax.f32 %v12482, 0.0
  %v12489 = vld [vmem:[%s4] sm:$0xff]
  %v12490 = vld [vmem:[%s8] sm:$0xff]
  %12492 = vset.pattern.permute.xlu0 0
  %12493 = vperm.xlu0 %12492, %v12490
  %v12494 = vpop.permute.xlu0 %12493
  %v12497 = vsel %vm10427, %v12489, 0
  %12499 = vmatprep.subr.mxu0 0.0
  %12500 = vmatpush1.msra.mxu0 %v12485
  %12501 = vmatprep.subr.mxu0 0.0
  %12502 = vmatpush1.msra.mxu0 %v12486
  %12503 = vmatprep.subr.mxu0 0.0
  %12504 = vmatpush1.msra.mxu0 %v12487
  %12505 = vmatprep.subr.mxu0 0.0
  %12506 = vmatpush1.msra.mxu0 %v12488
  %12507 = vmatprep.subr.mxu0 0.0
  %12508 = vmatpush1.msra.mxu0 0.0
  %12509 = vmatprep.subr.mxu0 0.0
  %12510 = vmatpush1.msra.mxu0 0.0
  %12511 = vmatprep.subr.mxu0 0.0
  %12512 = vmatpush1.msra.mxu0 0.0
  %12513 = vmatprep.subr.mxu0 0.0
  %12514 = vmatpush1.msra.mxu0 0.0
  %12515 = vmatprep.subr.mxu0 0.0
  %12516 = vmatpush1.msra.mxu0 0.0
  %12517 = vmatprep.subr.mxu0 0.0
  %12518 = vmatpush1.msra.mxu0 0.0
  %12519 = vmatprep.subr.mxu0 0.0
  %12520 = vmatpush1.msra.mxu0 0.0
  %12521 = vmatprep.subr.mxu0 0.0
  %12522 = vmatpush1.msra.mxu0 0.0
  %12523 = vmatprep.subr.mxu0 0.0
  %12524 = vmatpush1.msra.mxu0 0.0
  %12525 = vmatprep.subr.mxu0 0.0
  %12526 = vmatpush1.msra.mxu0 0.0
  %12527 = vmatprep.subr.mxu0 0.0
  %12528 = vmatpush1.msra.mxu0 0.0
  %12529 = vmatprep.subr.mxu0 0.0
  %12530 = vmatpush1.msra.mxu0 0.0
  %12531 = vmatprep.subr.mxu0 0.0
  %12532 = vmatpush1.msra.mxu0 0.0
  %12533 = vmatprep.subr.mxu0 0.0
  %12534 = vmatpush1.msra.mxu0 0.0
  %12535 = vmatprep.subr.mxu0 0.0
  %12536 = vmatpush1.msra.mxu0 0.0
  %12537 = vmatprep.subr.mxu0 0.0
  %12538 = vmatpush1.msra.mxu0 0.0
  %12539 = vmatprep.subr.mxu0 0.0
  %12540 = vmatpush1.msra.mxu0 0.0
  %12541 = vmatprep.subr.mxu0 0.0
  %12542 = vmatpush1.msra.mxu0 0.0
  %12543 = vmatprep.subr.mxu0 0.0
  %12544 = vmatpush1.msra.mxu0 0.0
  %12545 = vmatprep.subr.mxu0 0.0
  %12546 = vmatpush1.msra.mxu0 0.0
  %12547 = vmatprep.subr.mxu0 0.0
  %12548 = vmatpush1.msra.mxu0 0.0
  %12549 = vmatprep.subr.mxu0 0.0
  %12550 = vmatpush1.msra.mxu0 0.0
  %12551 = vmatprep.subr.mxu0 0.0
  %12552 = vmatpush1.msra.mxu0 0.0
  %12553 = vmatprep.subr.mxu0 0.0
  %12554 = vmatpush1.msra.mxu0 0.0
  %12555 = vmatprep.subr.mxu0 0.0
  %12556 = vmatpush1.msra.mxu0 0.0
  %12557 = vmatprep.subr.mxu0 0.0
  %12558 = vmatpush1.msra.mxu0 0.0
  %12559 = vmatprep.subr.mxu0 0.0
  %12560 = vmatpush1.msra.mxu0 0.0
  %12561 = vmatprep.subr.mxu0 0.0
  %12562 = vmatpush1.msra.mxu0 0.0
  %12563 = vmatprep.mubr.f32.mxu0 0.0
  %12564 = vmatmul.mubr.f32.gmra.mrb[0].mxu0 %v12497
  %v12565 = vpop.f32.mrb[0].mxu0
  %v12566 = vadd.f32 %v12494, %v12565
  %v12567 = vpop.f32.mrb[0].mxu0
  %12568 = vdwg.mxu0
  %12569 = vst [vmem:[%s9] sm:$0xff] %v12566
  // Predicated region
  $region38: #{conv_qnet_forward.1} parent=0 // pred_check
    _
  $region39: #{conv_qnet_forward.1} parent=0 // pred_check_branch
    %12571 = sbr.rel (0) target = $region41
  $region40: #{conv_qnet_forward.1} parent=0 // pred_region
    _
  $region41: #{conv_qnet_forward.1} parent=0 // pred_fallthru
    _
  // Predicated region
  $region42: #{conv_qnet_forward.1} parent=0 // pred_check
    _
  $region43: #{conv_qnet_forward.1} parent=0 // pred_check_branch
    %12573 = sbr.rel (0) target = $region45
  $region44: #{conv_qnet_forward.1} parent=0 // pred_region
    _
  $region45: #{conv_qnet_forward.1} parent=0 // pred_fallthru
    _

</llo_original>
